<compile_context>
chip_gen: v5e
topology: v5e:2x2
jax: 0.10.0
libtpu: 0.0.40
codegen_flags: <defaults>
</compile_context>

<pallas_src>
import functools

import numpy as np
import jax
import jax.numpy as jnp
from jax import lax
from jax.experimental import pallas as pl
from jax.experimental.pallas import tpu as pltpu

NUM_CLASSES = 10
# VGG19 feature config with channel widths scaled down 16x (small synthetic model).
VGG_CFG = [4, 4, "M", 8, 8, "M", 16, 16, 16, 16, "M",
           32, 32, 32, 32, "M", 32, 32, 32, 32, "M"]
POOL_OUT = 7                                        # nn.AdaptiveAvgPool2d((7, 7))
IN_FEATURES = VGG_CFG[-2] * POOL_OUT * POOL_OUT     # analog of VGG19_IN_FEATURES

IMG_HW = 32     # kernel is specialised to 3x32x32 inputs (final feature map 1x1)
LANES = 128     # lane width of every in-kernel activation / banded weight matrix


def _stages_cout(cfg):
    out, cur = [], []
    for v in cfg:
        if v == "M":
            out.append(tuple(cur))
            cur = []
        else:
            cur.append(v)
    assert not cur
    return tuple(out)


STAGES_COUT = _stages_cout(VGG_CFG)   # ((4,4),(8,8),(16,)*4,(32,)*4,(32,)*4)
NUM_CONVS = sum(len(s) for s in STAGES_COUT)


# --------------------------- fused Pallas kernel ----------------------------

def _fused_vgg_kernel(x_ref, wb_ref, bl_ref, wc_ref, bc_ref, o_ref, *,
                      batch, stages_cout):
    rows = batch * IMG_HW
    # Original-resolution h coordinate of every row (images stacked on rows).
    # Pure iota+mod: constant-folds, keeps the VPU free at runtime.
    row_y = lax.broadcasted_iota(jnp.int32, (rows, 1), 0) % IMG_HW

    def shift_rows(a, sigma):
        """a[r] <- a[r + sigma], zeros at image borders (conv zero padding)."""
        if sigma == 0:
            return a
        zeros = jnp.zeros((abs(sigma), a.shape[1]), a.dtype)
        if sigma > 0:
            shifted = jnp.concatenate([a[sigma:, :], zeros], axis=0)
        else:
            shifted = jnp.concatenate([zeros, a[:sigma, :]], axis=0)
        ok = jnp.logical_and(row_y + sigma >= 0, row_y + sigma < IMG_HW)
        return jnp.where(ok, shifted, jnp.zeros_like(shifted))

    act = x_ref[...].astype(jnp.float32)                 # (rows, 128), f32
    li = 0
    for s, couts in enumerate(stages_cout):
        step = 1 << s                                     # h stride of this stage
        for _c_out in couts:
            acc = jnp.zeros((rows, LANES), jnp.float32)
            for dh in range(3):                           # vertical taps -1, 0, +1
                src = shift_rows(act, (dh - 1) * step).astype(jnp.bfloat16)
                acc = acc + jnp.dot(src, wb_ref[li, dh],
                                    preferred_element_type=jnp.float32)
            act = jnp.maximum(acc + bl_ref[li], 0.0)      # bias + ReLU in f32
            li += 1
        # 2x2 / stride-2 maxpool: vertical partner is +step rows, horizontal
        # partner is +c_out lanes.  w is NOT compacted here — the next stage's
        # banded matrices read only the even-w lane groups, so the lane-roll
        # wraparound junk in the last c_stage lanes is never consumed.
        c_stage = couts[-1]
        ph = jnp.maximum(act, shift_rows(act, step))
        act = jnp.maximum(ph, pltpu.roll(ph, shift=LANES - c_stage, axis=1))

    # After 5 pools the real feature map is 1x1: image n's features sit in
    # row n*32, lanes 0:32 (junk lanes are killed by the zero rows of wc).
    feat = jnp.concatenate(
        [act[n * IMG_HW:n * IMG_HW + 1, :] for n in range(batch)], axis=0)
    o_ref[...] = (jnp.dot(feat, wc_ref[...], preferred_element_type=jnp.float32)
                  + bc_ref[...])


# ----------------------- host-side parameter folding ------------------------

def init_params(key):
    params = {"features": [], "classifier": None}
    c_in = 3
    for v in VGG_CFG:
        if v == "M":
            continue
        key, kw = jax.random.split(key)
        fan_in = 9 * c_in
        w = jax.random.normal(kw, (3, 3, c_in, v), jnp.float32) * (2.0 / fan_in) ** 0.5
        b = jnp.zeros((v,), jnp.float32)
        params["features"].append((w, b))
        c_in = v
    key, kw, kb = jax.random.split(key, 3)
    w = jax.random.normal(kw, (IN_FEATURES, NUM_CLASSES), jnp.float32) / (IN_FEATURES ** 0.5)
    b = jax.random.normal(kb, (NUM_CLASSES,), jnp.float32) * 0.01
    params["classifier"] = (w, b)
    return params


def prepare_params(params):
    """Fold the 3x3 conv weights into per-vertical-tap banded lane matrices.

    Activation layout at stage s: rows r = n*32 + h (h dilated by 2^s),
    lanes l = w*C + c (w compacted).  For output lane w*Cout+co the banded
    matrix gathers input lanes (w+dw-1)*Cin+ci (case A) or, for the first conv
    after a maxpool, 2*(w+dw-1)*Cin+ci (case B: pool's w-compaction folded in).
    """
    wb = np.zeros((NUM_CONVS, 3, LANES, LANES), np.float32)
    bl = np.zeros((NUM_CONVS, 1, LANES), np.float32)
    li = 0
    c_in = 3
    for s, couts in enumerate(STAGES_COUT):
        w_s = IMG_HW >> s                              # stage image width
        for k, c_out in enumerate(couts):
            w, b = params["features"][li]
            w = np.asarray(w, np.float32)              # (3, 3, c_in, c_out)
            b = np.asarray(b, np.float32)
            ci = c_in
            if li == 0:                                # pad input channels 3 -> 4
                w = np.pad(w, ((0, 0), (0, 0), (0, 1), (0, 0)))
                ci = 4
            after_pool = (s > 0 and k == 0)            # input in previous stage's lane layout
            for dh in range(3):
                for wo in range(w_s):
                    for dw in range(3):
                        wi = wo + dw - 1
                        if not 0 <= wi < w_s:
                            continue                   # conv zero padding in w
                        w_src = 2 * wi if after_pool else wi
                        wb[li, dh,
                           w_src * ci:(w_src + 1) * ci,
                           wo * c_out:(wo + 1) * c_out] = w[dh, dw]
            bl[li, 0, :] = np.tile(b, LANES // c_out)
            li += 1
            c_in = c_out

    # Fold AdaptiveAvgPool2d(7,7) (pure replication of the 1x1 map) + flatten
    # (NCHW order) + Linear into a single (C_last, NUM_CLASSES) matrix.
    # TODO(synk): general adaptive-pool bins (inputs other than 32x32) are only
    # handled by the plain-JAX reference, not by the fused kernel.
    wc, bc = params["classifier"]
    wc = np.asarray(wc, np.float32)                    # (c_last*49, NUM_CLASSES)
    c_last = c_in
    wc_fold = wc.reshape(c_last, POOL_OUT * POOL_OUT, NUM_CLASSES).sum(axis=1)
    wc_pad = np.zeros((LANES, NUM_CLASSES), np.float32)
    wc_pad[:c_last] = wc_fold
    return {
        "wb": jnp.asarray(wb, dtype=jnp.bfloat16),
        "bl": jnp.asarray(bl),
        "wc": jnp.asarray(wc_pad),
        "bc": jnp.asarray(np.asarray(bc, np.float32).reshape(1, NUM_CLASSES)),
    }


# --------------------------------- forward ----------------------------------

def custom_vgg_forward(prepped, x_nchw):
    n, c, h, w = x_nchw.shape
    assert (c, h, w) == (3, IMG_HW, IMG_HW), "kernel is specialised to 3x32x32 inputs"
    # Layout glue (tiny, one-time per call): NCHW -> rows=n*32+h, lanes=w*4+c.
    x = jnp.transpose(x_nchw, (0, 2, 3, 1))
    x = jnp.pad(x, ((0, 0), (0, 0), (0, 0), (0, 1)))       # channels 3 -> 4
    x = x.reshape(n * IMG_HW, LANES).astype(jnp.bfloat16)

    kern = functools.partial(_fused_vgg_kernel, batch=n, stages_cout=STAGES_COUT)
    return pl.pallas_call(
        kern,
        out_shape=jax.ShapeDtypeStruct((n, NUM_CLASSES), jnp.float32),
        grid=(1,),
        in_specs=[
            pl.BlockSpec((n * IMG_HW, LANES), lambda i: (0, 0)),
            pl.BlockSpec(prepped["wb"].shape, lambda i: (0, 0, 0, 0)),
            pl.BlockSpec(prepped["bl"].shape, lambda i: (0, 0, 0)),
            pl.BlockSpec(prepped["wc"].shape, lambda i: (0, 0)),
            pl.BlockSpec(prepped["bc"].shape, lambda i: (0, 0)),
        ],
        out_specs=pl.BlockSpec((n, NUM_CLASSES), lambda i: (0, 0)),
        compiler_params=pltpu.CompilerParams(
            dimension_semantics=("arbitrary",),
        ),
    )(x, prepped["wb"], prepped["bl"], prepped["wc"], prepped["bc"])


# -------------------------------- reference ---------------------------------

def adaptive_avg_pool(x, out_h, out_w):
    # Exact nn.AdaptiveAvgPool2d bin semantics (NHWC).
    N, H, W, C = x.shape
    rows = []
    for i in range(out_h):
        h0, h1 = (i * H) // out_h, -(-((i + 1) * H) // out_h)
        cols = []
        for j in range(out_w):
            w0, w1 = (j * W) // out_w, -(-((j + 1) * W) // out_w)
            cols.append(jnp.mean(x[:, h0:h1, w0:w1, :], axis=(1, 2)))
        rows.append(jnp.stack(cols, axis=1))
    return jnp.stack(rows, axis=1)


def reference_forward(params, x_nchw):
    """Plain-JAX reference using the SAME mixed precision as the kernel
    (bf16 conv operands, f32 accumulation / bias / ReLU / pooling)."""
    x = jnp.transpose(x_nchw, (0, 2, 3, 1)).astype(jnp.float32)
    li = 0
    for v in VGG_CFG:
        if v == "M":
            x = lax.reduce_window(x, -jnp.inf, lax.max,
                                  (1, 2, 2, 1), (1, 2, 2, 1), "VALID")
        else:
            w, b = params["features"][li]
            y = lax.conv_general_dilated(
                x.astype(jnp.bfloat16), w.astype(jnp.bfloat16), (1, 1), "SAME",
                dimension_numbers=("NHWC", "HWIO", "NHWC"),
                preferred_element_type=jnp.float32)
            x = jnp.maximum(y + b, 0.0)
            li += 1
    x = adaptive_avg_pool(x, POOL_OUT, POOL_OUT)               # (N, 7, 7, C)
    n = x.shape[0]
    feat = jnp.transpose(x, (0, 3, 1, 2)).reshape(n, -1)       # torch.flatten(x, 1) order
    w, b = params["classifier"]
    return feat @ w + b


if __name__ == "__main__":
    key = jax.random.PRNGKey(0)
    key, kx = jax.random.split(key)
    x = jax.random.normal(kx, (2, 3, IMG_HW, IMG_HW), jnp.float32)   # NCHW, like PyTorch
    params = init_params(key)
    prepped = prepare_params(params)        # host-side weight folding (init-time cost)

    fwd = jax.jit(custom_vgg_forward)
    out = jax.block_until_ready(fwd(prepped, x))
    assert out.shape == (2, NUM_CLASSES), out.shape

    ref = jax.block_until_ready(reference_forward(params, x))
    err = float(jnp.max(jnp.abs(out - ref)))
    assert jnp.allclose(out, ref, rtol=2e-3, atol=2e-3), f"max abs diff {err}"

    print("KERNEL_OK")
</pallas_src>

<mosaic_0001>
module attributes {stable_mosaic.version = 11 : i64} {
  func.func @_fused_vgg_kernel(%arg0: i32, %arg1: memref<64x128xbf16, #tpu.memory_space<vmem>>, %arg2: memref<16x3x128x128xbf16, #tpu.memory_space<vmem>>, %arg3: memref<16x1x128xf32, #tpu.memory_space<vmem>>, %arg4: memref<128x10xf32, #tpu.memory_space<vmem>>, %arg5: memref<1x10xf32, #tpu.memory_space<vmem>>, %arg6: memref<2x10xf32, #tpu.memory_space<vmem>>) attributes {dimension_semantics = [#tpu.dimension_semantics<arbitrary>], iteration_bounds = array<i64: 1>, scalar_prefetch = 0 : i64, scratch_operands = 0 : i64, tpu.core_type = #tpu.core_type<tc>, window_params = [{pipeline_mode = #tpu.pipeline_mode<synchronous>, transform_indices = @transform_0, window_bounds = array<i64: 64, 128>}, {pipeline_mode = #tpu.pipeline_mode<synchronous>, transform_indices = @transform_1, window_bounds = array<i64: 16, 3, 128, 128>}, {pipeline_mode = #tpu.pipeline_mode<synchronous>, transform_indices = @transform_2, window_bounds = array<i64: 16, 1, 128>}, {pipeline_mode = #tpu.pipeline_mode<synchronous>, transform_indices = @transform_3, window_bounds = array<i64: 128, 10>}, {pipeline_mode = #tpu.pipeline_mode<synchronous>, transform_indices = @transform_4, window_bounds = array<i64: 1, 10>}, {pipeline_mode = #tpu.pipeline_mode<synchronous>, transform_indices = @transform_5, window_bounds = array<i64: 2, 10>}]} {
    %0 = tpu.iota {dimensions = array<i32: 0>} : vector<64x1xi32>
    %c32_i32 = arith.constant 32 : i32
    %c0_i32 = arith.constant 0 : i32
    %1 = arith.cmpi eq, %c32_i32, %c0_i32 : i32
    %c1_i32 = arith.constant 1 : i32
    %2 = arith.select %1, %c1_i32, %c32_i32 : i32
    %3 = vector.broadcast %2 : i32 to vector<64x1xi32>
    %4 = arith.remsi %0, %3 : vector<64x1xi32>
    %c0_i32_0 = arith.constant 0 : i32
    %5 = vector.broadcast %c0_i32_0 : i32 to vector<64x1xi32>
    %6 = arith.cmpi ne, %4, %5 : vector<64x1xi32>
    %c0_i32_1 = arith.constant 0 : i32
    %7 = vector.broadcast %c0_i32_1 : i32 to vector<64x1xi32>
    %8 = arith.cmpi slt, %4, %7 : vector<64x1xi32>
    %c0_i32_2 = arith.constant 0 : i32
    %9 = arith.cmpi slt, %2, %c0_i32_2 : i32
    %10 = vector.broadcast %9 : i1 to vector<64x1xi1>
    %11 = vector.broadcast %10 : vector<64x1xi1> to vector<64x1xi1>
    %12 = arith.xori %8, %11 : vector<64x1xi1>
    %13 = arith.andi %12, %6 : vector<64x1xi1>
    %14 = vector.broadcast %2 : i32 to vector<64x1xi32>
    %15 = arith.addi %4, %14 : vector<64x1xi32>
    %16 = arith.select %13, %15, %4 : vector<64x1xi1>, vector<64x1xi32>
    %c0 = arith.constant 0 : index
    %c0_3 = arith.constant 0 : index
    %17 = vector.load %arg1[%c0, %c0_3] : memref<64x128xbf16, #tpu.memory_space<vmem>>, vector<64x128xbf16>
    %18 = arith.extf %17 : vector<64x128xbf16> to vector<64x128xf32>
    %cst = arith.constant 0.000000e+00 : f32
    %19 = vector.broadcast %cst : f32 to vector<64x128xf32>
    %cst_4 = arith.constant 0.000000e+00 : f32
    %20 = vector.broadcast %cst_4 : f32 to vector<1x128xf32>
    %21 = vector.extract_strided_slice %18 {offsets = [0, 0], sizes = [63, 128], strides = [1, 1]} : vector<64x128xf32> to vector<63x128xf32>
    %22 = tpu.concatenate %20, %21 in 0 : vector<1x128xf32>, vector<63x128xf32> -> vector<64x128xf32>
    %c-1_i32 = arith.constant -1 : i32
    %23 = vector.broadcast %c-1_i32 : i32 to vector<64x1xi32>
    %24 = arith.addi %16, %23 : vector<64x1xi32>
    %c0_i32_5 = arith.constant 0 : i32
    %25 = vector.broadcast %c0_i32_5 : i32 to vector<64x1xi32>
    %26 = arith.cmpi sge, %24, %25 : vector<64x1xi32>
    %c-1_i32_6 = arith.constant -1 : i32
    %27 = vector.broadcast %c-1_i32_6 : i32 to vector<64x1xi32>
    %28 = arith.addi %16, %27 : vector<64x1xi32>
    %c32_i32_7 = arith.constant 32 : i32
    %29 = vector.broadcast %c32_i32_7 : i32 to vector<64x1xi32>
    %30 = arith.cmpi slt, %28, %29 : vector<64x1xi32>
    %31 = arith.andi %26, %30 : vector<64x1xi1>
    %cst_8 = arith.constant 0.000000e+00 : f32
    %32 = vector.broadcast %cst_8 : f32 to vector<64x128xf32>
    %33 = vector.shape_cast %31 : vector<64x1xi1> to vector<64x1xi1>
    %34 = vector.broadcast %33 : vector<64x1xi1> to vector<64x128xi1>
    %35 = arith.select %34, %22, %32 : vector<64x128xi1>, vector<64x128xf32>
    %36 = arith.truncf %35 : vector<64x128xf32> to vector<64x128xbf16>
    %c0_9 = arith.constant 0 : index
    %c0_10 = arith.constant 0 : index
    %c0_11 = arith.constant 0 : index
    %c0_12 = arith.constant 0 : index
    %37 = vector.load %arg2[%c0_9, %c0_10, %c0_11, %c0_12] : memref<16x3x128x128xbf16, #tpu.memory_space<vmem>>, vector<1x1x128x128xbf16>
    %38 = vector.shape_cast %37 : vector<1x1x128x128xbf16> to vector<128x128xbf16>
    %cst_13 = arith.constant dense<0.000000e+00> : vector<64x128xf32>
    %39 = tpu.matmul %36, %38, %cst_13 {dimension_numbers = #tpu.dot_dimension_numbers<[1], [0], [0], [1], [0, 0, 1, 1], [], []>} : vector<64x128xbf16>, vector<128x128xbf16>, vector<64x128xf32> -> vector<64x128xf32>
    %40 = arith.addf %19, %39 : vector<64x128xf32>
    %41 = arith.truncf %18 : vector<64x128xf32> to vector<64x128xbf16>
    %c0_14 = arith.constant 0 : index
    %c1 = arith.constant 1 : index
    %c0_15 = arith.constant 0 : index
    %c0_16 = arith.constant 0 : index
    %42 = vector.load %arg2[%c0_14, %c1, %c0_15, %c0_16] : memref<16x3x128x128xbf16, #tpu.memory_space<vmem>>, vector<1x1x128x128xbf16>
    %43 = vector.shape_cast %42 : vector<1x1x128x128xbf16> to vector<128x128xbf16>
    %cst_17 = arith.constant dense<0.000000e+00> : vector<64x128xf32>
    %44 = tpu.matmul %41, %43, %cst_17 {dimension_numbers = #tpu.dot_dimension_numbers<[1], [0], [0], [1], [0, 0, 1, 1], [], []>} : vector<64x128xbf16>, vector<128x128xbf16>, vector<64x128xf32> -> vector<64x128xf32>
    %45 = arith.addf %40, %44 : vector<64x128xf32>
    %cst_18 = arith.constant 0.000000e+00 : f32
    %46 = vector.broadcast %cst_18 : f32 to vector<1x128xf32>
    %47 = vector.extract_strided_slice %18 {offsets = [1, 0], sizes = [63, 128], strides = [1, 1]} : vector<64x128xf32> to vector<63x128xf32>
    %48 = tpu.concatenate %47, %46 in 0 : vector<63x128xf32>, vector<1x128xf32> -> vector<64x128xf32>
    %c1_i32_19 = arith.constant 1 : i32
    %49 = vector.broadcast %c1_i32_19 : i32 to vector<64x1xi32>
    %50 = arith.addi %16, %49 : vector<64x1xi32>
    %c0_i32_20 = arith.constant 0 : i32
    %51 = vector.broadcast %c0_i32_20 : i32 to vector<64x1xi32>
    %52 = arith.cmpi sge, %50, %51 : vector<64x1xi32>
    %c1_i32_21 = arith.constant 1 : i32
    %53 = vector.broadcast %c1_i32_21 : i32 to vector<64x1xi32>
    %54 = arith.addi %16, %53 : vector<64x1xi32>
    %c32_i32_22 = arith.constant 32 : i32
    %55 = vector.broadcast %c32_i32_22 : i32 to vector<64x1xi32>
    %56 = arith.cmpi slt, %54, %55 : vector<64x1xi32>
    %57 = arith.andi %52, %56 : vector<64x1xi1>
    %cst_23 = arith.constant 0.000000e+00 : f32
    %58 = vector.broadcast %cst_23 : f32 to vector<64x128xf32>
    %59 = vector.shape_cast %57 : vector<64x1xi1> to vector<64x1xi1>
    %60 = vector.broadcast %59 : vector<64x1xi1> to vector<64x128xi1>
    %61 = arith.select %60, %48, %58 : vector<64x128xi1>, vector<64x128xf32>
    %62 = arith.truncf %61 : vector<64x128xf32> to vector<64x128xbf16>
    %c0_24 = arith.constant 0 : index
    %c2 = arith.constant 2 : index
    %c0_25 = arith.constant 0 : index
    %c0_26 = arith.constant 0 : index
    %63 = vector.load %arg2[%c0_24, %c2, %c0_25, %c0_26] : memref<16x3x128x128xbf16, #tpu.memory_space<vmem>>, vector<1x1x128x128xbf16>
    %64 = vector.shape_cast %63 : vector<1x1x128x128xbf16> to vector<128x128xbf16>
    %cst_27 = arith.constant dense<0.000000e+00> : vector<64x128xf32>
    %65 = tpu.matmul %62, %64, %cst_27 {dimension_numbers = #tpu.dot_dimension_numbers<[1], [0], [0], [1], [0, 0, 1, 1], [], []>} : vector<64x128xbf16>, vector<128x128xbf16>, vector<64x128xf32> -> vector<64x128xf32>
    %66 = arith.addf %45, %65 : vector<64x128xf32>
    %c0_28 = arith.constant 0 : index
    %c0_29 = arith.constant 0 : index
    %c0_30 = arith.constant 0 : index
    %67 = vector.load %arg3[%c0_28, %c0_29, %c0_30] : memref<16x1x128xf32, #tpu.memory_space<vmem>>, vector<1x1x128xf32>
    %68 = vector.shape_cast %67 : vector<1x1x128xf32> to vector<1x128xf32>
    %69 = vector.broadcast %68 : vector<1x128xf32> to vector<64x128xf32>
    %70 = arith.addf %66, %69 : vector<64x128xf32>
    %cst_31 = arith.constant 0.000000e+00 : f32
    %71 = vector.broadcast %cst_31 : f32 to vector<64x128xf32>
    %72 = arith.maximumf %70, %71 : vector<64x128xf32>
    %cst_32 = arith.constant 0.000000e+00 : f32
    %73 = vector.broadcast %cst_32 : f32 to vector<64x128xf32>
    %cst_33 = arith.constant 0.000000e+00 : f32
    %74 = vector.broadcast %cst_33 : f32 to vector<1x128xf32>
    %75 = vector.extract_strided_slice %72 {offsets = [0, 0], sizes = [63, 128], strides = [1, 1]} : vector<64x128xf32> to vector<63x128xf32>
    %76 = tpu.concatenate %74, %75 in 0 : vector<1x128xf32>, vector<63x128xf32> -> vector<64x128xf32>
    %c-1_i32_34 = arith.constant -1 : i32
    %77 = vector.broadcast %c-1_i32_34 : i32 to vector<64x1xi32>
    %78 = arith.addi %16, %77 : vector<64x1xi32>
    %c0_i32_35 = arith.constant 0 : i32
    %79 = vector.broadcast %c0_i32_35 : i32 to vector<64x1xi32>
    %80 = arith.cmpi sge, %78, %79 : vector<64x1xi32>
    %c-1_i32_36 = arith.constant -1 : i32
    %81 = vector.broadcast %c-1_i32_36 : i32 to vector<64x1xi32>
    %82 = arith.addi %16, %81 : vector<64x1xi32>
    %c32_i32_37 = arith.constant 32 : i32
    %83 = vector.broadcast %c32_i32_37 : i32 to vector<64x1xi32>
    %84 = arith.cmpi slt, %82, %83 : vector<64x1xi32>
    %85 = arith.andi %80, %84 : vector<64x1xi1>
    %cst_38 = arith.constant 0.000000e+00 : f32
    %86 = vector.broadcast %cst_38 : f32 to vector<64x128xf32>
    %87 = vector.shape_cast %85 : vector<64x1xi1> to vector<64x1xi1>
    %88 = vector.broadcast %87 : vector<64x1xi1> to vector<64x128xi1>
    %89 = arith.select %88, %76, %86 : vector<64x128xi1>, vector<64x128xf32>
    %90 = arith.truncf %89 : vector<64x128xf32> to vector<64x128xbf16>
    %c1_39 = arith.constant 1 : index
    %c0_40 = arith.constant 0 : index
    %c0_41 = arith.constant 0 : index
    %c0_42 = arith.constant 0 : index
    %91 = vector.load %arg2[%c1_39, %c0_40, %c0_41, %c0_42] : memref<16x3x128x128xbf16, #tpu.memory_space<vmem>>, vector<1x1x128x128xbf16>
    %92 = vector.shape_cast %91 : vector<1x1x128x128xbf16> to vector<128x128xbf16>
    %cst_43 = arith.constant dense<0.000000e+00> : vector<64x128xf32>
    %93 = tpu.matmul %90, %92, %cst_43 {dimension_numbers = #tpu.dot_dimension_numbers<[1], [0], [0], [1], [0, 0, 1, 1], [], []>} : vector<64x128xbf16>, vector<128x128xbf16>, vector<64x128xf32> -> vector<64x128xf32>
    %94 = arith.addf %73, %93 : vector<64x128xf32>
    %95 = arith.truncf %72 : vector<64x128xf32> to vector<64x128xbf16>
    %c1_44 = arith.constant 1 : index
    %c1_45 = arith.constant 1 : index
    %c0_46 = arith.constant 0 : index
    %c0_47 = arith.constant 0 : index
    %96 = vector.load %arg2[%c1_44, %c1_45, %c0_46, %c0_47] : memref<16x3x128x128xbf16, #tpu.memory_space<vmem>>, vector<1x1x128x128xbf16>
    %97 = vector.shape_cast %96 : vector<1x1x128x128xbf16> to vector<128x128xbf16>
    %cst_48 = arith.constant dense<0.000000e+00> : vector<64x128xf32>
    %98 = tpu.matmul %95, %97, %cst_48 {dimension_numbers = #tpu.dot_dimension_numbers<[1], [0], [0], [1], [0, 0, 1, 1], [], []>} : vector<64x128xbf16>, vector<128x128xbf16>, vector<64x128xf32> -> vector<64x128xf32>
    %99 = arith.addf %94, %98 : vector<64x128xf32>
    %cst_49 = arith.constant 0.000000e+00 : f32
    %100 = vector.broadcast %cst_49 : f32 to vector<1x128xf32>
    %101 = vector.extract_strided_slice %72 {offsets = [1, 0], sizes = [63, 128], strides = [1, 1]} : vector<64x128xf32> to vector<63x128xf32>
    %102 = tpu.concatenate %101, %100 in 0 : vector<63x128xf32>, vector<1x128xf32> -> vector<64x128xf32>
    %c1_i32_50 = arith.constant 1 : i32
    %103 = vector.broadcast %c1_i32_50 : i32 to vector<64x1xi32>
    %104 = arith.addi %16, %103 : vector<64x1xi32>
    %c0_i32_51 = arith.constant 0 : i32
    %105 = vector.broadcast %c0_i32_51 : i32 to vector<64x1xi32>
    %106 = arith.cmpi sge, %104, %105 : vector<64x1xi32>
    %c1_i32_52 = arith.constant 1 : i32
    %107 = vector.broadcast %c1_i32_52 : i32 to vector<64x1xi32>
    %108 = arith.addi %16, %107 : vector<64x1xi32>
    %c32_i32_53 = arith.constant 32 : i32
    %109 = vector.broadcast %c32_i32_53 : i32 to vector<64x1xi32>
    %110 = arith.cmpi slt, %108, %109 : vector<64x1xi32>
    %111 = arith.andi %106, %110 : vector<64x1xi1>
    %cst_54 = arith.constant 0.000000e+00 : f32
    %112 = vector.broadcast %cst_54 : f32 to vector<64x128xf32>
    %113 = vector.shape_cast %111 : vector<64x1xi1> to vector<64x1xi1>
    %114 = vector.broadcast %113 : vector<64x1xi1> to vector<64x128xi1>
    %115 = arith.select %114, %102, %112 : vector<64x128xi1>, vector<64x128xf32>
    %116 = arith.truncf %115 : vector<64x128xf32> to vector<64x128xbf16>
    %c1_55 = arith.constant 1 : index
    %c2_56 = arith.constant 2 : index
    %c0_57 = arith.constant 0 : index
    %c0_58 = arith.constant 0 : index
    %117 = vector.load %arg2[%c1_55, %c2_56, %c0_57, %c0_58] : memref<16x3x128x128xbf16, #tpu.memory_space<vmem>>, vector<1x1x128x128xbf16>
    %118 = vector.shape_cast %117 : vector<1x1x128x128xbf16> to vector<128x128xbf16>
    %cst_59 = arith.constant dense<0.000000e+00> : vector<64x128xf32>
    %119 = tpu.matmul %116, %118, %cst_59 {dimension_numbers = #tpu.dot_dimension_numbers<[1], [0], [0], [1], [0, 0, 1, 1], [], []>} : vector<64x128xbf16>, vector<128x128xbf16>, vector<64x128xf32> -> vector<64x128xf32>
    %120 = arith.addf %99, %119 : vector<64x128xf32>
    %c1_60 = arith.constant 1 : index
    %c0_61 = arith.constant 0 : index
    %c0_62 = arith.constant 0 : index
    %121 = vector.load %arg3[%c1_60, %c0_61, %c0_62] : memref<16x1x128xf32, #tpu.memory_space<vmem>>, vector<1x1x128xf32>
    %122 = vector.shape_cast %121 : vector<1x1x128xf32> to vector<1x128xf32>
    %123 = vector.broadcast %122 : vector<1x128xf32> to vector<64x128xf32>
    %124 = arith.addf %120, %123 : vector<64x128xf32>
    %cst_63 = arith.constant 0.000000e+00 : f32
    %125 = vector.broadcast %cst_63 : f32 to vector<64x128xf32>
    %126 = arith.maximumf %124, %125 : vector<64x128xf32>
    %cst_64 = arith.constant 0.000000e+00 : f32
    %127 = vector.broadcast %cst_64 : f32 to vector<1x128xf32>
    %128 = vector.extract_strided_slice %126 {offsets = [1, 0], sizes = [63, 128], strides = [1, 1]} : vector<64x128xf32> to vector<63x128xf32>
    %129 = tpu.concatenate %128, %127 in 0 : vector<63x128xf32>, vector<1x128xf32> -> vector<64x128xf32>
    %c1_i32_65 = arith.constant 1 : i32
    %130 = vector.broadcast %c1_i32_65 : i32 to vector<64x1xi32>
    %131 = arith.addi %16, %130 : vector<64x1xi32>
    %c0_i32_66 = arith.constant 0 : i32
    %132 = vector.broadcast %c0_i32_66 : i32 to vector<64x1xi32>
    %133 = arith.cmpi sge, %131, %132 : vector<64x1xi32>
    %c1_i32_67 = arith.constant 1 : i32
    %134 = vector.broadcast %c1_i32_67 : i32 to vector<64x1xi32>
    %135 = arith.addi %16, %134 : vector<64x1xi32>
    %c32_i32_68 = arith.constant 32 : i32
    %136 = vector.broadcast %c32_i32_68 : i32 to vector<64x1xi32>
    %137 = arith.cmpi slt, %135, %136 : vector<64x1xi32>
    %138 = arith.andi %133, %137 : vector<64x1xi1>
    %cst_69 = arith.constant 0.000000e+00 : f32
    %139 = vector.broadcast %cst_69 : f32 to vector<64x128xf32>
    %140 = vector.shape_cast %138 : vector<64x1xi1> to vector<64x1xi1>
    %141 = vector.broadcast %140 : vector<64x1xi1> to vector<64x128xi1>
    %142 = arith.select %141, %129, %139 : vector<64x128xi1>, vector<64x128xf32>
    %143 = arith.maximumf %126, %142 : vector<64x128xf32>
    %c124_i32 = arith.constant 124 : i32
    %144 = tpu.dynamic_rotate %143 by %c124_i32 dim 1 : vector<64x128xf32>, i32 -> vector<64x128xf32>
    %145 = arith.maximumf %143, %144 : vector<64x128xf32>
    %cst_70 = arith.constant 0.000000e+00 : f32
    %146 = vector.broadcast %cst_70 : f32 to vector<64x128xf32>
    %cst_71 = arith.constant 0.000000e+00 : f32
    %147 = vector.broadcast %cst_71 : f32 to vector<2x128xf32>
    %148 = vector.extract_strided_slice %145 {offsets = [0, 0], sizes = [62, 128], strides = [1, 1]} : vector<64x128xf32> to vector<62x128xf32>
    %149 = tpu.concatenate %147, %148 in 0 : vector<2x128xf32>, vector<62x128xf32> -> vector<64x128xf32>
    %c-2_i32 = arith.constant -2 : i32
    %150 = vector.broadcast %c-2_i32 : i32 to vector<64x1xi32>
    %151 = arith.addi %16, %150 : vector<64x1xi32>
    %c0_i32_72 = arith.constant 0 : i32
    %152 = vector.broadcast %c0_i32_72 : i32 to vector<64x1xi32>
    %153 = arith.cmpi sge, %151, %152 : vector<64x1xi32>
    %c-2_i32_73 = arith.constant -2 : i32
    %154 = vector.broadcast %c-2_i32_73 : i32 to vector<64x1xi32>
    %155 = arith.addi %16, %154 : vector<64x1xi32>
    %c32_i32_74 = arith.constant 32 : i32
    %156 = vector.broadcast %c32_i32_74 : i32 to vector<64x1xi32>
    %157 = arith.cmpi slt, %155, %156 : vector<64x1xi32>
    %158 = arith.andi %153, %157 : vector<64x1xi1>
    %cst_75 = arith.constant 0.000000e+00 : f32
    %159 = vector.broadcast %cst_75 : f32 to vector<64x128xf32>
    %160 = vector.shape_cast %158 : vector<64x1xi1> to vector<64x1xi1>
    %161 = vector.broadcast %160 : vector<64x1xi1> to vector<64x128xi1>
    %162 = arith.select %161, %149, %159 : vector<64x128xi1>, vector<64x128xf32>
    %163 = arith.truncf %162 : vector<64x128xf32> to vector<64x128xbf16>
    %c2_76 = arith.constant 2 : index
    %c0_77 = arith.constant 0 : index
    %c0_78 = arith.constant 0 : index
    %c0_79 = arith.constant 0 : index
    %164 = vector.load %arg2[%c2_76, %c0_77, %c0_78, %c0_79] : memref<16x3x128x128xbf16, #tpu.memory_space<vmem>>, vector<1x1x128x128xbf16>
    %165 = vector.shape_cast %164 : vector<1x1x128x128xbf16> to vector<128x128xbf16>
    %cst_80 = arith.constant dense<0.000000e+00> : vector<64x128xf32>
    %166 = tpu.matmul %163, %165, %cst_80 {dimension_numbers = #tpu.dot_dimension_numbers<[1], [0], [0], [1], [0, 0, 1, 1], [], []>} : vector<64x128xbf16>, vector<128x128xbf16>, vector<64x128xf32> -> vector<64x128xf32>
    %167 = arith.addf %146, %166 : vector<64x128xf32>
    %168 = arith.truncf %145 : vector<64x128xf32> to vector<64x128xbf16>
    %c2_81 = arith.constant 2 : index
    %c1_82 = arith.constant 1 : index
    %c0_83 = arith.constant 0 : index
    %c0_84 = arith.constant 0 : index
    %169 = vector.load %arg2[%c2_81, %c1_82, %c0_83, %c0_84] : memref<16x3x128x128xbf16, #tpu.memory_space<vmem>>, vector<1x1x128x128xbf16>
    %170 = vector.shape_cast %169 : vector<1x1x128x128xbf16> to vector<128x128xbf16>
    %cst_85 = arith.constant dense<0.000000e+00> : vector<64x128xf32>
    %171 = tpu.matmul %168, %170, %cst_85 {dimension_numbers = #tpu.dot_dimension_numbers<[1], [0], [0], [1], [0, 0, 1, 1], [], []>} : vector<64x128xbf16>, vector<128x128xbf16>, vector<64x128xf32> -> vector<64x128xf32>
    %172 = arith.addf %167, %171 : vector<64x128xf32>
    %cst_86 = arith.constant 0.000000e+00 : f32
    %173 = vector.broadcast %cst_86 : f32 to vector<2x128xf32>
    %174 = vector.extract_strided_slice %145 {offsets = [2, 0], sizes = [62, 128], strides = [1, 1]} : vector<64x128xf32> to vector<62x128xf32>
    %175 = tpu.concatenate %174, %173 in 0 : vector<62x128xf32>, vector<2x128xf32> -> vector<64x128xf32>
    %c2_i32 = arith.constant 2 : i32
    %176 = vector.broadcast %c2_i32 : i32 to vector<64x1xi32>
    %177 = arith.addi %16, %176 : vector<64x1xi32>
    %c0_i32_87 = arith.constant 0 : i32
    %178 = vector.broadcast %c0_i32_87 : i32 to vector<64x1xi32>
    %179 = arith.cmpi sge, %177, %178 : vector<64x1xi32>
    %c2_i32_88 = arith.constant 2 : i32
    %180 = vector.broadcast %c2_i32_88 : i32 to vector<64x1xi32>
    %181 = arith.addi %16, %180 : vector<64x1xi32>
    %c32_i32_89 = arith.constant 32 : i32
    %182 = vector.broadcast %c32_i32_89 : i32 to vector<64x1xi32>
    %183 = arith.cmpi slt, %181, %182 : vector<64x1xi32>
    %184 = arith.andi %179, %183 : vector<64x1xi1>
    %cst_90 = arith.constant 0.000000e+00 : f32
    %185 = vector.broadcast %cst_90 : f32 to vector<64x128xf32>
    %186 = vector.shape_cast %184 : vector<64x1xi1> to vector<64x1xi1>
    %187 = vector.broadcast %186 : vector<64x1xi1> to vector<64x128xi1>
    %188 = arith.select %187, %175, %185 : vector<64x128xi1>, vector<64x128xf32>
    %189 = arith.truncf %188 : vector<64x128xf32> to vector<64x128xbf16>
    %c2_91 = arith.constant 2 : index
    %c2_92 = arith.constant 2 : index
    %c0_93 = arith.constant 0 : index
    %c0_94 = arith.constant 0 : index
    %190 = vector.load %arg2[%c2_91, %c2_92, %c0_93, %c0_94] : memref<16x3x128x128xbf16, #tpu.memory_space<vmem>>, vector<1x1x128x128xbf16>
    %191 = vector.shape_cast %190 : vector<1x1x128x128xbf16> to vector<128x128xbf16>
    %cst_95 = arith.constant dense<0.000000e+00> : vector<64x128xf32>
    %192 = tpu.matmul %189, %191, %cst_95 {dimension_numbers = #tpu.dot_dimension_numbers<[1], [0], [0], [1], [0, 0, 1, 1], [], []>} : vector<64x128xbf16>, vector<128x128xbf16>, vector<64x128xf32> -> vector<64x128xf32>
    %193 = arith.addf %172, %192 : vector<64x128xf32>
    %c2_96 = arith.constant 2 : index
    %c0_97 = arith.constant 0 : index
    %c0_98 = arith.constant 0 : index
    %194 = vector.load %arg3[%c2_96, %c0_97, %c0_98] : memref<16x1x128xf32, #tpu.memory_space<vmem>>, vector<1x1x128xf32>
    %195 = vector.shape_cast %194 : vector<1x1x128xf32> to vector<1x128xf32>
    %196 = vector.broadcast %195 : vector<1x128xf32> to vector<64x128xf32>
    %197 = arith.addf %193, %196 : vector<64x128xf32>
    %cst_99 = arith.constant 0.000000e+00 : f32
    %198 = vector.broadcast %cst_99 : f32 to vector<64x128xf32>
    %199 = arith.maximumf %197, %198 : vector<64x128xf32>
    %cst_100 = arith.constant 0.000000e+00 : f32
    %200 = vector.broadcast %cst_100 : f32 to vector<64x128xf32>
    %cst_101 = arith.constant 0.000000e+00 : f32
    %201 = vector.broadcast %cst_101 : f32 to vector<2x128xf32>
    %202 = vector.extract_strided_slice %199 {offsets = [0, 0], sizes = [62, 128], strides = [1, 1]} : vector<64x128xf32> to vector<62x128xf32>
    %203 = tpu.concatenate %201, %202 in 0 : vector<2x128xf32>, vector<62x128xf32> -> vector<64x128xf32>
    %c-2_i32_102 = arith.constant -2 : i32
    %204 = vector.broadcast %c-2_i32_102 : i32 to vector<64x1xi32>
    %205 = arith.addi %16, %204 : vector<64x1xi32>
    %c0_i32_103 = arith.constant 0 : i32
    %206 = vector.broadcast %c0_i32_103 : i32 to vector<64x1xi32>
    %207 = arith.cmpi sge, %205, %206 : vector<64x1xi32>
    %c-2_i32_104 = arith.constant -2 : i32
    %208 = vector.broadcast %c-2_i32_104 : i32 to vector<64x1xi32>
    %209 = arith.addi %16, %208 : vector<64x1xi32>
    %c32_i32_105 = arith.constant 32 : i32
    %210 = vector.broadcast %c32_i32_105 : i32 to vector<64x1xi32>
    %211 = arith.cmpi slt, %209, %210 : vector<64x1xi32>
    %212 = arith.andi %207, %211 : vector<64x1xi1>
    %cst_106 = arith.constant 0.000000e+00 : f32
    %213 = vector.broadcast %cst_106 : f32 to vector<64x128xf32>
    %214 = vector.shape_cast %212 : vector<64x1xi1> to vector<64x1xi1>
    %215 = vector.broadcast %214 : vector<64x1xi1> to vector<64x128xi1>
    %216 = arith.select %215, %203, %213 : vector<64x128xi1>, vector<64x128xf32>
    %217 = arith.truncf %216 : vector<64x128xf32> to vector<64x128xbf16>
    %c3 = arith.constant 3 : index
    %c0_107 = arith.constant 0 : index
    %c0_108 = arith.constant 0 : index
    %c0_109 = arith.constant 0 : index
    %218 = vector.load %arg2[%c3, %c0_107, %c0_108, %c0_109] : memref<16x3x128x128xbf16, #tpu.memory_space<vmem>>, vector<1x1x128x128xbf16>
    %219 = vector.shape_cast %218 : vector<1x1x128x128xbf16> to vector<128x128xbf16>
    %cst_110 = arith.constant dense<0.000000e+00> : vector<64x128xf32>
    %220 = tpu.matmul %217, %219, %cst_110 {dimension_numbers = #tpu.dot_dimension_numbers<[1], [0], [0], [1], [0, 0, 1, 1], [], []>} : vector<64x128xbf16>, vector<128x128xbf16>, vector<64x128xf32> -> vector<64x128xf32>
    %221 = arith.addf %200, %220 : vector<64x128xf32>
    %222 = arith.truncf %199 : vector<64x128xf32> to vector<64x128xbf16>
    %c3_111 = arith.constant 3 : index
    %c1_112 = arith.constant 1 : index
    %c0_113 = arith.constant 0 : index
    %c0_114 = arith.constant 0 : index
    %223 = vector.load %arg2[%c3_111, %c1_112, %c0_113, %c0_114] : memref<16x3x128x128xbf16, #tpu.memory_space<vmem>>, vector<1x1x128x128xbf16>
    %224 = vector.shape_cast %223 : vector<1x1x128x128xbf16> to vector<128x128xbf16>
    %cst_115 = arith.constant dense<0.000000e+00> : vector<64x128xf32>
    %225 = tpu.matmul %222, %224, %cst_115 {dimension_numbers = #tpu.dot_dimension_numbers<[1], [0], [0], [1], [0, 0, 1, 1], [], []>} : vector<64x128xbf16>, vector<128x128xbf16>, vector<64x128xf32> -> vector<64x128xf32>
    %226 = arith.addf %221, %225 : vector<64x128xf32>
    %cst_116 = arith.constant 0.000000e+00 : f32
    %227 = vector.broadcast %cst_116 : f32 to vector<2x128xf32>
    %228 = vector.extract_strided_slice %199 {offsets = [2, 0], sizes = [62, 128], strides = [1, 1]} : vector<64x128xf32> to vector<62x128xf32>
    %229 = tpu.concatenate %228, %227 in 0 : vector<62x128xf32>, vector<2x128xf32> -> vector<64x128xf32>
    %c2_i32_117 = arith.constant 2 : i32
    %230 = vector.broadcast %c2_i32_117 : i32 to vector<64x1xi32>
    %231 = arith.addi %16, %230 : vector<64x1xi32>
    %c0_i32_118 = arith.constant 0 : i32
    %232 = vector.broadcast %c0_i32_118 : i32 to vector<64x1xi32>
    %233 = arith.cmpi sge, %231, %232 : vector<64x1xi32>
    %c2_i32_119 = arith.constant 2 : i32
    %234 = vector.broadcast %c2_i32_119 : i32 to vector<64x1xi32>
    %235 = arith.addi %16, %234 : vector<64x1xi32>
    %c32_i32_120 = arith.constant 32 : i32
    %236 = vector.broadcast %c32_i32_120 : i32 to vector<64x1xi32>
    %237 = arith.cmpi slt, %235, %236 : vector<64x1xi32>
    %238 = arith.andi %233, %237 : vector<64x1xi1>
    %cst_121 = arith.constant 0.000000e+00 : f32
    %239 = vector.broadcast %cst_121 : f32 to vector<64x128xf32>
    %240 = vector.shape_cast %238 : vector<64x1xi1> to vector<64x1xi1>
    %241 = vector.broadcast %240 : vector<64x1xi1> to vector<64x128xi1>
    %242 = arith.select %241, %229, %239 : vector<64x128xi1>, vector<64x128xf32>
    %243 = arith.truncf %242 : vector<64x128xf32> to vector<64x128xbf16>
    %c3_122 = arith.constant 3 : index
    %c2_123 = arith.constant 2 : index
    %c0_124 = arith.constant 0 : index
    %c0_125 = arith.constant 0 : index
    %244 = vector.load %arg2[%c3_122, %c2_123, %c0_124, %c0_125] : memref<16x3x128x128xbf16, #tpu.memory_space<vmem>>, vector<1x1x128x128xbf16>
    %245 = vector.shape_cast %244 : vector<1x1x128x128xbf16> to vector<128x128xbf16>
    %cst_126 = arith.constant dense<0.000000e+00> : vector<64x128xf32>
    %246 = tpu.matmul %243, %245, %cst_126 {dimension_numbers = #tpu.dot_dimension_numbers<[1], [0], [0], [1], [0, 0, 1, 1], [], []>} : vector<64x128xbf16>, vector<128x128xbf16>, vector<64x128xf32> -> vector<64x128xf32>
    %247 = arith.addf %226, %246 : vector<64x128xf32>
    %c3_127 = arith.constant 3 : index
    %c0_128 = arith.constant 0 : index
    %c0_129 = arith.constant 0 : index
    %248 = vector.load %arg3[%c3_127, %c0_128, %c0_129] : memref<16x1x128xf32, #tpu.memory_space<vmem>>, vector<1x1x128xf32>
    %249 = vector.shape_cast %248 : vector<1x1x128xf32> to vector<1x128xf32>
    %250 = vector.broadcast %249 : vector<1x128xf32> to vector<64x128xf32>
    %251 = arith.addf %247, %250 : vector<64x128xf32>
    %cst_130 = arith.constant 0.000000e+00 : f32
    %252 = vector.broadcast %cst_130 : f32 to vector<64x128xf32>
    %253 = arith.maximumf %251, %252 : vector<64x128xf32>
    %cst_131 = arith.constant 0.000000e+00 : f32
    %254 = vector.broadcast %cst_131 : f32 to vector<2x128xf32>
    %255 = vector.extract_strided_slice %253 {offsets = [2, 0], sizes = [62, 128], strides = [1, 1]} : vector<64x128xf32> to vector<62x128xf32>
    %256 = tpu.concatenate %255, %254 in 0 : vector<62x128xf32>, vector<2x128xf32> -> vector<64x128xf32>
    %c2_i32_132 = arith.constant 2 : i32
    %257 = vector.broadcast %c2_i32_132 : i32 to vector<64x1xi32>
    %258 = arith.addi %16, %257 : vector<64x1xi32>
    %c0_i32_133 = arith.constant 0 : i32
    %259 = vector.broadcast %c0_i32_133 : i32 to vector<64x1xi32>
    %260 = arith.cmpi sge, %258, %259 : vector<64x1xi32>
    %c2_i32_134 = arith.constant 2 : i32
    %261 = vector.broadcast %c2_i32_134 : i32 to vector<64x1xi32>
    %262 = arith.addi %16, %261 : vector<64x1xi32>
    %c32_i32_135 = arith.constant 32 : i32
    %263 = vector.broadcast %c32_i32_135 : i32 to vector<64x1xi32>
    %264 = arith.cmpi slt, %262, %263 : vector<64x1xi32>
    %265 = arith.andi %260, %264 : vector<64x1xi1>
    %cst_136 = arith.constant 0.000000e+00 : f32
    %266 = vector.broadcast %cst_136 : f32 to vector<64x128xf32>
    %267 = vector.shape_cast %265 : vector<64x1xi1> to vector<64x1xi1>
    %268 = vector.broadcast %267 : vector<64x1xi1> to vector<64x128xi1>
    %269 = arith.select %268, %256, %266 : vector<64x128xi1>, vector<64x128xf32>
    %270 = arith.maximumf %253, %269 : vector<64x128xf32>
    %c120_i32 = arith.constant 120 : i32
    %271 = tpu.dynamic_rotate %270 by %c120_i32 dim 1 : vector<64x128xf32>, i32 -> vector<64x128xf32>
    %272 = arith.maximumf %270, %271 : vector<64x128xf32>
    %cst_137 = arith.constant 0.000000e+00 : f32
    %273 = vector.broadcast %cst_137 : f32 to vector<64x128xf32>
    %cst_138 = arith.constant 0.000000e+00 : f32
    %274 = vector.broadcast %cst_138 : f32 to vector<4x128xf32>
    %275 = vector.extract_strided_slice %272 {offsets = [0, 0], sizes = [60, 128], strides = [1, 1]} : vector<64x128xf32> to vector<60x128xf32>
    %276 = tpu.concatenate %274, %275 in 0 : vector<4x128xf32>, vector<60x128xf32> -> vector<64x128xf32>
    %c-4_i32 = arith.constant -4 : i32
    %277 = vector.broadcast %c-4_i32 : i32 to vector<64x1xi32>
    %278 = arith.addi %16, %277 : vector<64x1xi32>
    %c0_i32_139 = arith.constant 0 : i32
    %279 = vector.broadcast %c0_i32_139 : i32 to vector<64x1xi32>
    %280 = arith.cmpi sge, %278, %279 : vector<64x1xi32>
    %c-4_i32_140 = arith.constant -4 : i32
    %281 = vector.broadcast %c-4_i32_140 : i32 to vector<64x1xi32>
    %282 = arith.addi %16, %281 : vector<64x1xi32>
    %c32_i32_141 = arith.constant 32 : i32
    %283 = vector.broadcast %c32_i32_141 : i32 to vector<64x1xi32>
    %284 = arith.cmpi slt, %282, %283 : vector<64x1xi32>
    %285 = arith.andi %280, %284 : vector<64x1xi1>
    %cst_142 = arith.constant 0.000000e+00 : f32
    %286 = vector.broadcast %cst_142 : f32 to vector<64x128xf32>
    %287 = vector.shape_cast %285 : vector<64x1xi1> to vector<64x1xi1>
    %288 = vector.broadcast %287 : vector<64x1xi1> to vector<64x128xi1>
    %289 = arith.select %288, %276, %286 : vector<64x128xi1>, vector<64x128xf32>
    %290 = arith.truncf %289 : vector<64x128xf32> to vector<64x128xbf16>
    %c4 = arith.constant 4 : index
    %c0_143 = arith.constant 0 : index
    %c0_144 = arith.constant 0 : index
    %c0_145 = arith.constant 0 : index
    %291 = vector.load %arg2[%c4, %c0_143, %c0_144, %c0_145] : memref<16x3x128x128xbf16, #tpu.memory_space<vmem>>, vector<1x1x128x128xbf16>
    %292 = vector.shape_cast %291 : vector<1x1x128x128xbf16> to vector<128x128xbf16>
    %cst_146 = arith.constant dense<0.000000e+00> : vector<64x128xf32>
    %293 = tpu.matmul %290, %292, %cst_146 {dimension_numbers = #tpu.dot_dimension_numbers<[1], [0], [0], [1], [0, 0, 1, 1], [], []>} : vector<64x128xbf16>, vector<128x128xbf16>, vector<64x128xf32> -> vector<64x128xf32>
    %294 = arith.addf %273, %293 : vector<64x128xf32>
    %295 = arith.truncf %272 : vector<64x128xf32> to vector<64x128xbf16>
    %c4_147 = arith.constant 4 : index
    %c1_148 = arith.constant 1 : index
    %c0_149 = arith.constant 0 : index
    %c0_150 = arith.constant 0 : index
    %296 = vector.load %arg2[%c4_147, %c1_148, %c0_149, %c0_150] : memref<16x3x128x128xbf16, #tpu.memory_space<vmem>>, vector<1x1x128x128xbf16>
    %297 = vector.shape_cast %296 : vector<1x1x128x128xbf16> to vector<128x128xbf16>
    %cst_151 = arith.constant dense<0.000000e+00> : vector<64x128xf32>
    %298 = tpu.matmul %295, %297, %cst_151 {dimension_numbers = #tpu.dot_dimension_numbers<[1], [0], [0], [1], [0, 0, 1, 1], [], []>} : vector<64x128xbf16>, vector<128x128xbf16>, vector<64x128xf32> -> vector<64x128xf32>
    %299 = arith.addf %294, %298 : vector<64x128xf32>
    %cst_152 = arith.constant 0.000000e+00 : f32
    %300 = vector.broadcast %cst_152 : f32 to vector<4x128xf32>
    %301 = vector.extract_strided_slice %272 {offsets = [4, 0], sizes = [60, 128], strides = [1, 1]} : vector<64x128xf32> to vector<60x128xf32>
    %302 = tpu.concatenate %301, %300 in 0 : vector<60x128xf32>, vector<4x128xf32> -> vector<64x128xf32>
    %c4_i32 = arith.constant 4 : i32
    %303 = vector.broadcast %c4_i32 : i32 to vector<64x1xi32>
    %304 = arith.addi %16, %303 : vector<64x1xi32>
    %c0_i32_153 = arith.constant 0 : i32
    %305 = vector.broadcast %c0_i32_153 : i32 to vector<64x1xi32>
    %306 = arith.cmpi sge, %304, %305 : vector<64x1xi32>
    %c4_i32_154 = arith.constant 4 : i32
    %307 = vector.broadcast %c4_i32_154 : i32 to vector<64x1xi32>
    %308 = arith.addi %16, %307 : vector<64x1xi32>
    %c32_i32_155 = arith.constant 32 : i32
    %309 = vector.broadcast %c32_i32_155 : i32 to vector<64x1xi32>
    %310 = arith.cmpi slt, %308, %309 : vector<64x1xi32>
    %311 = arith.andi %306, %310 : vector<64x1xi1>
    %cst_156 = arith.constant 0.000000e+00 : f32
    %312 = vector.broadcast %cst_156 : f32 to vector<64x128xf32>
    %313 = vector.shape_cast %311 : vector<64x1xi1> to vector<64x1xi1>
    %314 = vector.broadcast %313 : vector<64x1xi1> to vector<64x128xi1>
    %315 = arith.select %314, %302, %312 : vector<64x128xi1>, vector<64x128xf32>
    %316 = arith.truncf %315 : vector<64x128xf32> to vector<64x128xbf16>
    %c4_157 = arith.constant 4 : index
    %c2_158 = arith.constant 2 : index
    %c0_159 = arith.constant 0 : index
    %c0_160 = arith.constant 0 : index
    %317 = vector.load %arg2[%c4_157, %c2_158, %c0_159, %c0_160] : memref<16x3x128x128xbf16, #tpu.memory_space<vmem>>, vector<1x1x128x128xbf16>
    %318 = vector.shape_cast %317 : vector<1x1x128x128xbf16> to vector<128x128xbf16>
    %cst_161 = arith.constant dense<0.000000e+00> : vector<64x128xf32>
    %319 = tpu.matmul %316, %318, %cst_161 {dimension_numbers = #tpu.dot_dimension_numbers<[1], [0], [0], [1], [0, 0, 1, 1], [], []>} : vector<64x128xbf16>, vector<128x128xbf16>, vector<64x128xf32> -> vector<64x128xf32>
    %320 = arith.addf %299, %319 : vector<64x128xf32>
    %c4_162 = arith.constant 4 : index
    %c0_163 = arith.constant 0 : index
    %c0_164 = arith.constant 0 : index
    %321 = vector.load %arg3[%c4_162, %c0_163, %c0_164] : memref<16x1x128xf32, #tpu.memory_space<vmem>>, vector<1x1x128xf32>
    %322 = vector.shape_cast %321 : vector<1x1x128xf32> to vector<1x128xf32>
    %323 = vector.broadcast %322 : vector<1x128xf32> to vector<64x128xf32>
    %324 = arith.addf %320, %323 : vector<64x128xf32>
    %cst_165 = arith.constant 0.000000e+00 : f32
    %325 = vector.broadcast %cst_165 : f32 to vector<64x128xf32>
    %326 = arith.maximumf %324, %325 : vector<64x128xf32>
    %cst_166 = arith.constant 0.000000e+00 : f32
    %327 = vector.broadcast %cst_166 : f32 to vector<64x128xf32>
    %cst_167 = arith.constant 0.000000e+00 : f32
    %328 = vector.broadcast %cst_167 : f32 to vector<4x128xf32>
    %329 = vector.extract_strided_slice %326 {offsets = [0, 0], sizes = [60, 128], strides = [1, 1]} : vector<64x128xf32> to vector<60x128xf32>
    %330 = tpu.concatenate %328, %329 in 0 : vector<4x128xf32>, vector<60x128xf32> -> vector<64x128xf32>
    %c-4_i32_168 = arith.constant -4 : i32
    %331 = vector.broadcast %c-4_i32_168 : i32 to vector<64x1xi32>
    %332 = arith.addi %16, %331 : vector<64x1xi32>
    %c0_i32_169 = arith.constant 0 : i32
    %333 = vector.broadcast %c0_i32_169 : i32 to vector<64x1xi32>
    %334 = arith.cmpi sge, %332, %333 : vector<64x1xi32>
    %c-4_i32_170 = arith.constant -4 : i32
    %335 = vector.broadcast %c-4_i32_170 : i32 to vector<64x1xi32>
    %336 = arith.addi %16, %335 : vector<64x1xi32>
    %c32_i32_171 = arith.constant 32 : i32
    %337 = vector.broadcast %c32_i32_171 : i32 to vector<64x1xi32>
    %338 = arith.cmpi slt, %336, %337 : vector<64x1xi32>
    %339 = arith.andi %334, %338 : vector<64x1xi1>
    %cst_172 = arith.constant 0.000000e+00 : f32
    %340 = vector.broadcast %cst_172 : f32 to vector<64x128xf32>
    %341 = vector.shape_cast %339 : vector<64x1xi1> to vector<64x1xi1>
    %342 = vector.broadcast %341 : vector<64x1xi1> to vector<64x128xi1>
    %343 = arith.select %342, %330, %340 : vector<64x128xi1>, vector<64x128xf32>
    %344 = arith.truncf %343 : vector<64x128xf32> to vector<64x128xbf16>
    %c5 = arith.constant 5 : index
    %c0_173 = arith.constant 0 : index
    %c0_174 = arith.constant 0 : index
    %c0_175 = arith.constant 0 : index
    %345 = vector.load %arg2[%c5, %c0_173, %c0_174, %c0_175] : memref<16x3x128x128xbf16, #tpu.memory_space<vmem>>, vector<1x1x128x128xbf16>
    %346 = vector.shape_cast %345 : vector<1x1x128x128xbf16> to vector<128x128xbf16>
    %cst_176 = arith.constant dense<0.000000e+00> : vector<64x128xf32>
    %347 = tpu.matmul %344, %346, %cst_176 {dimension_numbers = #tpu.dot_dimension_numbers<[1], [0], [0], [1], [0, 0, 1, 1], [], []>} : vector<64x128xbf16>, vector<128x128xbf16>, vector<64x128xf32> -> vector<64x128xf32>
    %348 = arith.addf %327, %347 : vector<64x128xf32>
    %349 = arith.truncf %326 : vector<64x128xf32> to vector<64x128xbf16>
    %c5_177 = arith.constant 5 : index
    %c1_178 = arith.constant 1 : index
    %c0_179 = arith.constant 0 : index
    %c0_180 = arith.constant 0 : index
    %350 = vector.load %arg2[%c5_177, %c1_178, %c0_179, %c0_180] : memref<16x3x128x128xbf16, #tpu.memory_space<vmem>>, vector<1x1x128x128xbf16>
    %351 = vector.shape_cast %350 : vector<1x1x128x128xbf16> to vector<128x128xbf16>
    %cst_181 = arith.constant dense<0.000000e+00> : vector<64x128xf32>
    %352 = tpu.matmul %349, %351, %cst_181 {dimension_numbers = #tpu.dot_dimension_numbers<[1], [0], [0], [1], [0, 0, 1, 1], [], []>} : vector<64x128xbf16>, vector<128x128xbf16>, vector<64x128xf32> -> vector<64x128xf32>
    %353 = arith.addf %348, %352 : vector<64x128xf32>
    %cst_182 = arith.constant 0.000000e+00 : f32
    %354 = vector.broadcast %cst_182 : f32 to vector<4x128xf32>
    %355 = vector.extract_strided_slice %326 {offsets = [4, 0], sizes = [60, 128], strides = [1, 1]} : vector<64x128xf32> to vector<60x128xf32>
    %356 = tpu.concatenate %355, %354 in 0 : vector<60x128xf32>, vector<4x128xf32> -> vector<64x128xf32>
    %c4_i32_183 = arith.constant 4 : i32
    %357 = vector.broadcast %c4_i32_183 : i32 to vector<64x1xi32>
    %358 = arith.addi %16, %357 : vector<64x1xi32>
    %c0_i32_184 = arith.constant 0 : i32
    %359 = vector.broadcast %c0_i32_184 : i32 to vector<64x1xi32>
    %360 = arith.cmpi sge, %358, %359 : vector<64x1xi32>
    %c4_i32_185 = arith.constant 4 : i32
    %361 = vector.broadcast %c4_i32_185 : i32 to vector<64x1xi32>
    %362 = arith.addi %16, %361 : vector<64x1xi32>
    %c32_i32_186 = arith.constant 32 : i32
    %363 = vector.broadcast %c32_i32_186 : i32 to vector<64x1xi32>
    %364 = arith.cmpi slt, %362, %363 : vector<64x1xi32>
    %365 = arith.andi %360, %364 : vector<64x1xi1>
    %cst_187 = arith.constant 0.000000e+00 : f32
    %366 = vector.broadcast %cst_187 : f32 to vector<64x128xf32>
    %367 = vector.shape_cast %365 : vector<64x1xi1> to vector<64x1xi1>
    %368 = vector.broadcast %367 : vector<64x1xi1> to vector<64x128xi1>
    %369 = arith.select %368, %356, %366 : vector<64x128xi1>, vector<64x128xf32>
    %370 = arith.truncf %369 : vector<64x128xf32> to vector<64x128xbf16>
    %c5_188 = arith.constant 5 : index
    %c2_189 = arith.constant 2 : index
    %c0_190 = arith.constant 0 : index
    %c0_191 = arith.constant 0 : index
    %371 = vector.load %arg2[%c5_188, %c2_189, %c0_190, %c0_191] : memref<16x3x128x128xbf16, #tpu.memory_space<vmem>>, vector<1x1x128x128xbf16>
    %372 = vector.shape_cast %371 : vector<1x1x128x128xbf16> to vector<128x128xbf16>
    %cst_192 = arith.constant dense<0.000000e+00> : vector<64x128xf32>
    %373 = tpu.matmul %370, %372, %cst_192 {dimension_numbers = #tpu.dot_dimension_numbers<[1], [0], [0], [1], [0, 0, 1, 1], [], []>} : vector<64x128xbf16>, vector<128x128xbf16>, vector<64x128xf32> -> vector<64x128xf32>
    %374 = arith.addf %353, %373 : vector<64x128xf32>
    %c5_193 = arith.constant 5 : index
    %c0_194 = arith.constant 0 : index
    %c0_195 = arith.constant 0 : index
    %375 = vector.load %arg3[%c5_193, %c0_194, %c0_195] : memref<16x1x128xf32, #tpu.memory_space<vmem>>, vector<1x1x128xf32>
    %376 = vector.shape_cast %375 : vector<1x1x128xf32> to vector<1x128xf32>
    %377 = vector.broadcast %376 : vector<1x128xf32> to vector<64x128xf32>
    %378 = arith.addf %374, %377 : vector<64x128xf32>
    %cst_196 = arith.constant 0.000000e+00 : f32
    %379 = vector.broadcast %cst_196 : f32 to vector<64x128xf32>
    %380 = arith.maximumf %378, %379 : vector<64x128xf32>
    %cst_197 = arith.constant 0.000000e+00 : f32
    %381 = vector.broadcast %cst_197 : f32 to vector<64x128xf32>
    %cst_198 = arith.constant 0.000000e+00 : f32
    %382 = vector.broadcast %cst_198 : f32 to vector<4x128xf32>
    %383 = vector.extract_strided_slice %380 {offsets = [0, 0], sizes = [60, 128], strides = [1, 1]} : vector<64x128xf32> to vector<60x128xf32>
    %384 = tpu.concatenate %382, %383 in 0 : vector<4x128xf32>, vector<60x128xf32> -> vector<64x128xf32>
    %c-4_i32_199 = arith.constant -4 : i32
    %385 = vector.broadcast %c-4_i32_199 : i32 to vector<64x1xi32>
    %386 = arith.addi %16, %385 : vector<64x1xi32>
    %c0_i32_200 = arith.constant 0 : i32
    %387 = vector.broadcast %c0_i32_200 : i32 to vector<64x1xi32>
    %388 = arith.cmpi sge, %386, %387 : vector<64x1xi32>
    %c-4_i32_201 = arith.constant -4 : i32
    %389 = vector.broadcast %c-4_i32_201 : i32 to vector<64x1xi32>
    %390 = arith.addi %16, %389 : vector<64x1xi32>
    %c32_i32_202 = arith.constant 32 : i32
    %391 = vector.broadcast %c32_i32_202 : i32 to vector<64x1xi32>
    %392 = arith.cmpi slt, %390, %391 : vector<64x1xi32>
    %393 = arith.andi %388, %392 : vector<64x1xi1>
    %cst_203 = arith.constant 0.000000e+00 : f32
    %394 = vector.broadcast %cst_203 : f32 to vector<64x128xf32>
    %395 = vector.shape_cast %393 : vector<64x1xi1> to vector<64x1xi1>
    %396 = vector.broadcast %395 : vector<64x1xi1> to vector<64x128xi1>
    %397 = arith.select %396, %384, %394 : vector<64x128xi1>, vector<64x128xf32>
    %398 = arith.truncf %397 : vector<64x128xf32> to vector<64x128xbf16>
    %c6 = arith.constant 6 : index
    %c0_204 = arith.constant 0 : index
    %c0_205 = arith.constant 0 : index
    %c0_206 = arith.constant 0 : index
    %399 = vector.load %arg2[%c6, %c0_204, %c0_205, %c0_206] : memref<16x3x128x128xbf16, #tpu.memory_space<vmem>>, vector<1x1x128x128xbf16>
    %400 = vector.shape_cast %399 : vector<1x1x128x128xbf16> to vector<128x128xbf16>
    %cst_207 = arith.constant dense<0.000000e+00> : vector<64x128xf32>
    %401 = tpu.matmul %398, %400, %cst_207 {dimension_numbers = #tpu.dot_dimension_numbers<[1], [0], [0], [1], [0, 0, 1, 1], [], []>} : vector<64x128xbf16>, vector<128x128xbf16>, vector<64x128xf32> -> vector<64x128xf32>
    %402 = arith.addf %381, %401 : vector<64x128xf32>
    %403 = arith.truncf %380 : vector<64x128xf32> to vector<64x128xbf16>
    %c6_208 = arith.constant 6 : index
    %c1_209 = arith.constant 1 : index
    %c0_210 = arith.constant 0 : index
    %c0_211 = arith.constant 0 : index
    %404 = vector.load %arg2[%c6_208, %c1_209, %c0_210, %c0_211] : memref<16x3x128x128xbf16, #tpu.memory_space<vmem>>, vector<1x1x128x128xbf16>
    %405 = vector.shape_cast %404 : vector<1x1x128x128xbf16> to vector<128x128xbf16>
    %cst_212 = arith.constant dense<0.000000e+00> : vector<64x128xf32>
    %406 = tpu.matmul %403, %405, %cst_212 {dimension_numbers = #tpu.dot_dimension_numbers<[1], [0], [0], [1], [0, 0, 1, 1], [], []>} : vector<64x128xbf16>, vector<128x128xbf16>, vector<64x128xf32> -> vector<64x128xf32>
    %407 = arith.addf %402, %406 : vector<64x128xf32>
    %cst_213 = arith.constant 0.000000e+00 : f32
    %408 = vector.broadcast %cst_213 : f32 to vector<4x128xf32>
    %409 = vector.extract_strided_slice %380 {offsets = [4, 0], sizes = [60, 128], strides = [1, 1]} : vector<64x128xf32> to vector<60x128xf32>
    %410 = tpu.concatenate %409, %408 in 0 : vector<60x128xf32>, vector<4x128xf32> -> vector<64x128xf32>
    %c4_i32_214 = arith.constant 4 : i32
    %411 = vector.broadcast %c4_i32_214 : i32 to vector<64x1xi32>
    %412 = arith.addi %16, %411 : vector<64x1xi32>
    %c0_i32_215 = arith.constant 0 : i32
    %413 = vector.broadcast %c0_i32_215 : i32 to vector<64x1xi32>
    %414 = arith.cmpi sge, %412, %413 : vector<64x1xi32>
    %c4_i32_216 = arith.constant 4 : i32
    %415 = vector.broadcast %c4_i32_216 : i32 to vector<64x1xi32>
    %416 = arith.addi %16, %415 : vector<64x1xi32>
    %c32_i32_217 = arith.constant 32 : i32
    %417 = vector.broadcast %c32_i32_217 : i32 to vector<64x1xi32>
    %418 = arith.cmpi slt, %416, %417 : vector<64x1xi32>
    %419 = arith.andi %414, %418 : vector<64x1xi1>
    %cst_218 = arith.constant 0.000000e+00 : f32
    %420 = vector.broadcast %cst_218 : f32 to vector<64x128xf32>
    %421 = vector.shape_cast %419 : vector<64x1xi1> to vector<64x1xi1>
    %422 = vector.broadcast %421 : vector<64x1xi1> to vector<64x128xi1>
    %423 = arith.select %422, %410, %420 : vector<64x128xi1>, vector<64x128xf32>
    %424 = arith.truncf %423 : vector<64x128xf32> to vector<64x128xbf16>
    %c6_219 = arith.constant 6 : index
    %c2_220 = arith.constant 2 : index
    %c0_221 = arith.constant 0 : index
    %c0_222 = arith.constant 0 : index
    %425 = vector.load %arg2[%c6_219, %c2_220, %c0_221, %c0_222] : memref<16x3x128x128xbf16, #tpu.memory_space<vmem>>, vector<1x1x128x128xbf16>
    %426 = vector.shape_cast %425 : vector<1x1x128x128xbf16> to vector<128x128xbf16>
    %cst_223 = arith.constant dense<0.000000e+00> : vector<64x128xf32>
    %427 = tpu.matmul %424, %426, %cst_223 {dimension_numbers = #tpu.dot_dimension_numbers<[1], [0], [0], [1], [0, 0, 1, 1], [], []>} : vector<64x128xbf16>, vector<128x128xbf16>, vector<64x128xf32> -> vector<64x128xf32>
    %428 = arith.addf %407, %427 : vector<64x128xf32>
    %c6_224 = arith.constant 6 : index
    %c0_225 = arith.constant 0 : index
    %c0_226 = arith.constant 0 : index
    %429 = vector.load %arg3[%c6_224, %c0_225, %c0_226] : memref<16x1x128xf32, #tpu.memory_space<vmem>>, vector<1x1x128xf32>
    %430 = vector.shape_cast %429 : vector<1x1x128xf32> to vector<1x128xf32>
    %431 = vector.broadcast %430 : vector<1x128xf32> to vector<64x128xf32>
    %432 = arith.addf %428, %431 : vector<64x128xf32>
    %cst_227 = arith.constant 0.000000e+00 : f32
    %433 = vector.broadcast %cst_227 : f32 to vector<64x128xf32>
    %434 = arith.maximumf %432, %433 : vector<64x128xf32>
    %cst_228 = arith.constant 0.000000e+00 : f32
    %435 = vector.broadcast %cst_228 : f32 to vector<64x128xf32>
    %cst_229 = arith.constant 0.000000e+00 : f32
    %436 = vector.broadcast %cst_229 : f32 to vector<4x128xf32>
    %437 = vector.extract_strided_slice %434 {offsets = [0, 0], sizes = [60, 128], strides = [1, 1]} : vector<64x128xf32> to vector<60x128xf32>
    %438 = tpu.concatenate %436, %437 in 0 : vector<4x128xf32>, vector<60x128xf32> -> vector<64x128xf32>
    %c-4_i32_230 = arith.constant -4 : i32
    %439 = vector.broadcast %c-4_i32_230 : i32 to vector<64x1xi32>
    %440 = arith.addi %16, %439 : vector<64x1xi32>
    %c0_i32_231 = arith.constant 0 : i32
    %441 = vector.broadcast %c0_i32_231 : i32 to vector<64x1xi32>
    %442 = arith.cmpi sge, %440, %441 : vector<64x1xi32>
    %c-4_i32_232 = arith.constant -4 : i32
    %443 = vector.broadcast %c-4_i32_232 : i32 to vector<64x1xi32>
    %444 = arith.addi %16, %443 : vector<64x1xi32>
    %c32_i32_233 = arith.constant 32 : i32
    %445 = vector.broadcast %c32_i32_233 : i32 to vector<64x1xi32>
    %446 = arith.cmpi slt, %444, %445 : vector<64x1xi32>
    %447 = arith.andi %442, %446 : vector<64x1xi1>
    %cst_234 = arith.constant 0.000000e+00 : f32
    %448 = vector.broadcast %cst_234 : f32 to vector<64x128xf32>
    %449 = vector.shape_cast %447 : vector<64x1xi1> to vector<64x1xi1>
    %450 = vector.broadcast %449 : vector<64x1xi1> to vector<64x128xi1>
    %451 = arith.select %450, %438, %448 : vector<64x128xi1>, vector<64x128xf32>
    %452 = arith.truncf %451 : vector<64x128xf32> to vector<64x128xbf16>
    %c7 = arith.constant 7 : index
    %c0_235 = arith.constant 0 : index
    %c0_236 = arith.constant 0 : index
    %c0_237 = arith.constant 0 : index
    %453 = vector.load %arg2[%c7, %c0_235, %c0_236, %c0_237] : memref<16x3x128x128xbf16, #tpu.memory_space<vmem>>, vector<1x1x128x128xbf16>
    %454 = vector.shape_cast %453 : vector<1x1x128x128xbf16> to vector<128x128xbf16>
    %cst_238 = arith.constant dense<0.000000e+00> : vector<64x128xf32>
    %455 = tpu.matmul %452, %454, %cst_238 {dimension_numbers = #tpu.dot_dimension_numbers<[1], [0], [0], [1], [0, 0, 1, 1], [], []>} : vector<64x128xbf16>, vector<128x128xbf16>, vector<64x128xf32> -> vector<64x128xf32>
    %456 = arith.addf %435, %455 : vector<64x128xf32>
    %457 = arith.truncf %434 : vector<64x128xf32> to vector<64x128xbf16>
    %c7_239 = arith.constant 7 : index
    %c1_240 = arith.constant 1 : index
    %c0_241 = arith.constant 0 : index
    %c0_242 = arith.constant 0 : index
    %458 = vector.load %arg2[%c7_239, %c1_240, %c0_241, %c0_242] : memref<16x3x128x128xbf16, #tpu.memory_space<vmem>>, vector<1x1x128x128xbf16>
    %459 = vector.shape_cast %458 : vector<1x1x128x128xbf16> to vector<128x128xbf16>
    %cst_243 = arith.constant dense<0.000000e+00> : vector<64x128xf32>
    %460 = tpu.matmul %457, %459, %cst_243 {dimension_numbers = #tpu.dot_dimension_numbers<[1], [0], [0], [1], [0, 0, 1, 1], [], []>} : vector<64x128xbf16>, vector<128x128xbf16>, vector<64x128xf32> -> vector<64x128xf32>
    %461 = arith.addf %456, %460 : vector<64x128xf32>
    %cst_244 = arith.constant 0.000000e+00 : f32
    %462 = vector.broadcast %cst_244 : f32 to vector<4x128xf32>
    %463 = vector.extract_strided_slice %434 {offsets = [4, 0], sizes = [60, 128], strides = [1, 1]} : vector<64x128xf32> to vector<60x128xf32>
    %464 = tpu.concatenate %463, %462 in 0 : vector<60x128xf32>, vector<4x128xf32> -> vector<64x128xf32>
    %c4_i32_245 = arith.constant 4 : i32
    %465 = vector.broadcast %c4_i32_245 : i32 to vector<64x1xi32>
    %466 = arith.addi %16, %465 : vector<64x1xi32>
    %c0_i32_246 = arith.constant 0 : i32
    %467 = vector.broadcast %c0_i32_246 : i32 to vector<64x1xi32>
    %468 = arith.cmpi sge, %466, %467 : vector<64x1xi32>
    %c4_i32_247 = arith.constant 4 : i32
    %469 = vector.broadcast %c4_i32_247 : i32 to vector<64x1xi32>
    %470 = arith.addi %16, %469 : vector<64x1xi32>
    %c32_i32_248 = arith.constant 32 : i32
    %471 = vector.broadcast %c32_i32_248 : i32 to vector<64x1xi32>
    %472 = arith.cmpi slt, %470, %471 : vector<64x1xi32>
    %473 = arith.andi %468, %472 : vector<64x1xi1>
    %cst_249 = arith.constant 0.000000e+00 : f32
    %474 = vector.broadcast %cst_249 : f32 to vector<64x128xf32>
    %475 = vector.shape_cast %473 : vector<64x1xi1> to vector<64x1xi1>
    %476 = vector.broadcast %475 : vector<64x1xi1> to vector<64x128xi1>
    %477 = arith.select %476, %464, %474 : vector<64x128xi1>, vector<64x128xf32>
    %478 = arith.truncf %477 : vector<64x128xf32> to vector<64x128xbf16>
    %c7_250 = arith.constant 7 : index
    %c2_251 = arith.constant 2 : index
    %c0_252 = arith.constant 0 : index
    %c0_253 = arith.constant 0 : index
    %479 = vector.load %arg2[%c7_250, %c2_251, %c0_252, %c0_253] : memref<16x3x128x128xbf16, #tpu.memory_space<vmem>>, vector<1x1x128x128xbf16>
    %480 = vector.shape_cast %479 : vector<1x1x128x128xbf16> to vector<128x128xbf16>
    %cst_254 = arith.constant dense<0.000000e+00> : vector<64x128xf32>
    %481 = tpu.matmul %478, %480, %cst_254 {dimension_numbers = #tpu.dot_dimension_numbers<[1], [0], [0], [1], [0, 0, 1, 1], [], []>} : vector<64x128xbf16>, vector<128x128xbf16>, vector<64x128xf32> -> vector<64x128xf32>
    %482 = arith.addf %461, %481 : vector<64x128xf32>
    %c7_255 = arith.constant 7 : index
    %c0_256 = arith.constant 0 : index
    %c0_257 = arith.constant 0 : index
    %483 = vector.load %arg3[%c7_255, %c0_256, %c0_257] : memref<16x1x128xf32, #tpu.memory_space<vmem>>, vector<1x1x128xf32>
    %484 = vector.shape_cast %483 : vector<1x1x128xf32> to vector<1x128xf32>
    %485 = vector.broadcast %484 : vector<1x128xf32> to vector<64x128xf32>
    %486 = arith.addf %482, %485 : vector<64x128xf32>
    %cst_258 = arith.constant 0.000000e+00 : f32
    %487 = vector.broadcast %cst_258 : f32 to vector<64x128xf32>
    %488 = arith.maximumf %486, %487 : vector<64x128xf32>
    %cst_259 = arith.constant 0.000000e+00 : f32
    %489 = vector.broadcast %cst_259 : f32 to vector<4x128xf32>
    %490 = vector.extract_strided_slice %488 {offsets = [4, 0], sizes = [60, 128], strides = [1, 1]} : vector<64x128xf32> to vector<60x128xf32>
    %491 = tpu.concatenate %490, %489 in 0 : vector<60x128xf32>, vector<4x128xf32> -> vector<64x128xf32>
    %c4_i32_260 = arith.constant 4 : i32
    %492 = vector.broadcast %c4_i32_260 : i32 to vector<64x1xi32>
    %493 = arith.addi %16, %492 : vector<64x1xi32>
    %c0_i32_261 = arith.constant 0 : i32
    %494 = vector.broadcast %c0_i32_261 : i32 to vector<64x1xi32>
    %495 = arith.cmpi sge, %493, %494 : vector<64x1xi32>
    %c4_i32_262 = arith.constant 4 : i32
    %496 = vector.broadcast %c4_i32_262 : i32 to vector<64x1xi32>
    %497 = arith.addi %16, %496 : vector<64x1xi32>
    %c32_i32_263 = arith.constant 32 : i32
    %498 = vector.broadcast %c32_i32_263 : i32 to vector<64x1xi32>
    %499 = arith.cmpi slt, %497, %498 : vector<64x1xi32>
    %500 = arith.andi %495, %499 : vector<64x1xi1>
    %cst_264 = arith.constant 0.000000e+00 : f32
    %501 = vector.broadcast %cst_264 : f32 to vector<64x128xf32>
    %502 = vector.shape_cast %500 : vector<64x1xi1> to vector<64x1xi1>
    %503 = vector.broadcast %502 : vector<64x1xi1> to vector<64x128xi1>
    %504 = arith.select %503, %491, %501 : vector<64x128xi1>, vector<64x128xf32>
    %505 = arith.maximumf %488, %504 : vector<64x128xf32>
    %c112_i32 = arith.constant 112 : i32
    %506 = tpu.dynamic_rotate %505 by %c112_i32 dim 1 : vector<64x128xf32>, i32 -> vector<64x128xf32>
    %507 = arith.maximumf %505, %506 : vector<64x128xf32>
    %cst_265 = arith.constant 0.000000e+00 : f32
    %508 = vector.broadcast %cst_265 : f32 to vector<64x128xf32>
    %cst_266 = arith.constant 0.000000e+00 : f32
    %509 = vector.broadcast %cst_266 : f32 to vector<8x128xf32>
    %510 = vector.extract_strided_slice %507 {offsets = [0, 0], sizes = [56, 128], strides = [1, 1]} : vector<64x128xf32> to vector<56x128xf32>
    %511 = tpu.concatenate %509, %510 in 0 : vector<8x128xf32>, vector<56x128xf32> -> vector<64x128xf32>
    %c-8_i32 = arith.constant -8 : i32
    %512 = vector.broadcast %c-8_i32 : i32 to vector<64x1xi32>
    %513 = arith.addi %16, %512 : vector<64x1xi32>
    %c0_i32_267 = arith.constant 0 : i32
    %514 = vector.broadcast %c0_i32_267 : i32 to vector<64x1xi32>
    %515 = arith.cmpi sge, %513, %514 : vector<64x1xi32>
    %c-8_i32_268 = arith.constant -8 : i32
    %516 = vector.broadcast %c-8_i32_268 : i32 to vector<64x1xi32>
    %517 = arith.addi %16, %516 : vector<64x1xi32>
    %c32_i32_269 = arith.constant 32 : i32
    %518 = vector.broadcast %c32_i32_269 : i32 to vector<64x1xi32>
    %519 = arith.cmpi slt, %517, %518 : vector<64x1xi32>
    %520 = arith.andi %515, %519 : vector<64x1xi1>
    %cst_270 = arith.constant 0.000000e+00 : f32
    %521 = vector.broadcast %cst_270 : f32 to vector<64x128xf32>
    %522 = vector.shape_cast %520 : vector<64x1xi1> to vector<64x1xi1>
    %523 = vector.broadcast %522 : vector<64x1xi1> to vector<64x128xi1>
    %524 = arith.select %523, %511, %521 : vector<64x128xi1>, vector<64x128xf32>
    %525 = arith.truncf %524 : vector<64x128xf32> to vector<64x128xbf16>
    %c8 = arith.constant 8 : index
    %c0_271 = arith.constant 0 : index
    %c0_272 = arith.constant 0 : index
    %c0_273 = arith.constant 0 : index
    %526 = vector.load %arg2[%c8, %c0_271, %c0_272, %c0_273] : memref<16x3x128x128xbf16, #tpu.memory_space<vmem>>, vector<1x1x128x128xbf16>
    %527 = vector.shape_cast %526 : vector<1x1x128x128xbf16> to vector<128x128xbf16>
    %cst_274 = arith.constant dense<0.000000e+00> : vector<64x128xf32>
    %528 = tpu.matmul %525, %527, %cst_274 {dimension_numbers = #tpu.dot_dimension_numbers<[1], [0], [0], [1], [0, 0, 1, 1], [], []>} : vector<64x128xbf16>, vector<128x128xbf16>, vector<64x128xf32> -> vector<64x128xf32>
    %529 = arith.addf %508, %528 : vector<64x128xf32>
    %530 = arith.truncf %507 : vector<64x128xf32> to vector<64x128xbf16>
    %c8_275 = arith.constant 8 : index
    %c1_276 = arith.constant 1 : index
    %c0_277 = arith.constant 0 : index
    %c0_278 = arith.constant 0 : index
    %531 = vector.load %arg2[%c8_275, %c1_276, %c0_277, %c0_278] : memref<16x3x128x128xbf16, #tpu.memory_space<vmem>>, vector<1x1x128x128xbf16>
    %532 = vector.shape_cast %531 : vector<1x1x128x128xbf16> to vector<128x128xbf16>
    %cst_279 = arith.constant dense<0.000000e+00> : vector<64x128xf32>
    %533 = tpu.matmul %530, %532, %cst_279 {dimension_numbers = #tpu.dot_dimension_numbers<[1], [0], [0], [1], [0, 0, 1, 1], [], []>} : vector<64x128xbf16>, vector<128x128xbf16>, vector<64x128xf32> -> vector<64x128xf32>
    %534 = arith.addf %529, %533 : vector<64x128xf32>
    %cst_280 = arith.constant 0.000000e+00 : f32
    %535 = vector.broadcast %cst_280 : f32 to vector<8x128xf32>
    %536 = vector.extract_strided_slice %507 {offsets = [8, 0], sizes = [56, 128], strides = [1, 1]} : vector<64x128xf32> to vector<56x128xf32>
    %537 = tpu.concatenate %536, %535 in 0 : vector<56x128xf32>, vector<8x128xf32> -> vector<64x128xf32>
    %c8_i32 = arith.constant 8 : i32
    %538 = vector.broadcast %c8_i32 : i32 to vector<64x1xi32>
    %539 = arith.addi %16, %538 : vector<64x1xi32>
    %c0_i32_281 = arith.constant 0 : i32
    %540 = vector.broadcast %c0_i32_281 : i32 to vector<64x1xi32>
    %541 = arith.cmpi sge, %539, %540 : vector<64x1xi32>
    %c8_i32_282 = arith.constant 8 : i32
    %542 = vector.broadcast %c8_i32_282 : i32 to vector<64x1xi32>
    %543 = arith.addi %16, %542 : vector<64x1xi32>
    %c32_i32_283 = arith.constant 32 : i32
    %544 = vector.broadcast %c32_i32_283 : i32 to vector<64x1xi32>
    %545 = arith.cmpi slt, %543, %544 : vector<64x1xi32>
    %546 = arith.andi %541, %545 : vector<64x1xi1>
    %cst_284 = arith.constant 0.000000e+00 : f32
    %547 = vector.broadcast %cst_284 : f32 to vector<64x128xf32>
    %548 = vector.shape_cast %546 : vector<64x1xi1> to vector<64x1xi1>
    %549 = vector.broadcast %548 : vector<64x1xi1> to vector<64x128xi1>
    %550 = arith.select %549, %537, %547 : vector<64x128xi1>, vector<64x128xf32>
    %551 = arith.truncf %550 : vector<64x128xf32> to vector<64x128xbf16>
    %c8_285 = arith.constant 8 : index
    %c2_286 = arith.constant 2 : index
    %c0_287 = arith.constant 0 : index
    %c0_288 = arith.constant 0 : index
    %552 = vector.load %arg2[%c8_285, %c2_286, %c0_287, %c0_288] : memref<16x3x128x128xbf16, #tpu.memory_space<vmem>>, vector<1x1x128x128xbf16>
    %553 = vector.shape_cast %552 : vector<1x1x128x128xbf16> to vector<128x128xbf16>
    %cst_289 = arith.constant dense<0.000000e+00> : vector<64x128xf32>
    %554 = tpu.matmul %551, %553, %cst_289 {dimension_numbers = #tpu.dot_dimension_numbers<[1], [0], [0], [1], [0, 0, 1, 1], [], []>} : vector<64x128xbf16>, vector<128x128xbf16>, vector<64x128xf32> -> vector<64x128xf32>
    %555 = arith.addf %534, %554 : vector<64x128xf32>
    %c8_290 = arith.constant 8 : index
    %c0_291 = arith.constant 0 : index
    %c0_292 = arith.constant 0 : index
    %556 = vector.load %arg3[%c8_290, %c0_291, %c0_292] : memref<16x1x128xf32, #tpu.memory_space<vmem>>, vector<1x1x128xf32>
    %557 = vector.shape_cast %556 : vector<1x1x128xf32> to vector<1x128xf32>
    %558 = vector.broadcast %557 : vector<1x128xf32> to vector<64x128xf32>
    %559 = arith.addf %555, %558 : vector<64x128xf32>
    %cst_293 = arith.constant 0.000000e+00 : f32
    %560 = vector.broadcast %cst_293 : f32 to vector<64x128xf32>
    %561 = arith.maximumf %559, %560 : vector<64x128xf32>
    %cst_294 = arith.constant 0.000000e+00 : f32
    %562 = vector.broadcast %cst_294 : f32 to vector<64x128xf32>
    %cst_295 = arith.constant 0.000000e+00 : f32
    %563 = vector.broadcast %cst_295 : f32 to vector<8x128xf32>
    %564 = vector.extract_strided_slice %561 {offsets = [0, 0], sizes = [56, 128], strides = [1, 1]} : vector<64x128xf32> to vector<56x128xf32>
    %565 = tpu.concatenate %563, %564 in 0 : vector<8x128xf32>, vector<56x128xf32> -> vector<64x128xf32>
    %c-8_i32_296 = arith.constant -8 : i32
    %566 = vector.broadcast %c-8_i32_296 : i32 to vector<64x1xi32>
    %567 = arith.addi %16, %566 : vector<64x1xi32>
    %c0_i32_297 = arith.constant 0 : i32
    %568 = vector.broadcast %c0_i32_297 : i32 to vector<64x1xi32>
    %569 = arith.cmpi sge, %567, %568 : vector<64x1xi32>
    %c-8_i32_298 = arith.constant -8 : i32
    %570 = vector.broadcast %c-8_i32_298 : i32 to vector<64x1xi32>
    %571 = arith.addi %16, %570 : vector<64x1xi32>
    %c32_i32_299 = arith.constant 32 : i32
    %572 = vector.broadcast %c32_i32_299 : i32 to vector<64x1xi32>
    %573 = arith.cmpi slt, %571, %572 : vector<64x1xi32>
    %574 = arith.andi %569, %573 : vector<64x1xi1>
    %cst_300 = arith.constant 0.000000e+00 : f32
    %575 = vector.broadcast %cst_300 : f32 to vector<64x128xf32>
    %576 = vector.shape_cast %574 : vector<64x1xi1> to vector<64x1xi1>
    %577 = vector.broadcast %576 : vector<64x1xi1> to vector<64x128xi1>
    %578 = arith.select %577, %565, %575 : vector<64x128xi1>, vector<64x128xf32>
    %579 = arith.truncf %578 : vector<64x128xf32> to vector<64x128xbf16>
    %c9 = arith.constant 9 : index
    %c0_301 = arith.constant 0 : index
    %c0_302 = arith.constant 0 : index
    %c0_303 = arith.constant 0 : index
    %580 = vector.load %arg2[%c9, %c0_301, %c0_302, %c0_303] : memref<16x3x128x128xbf16, #tpu.memory_space<vmem>>, vector<1x1x128x128xbf16>
    %581 = vector.shape_cast %580 : vector<1x1x128x128xbf16> to vector<128x128xbf16>
    %cst_304 = arith.constant dense<0.000000e+00> : vector<64x128xf32>
    %582 = tpu.matmul %579, %581, %cst_304 {dimension_numbers = #tpu.dot_dimension_numbers<[1], [0], [0], [1], [0, 0, 1, 1], [], []>} : vector<64x128xbf16>, vector<128x128xbf16>, vector<64x128xf32> -> vector<64x128xf32>
    %583 = arith.addf %562, %582 : vector<64x128xf32>
    %584 = arith.truncf %561 : vector<64x128xf32> to vector<64x128xbf16>
    %c9_305 = arith.constant 9 : index
    %c1_306 = arith.constant 1 : index
    %c0_307 = arith.constant 0 : index
    %c0_308 = arith.constant 0 : index
    %585 = vector.load %arg2[%c9_305, %c1_306, %c0_307, %c0_308] : memref<16x3x128x128xbf16, #tpu.memory_space<vmem>>, vector<1x1x128x128xbf16>
    %586 = vector.shape_cast %585 : vector<1x1x128x128xbf16> to vector<128x128xbf16>
    %cst_309 = arith.constant dense<0.000000e+00> : vector<64x128xf32>
    %587 = tpu.matmul %584, %586, %cst_309 {dimension_numbers = #tpu.dot_dimension_numbers<[1], [0], [0], [1], [0, 0, 1, 1], [], []>} : vector<64x128xbf16>, vector<128x128xbf16>, vector<64x128xf32> -> vector<64x128xf32>
    %588 = arith.addf %583, %587 : vector<64x128xf32>
    %cst_310 = arith.constant 0.000000e+00 : f32
    %589 = vector.broadcast %cst_310 : f32 to vector<8x128xf32>
    %590 = vector.extract_strided_slice %561 {offsets = [8, 0], sizes = [56, 128], strides = [1, 1]} : vector<64x128xf32> to vector<56x128xf32>
    %591 = tpu.concatenate %590, %589 in 0 : vector<56x128xf32>, vector<8x128xf32> -> vector<64x128xf32>
    %c8_i32_311 = arith.constant 8 : i32
    %592 = vector.broadcast %c8_i32_311 : i32 to vector<64x1xi32>
    %593 = arith.addi %16, %592 : vector<64x1xi32>
    %c0_i32_312 = arith.constant 0 : i32
    %594 = vector.broadcast %c0_i32_312 : i32 to vector<64x1xi32>
    %595 = arith.cmpi sge, %593, %594 : vector<64x1xi32>
    %c8_i32_313 = arith.constant 8 : i32
    %596 = vector.broadcast %c8_i32_313 : i32 to vector<64x1xi32>
    %597 = arith.addi %16, %596 : vector<64x1xi32>
    %c32_i32_314 = arith.constant 32 : i32
    %598 = vector.broadcast %c32_i32_314 : i32 to vector<64x1xi32>
    %599 = arith.cmpi slt, %597, %598 : vector<64x1xi32>
    %600 = arith.andi %595, %599 : vector<64x1xi1>
    %cst_315 = arith.constant 0.000000e+00 : f32
    %601 = vector.broadcast %cst_315 : f32 to vector<64x128xf32>
    %602 = vector.shape_cast %600 : vector<64x1xi1> to vector<64x1xi1>
    %603 = vector.broadcast %602 : vector<64x1xi1> to vector<64x128xi1>
    %604 = arith.select %603, %591, %601 : vector<64x128xi1>, vector<64x128xf32>
    %605 = arith.truncf %604 : vector<64x128xf32> to vector<64x128xbf16>
    %c9_316 = arith.constant 9 : index
    %c2_317 = arith.constant 2 : index
    %c0_318 = arith.constant 0 : index
    %c0_319 = arith.constant 0 : index
    %606 = vector.load %arg2[%c9_316, %c2_317, %c0_318, %c0_319] : memref<16x3x128x128xbf16, #tpu.memory_space<vmem>>, vector<1x1x128x128xbf16>
    %607 = vector.shape_cast %606 : vector<1x1x128x128xbf16> to vector<128x128xbf16>
    %cst_320 = arith.constant dense<0.000000e+00> : vector<64x128xf32>
    %608 = tpu.matmul %605, %607, %cst_320 {dimension_numbers = #tpu.dot_dimension_numbers<[1], [0], [0], [1], [0, 0, 1, 1], [], []>} : vector<64x128xbf16>, vector<128x128xbf16>, vector<64x128xf32> -> vector<64x128xf32>
    %609 = arith.addf %588, %608 : vector<64x128xf32>
    %c9_321 = arith.constant 9 : index
    %c0_322 = arith.constant 0 : index
    %c0_323 = arith.constant 0 : index
    %610 = vector.load %arg3[%c9_321, %c0_322, %c0_323] : memref<16x1x128xf32, #tpu.memory_space<vmem>>, vector<1x1x128xf32>
    %611 = vector.shape_cast %610 : vector<1x1x128xf32> to vector<1x128xf32>
    %612 = vector.broadcast %611 : vector<1x128xf32> to vector<64x128xf32>
    %613 = arith.addf %609, %612 : vector<64x128xf32>
    %cst_324 = arith.constant 0.000000e+00 : f32
    %614 = vector.broadcast %cst_324 : f32 to vector<64x128xf32>
    %615 = arith.maximumf %613, %614 : vector<64x128xf32>
    %cst_325 = arith.constant 0.000000e+00 : f32
    %616 = vector.broadcast %cst_325 : f32 to vector<64x128xf32>
    %cst_326 = arith.constant 0.000000e+00 : f32
    %617 = vector.broadcast %cst_326 : f32 to vector<8x128xf32>
    %618 = vector.extract_strided_slice %615 {offsets = [0, 0], sizes = [56, 128], strides = [1, 1]} : vector<64x128xf32> to vector<56x128xf32>
    %619 = tpu.concatenate %617, %618 in 0 : vector<8x128xf32>, vector<56x128xf32> -> vector<64x128xf32>
    %c-8_i32_327 = arith.constant -8 : i32
    %620 = vector.broadcast %c-8_i32_327 : i32 to vector<64x1xi32>
    %621 = arith.addi %16, %620 : vector<64x1xi32>
    %c0_i32_328 = arith.constant 0 : i32
    %622 = vector.broadcast %c0_i32_328 : i32 to vector<64x1xi32>
    %623 = arith.cmpi sge, %621, %622 : vector<64x1xi32>
    %c-8_i32_329 = arith.constant -8 : i32
    %624 = vector.broadcast %c-8_i32_329 : i32 to vector<64x1xi32>
    %625 = arith.addi %16, %624 : vector<64x1xi32>
    %c32_i32_330 = arith.constant 32 : i32
    %626 = vector.broadcast %c32_i32_330 : i32 to vector<64x1xi32>
    %627 = arith.cmpi slt, %625, %626 : vector<64x1xi32>
    %628 = arith.andi %623, %627 : vector<64x1xi1>
    %cst_331 = arith.constant 0.000000e+00 : f32
    %629 = vector.broadcast %cst_331 : f32 to vector<64x128xf32>
    %630 = vector.shape_cast %628 : vector<64x1xi1> to vector<64x1xi1>
    %631 = vector.broadcast %630 : vector<64x1xi1> to vector<64x128xi1>
    %632 = arith.select %631, %619, %629 : vector<64x128xi1>, vector<64x128xf32>
    %633 = arith.truncf %632 : vector<64x128xf32> to vector<64x128xbf16>
    %c10 = arith.constant 10 : index
    %c0_332 = arith.constant 0 : index
    %c0_333 = arith.constant 0 : index
    %c0_334 = arith.constant 0 : index
    %634 = vector.load %arg2[%c10, %c0_332, %c0_333, %c0_334] : memref<16x3x128x128xbf16, #tpu.memory_space<vmem>>, vector<1x1x128x128xbf16>
    %635 = vector.shape_cast %634 : vector<1x1x128x128xbf16> to vector<128x128xbf16>
    %cst_335 = arith.constant dense<0.000000e+00> : vector<64x128xf32>
    %636 = tpu.matmul %633, %635, %cst_335 {dimension_numbers = #tpu.dot_dimension_numbers<[1], [0], [0], [1], [0, 0, 1, 1], [], []>} : vector<64x128xbf16>, vector<128x128xbf16>, vector<64x128xf32> -> vector<64x128xf32>
    %637 = arith.addf %616, %636 : vector<64x128xf32>
    %638 = arith.truncf %615 : vector<64x128xf32> to vector<64x128xbf16>
    %c10_336 = arith.constant 10 : index
    %c1_337 = arith.constant 1 : index
    %c0_338 = arith.constant 0 : index
    %c0_339 = arith.constant 0 : index
    %639 = vector.load %arg2[%c10_336, %c1_337, %c0_338, %c0_339] : memref<16x3x128x128xbf16, #tpu.memory_space<vmem>>, vector<1x1x128x128xbf16>
    %640 = vector.shape_cast %639 : vector<1x1x128x128xbf16> to vector<128x128xbf16>
    %cst_340 = arith.constant dense<0.000000e+00> : vector<64x128xf32>
    %641 = tpu.matmul %638, %640, %cst_340 {dimension_numbers = #tpu.dot_dimension_numbers<[1], [0], [0], [1], [0, 0, 1, 1], [], []>} : vector<64x128xbf16>, vector<128x128xbf16>, vector<64x128xf32> -> vector<64x128xf32>
    %642 = arith.addf %637, %641 : vector<64x128xf32>
    %cst_341 = arith.constant 0.000000e+00 : f32
    %643 = vector.broadcast %cst_341 : f32 to vector<8x128xf32>
    %644 = vector.extract_strided_slice %615 {offsets = [8, 0], sizes = [56, 128], strides = [1, 1]} : vector<64x128xf32> to vector<56x128xf32>
    %645 = tpu.concatenate %644, %643 in 0 : vector<56x128xf32>, vector<8x128xf32> -> vector<64x128xf32>
    %c8_i32_342 = arith.constant 8 : i32
    %646 = vector.broadcast %c8_i32_342 : i32 to vector<64x1xi32>
    %647 = arith.addi %16, %646 : vector<64x1xi32>
    %c0_i32_343 = arith.constant 0 : i32
    %648 = vector.broadcast %c0_i32_343 : i32 to vector<64x1xi32>
    %649 = arith.cmpi sge, %647, %648 : vector<64x1xi32>
    %c8_i32_344 = arith.constant 8 : i32
    %650 = vector.broadcast %c8_i32_344 : i32 to vector<64x1xi32>
    %651 = arith.addi %16, %650 : vector<64x1xi32>
    %c32_i32_345 = arith.constant 32 : i32
    %652 = vector.broadcast %c32_i32_345 : i32 to vector<64x1xi32>
    %653 = arith.cmpi slt, %651, %652 : vector<64x1xi32>
    %654 = arith.andi %649, %653 : vector<64x1xi1>
    %cst_346 = arith.constant 0.000000e+00 : f32
    %655 = vector.broadcast %cst_346 : f32 to vector<64x128xf32>
    %656 = vector.shape_cast %654 : vector<64x1xi1> to vector<64x1xi1>
    %657 = vector.broadcast %656 : vector<64x1xi1> to vector<64x128xi1>
    %658 = arith.select %657, %645, %655 : vector<64x128xi1>, vector<64x128xf32>
    %659 = arith.truncf %658 : vector<64x128xf32> to vector<64x128xbf16>
    %c10_347 = arith.constant 10 : index
    %c2_348 = arith.constant 2 : index
    %c0_349 = arith.constant 0 : index
    %c0_350 = arith.constant 0 : index
    %660 = vector.load %arg2[%c10_347, %c2_348, %c0_349, %c0_350] : memref<16x3x128x128xbf16, #tpu.memory_space<vmem>>, vector<1x1x128x128xbf16>
    %661 = vector.shape_cast %660 : vector<1x1x128x128xbf16> to vector<128x128xbf16>
    %cst_351 = arith.constant dense<0.000000e+00> : vector<64x128xf32>
    %662 = tpu.matmul %659, %661, %cst_351 {dimension_numbers = #tpu.dot_dimension_numbers<[1], [0], [0], [1], [0, 0, 1, 1], [], []>} : vector<64x128xbf16>, vector<128x128xbf16>, vector<64x128xf32> -> vector<64x128xf32>
    %663 = arith.addf %642, %662 : vector<64x128xf32>
    %c10_352 = arith.constant 10 : index
    %c0_353 = arith.constant 0 : index
    %c0_354 = arith.constant 0 : index
    %664 = vector.load %arg3[%c10_352, %c0_353, %c0_354] : memref<16x1x128xf32, #tpu.memory_space<vmem>>, vector<1x1x128xf32>
    %665 = vector.shape_cast %664 : vector<1x1x128xf32> to vector<1x128xf32>
    %666 = vector.broadcast %665 : vector<1x128xf32> to vector<64x128xf32>
    %667 = arith.addf %663, %666 : vector<64x128xf32>
    %cst_355 = arith.constant 0.000000e+00 : f32
    %668 = vector.broadcast %cst_355 : f32 to vector<64x128xf32>
    %669 = arith.maximumf %667, %668 : vector<64x128xf32>
    %cst_356 = arith.constant 0.000000e+00 : f32
    %670 = vector.broadcast %cst_356 : f32 to vector<64x128xf32>
    %cst_357 = arith.constant 0.000000e+00 : f32
    %671 = vector.broadcast %cst_357 : f32 to vector<8x128xf32>
    %672 = vector.extract_strided_slice %669 {offsets = [0, 0], sizes = [56, 128], strides = [1, 1]} : vector<64x128xf32> to vector<56x128xf32>
    %673 = tpu.concatenate %671, %672 in 0 : vector<8x128xf32>, vector<56x128xf32> -> vector<64x128xf32>
    %c-8_i32_358 = arith.constant -8 : i32
    %674 = vector.broadcast %c-8_i32_358 : i32 to vector<64x1xi32>
    %675 = arith.addi %16, %674 : vector<64x1xi32>
    %c0_i32_359 = arith.constant 0 : i32
    %676 = vector.broadcast %c0_i32_359 : i32 to vector<64x1xi32>
    %677 = arith.cmpi sge, %675, %676 : vector<64x1xi32>
    %c-8_i32_360 = arith.constant -8 : i32
    %678 = vector.broadcast %c-8_i32_360 : i32 to vector<64x1xi32>
    %679 = arith.addi %16, %678 : vector<64x1xi32>
    %c32_i32_361 = arith.constant 32 : i32
    %680 = vector.broadcast %c32_i32_361 : i32 to vector<64x1xi32>
    %681 = arith.cmpi slt, %679, %680 : vector<64x1xi32>
    %682 = arith.andi %677, %681 : vector<64x1xi1>
    %cst_362 = arith.constant 0.000000e+00 : f32
    %683 = vector.broadcast %cst_362 : f32 to vector<64x128xf32>
    %684 = vector.shape_cast %682 : vector<64x1xi1> to vector<64x1xi1>
    %685 = vector.broadcast %684 : vector<64x1xi1> to vector<64x128xi1>
    %686 = arith.select %685, %673, %683 : vector<64x128xi1>, vector<64x128xf32>
    %687 = arith.truncf %686 : vector<64x128xf32> to vector<64x128xbf16>
    %c11 = arith.constant 11 : index
    %c0_363 = arith.constant 0 : index
    %c0_364 = arith.constant 0 : index
    %c0_365 = arith.constant 0 : index
    %688 = vector.load %arg2[%c11, %c0_363, %c0_364, %c0_365] : memref<16x3x128x128xbf16, #tpu.memory_space<vmem>>, vector<1x1x128x128xbf16>
    %689 = vector.shape_cast %688 : vector<1x1x128x128xbf16> to vector<128x128xbf16>
    %cst_366 = arith.constant dense<0.000000e+00> : vector<64x128xf32>
    %690 = tpu.matmul %687, %689, %cst_366 {dimension_numbers = #tpu.dot_dimension_numbers<[1], [0], [0], [1], [0, 0, 1, 1], [], []>} : vector<64x128xbf16>, vector<128x128xbf16>, vector<64x128xf32> -> vector<64x128xf32>
    %691 = arith.addf %670, %690 : vector<64x128xf32>
    %692 = arith.truncf %669 : vector<64x128xf32> to vector<64x128xbf16>
    %c11_367 = arith.constant 11 : index
    %c1_368 = arith.constant 1 : index
    %c0_369 = arith.constant 0 : index
    %c0_370 = arith.constant 0 : index
    %693 = vector.load %arg2[%c11_367, %c1_368, %c0_369, %c0_370] : memref<16x3x128x128xbf16, #tpu.memory_space<vmem>>, vector<1x1x128x128xbf16>
    %694 = vector.shape_cast %693 : vector<1x1x128x128xbf16> to vector<128x128xbf16>
    %cst_371 = arith.constant dense<0.000000e+00> : vector<64x128xf32>
    %695 = tpu.matmul %692, %694, %cst_371 {dimension_numbers = #tpu.dot_dimension_numbers<[1], [0], [0], [1], [0, 0, 1, 1], [], []>} : vector<64x128xbf16>, vector<128x128xbf16>, vector<64x128xf32> -> vector<64x128xf32>
    %696 = arith.addf %691, %695 : vector<64x128xf32>
    %cst_372 = arith.constant 0.000000e+00 : f32
    %697 = vector.broadcast %cst_372 : f32 to vector<8x128xf32>
    %698 = vector.extract_strided_slice %669 {offsets = [8, 0], sizes = [56, 128], strides = [1, 1]} : vector<64x128xf32> to vector<56x128xf32>
    %699 = tpu.concatenate %698, %697 in 0 : vector<56x128xf32>, vector<8x128xf32> -> vector<64x128xf32>
    %c8_i32_373 = arith.constant 8 : i32
    %700 = vector.broadcast %c8_i32_373 : i32 to vector<64x1xi32>
    %701 = arith.addi %16, %700 : vector<64x1xi32>
    %c0_i32_374 = arith.constant 0 : i32
    %702 = vector.broadcast %c0_i32_374 : i32 to vector<64x1xi32>
    %703 = arith.cmpi sge, %701, %702 : vector<64x1xi32>
    %c8_i32_375 = arith.constant 8 : i32
    %704 = vector.broadcast %c8_i32_375 : i32 to vector<64x1xi32>
    %705 = arith.addi %16, %704 : vector<64x1xi32>
    %c32_i32_376 = arith.constant 32 : i32
    %706 = vector.broadcast %c32_i32_376 : i32 to vector<64x1xi32>
    %707 = arith.cmpi slt, %705, %706 : vector<64x1xi32>
    %708 = arith.andi %703, %707 : vector<64x1xi1>
    %cst_377 = arith.constant 0.000000e+00 : f32
    %709 = vector.broadcast %cst_377 : f32 to vector<64x128xf32>
    %710 = vector.shape_cast %708 : vector<64x1xi1> to vector<64x1xi1>
    %711 = vector.broadcast %710 : vector<64x1xi1> to vector<64x128xi1>
    %712 = arith.select %711, %699, %709 : vector<64x128xi1>, vector<64x128xf32>
    %713 = arith.truncf %712 : vector<64x128xf32> to vector<64x128xbf16>
    %c11_378 = arith.constant 11 : index
    %c2_379 = arith.constant 2 : index
    %c0_380 = arith.constant 0 : index
    %c0_381 = arith.constant 0 : index
    %714 = vector.load %arg2[%c11_378, %c2_379, %c0_380, %c0_381] : memref<16x3x128x128xbf16, #tpu.memory_space<vmem>>, vector<1x1x128x128xbf16>
    %715 = vector.shape_cast %714 : vector<1x1x128x128xbf16> to vector<128x128xbf16>
    %cst_382 = arith.constant dense<0.000000e+00> : vector<64x128xf32>
    %716 = tpu.matmul %713, %715, %cst_382 {dimension_numbers = #tpu.dot_dimension_numbers<[1], [0], [0], [1], [0, 0, 1, 1], [], []>} : vector<64x128xbf16>, vector<128x128xbf16>, vector<64x128xf32> -> vector<64x128xf32>
    %717 = arith.addf %696, %716 : vector<64x128xf32>
    %c11_383 = arith.constant 11 : index
    %c0_384 = arith.constant 0 : index
    %c0_385 = arith.constant 0 : index
    %718 = vector.load %arg3[%c11_383, %c0_384, %c0_385] : memref<16x1x128xf32, #tpu.memory_space<vmem>>, vector<1x1x128xf32>
    %719 = vector.shape_cast %718 : vector<1x1x128xf32> to vector<1x128xf32>
    %720 = vector.broadcast %719 : vector<1x128xf32> to vector<64x128xf32>
    %721 = arith.addf %717, %720 : vector<64x128xf32>
    %cst_386 = arith.constant 0.000000e+00 : f32
    %722 = vector.broadcast %cst_386 : f32 to vector<64x128xf32>
    %723 = arith.maximumf %721, %722 : vector<64x128xf32>
    %cst_387 = arith.constant 0.000000e+00 : f32
    %724 = vector.broadcast %cst_387 : f32 to vector<8x128xf32>
    %725 = vector.extract_strided_slice %723 {offsets = [8, 0], sizes = [56, 128], strides = [1, 1]} : vector<64x128xf32> to vector<56x128xf32>
    %726 = tpu.concatenate %725, %724 in 0 : vector<56x128xf32>, vector<8x128xf32> -> vector<64x128xf32>
    %c8_i32_388 = arith.constant 8 : i32
    %727 = vector.broadcast %c8_i32_388 : i32 to vector<64x1xi32>
    %728 = arith.addi %16, %727 : vector<64x1xi32>
    %c0_i32_389 = arith.constant 0 : i32
    %729 = vector.broadcast %c0_i32_389 : i32 to vector<64x1xi32>
    %730 = arith.cmpi sge, %728, %729 : vector<64x1xi32>
    %c8_i32_390 = arith.constant 8 : i32
    %731 = vector.broadcast %c8_i32_390 : i32 to vector<64x1xi32>
    %732 = arith.addi %16, %731 : vector<64x1xi32>
    %c32_i32_391 = arith.constant 32 : i32
    %733 = vector.broadcast %c32_i32_391 : i32 to vector<64x1xi32>
    %734 = arith.cmpi slt, %732, %733 : vector<64x1xi32>
    %735 = arith.andi %730, %734 : vector<64x1xi1>
    %cst_392 = arith.constant 0.000000e+00 : f32
    %736 = vector.broadcast %cst_392 : f32 to vector<64x128xf32>
    %737 = vector.shape_cast %735 : vector<64x1xi1> to vector<64x1xi1>
    %738 = vector.broadcast %737 : vector<64x1xi1> to vector<64x128xi1>
    %739 = arith.select %738, %726, %736 : vector<64x128xi1>, vector<64x128xf32>
    %740 = arith.maximumf %723, %739 : vector<64x128xf32>
    %c96_i32 = arith.constant 96 : i32
    %741 = tpu.dynamic_rotate %740 by %c96_i32 dim 1 : vector<64x128xf32>, i32 -> vector<64x128xf32>
    %742 = arith.maximumf %740, %741 : vector<64x128xf32>
    %cst_393 = arith.constant 0.000000e+00 : f32
    %743 = vector.broadcast %cst_393 : f32 to vector<64x128xf32>
    %cst_394 = arith.constant 0.000000e+00 : f32
    %744 = vector.broadcast %cst_394 : f32 to vector<16x128xf32>
    %745 = vector.extract_strided_slice %742 {offsets = [0, 0], sizes = [48, 128], strides = [1, 1]} : vector<64x128xf32> to vector<48x128xf32>
    %746 = tpu.concatenate %744, %745 in 0 : vector<16x128xf32>, vector<48x128xf32> -> vector<64x128xf32>
    %c-16_i32 = arith.constant -16 : i32
    %747 = vector.broadcast %c-16_i32 : i32 to vector<64x1xi32>
    %748 = arith.addi %16, %747 : vector<64x1xi32>
    %c0_i32_395 = arith.constant 0 : i32
    %749 = vector.broadcast %c0_i32_395 : i32 to vector<64x1xi32>
    %750 = arith.cmpi sge, %748, %749 : vector<64x1xi32>
    %c-16_i32_396 = arith.constant -16 : i32
    %751 = vector.broadcast %c-16_i32_396 : i32 to vector<64x1xi32>
    %752 = arith.addi %16, %751 : vector<64x1xi32>
    %c32_i32_397 = arith.constant 32 : i32
    %753 = vector.broadcast %c32_i32_397 : i32 to vector<64x1xi32>
    %754 = arith.cmpi slt, %752, %753 : vector<64x1xi32>
    %755 = arith.andi %750, %754 : vector<64x1xi1>
    %cst_398 = arith.constant 0.000000e+00 : f32
    %756 = vector.broadcast %cst_398 : f32 to vector<64x128xf32>
    %757 = vector.shape_cast %755 : vector<64x1xi1> to vector<64x1xi1>
    %758 = vector.broadcast %757 : vector<64x1xi1> to vector<64x128xi1>
    %759 = arith.select %758, %746, %756 : vector<64x128xi1>, vector<64x128xf32>
    %760 = arith.truncf %759 : vector<64x128xf32> to vector<64x128xbf16>
    %c12 = arith.constant 12 : index
    %c0_399 = arith.constant 0 : index
    %c0_400 = arith.constant 0 : index
    %c0_401 = arith.constant 0 : index
    %761 = vector.load %arg2[%c12, %c0_399, %c0_400, %c0_401] : memref<16x3x128x128xbf16, #tpu.memory_space<vmem>>, vector<1x1x128x128xbf16>
    %762 = vector.shape_cast %761 : vector<1x1x128x128xbf16> to vector<128x128xbf16>
    %cst_402 = arith.constant dense<0.000000e+00> : vector<64x128xf32>
    %763 = tpu.matmul %760, %762, %cst_402 {dimension_numbers = #tpu.dot_dimension_numbers<[1], [0], [0], [1], [0, 0, 1, 1], [], []>} : vector<64x128xbf16>, vector<128x128xbf16>, vector<64x128xf32> -> vector<64x128xf32>
    %764 = arith.addf %743, %763 : vector<64x128xf32>
    %765 = arith.truncf %742 : vector<64x128xf32> to vector<64x128xbf16>
    %c12_403 = arith.constant 12 : index
    %c1_404 = arith.constant 1 : index
    %c0_405 = arith.constant 0 : index
    %c0_406 = arith.constant 0 : index
    %766 = vector.load %arg2[%c12_403, %c1_404, %c0_405, %c0_406] : memref<16x3x128x128xbf16, #tpu.memory_space<vmem>>, vector<1x1x128x128xbf16>
    %767 = vector.shape_cast %766 : vector<1x1x128x128xbf16> to vector<128x128xbf16>
    %cst_407 = arith.constant dense<0.000000e+00> : vector<64x128xf32>
    %768 = tpu.matmul %765, %767, %cst_407 {dimension_numbers = #tpu.dot_dimension_numbers<[1], [0], [0], [1], [0, 0, 1, 1], [], []>} : vector<64x128xbf16>, vector<128x128xbf16>, vector<64x128xf32> -> vector<64x128xf32>
    %769 = arith.addf %764, %768 : vector<64x128xf32>
    %cst_408 = arith.constant 0.000000e+00 : f32
    %770 = vector.broadcast %cst_408 : f32 to vector<16x128xf32>
    %771 = vector.extract_strided_slice %742 {offsets = [16, 0], sizes = [48, 128], strides = [1, 1]} : vector<64x128xf32> to vector<48x128xf32>
    %772 = tpu.concatenate %771, %770 in 0 : vector<48x128xf32>, vector<16x128xf32> -> vector<64x128xf32>
    %c16_i32 = arith.constant 16 : i32
    %773 = vector.broadcast %c16_i32 : i32 to vector<64x1xi32>
    %774 = arith.addi %16, %773 : vector<64x1xi32>
    %c0_i32_409 = arith.constant 0 : i32
    %775 = vector.broadcast %c0_i32_409 : i32 to vector<64x1xi32>
    %776 = arith.cmpi sge, %774, %775 : vector<64x1xi32>
    %c16_i32_410 = arith.constant 16 : i32
    %777 = vector.broadcast %c16_i32_410 : i32 to vector<64x1xi32>
    %778 = arith.addi %16, %777 : vector<64x1xi32>
    %c32_i32_411 = arith.constant 32 : i32
    %779 = vector.broadcast %c32_i32_411 : i32 to vector<64x1xi32>
    %780 = arith.cmpi slt, %778, %779 : vector<64x1xi32>
    %781 = arith.andi %776, %780 : vector<64x1xi1>
    %cst_412 = arith.constant 0.000000e+00 : f32
    %782 = vector.broadcast %cst_412 : f32 to vector<64x128xf32>
    %783 = vector.shape_cast %781 : vector<64x1xi1> to vector<64x1xi1>
    %784 = vector.broadcast %783 : vector<64x1xi1> to vector<64x128xi1>
    %785 = arith.select %784, %772, %782 : vector<64x128xi1>, vector<64x128xf32>
    %786 = arith.truncf %785 : vector<64x128xf32> to vector<64x128xbf16>
    %c12_413 = arith.constant 12 : index
    %c2_414 = arith.constant 2 : index
    %c0_415 = arith.constant 0 : index
    %c0_416 = arith.constant 0 : index
    %787 = vector.load %arg2[%c12_413, %c2_414, %c0_415, %c0_416] : memref<16x3x128x128xbf16, #tpu.memory_space<vmem>>, vector<1x1x128x128xbf16>
    %788 = vector.shape_cast %787 : vector<1x1x128x128xbf16> to vector<128x128xbf16>
    %cst_417 = arith.constant dense<0.000000e+00> : vector<64x128xf32>
    %789 = tpu.matmul %786, %788, %cst_417 {dimension_numbers = #tpu.dot_dimension_numbers<[1], [0], [0], [1], [0, 0, 1, 1], [], []>} : vector<64x128xbf16>, vector<128x128xbf16>, vector<64x128xf32> -> vector<64x128xf32>
    %790 = arith.addf %769, %789 : vector<64x128xf32>
    %c12_418 = arith.constant 12 : index
    %c0_419 = arith.constant 0 : index
    %c0_420 = arith.constant 0 : index
    %791 = vector.load %arg3[%c12_418, %c0_419, %c0_420] : memref<16x1x128xf32, #tpu.memory_space<vmem>>, vector<1x1x128xf32>
    %792 = vector.shape_cast %791 : vector<1x1x128xf32> to vector<1x128xf32>
    %793 = vector.broadcast %792 : vector<1x128xf32> to vector<64x128xf32>
    %794 = arith.addf %790, %793 : vector<64x128xf32>
    %cst_421 = arith.constant 0.000000e+00 : f32
    %795 = vector.broadcast %cst_421 : f32 to vector<64x128xf32>
    %796 = arith.maximumf %794, %795 : vector<64x128xf32>
    %cst_422 = arith.constant 0.000000e+00 : f32
    %797 = vector.broadcast %cst_422 : f32 to vector<64x128xf32>
    %cst_423 = arith.constant 0.000000e+00 : f32
    %798 = vector.broadcast %cst_423 : f32 to vector<16x128xf32>
    %799 = vector.extract_strided_slice %796 {offsets = [0, 0], sizes = [48, 128], strides = [1, 1]} : vector<64x128xf32> to vector<48x128xf32>
    %800 = tpu.concatenate %798, %799 in 0 : vector<16x128xf32>, vector<48x128xf32> -> vector<64x128xf32>
    %c-16_i32_424 = arith.constant -16 : i32
    %801 = vector.broadcast %c-16_i32_424 : i32 to vector<64x1xi32>
    %802 = arith.addi %16, %801 : vector<64x1xi32>
    %c0_i32_425 = arith.constant 0 : i32
    %803 = vector.broadcast %c0_i32_425 : i32 to vector<64x1xi32>
    %804 = arith.cmpi sge, %802, %803 : vector<64x1xi32>
    %c-16_i32_426 = arith.constant -16 : i32
    %805 = vector.broadcast %c-16_i32_426 : i32 to vector<64x1xi32>
    %806 = arith.addi %16, %805 : vector<64x1xi32>
    %c32_i32_427 = arith.constant 32 : i32
    %807 = vector.broadcast %c32_i32_427 : i32 to vector<64x1xi32>
    %808 = arith.cmpi slt, %806, %807 : vector<64x1xi32>
    %809 = arith.andi %804, %808 : vector<64x1xi1>
    %cst_428 = arith.constant 0.000000e+00 : f32
    %810 = vector.broadcast %cst_428 : f32 to vector<64x128xf32>
    %811 = vector.shape_cast %809 : vector<64x1xi1> to vector<64x1xi1>
    %812 = vector.broadcast %811 : vector<64x1xi1> to vector<64x128xi1>
    %813 = arith.select %812, %800, %810 : vector<64x128xi1>, vector<64x128xf32>
    %814 = arith.truncf %813 : vector<64x128xf32> to vector<64x128xbf16>
    %c13 = arith.constant 13 : index
    %c0_429 = arith.constant 0 : index
    %c0_430 = arith.constant 0 : index
    %c0_431 = arith.constant 0 : index
    %815 = vector.load %arg2[%c13, %c0_429, %c0_430, %c0_431] : memref<16x3x128x128xbf16, #tpu.memory_space<vmem>>, vector<1x1x128x128xbf16>
    %816 = vector.shape_cast %815 : vector<1x1x128x128xbf16> to vector<128x128xbf16>
    %cst_432 = arith.constant dense<0.000000e+00> : vector<64x128xf32>
    %817 = tpu.matmul %814, %816, %cst_432 {dimension_numbers = #tpu.dot_dimension_numbers<[1], [0], [0], [1], [0, 0, 1, 1], [], []>} : vector<64x128xbf16>, vector<128x128xbf16>, vector<64x128xf32> -> vector<64x128xf32>
    %818 = arith.addf %797, %817 : vector<64x128xf32>
    %819 = arith.truncf %796 : vector<64x128xf32> to vector<64x128xbf16>
    %c13_433 = arith.constant 13 : index
    %c1_434 = arith.constant 1 : index
    %c0_435 = arith.constant 0 : index
    %c0_436 = arith.constant 0 : index
    %820 = vector.load %arg2[%c13_433, %c1_434, %c0_435, %c0_436] : memref<16x3x128x128xbf16, #tpu.memory_space<vmem>>, vector<1x1x128x128xbf16>
    %821 = vector.shape_cast %820 : vector<1x1x128x128xbf16> to vector<128x128xbf16>
    %cst_437 = arith.constant dense<0.000000e+00> : vector<64x128xf32>
    %822 = tpu.matmul %819, %821, %cst_437 {dimension_numbers = #tpu.dot_dimension_numbers<[1], [0], [0], [1], [0, 0, 1, 1], [], []>} : vector<64x128xbf16>, vector<128x128xbf16>, vector<64x128xf32> -> vector<64x128xf32>
    %823 = arith.addf %818, %822 : vector<64x128xf32>
    %cst_438 = arith.constant 0.000000e+00 : f32
    %824 = vector.broadcast %cst_438 : f32 to vector<16x128xf32>
    %825 = vector.extract_strided_slice %796 {offsets = [16, 0], sizes = [48, 128], strides = [1, 1]} : vector<64x128xf32> to vector<48x128xf32>
    %826 = tpu.concatenate %825, %824 in 0 : vector<48x128xf32>, vector<16x128xf32> -> vector<64x128xf32>
    %c16_i32_439 = arith.constant 16 : i32
    %827 = vector.broadcast %c16_i32_439 : i32 to vector<64x1xi32>
    %828 = arith.addi %16, %827 : vector<64x1xi32>
    %c0_i32_440 = arith.constant 0 : i32
    %829 = vector.broadcast %c0_i32_440 : i32 to vector<64x1xi32>
    %830 = arith.cmpi sge, %828, %829 : vector<64x1xi32>
    %c16_i32_441 = arith.constant 16 : i32
    %831 = vector.broadcast %c16_i32_441 : i32 to vector<64x1xi32>
    %832 = arith.addi %16, %831 : vector<64x1xi32>
    %c32_i32_442 = arith.constant 32 : i32
    %833 = vector.broadcast %c32_i32_442 : i32 to vector<64x1xi32>
    %834 = arith.cmpi slt, %832, %833 : vector<64x1xi32>
    %835 = arith.andi %830, %834 : vector<64x1xi1>
    %cst_443 = arith.constant 0.000000e+00 : f32
    %836 = vector.broadcast %cst_443 : f32 to vector<64x128xf32>
    %837 = vector.shape_cast %835 : vector<64x1xi1> to vector<64x1xi1>
    %838 = vector.broadcast %837 : vector<64x1xi1> to vector<64x128xi1>
    %839 = arith.select %838, %826, %836 : vector<64x128xi1>, vector<64x128xf32>
    %840 = arith.truncf %839 : vector<64x128xf32> to vector<64x128xbf16>
    %c13_444 = arith.constant 13 : index
    %c2_445 = arith.constant 2 : index
    %c0_446 = arith.constant 0 : index
    %c0_447 = arith.constant 0 : index
    %841 = vector.load %arg2[%c13_444, %c2_445, %c0_446, %c0_447] : memref<16x3x128x128xbf16, #tpu.memory_space<vmem>>, vector<1x1x128x128xbf16>
    %842 = vector.shape_cast %841 : vector<1x1x128x128xbf16> to vector<128x128xbf16>
    %cst_448 = arith.constant dense<0.000000e+00> : vector<64x128xf32>
    %843 = tpu.matmul %840, %842, %cst_448 {dimension_numbers = #tpu.dot_dimension_numbers<[1], [0], [0], [1], [0, 0, 1, 1], [], []>} : vector<64x128xbf16>, vector<128x128xbf16>, vector<64x128xf32> -> vector<64x128xf32>
    %844 = arith.addf %823, %843 : vector<64x128xf32>
    %c13_449 = arith.constant 13 : index
    %c0_450 = arith.constant 0 : index
    %c0_451 = arith.constant 0 : index
    %845 = vector.load %arg3[%c13_449, %c0_450, %c0_451] : memref<16x1x128xf32, #tpu.memory_space<vmem>>, vector<1x1x128xf32>
    %846 = vector.shape_cast %845 : vector<1x1x128xf32> to vector<1x128xf32>
    %847 = vector.broadcast %846 : vector<1x128xf32> to vector<64x128xf32>
    %848 = arith.addf %844, %847 : vector<64x128xf32>
    %cst_452 = arith.constant 0.000000e+00 : f32
    %849 = vector.broadcast %cst_452 : f32 to vector<64x128xf32>
    %850 = arith.maximumf %848, %849 : vector<64x128xf32>
    %cst_453 = arith.constant 0.000000e+00 : f32
    %851 = vector.broadcast %cst_453 : f32 to vector<64x128xf32>
    %cst_454 = arith.constant 0.000000e+00 : f32
    %852 = vector.broadcast %cst_454 : f32 to vector<16x128xf32>
    %853 = vector.extract_strided_slice %850 {offsets = [0, 0], sizes = [48, 128], strides = [1, 1]} : vector<64x128xf32> to vector<48x128xf32>
    %854 = tpu.concatenate %852, %853 in 0 : vector<16x128xf32>, vector<48x128xf32> -> vector<64x128xf32>
    %c-16_i32_455 = arith.constant -16 : i32
    %855 = vector.broadcast %c-16_i32_455 : i32 to vector<64x1xi32>
    %856 = arith.addi %16, %855 : vector<64x1xi32>
    %c0_i32_456 = arith.constant 0 : i32
    %857 = vector.broadcast %c0_i32_456 : i32 to vector<64x1xi32>
    %858 = arith.cmpi sge, %856, %857 : vector<64x1xi32>
    %c-16_i32_457 = arith.constant -16 : i32
    %859 = vector.broadcast %c-16_i32_457 : i32 to vector<64x1xi32>
    %860 = arith.addi %16, %859 : vector<64x1xi32>
    %c32_i32_458 = arith.constant 32 : i32
    %861 = vector.broadcast %c32_i32_458 : i32 to vector<64x1xi32>
    %862 = arith.cmpi slt, %860, %861 : vector<64x1xi32>
    %863 = arith.andi %858, %862 : vector<64x1xi1>
    %cst_459 = arith.constant 0.000000e+00 : f32
    %864 = vector.broadcast %cst_459 : f32 to vector<64x128xf32>
    %865 = vector.shape_cast %863 : vector<64x1xi1> to vector<64x1xi1>
    %866 = vector.broadcast %865 : vector<64x1xi1> to vector<64x128xi1>
    %867 = arith.select %866, %854, %864 : vector<64x128xi1>, vector<64x128xf32>
    %868 = arith.truncf %867 : vector<64x128xf32> to vector<64x128xbf16>
    %c14 = arith.constant 14 : index
    %c0_460 = arith.constant 0 : index
    %c0_461 = arith.constant 0 : index
    %c0_462 = arith.constant 0 : index
    %869 = vector.load %arg2[%c14, %c0_460, %c0_461, %c0_462] : memref<16x3x128x128xbf16, #tpu.memory_space<vmem>>, vector<1x1x128x128xbf16>
    %870 = vector.shape_cast %869 : vector<1x1x128x128xbf16> to vector<128x128xbf16>
    %cst_463 = arith.constant dense<0.000000e+00> : vector<64x128xf32>
    %871 = tpu.matmul %868, %870, %cst_463 {dimension_numbers = #tpu.dot_dimension_numbers<[1], [0], [0], [1], [0, 0, 1, 1], [], []>} : vector<64x128xbf16>, vector<128x128xbf16>, vector<64x128xf32> -> vector<64x128xf32>
    %872 = arith.addf %851, %871 : vector<64x128xf32>
    %873 = arith.truncf %850 : vector<64x128xf32> to vector<64x128xbf16>
    %c14_464 = arith.constant 14 : index
    %c1_465 = arith.constant 1 : index
    %c0_466 = arith.constant 0 : index
    %c0_467 = arith.constant 0 : index
    %874 = vector.load %arg2[%c14_464, %c1_465, %c0_466, %c0_467] : memref<16x3x128x128xbf16, #tpu.memory_space<vmem>>, vector<1x1x128x128xbf16>
    %875 = vector.shape_cast %874 : vector<1x1x128x128xbf16> to vector<128x128xbf16>
    %cst_468 = arith.constant dense<0.000000e+00> : vector<64x128xf32>
    %876 = tpu.matmul %873, %875, %cst_468 {dimension_numbers = #tpu.dot_dimension_numbers<[1], [0], [0], [1], [0, 0, 1, 1], [], []>} : vector<64x128xbf16>, vector<128x128xbf16>, vector<64x128xf32> -> vector<64x128xf32>
    %877 = arith.addf %872, %876 : vector<64x128xf32>
    %cst_469 = arith.constant 0.000000e+00 : f32
    %878 = vector.broadcast %cst_469 : f32 to vector<16x128xf32>
    %879 = vector.extract_strided_slice %850 {offsets = [16, 0], sizes = [48, 128], strides = [1, 1]} : vector<64x128xf32> to vector<48x128xf32>
    %880 = tpu.concatenate %879, %878 in 0 : vector<48x128xf32>, vector<16x128xf32> -> vector<64x128xf32>
    %c16_i32_470 = arith.constant 16 : i32
    %881 = vector.broadcast %c16_i32_470 : i32 to vector<64x1xi32>
    %882 = arith.addi %16, %881 : vector<64x1xi32>
    %c0_i32_471 = arith.constant 0 : i32
    %883 = vector.broadcast %c0_i32_471 : i32 to vector<64x1xi32>
    %884 = arith.cmpi sge, %882, %883 : vector<64x1xi32>
    %c16_i32_472 = arith.constant 16 : i32
    %885 = vector.broadcast %c16_i32_472 : i32 to vector<64x1xi32>
    %886 = arith.addi %16, %885 : vector<64x1xi32>
    %c32_i32_473 = arith.constant 32 : i32
    %887 = vector.broadcast %c32_i32_473 : i32 to vector<64x1xi32>
    %888 = arith.cmpi slt, %886, %887 : vector<64x1xi32>
    %889 = arith.andi %884, %888 : vector<64x1xi1>
    %cst_474 = arith.constant 0.000000e+00 : f32
    %890 = vector.broadcast %cst_474 : f32 to vector<64x128xf32>
    %891 = vector.shape_cast %889 : vector<64x1xi1> to vector<64x1xi1>
    %892 = vector.broadcast %891 : vector<64x1xi1> to vector<64x128xi1>
    %893 = arith.select %892, %880, %890 : vector<64x128xi1>, vector<64x128xf32>
    %894 = arith.truncf %893 : vector<64x128xf32> to vector<64x128xbf16>
    %c14_475 = arith.constant 14 : index
    %c2_476 = arith.constant 2 : index
    %c0_477 = arith.constant 0 : index
    %c0_478 = arith.constant 0 : index
    %895 = vector.load %arg2[%c14_475, %c2_476, %c0_477, %c0_478] : memref<16x3x128x128xbf16, #tpu.memory_space<vmem>>, vector<1x1x128x128xbf16>
    %896 = vector.shape_cast %895 : vector<1x1x128x128xbf16> to vector<128x128xbf16>
    %cst_479 = arith.constant dense<0.000000e+00> : vector<64x128xf32>
    %897 = tpu.matmul %894, %896, %cst_479 {dimension_numbers = #tpu.dot_dimension_numbers<[1], [0], [0], [1], [0, 0, 1, 1], [], []>} : vector<64x128xbf16>, vector<128x128xbf16>, vector<64x128xf32> -> vector<64x128xf32>
    %898 = arith.addf %877, %897 : vector<64x128xf32>
    %c14_480 = arith.constant 14 : index
    %c0_481 = arith.constant 0 : index
    %c0_482 = arith.constant 0 : index
    %899 = vector.load %arg3[%c14_480, %c0_481, %c0_482] : memref<16x1x128xf32, #tpu.memory_space<vmem>>, vector<1x1x128xf32>
    %900 = vector.shape_cast %899 : vector<1x1x128xf32> to vector<1x128xf32>
    %901 = vector.broadcast %900 : vector<1x128xf32> to vector<64x128xf32>
    %902 = arith.addf %898, %901 : vector<64x128xf32>
    %cst_483 = arith.constant 0.000000e+00 : f32
    %903 = vector.broadcast %cst_483 : f32 to vector<64x128xf32>
    %904 = arith.maximumf %902, %903 : vector<64x128xf32>
    %cst_484 = arith.constant 0.000000e+00 : f32
    %905 = vector.broadcast %cst_484 : f32 to vector<64x128xf32>
    %cst_485 = arith.constant 0.000000e+00 : f32
    %906 = vector.broadcast %cst_485 : f32 to vector<16x128xf32>
    %907 = vector.extract_strided_slice %904 {offsets = [0, 0], sizes = [48, 128], strides = [1, 1]} : vector<64x128xf32> to vector<48x128xf32>
    %908 = tpu.concatenate %906, %907 in 0 : vector<16x128xf32>, vector<48x128xf32> -> vector<64x128xf32>
    %c-16_i32_486 = arith.constant -16 : i32
    %909 = vector.broadcast %c-16_i32_486 : i32 to vector<64x1xi32>
    %910 = arith.addi %16, %909 : vector<64x1xi32>
    %c0_i32_487 = arith.constant 0 : i32
    %911 = vector.broadcast %c0_i32_487 : i32 to vector<64x1xi32>
    %912 = arith.cmpi sge, %910, %911 : vector<64x1xi32>
    %c-16_i32_488 = arith.constant -16 : i32
    %913 = vector.broadcast %c-16_i32_488 : i32 to vector<64x1xi32>
    %914 = arith.addi %16, %913 : vector<64x1xi32>
    %c32_i32_489 = arith.constant 32 : i32
    %915 = vector.broadcast %c32_i32_489 : i32 to vector<64x1xi32>
    %916 = arith.cmpi slt, %914, %915 : vector<64x1xi32>
    %917 = arith.andi %912, %916 : vector<64x1xi1>
    %cst_490 = arith.constant 0.000000e+00 : f32
    %918 = vector.broadcast %cst_490 : f32 to vector<64x128xf32>
    %919 = vector.shape_cast %917 : vector<64x1xi1> to vector<64x1xi1>
    %920 = vector.broadcast %919 : vector<64x1xi1> to vector<64x128xi1>
    %921 = arith.select %920, %908, %918 : vector<64x128xi1>, vector<64x128xf32>
    %922 = arith.truncf %921 : vector<64x128xf32> to vector<64x128xbf16>
    %c15 = arith.constant 15 : index
    %c0_491 = arith.constant 0 : index
    %c0_492 = arith.constant 0 : index
    %c0_493 = arith.constant 0 : index
    %923 = vector.load %arg2[%c15, %c0_491, %c0_492, %c0_493] : memref<16x3x128x128xbf16, #tpu.memory_space<vmem>>, vector<1x1x128x128xbf16>
    %924 = vector.shape_cast %923 : vector<1x1x128x128xbf16> to vector<128x128xbf16>
    %cst_494 = arith.constant dense<0.000000e+00> : vector<64x128xf32>
    %925 = tpu.matmul %922, %924, %cst_494 {dimension_numbers = #tpu.dot_dimension_numbers<[1], [0], [0], [1], [0, 0, 1, 1], [], []>} : vector<64x128xbf16>, vector<128x128xbf16>, vector<64x128xf32> -> vector<64x128xf32>
    %926 = arith.addf %905, %925 : vector<64x128xf32>
    %927 = arith.truncf %904 : vector<64x128xf32> to vector<64x128xbf16>
    %c15_495 = arith.constant 15 : index
    %c1_496 = arith.constant 1 : index
    %c0_497 = arith.constant 0 : index
    %c0_498 = arith.constant 0 : index
    %928 = vector.load %arg2[%c15_495, %c1_496, %c0_497, %c0_498] : memref<16x3x128x128xbf16, #tpu.memory_space<vmem>>, vector<1x1x128x128xbf16>
    %929 = vector.shape_cast %928 : vector<1x1x128x128xbf16> to vector<128x128xbf16>
    %cst_499 = arith.constant dense<0.000000e+00> : vector<64x128xf32>
    %930 = tpu.matmul %927, %929, %cst_499 {dimension_numbers = #tpu.dot_dimension_numbers<[1], [0], [0], [1], [0, 0, 1, 1], [], []>} : vector<64x128xbf16>, vector<128x128xbf16>, vector<64x128xf32> -> vector<64x128xf32>
    %931 = arith.addf %926, %930 : vector<64x128xf32>
    %cst_500 = arith.constant 0.000000e+00 : f32
    %932 = vector.broadcast %cst_500 : f32 to vector<16x128xf32>
    %933 = vector.extract_strided_slice %904 {offsets = [16, 0], sizes = [48, 128], strides = [1, 1]} : vector<64x128xf32> to vector<48x128xf32>
    %934 = tpu.concatenate %933, %932 in 0 : vector<48x128xf32>, vector<16x128xf32> -> vector<64x128xf32>
    %c16_i32_501 = arith.constant 16 : i32
    %935 = vector.broadcast %c16_i32_501 : i32 to vector<64x1xi32>
    %936 = arith.addi %16, %935 : vector<64x1xi32>
    %c0_i32_502 = arith.constant 0 : i32
    %937 = vector.broadcast %c0_i32_502 : i32 to vector<64x1xi32>
    %938 = arith.cmpi sge, %936, %937 : vector<64x1xi32>
    %c16_i32_503 = arith.constant 16 : i32
    %939 = vector.broadcast %c16_i32_503 : i32 to vector<64x1xi32>
    %940 = arith.addi %16, %939 : vector<64x1xi32>
    %c32_i32_504 = arith.constant 32 : i32
    %941 = vector.broadcast %c32_i32_504 : i32 to vector<64x1xi32>
    %942 = arith.cmpi slt, %940, %941 : vector<64x1xi32>
    %943 = arith.andi %938, %942 : vector<64x1xi1>
    %cst_505 = arith.constant 0.000000e+00 : f32
    %944 = vector.broadcast %cst_505 : f32 to vector<64x128xf32>
    %945 = vector.shape_cast %943 : vector<64x1xi1> to vector<64x1xi1>
    %946 = vector.broadcast %945 : vector<64x1xi1> to vector<64x128xi1>
    %947 = arith.select %946, %934, %944 : vector<64x128xi1>, vector<64x128xf32>
    %948 = arith.truncf %947 : vector<64x128xf32> to vector<64x128xbf16>
    %c15_506 = arith.constant 15 : index
    %c2_507 = arith.constant 2 : index
    %c0_508 = arith.constant 0 : index
    %c0_509 = arith.constant 0 : index
    %949 = vector.load %arg2[%c15_506, %c2_507, %c0_508, %c0_509] : memref<16x3x128x128xbf16, #tpu.memory_space<vmem>>, vector<1x1x128x128xbf16>
    %950 = vector.shape_cast %949 : vector<1x1x128x128xbf16> to vector<128x128xbf16>
    %cst_510 = arith.constant dense<0.000000e+00> : vector<64x128xf32>
    %951 = tpu.matmul %948, %950, %cst_510 {dimension_numbers = #tpu.dot_dimension_numbers<[1], [0], [0], [1], [0, 0, 1, 1], [], []>} : vector<64x128xbf16>, vector<128x128xbf16>, vector<64x128xf32> -> vector<64x128xf32>
    %952 = arith.addf %931, %951 : vector<64x128xf32>
    %c15_511 = arith.constant 15 : index
    %c0_512 = arith.constant 0 : index
    %c0_513 = arith.constant 0 : index
    %953 = vector.load %arg3[%c15_511, %c0_512, %c0_513] : memref<16x1x128xf32, #tpu.memory_space<vmem>>, vector<1x1x128xf32>
    %954 = vector.shape_cast %953 : vector<1x1x128xf32> to vector<1x128xf32>
    %955 = vector.broadcast %954 : vector<1x128xf32> to vector<64x128xf32>
    %956 = arith.addf %952, %955 : vector<64x128xf32>
    %cst_514 = arith.constant 0.000000e+00 : f32
    %957 = vector.broadcast %cst_514 : f32 to vector<64x128xf32>
    %958 = arith.maximumf %956, %957 : vector<64x128xf32>
    %cst_515 = arith.constant 0.000000e+00 : f32
    %959 = vector.broadcast %cst_515 : f32 to vector<16x128xf32>
    %960 = vector.extract_strided_slice %958 {offsets = [16, 0], sizes = [48, 128], strides = [1, 1]} : vector<64x128xf32> to vector<48x128xf32>
    %961 = tpu.concatenate %960, %959 in 0 : vector<48x128xf32>, vector<16x128xf32> -> vector<64x128xf32>
    %c16_i32_516 = arith.constant 16 : i32
    %962 = vector.broadcast %c16_i32_516 : i32 to vector<64x1xi32>
    %963 = arith.addi %16, %962 : vector<64x1xi32>
    %c0_i32_517 = arith.constant 0 : i32
    %964 = vector.broadcast %c0_i32_517 : i32 to vector<64x1xi32>
    %965 = arith.cmpi sge, %963, %964 : vector<64x1xi32>
    %c16_i32_518 = arith.constant 16 : i32
    %966 = vector.broadcast %c16_i32_518 : i32 to vector<64x1xi32>
    %967 = arith.addi %16, %966 : vector<64x1xi32>
    %c32_i32_519 = arith.constant 32 : i32
    %968 = vector.broadcast %c32_i32_519 : i32 to vector<64x1xi32>
    %969 = arith.cmpi slt, %967, %968 : vector<64x1xi32>
    %970 = arith.andi %965, %969 : vector<64x1xi1>
    %cst_520 = arith.constant 0.000000e+00 : f32
    %971 = vector.broadcast %cst_520 : f32 to vector<64x128xf32>
    %972 = vector.shape_cast %970 : vector<64x1xi1> to vector<64x1xi1>
    %973 = vector.broadcast %972 : vector<64x1xi1> to vector<64x128xi1>
    %974 = arith.select %973, %961, %971 : vector<64x128xi1>, vector<64x128xf32>
    %975 = arith.maximumf %958, %974 : vector<64x128xf32>
    %c96_i32_521 = arith.constant 96 : i32
    %976 = tpu.dynamic_rotate %975 by %c96_i32_521 dim 1 : vector<64x128xf32>, i32 -> vector<64x128xf32>
    %977 = arith.maximumf %975, %976 : vector<64x128xf32>
    %978 = vector.extract_strided_slice %977 {offsets = [0, 0], sizes = [1, 128], strides = [1, 1]} : vector<64x128xf32> to vector<1x128xf32>
    %979 = vector.extract_strided_slice %977 {offsets = [32, 0], sizes = [1, 128], strides = [1, 1]} : vector<64x128xf32> to vector<1x128xf32>
    %980 = tpu.concatenate %978, %979 in 0 : vector<1x128xf32>, vector<1x128xf32> -> vector<2x128xf32>
    %c0_522 = arith.constant 0 : index
    %c0_523 = arith.constant 0 : index
    %981 = vector.load %arg4[%c0_522, %c0_523] : memref<128x10xf32, #tpu.memory_space<vmem>>, vector<128x10xf32>
    %cst_524 = arith.constant dense<0.000000e+00> : vector<2x10xf32>
    %982 = tpu.matmul %980, %981, %cst_524 {dimension_numbers = #tpu.dot_dimension_numbers<[1], [0], [0], [1], [0, 0, 1, 1], [], []>} : vector<2x128xf32>, vector<128x10xf32>, vector<2x10xf32> -> vector<2x10xf32>
    %c0_525 = arith.constant 0 : index
    %c0_526 = arith.constant 0 : index
    %983 = vector.load %arg5[%c0_525, %c0_526] : memref<1x10xf32, #tpu.memory_space<vmem>>, vector<1x10xf32>
    %984 = vector.broadcast %983 : vector<1x10xf32> to vector<2x10xf32>
    %985 = arith.addf %982, %984 : vector<2x10xf32>
    %c0_527 = arith.constant 0 : index
    %c0_528 = arith.constant 0 : index
    %986 = vector.load %arg6[%c0_527, %c0_528] : memref<2x10xf32, #tpu.memory_space<vmem>>, vector<2x10xf32>
    tpu.vector_store %arg6[%c0_527, %c0_528], %985 {strides = array<i32>} : memref<2x10xf32, #tpu.memory_space<vmem>>, vector<2x10xf32>,
    return
  }
  func.func @transform_0(%arg0: i32) -> (i32, i32) {
    %c0_i32 = arith.constant 0 : i32
    %c0_i32_0 = arith.constant 0 : i32
    %c0_i32_1 = arith.constant 0 : i32
    return %c0_i32, %c0_i32_0 : i32, i32
  }
  func.func @transform_1(%arg0: i32) -> (i32, i32, i32, i32) {
    %c0_i32 = arith.constant 0 : i32
    %c0_i32_0 = arith.constant 0 : i32
    %c0_i32_1 = arith.constant 0 : i32
    %c0_i32_2 = arith.constant 0 : i32
    %c0_i32_3 = arith.constant 0 : i32
    return %c0_i32, %c0_i32_0, %c0_i32_1, %c0_i32_2 : i32, i32, i32, i32
  }
  func.func @transform_2(%arg0: i32) -> (i32, i32, i32) {
    %c0_i32 = arith.constant 0 : i32
    %c0_i32_0 = arith.constant 0 : i32
    %c0_i32_1 = arith.constant 0 : i32
    %c0_i32_2 = arith.constant 0 : i32
    return %c0_i32, %c0_i32_0, %c0_i32_1 : i32, i32, i32
  }
  func.func @transform_3(%arg0: i32) -> (i32, i32) {
    %c0_i32 = arith.constant 0 : i32
    %c0_i32_0 = arith.constant 0 : i32
    %c0_i32_1 = arith.constant 0 : i32
    return %c0_i32, %c0_i32_0 : i32, i32
  }
  func.func @transform_4(%arg0: i32) -> (i32, i32) {
    %c0_i32 = arith.constant 0 : i32
    %c0_i32_0 = arith.constant 0 : i32
    %c0_i32_1 = arith.constant 0 : i32
    return %c0_i32, %c0_i32_0 : i32, i32
  }
  func.func @transform_5(%arg0: i32) -> (i32, i32) {
    %c0_i32 = arith.constant 0 : i32
    %c0_i32_0 = arith.constant 0 : i32
    %c0_i32_1 = arith.constant 0 : i32
    return %c0_i32, %c0_i32_0 : i32, i32
  }
}

</mosaic_0001>

<llo_original>
// kernel: custom_vgg_forward.1
$region0: #{custom_vgg_forward.1}
  #allocation0 [shape = 'u32[]', space=smem, size = 0x4, offset = 0x4, fixed_abs, tag = 'smem constant byte address 0x4 - core index']
  #allocation1 [shape = 'u32[72,128]{1,0:T(1,128)}', space=vmem, size = 0x9000, scoped, tag = 'internal scratch']
  %s0 = inlined_call_operand.vmem [shape: bf16[64,128], index: 0, kind: input, shape index: {}]
  %s1 = inlined_call_operand.hbm [shape: bf16[16,3,128,128], index: 1, kind: input, shape index: {}]
  %s2 = inlined_call_operand.hbm [shape: f32[16,1,128], index: 2, kind: input, shape index: {}]
  %s3 = inlined_call_operand.vmem [shape: f32[128,10], index: 3, kind: input, shape index: {}]
  %s4 = inlined_call_operand.hbm [shape: f32[1,10], index: 4, kind: input, shape index: {}]
  %s5 = inlined_call_operand.hbm [shape: f32[2,10], index: 5, kind: output, shape index: {}]
  %s6 = sld [smem:[#allocation0]]
  $region42: #{custom_vgg_forward.1} parent=0
    _
  %s8 = ssub.s32 1, %s6
  %s9 = scalar_select 0, %s8, %s6
  $region1: #{custom_vgg_forward.1} parent=0
    #allocation2 [shape = 'u8[1572864]{0}', space=vmem, size = 0x180000, scoped, tag = 'input window, operand 1, single buffered']
    #allocation3 [shape = 's32[1]{0}', space=sflag, size = 0x4, scoped, tag = 'scoped memory for custom_vgg_forward.1']
    #allocation4 [shape = 's32[1]{0}', space=sflag, size = 0x4, scoped, tag = 'scoped memory for custom_vgg_forward.1']
    #allocation5 [shape = 'u8[8192]{0}', space=vmem, size = 0x2000, scoped, tag = 'input window, operand 2, single buffered']
    #allocation6 [shape = 's32[1]{0}', space=sflag, size = 0x4, scoped, tag = 'scoped memory for custom_vgg_forward.1']
    #allocation7 [shape = 'u8[512]{0}', space=vmem, size = 0x400, scoped, tag = 'input window, operand 4, single buffered']
    #allocation8 [shape = 'u8[1024]{0}', space=vmem, size = 0x400, scoped, tag = 'output window, operand 0, single buffered']
    %10 = vsyncpa [#allocation3], 0
    %11 = vsyncpa [#allocation6], 0
    %12 = vsyncpa [#allocation4], 0
    // Predicated region
    $region2: #{custom_vgg_forward.1} parent=1 // pred_check
      _
    $region3: #{custom_vgg_forward.1} parent=1 // pred_check_branch
      %14 = sbr.rel (0) target = $region5
    $region4: #{custom_vgg_forward.1} parent=1 // pred_region
      _
    $region5: #{custom_vgg_forward.1} parent=1 // pred_fallthru
      _
    // Predicated region
    $region6: #{custom_vgg_forward.1} parent=1 // pred_check
      _
    $region7: #{custom_vgg_forward.1} parent=1 // pred_check_branch
      %16 = sbr.rel (0) target = $region9
    $region8: #{custom_vgg_forward.1} parent=1 // pred_region
      %18 = vsyncadd [#allocation3], 0
      %s19 = sshll.u32 %s1, 4
      %s20 = int_to_ptr.hbm [resolvable:$true] %s19
      %s21 = sshll.u32 [#allocation2], 4
      %s22 = int_to_ptr.vmem [resolvable:$true] %s21
      %27 = dma.hbm_to_vmem [thread:$0]  %s20, 49152, %s22, [#allocation3], 64, 64, 4
    $region9: #{custom_vgg_forward.1} parent=1 // pred_fallthru
      _
    // Predicated region
    $region10: #{custom_vgg_forward.1} parent=1 // pred_check
      _
    $region11: #{custom_vgg_forward.1} parent=1 // pred_check_branch
      %29 = sbr.rel (0) target = $region13
    $region12: #{custom_vgg_forward.1} parent=1 // pred_region
      %31 = vsyncadd [#allocation6], 0
      %s32 = sshll.u32 %s2, 4
      %s33 = int_to_ptr.hbm [resolvable:$true] %s32
      %s34 = sshll.u32 [#allocation5], 4
      %s35 = int_to_ptr.vmem [resolvable:$true] %s34
      %40 = dma.hbm_to_vmem [thread:$0]  %s33, 256, %s35, [#allocation6], 16, 16, 1
    $region13: #{custom_vgg_forward.1} parent=1 // pred_fallthru
      _
    // Predicated region
    $region14: #{custom_vgg_forward.1} parent=1 // pred_check
      _
    $region15: #{custom_vgg_forward.1} parent=1 // pred_check_branch
      %42 = sbr.rel (0) target = $region17
    $region16: #{custom_vgg_forward.1} parent=1 // pred_region
      _
    $region17: #{custom_vgg_forward.1} parent=1 // pred_fallthru
      _
    // Predicated region
    $region18: #{custom_vgg_forward.1} parent=1 // pred_check
      _
    $region19: #{custom_vgg_forward.1} parent=1 // pred_check_branch
      %44 = sbr.rel (0) target = $region21
    $region20: #{custom_vgg_forward.1} parent=1 // pred_region
      %46 = vsyncadd [#allocation6], 0
      %s48 = sshll.u32 %s4, 4
      %s49 = int_to_ptr.hbm [resolvable:$true] %s48
      %s50 = sshll.u32 [#allocation7], 4
      %s51 = int_to_ptr.vmem [resolvable:$true] %s50
      %53 = dma.hbm_to_vmem [thread:$0]  %s49, 16, %s51, [#allocation6]
    $region21: #{custom_vgg_forward.1} parent=1 // pred_fallthru
      _
    // Predicated region
    $region22: #{custom_vgg_forward.1} parent=1 // pred_check
      _
    $region23: #{custom_vgg_forward.1} parent=1 // pred_check_branch
      %55 = sbr.rel (0) target = $region25
    $region24: #{custom_vgg_forward.1} parent=1 // pred_region
      %57 = dma.done [#allocation3], 49152
    $region25: #{custom_vgg_forward.1} parent=1 // pred_fallthru
      _
    // Predicated region
    $region26: #{custom_vgg_forward.1} parent=1 // pred_check
      _
    $region27: #{custom_vgg_forward.1} parent=1 // pred_check_branch
      %59 = sbr.rel (0) target = $region29
    $region28: #{custom_vgg_forward.1} parent=1 // pred_region
      %61 = dma.done [#allocation6], 256
    $region29: #{custom_vgg_forward.1} parent=1 // pred_fallthru
      _
    // Predicated region
    $region30: #{custom_vgg_forward.1} parent=1 // pred_check
      _
    $region31: #{custom_vgg_forward.1} parent=1 // pred_check_branch
      %63 = sbr.rel (0) target = $region33
    $region32: #{custom_vgg_forward.1} parent=1 // pred_region
      %65 = dma.done [#allocation6], 16
    $region33: #{custom_vgg_forward.1} parent=1 // pred_fallthru
      _
    %v66 = vlaneseq
    %v67 = vshrl.u32 %v66, 7
    %v68 = vadd.s32 %v67, 8
    %v69 = vadd.s32 %v67, 16
    %v70 = vadd.s32 %v67, 24
    %v71 = vadd.s32 %v67, 32
    %v72 = vadd.s32 %v67, 40
    %v73 = vadd.s32 %v67, 48
    %v74 = vadd.s32 %v67, 56
    %vm75 = vcmp.lt.s32.totalorder %v67, 0
    %v76 = vsub.s32 0, %v67
    %v77 = vsel %vm75, %v76, %v67
    %v78 = vshrl.u32 %v77, 5
    %v79 = vand.u32 %v77, 31
    %v80 = vsub.s32 0, %v79
    %v81 = vsel %vm75, %v80, %v79
    %vm82 = vcmp.lt.s32.totalorder %v68, 0
    %v83 = vsub.s32 0, %v68
    %v84 = vsel %vm82, %v83, %v68
    %v85 = vshrl.u32 %v84, 5
    %v86 = vand.u32 %v84, 31
    %v87 = vsub.s32 0, %v86
    %v88 = vsel %vm82, %v87, %v86
    %vm89 = vcmp.lt.s32.totalorder %v69, 0
    %v90 = vsub.s32 0, %v69
    %v91 = vsel %vm89, %v90, %v69
    %v92 = vshrl.u32 %v91, 5
    %v93 = vand.u32 %v91, 31
    %v94 = vsub.s32 0, %v93
    %v95 = vsel %vm89, %v94, %v93
    %vm96 = vcmp.lt.s32.totalorder %v70, 0
    %v97 = vsub.s32 0, %v70
    %v98 = vsel %vm96, %v97, %v70
    %v99 = vshrl.u32 %v98, 5
    %v100 = vand.u32 %v98, 31
    %v101 = vsub.s32 0, %v100
    %v102 = vsel %vm96, %v101, %v100
    %vm103 = vcmp.lt.s32.totalorder %v71, 0
    %v104 = vsub.s32 0, %v71
    %v105 = vsel %vm103, %v104, %v71
    %v106 = vshrl.u32 %v105, 5
    %v107 = vand.u32 %v105, 31
    %v108 = vsub.s32 0, %v107
    %v109 = vsel %vm103, %v108, %v107
    %vm110 = vcmp.lt.s32.totalorder %v72, 0
    %v111 = vsub.s32 0, %v72
    %v112 = vsel %vm110, %v111, %v72
    %v113 = vshrl.u32 %v112, 5
    %v114 = vand.u32 %v112, 31
    %v115 = vsub.s32 0, %v114
    %v116 = vsel %vm110, %v115, %v114
    %vm117 = vcmp.lt.s32.totalorder %v73, 0
    %v118 = vsub.s32 0, %v73
    %v119 = vsel %vm117, %v118, %v73
    %v120 = vshrl.u32 %v119, 5
    %v121 = vand.u32 %v119, 31
    %v122 = vsub.s32 0, %v121
    %v123 = vsel %vm117, %v122, %v121
    %vm124 = vcmp.lt.s32.totalorder %v74, 0
    %v125 = vsub.s32 0, %v74
    %v126 = vsel %vm124, %v125, %v74
    %v127 = vshrl.u32 %v126, 5
    %v128 = vand.u32 %v126, 31
    %v129 = vsub.s32 0, %v128
    %v130 = vsel %vm124, %v129, %v128
    %vm131 = vcmp.ne.s32.totalorder %v81, 0
    %vm132 = vcmp.ne.s32.totalorder %v88, 0
    %vm133 = vcmp.ne.s32.totalorder %v95, 0
    %vm134 = vcmp.ne.s32.totalorder %v102, 0
    %vm135 = vcmp.ne.s32.totalorder %v109, 0
    %vm136 = vcmp.ne.s32.totalorder %v116, 0
    %vm137 = vcmp.ne.s32.totalorder %v123, 0
    %vm138 = vcmp.ne.s32.totalorder %v130, 0
    %vm139 = vcmp.lt.s32.totalorder %v81, 0
    %vm140 = vcmp.lt.s32.totalorder %v88, 0
    %vm141 = vcmp.lt.s32.totalorder %v95, 0
    %vm142 = vcmp.lt.s32.totalorder %v102, 0
    %vm143 = vcmp.lt.s32.totalorder %v109, 0
    %vm144 = vcmp.lt.s32.totalorder %v116, 0
    %vm145 = vcmp.lt.s32.totalorder %v123, 0
    %vm146 = vcmp.lt.s32.totalorder %v130, 0
    %vm147 = vmand %vm139, %vm131
    %vm148 = vmand %vm140, %vm132
    %vm149 = vmand %vm141, %vm133
    %vm150 = vmand %vm142, %vm134
    %vm151 = vmand %vm143, %vm135
    %vm152 = vmand %vm144, %vm136
    %vm153 = vmand %vm145, %vm137
    %vm154 = vmand %vm146, %vm138
    %v155 = vadd.s32 %v81, 32
    %v156 = vadd.s32 %v88, 32
    %v157 = vadd.s32 %v95, 32
    %v158 = vadd.s32 %v102, 32
    %v159 = vadd.s32 %v109, 32
    %v160 = vadd.s32 %v116, 32
    %v161 = vadd.s32 %v123, 32
    %v162 = vadd.s32 %v130, 32
    %v163 = vsel %vm147, %v155, %v81
    %v164 = vsel %vm148, %v156, %v88
    %v165 = vsel %vm149, %v157, %v95
    %v166 = vsel %vm150, %v158, %v102
    %v167 = vsel %vm151, %v159, %v109
    %v168 = vsel %vm152, %v160, %v116
    %v169 = vsel %vm153, %v161, %v123
    %v170 = vsel %vm154, %v162, %v130
    %v171 = vld [vmem:[%s0] sm:$0xf]
    %v172 = vld [vmem:[%s0 + $0x4] sm:$0xf]
    %v173 = vld [vmem:[%s0 + $0x8] sm:$0xf]
    %v174 = vld [vmem:[%s0 + $0xc] sm:$0xf]
    %v175 = vld [vmem:[%s0 + $0x10] sm:$0xf]
    %v176 = vld [vmem:[%s0 + $0x14] sm:$0xf]
    %v177 = vld [vmem:[%s0 + $0x18] sm:$0xf]
    %v178 = vld [vmem:[%s0 + $0x1c] sm:$0xf]
    %v179 = vunpack.c.l.bf16 %v171
    %v180 = vunpack.c.l.bf16 %v172
    %v181 = vunpack.c.l.bf16 %v173
    %v182 = vunpack.c.l.bf16 %v174
    %v183 = vunpack.c.l.bf16 %v175
    %v184 = vunpack.c.l.bf16 %v176
    %v185 = vunpack.c.l.bf16 %v177
    %v186 = vunpack.c.l.bf16 %v178
    %vm195 = vcmask 1040384
    %v196 = vrot.slane %v179, 7
    %v197 = vrot.slane %v180, 7
    %v198 = vsel %vm195, %v196, %v197
    %v199 = vrot.slane %v181, 7
    %v200 = vsel %vm195, %v197, %v199
    %v201 = vrot.slane %v182, 7
    %v202 = vsel %vm195, %v199, %v201
    %v203 = vrot.slane %v183, 7
    %v204 = vsel %vm195, %v201, %v203
    %v205 = vrot.slane %v184, 7
    %v206 = vsel %vm195, %v203, %v205
    %v207 = vrot.slane %v185, 7
    %v208 = vsel %vm195, %v205, %v207
    %v209 = vrot.slane %v186, 7
    %v210 = vsel %vm195, %v207, %v209
    %v219 = vsel %vm195, 0.0, %v196
    %v220 = vadd.s32 %v163, 4294967295
    %v221 = vadd.s32 %v164, 4294967295
    %v222 = vadd.s32 %v165, 4294967295
    %v223 = vadd.s32 %v166, 4294967295
    %v224 = vadd.s32 %v167, 4294967295
    %v225 = vadd.s32 %v168, 4294967295
    %v226 = vadd.s32 %v169, 4294967295
    %v227 = vadd.s32 %v170, 4294967295
    %vm228 = vcmp.ge.s32.totalorder %v220, 0
    %vm229 = vcmp.ge.s32.totalorder %v221, 0
    %vm230 = vcmp.ge.s32.totalorder %v222, 0
    %vm231 = vcmp.ge.s32.totalorder %v223, 0
    %vm232 = vcmp.ge.s32.totalorder %v224, 0
    %vm233 = vcmp.ge.s32.totalorder %v225, 0
    %vm234 = vcmp.ge.s32.totalorder %v226, 0
    %vm235 = vcmp.ge.s32.totalorder %v227, 0
    %vm236 = vcmp.lt.s32.totalorder %v220, 32
    %vm237 = vcmp.lt.s32.totalorder %v221, 32
    %vm238 = vcmp.lt.s32.totalorder %v222, 32
    %vm239 = vcmp.lt.s32.totalorder %v223, 32
    %vm240 = vcmp.lt.s32.totalorder %v224, 32
    %vm241 = vcmp.lt.s32.totalorder %v225, 32
    %vm242 = vcmp.lt.s32.totalorder %v226, 32
    %vm243 = vcmp.lt.s32.totalorder %v227, 32
    %vm244 = vmand %vm228, %vm236
    %vm245 = vmand %vm229, %vm237
    %vm246 = vmand %vm230, %vm238
    %vm247 = vmand %vm231, %vm239
    %vm248 = vmand %vm232, %vm240
    %vm249 = vmand %vm233, %vm241
    %vm250 = vmand %vm234, %vm242
    %vm251 = vmand %vm235, %vm243
    %v252 = vsel %vm244, 1, 0
    %v253 = vsel %vm245, 1, 0
    %v254 = vsel %vm246, 1, 0
    %v255 = vsel %vm247, 1, 0
    %v256 = vsel %vm248, 1, 0
    %v257 = vsel %vm249, 1, 0
    %v258 = vsel %vm250, 1, 0
    %v259 = vsel %vm251, 1, 0
    %vm260 = vcmp.eq.s32.totalorder %v252, 1
    %vm261 = vcmp.eq.s32.totalorder %v253, 1
    %vm262 = vcmp.eq.s32.totalorder %v254, 1
    %vm263 = vcmp.eq.s32.totalorder %v255, 1
    %vm264 = vcmp.eq.s32.totalorder %v256, 1
    %vm265 = vcmp.eq.s32.totalorder %v257, 1
    %vm266 = vcmp.eq.s32.totalorder %v258, 1
    %vm267 = vcmp.eq.s32.totalorder %v259, 1
    %v268 = vsel %vm260, %v219, 0.0
    %v269 = vsel %vm261, %v198, 0.0
    %v270 = vsel %vm262, %v200, 0.0
    %v271 = vsel %vm263, %v202, 0.0
    %v272 = vsel %vm264, %v204, 0.0
    %v273 = vsel %vm265, %v206, 0.0
    %v274 = vsel %vm266, %v208, 0.0
    %v275 = vsel %vm267, %v210, 0.0
    %v276 = vpack.c.bf16 %v269, %v268
    %v277 = vpack.c.bf16 %v271, %v270
    %v278 = vpack.c.bf16 %v273, %v272
    %v279 = vpack.c.bf16 %v275, %v274
    %v280 = vld [vmem:[#allocation2] sm:$0xf]
    %v281 = vld [vmem:[#allocation2 + $0x4] sm:$0xf]
    %v282 = vld [vmem:[#allocation2 + $0x8] sm:$0xf]
    %v283 = vld [vmem:[#allocation2 + $0xc] sm:$0xf]
    %v284 = vld [vmem:[#allocation2 + $0x10] sm:$0xf]
    %v285 = vld [vmem:[#allocation2 + $0x14] sm:$0xf]
    %v286 = vld [vmem:[#allocation2 + $0x18] sm:$0xf]
    %v287 = vld [vmem:[#allocation2 + $0x1c] sm:$0xf]
    %v288 = vld [vmem:[#allocation2 + $0x20] sm:$0xf]
    %v289 = vld [vmem:[#allocation2 + $0x24] sm:$0xf]
    %v290 = vld [vmem:[#allocation2 + $0x28] sm:$0xf]
    %v291 = vld [vmem:[#allocation2 + $0x2c] sm:$0xf]
    %v292 = vld [vmem:[#allocation2 + $0x30] sm:$0xf]
    %v293 = vld [vmem:[#allocation2 + $0x34] sm:$0xf]
    %v294 = vld [vmem:[#allocation2 + $0x38] sm:$0xf]
    %v295 = vld [vmem:[#allocation2 + $0x3c] sm:$0xf]
    %s296 = scalar_lea.vmem [#allocation2], 64
    %v297 = vld [vmem:[%s296] sm:$0xf]
    %v298 = vld [vmem:[%s296 + $0x4] sm:$0xf]
    %v299 = vld [vmem:[%s296 + $0x8] sm:$0xf]
    %v300 = vld [vmem:[%s296 + $0xc] sm:$0xf]
    %v301 = vld [vmem:[%s296 + $0x10] sm:$0xf]
    %v302 = vld [vmem:[%s296 + $0x14] sm:$0xf]
    %v303 = vld [vmem:[%s296 + $0x18] sm:$0xf]
    %v304 = vld [vmem:[%s296 + $0x1c] sm:$0xf]
    %v305 = vld [vmem:[%s296 + $0x20] sm:$0xf]
    %v306 = vld [vmem:[%s296 + $0x24] sm:$0xf]
    %v307 = vld [vmem:[%s296 + $0x28] sm:$0xf]
    %v308 = vld [vmem:[%s296 + $0x2c] sm:$0xf]
    %v309 = vld [vmem:[%s296 + $0x30] sm:$0xf]
    %v310 = vld [vmem:[%s296 + $0x34] sm:$0xf]
    %v311 = vld [vmem:[%s296 + $0x38] sm:$0xf]
    %v312 = vld [vmem:[%s296 + $0x3c] sm:$0xf]
    %v321 = vunpack.c.l.b16 %v171
    %v322 = vunpack.c.l.b16 %v172
    %v323 = vunpack.c.l.b16 %v173
    %v324 = vunpack.c.l.b16 %v174
    %v325 = vunpack.c.l.b16 %v175
    %v326 = vunpack.c.l.b16 %v176
    %v327 = vunpack.c.l.b16 %v177
    %v328 = vunpack.c.l.b16 %v178
    %v329 = vpack.c.b16 %v322, %v321
    %v330 = vpack.c.b16 %v324, %v323
    %v331 = vpack.c.b16 %v326, %v325
    %v332 = vpack.c.b16 %v328, %v327
    %v353 = vunpack.c.l.b16 %v297
    %v354 = vunpack.c.l.b16 %v298
    %v355 = vunpack.c.l.b16 %v299
    %v356 = vunpack.c.l.b16 %v300
    %v357 = vunpack.c.l.b16 %v301
    %v358 = vunpack.c.l.b16 %v302
    %v359 = vunpack.c.l.b16 %v303
    %v360 = vunpack.c.l.b16 %v304
    %v361 = vunpack.c.l.b16 %v305
    %v362 = vunpack.c.l.b16 %v306
    %v363 = vunpack.c.l.b16 %v307
    %v364 = vunpack.c.l.b16 %v308
    %v365 = vunpack.c.l.b16 %v309
    %v366 = vunpack.c.l.b16 %v310
    %v367 = vunpack.c.l.b16 %v311
    %v368 = vunpack.c.l.b16 %v312
    %v369 = vpack.c.b16 %v354, %v353
    %v370 = vpack.c.b16 %v356, %v355
    %v371 = vpack.c.b16 %v358, %v357
    %v372 = vpack.c.b16 %v360, %v359
    %v373 = vpack.c.b16 %v362, %v361
    %v374 = vpack.c.b16 %v364, %v363
    %v375 = vpack.c.b16 %v366, %v365
    %v376 = vpack.c.b16 %v368, %v367
    %385 = vmatpush.bf16.msra.mxu0 %v376
    %386 = vmatpush.bf16.msra.mxu0 %v375
    %387 = vmatpush.bf16.msra.mxu0 %v374
    %388 = vmatpush.bf16.msra.mxu0 %v373
    %389 = vmatpush.bf16.msra.mxu0 %v372
    %390 = vmatpush.bf16.msra.mxu0 %v371
    %391 = vmatpush.bf16.msra.mxu0 %v370
    %392 = vmatpush.bf16.msra.mxu0 %v369
    %393 = vmatmul.bf16.gmra.mxu0 %v329
    %v394 = vpop.f32.mrf.mxu0
    %v395 = vadd.f32 0.0, %v394
    %v396 = vpop.f32.mrf.mxu0
    %v397 = vadd.f32 0.0, %v396
    %398 = vmatmul.bf16.gmra.mxu0 %v330
    %v399 = vpop.f32.mrf.mxu0
    %v400 = vadd.f32 0.0, %v399
    %v401 = vpop.f32.mrf.mxu0
    %v402 = vadd.f32 0.0, %v401
    %403 = vmatmul.bf16.gmra.mxu0 %v331
    %v404 = vpop.f32.mrf.mxu0
    %v405 = vadd.f32 0.0, %v404
    %v406 = vpop.f32.mrf.mxu0
    %v407 = vadd.f32 0.0, %v406
    %408 = vmatmul.bf16.gmra.mxu0 %v332
    %v409 = vpop.f32.mrf.mxu0
    %v410 = vadd.f32 0.0, %v409
    %v411 = vpop.f32.mrf.mxu0
    %v412 = vadd.f32 0.0, %v411
    %413 = vdwg.mxu0
    %v430 = vunpack.c.l.b16 %v280
    %v431 = vunpack.c.l.b16 %v281
    %v432 = vunpack.c.l.b16 %v282
    %v433 = vunpack.c.l.b16 %v283
    %v434 = vunpack.c.l.b16 %v284
    %v435 = vunpack.c.l.b16 %v285
    %v436 = vunpack.c.l.b16 %v286
    %v437 = vunpack.c.l.b16 %v287
    %v438 = vunpack.c.l.b16 %v288
    %v439 = vunpack.c.l.b16 %v289
    %v440 = vunpack.c.l.b16 %v290
    %v441 = vunpack.c.l.b16 %v291
    %v442 = vunpack.c.l.b16 %v292
    %v443 = vunpack.c.l.b16 %v293
    %v444 = vunpack.c.l.b16 %v294
    %v445 = vunpack.c.l.b16 %v295
    %v446 = vpack.c.b16 %v431, %v430
    %v447 = vpack.c.b16 %v433, %v432
    %v448 = vpack.c.b16 %v435, %v434
    %v449 = vpack.c.b16 %v437, %v436
    %v450 = vpack.c.b16 %v439, %v438
    %v451 = vpack.c.b16 %v441, %v440
    %v452 = vpack.c.b16 %v443, %v442
    %v453 = vpack.c.b16 %v445, %v444
    %462 = vmatpush.bf16.msra.mxu0 %v453
    %463 = vmatpush.bf16.msra.mxu0 %v452
    %464 = vmatpush.bf16.msra.mxu0 %v451
    %465 = vmatpush.bf16.msra.mxu0 %v450
    %466 = vmatpush.bf16.msra.mxu0 %v449
    %467 = vmatpush.bf16.msra.mxu0 %v448
    %468 = vmatpush.bf16.msra.mxu0 %v447
    %469 = vmatpush.bf16.msra.mxu0 %v446
    %470 = vmatmul.bf16.gmra.mxu0 %v276
    %v471 = vpop.f32.mrf.mxu0
    %v472 = vadd.f32 %v395, %v471
    %v473 = vpop.f32.mrf.mxu0
    %v474 = vadd.f32 %v397, %v473
    %475 = vmatmul.bf16.gmra.mxu0 %v277
    %v476 = vpop.f32.mrf.mxu0
    %v477 = vadd.f32 %v400, %v476
    %v478 = vpop.f32.mrf.mxu0
    %v479 = vadd.f32 %v402, %v478
    %480 = vmatmul.bf16.gmra.mxu0 %v278
    %v481 = vpop.f32.mrf.mxu0
    %v482 = vadd.f32 %v405, %v481
    %v483 = vpop.f32.mrf.mxu0
    %v484 = vadd.f32 %v407, %v483
    %485 = vmatmul.bf16.gmra.mxu0 %v279
    %v486 = vpop.f32.mrf.mxu0
    %v487 = vadd.f32 %v410, %v486
    %v488 = vpop.f32.mrf.mxu0
    %v489 = vadd.f32 %v412, %v488
    %490 = vdwg.mxu0
    %vm491 = vcmask 1046528
    %v492 = vrot.slane %v179, 1
    %v493 = vrot.slane %v180, 1
    %v494 = vsel %vm491, %v492, %v493
    %v495 = vrot.slane %v181, 1
    %v496 = vsel %vm491, %v493, %v495
    %v497 = vrot.slane %v182, 1
    %v498 = vsel %vm491, %v495, %v497
    %v499 = vrot.slane %v183, 1
    %v500 = vsel %vm491, %v497, %v499
    %v501 = vrot.slane %v184, 1
    %v502 = vsel %vm491, %v499, %v501
    %v503 = vrot.slane %v185, 1
    %v504 = vsel %vm491, %v501, %v503
    %v505 = vrot.slane %v186, 1
    %v506 = vsel %vm491, %v503, %v505
    %v515 = vsel %vm491, %v505, 0.0
    %v516 = vadd.s32 %v163, 1
    %v517 = vadd.s32 %v164, 1
    %v518 = vadd.s32 %v165, 1
    %v519 = vadd.s32 %v166, 1
    %v520 = vadd.s32 %v167, 1
    %v521 = vadd.s32 %v168, 1
    %v522 = vadd.s32 %v169, 1
    %v523 = vadd.s32 %v170, 1
    %vm524 = vcmp.ge.s32.totalorder %v516, 0
    %vm525 = vcmp.ge.s32.totalorder %v517, 0
    %vm526 = vcmp.ge.s32.totalorder %v518, 0
    %vm527 = vcmp.ge.s32.totalorder %v519, 0
    %vm528 = vcmp.ge.s32.totalorder %v520, 0
    %vm529 = vcmp.ge.s32.totalorder %v521, 0
    %vm530 = vcmp.ge.s32.totalorder %v522, 0
    %vm531 = vcmp.ge.s32.totalorder %v523, 0
    %vm532 = vcmp.lt.s32.totalorder %v516, 32
    %vm533 = vcmp.lt.s32.totalorder %v517, 32
    %vm534 = vcmp.lt.s32.totalorder %v518, 32
    %vm535 = vcmp.lt.s32.totalorder %v519, 32
    %vm536 = vcmp.lt.s32.totalorder %v520, 32
    %vm537 = vcmp.lt.s32.totalorder %v521, 32
    %vm538 = vcmp.lt.s32.totalorder %v522, 32
    %vm539 = vcmp.lt.s32.totalorder %v523, 32
    %vm540 = vmand %vm524, %vm532
    %vm541 = vmand %vm525, %vm533
    %vm542 = vmand %vm526, %vm534
    %vm543 = vmand %vm527, %vm535
    %vm544 = vmand %vm528, %vm536
    %vm545 = vmand %vm529, %vm537
    %vm546 = vmand %vm530, %vm538
    %vm547 = vmand %vm531, %vm539
    %v548 = vsel %vm540, 1, 0
    %v549 = vsel %vm541, 1, 0
    %v550 = vsel %vm542, 1, 0
    %v551 = vsel %vm543, 1, 0
    %v552 = vsel %vm544, 1, 0
    %v553 = vsel %vm545, 1, 0
    %v554 = vsel %vm546, 1, 0
    %v555 = vsel %vm547, 1, 0
    %vm556 = vcmp.eq.s32.totalorder %v548, 1
    %vm557 = vcmp.eq.s32.totalorder %v549, 1
    %vm558 = vcmp.eq.s32.totalorder %v550, 1
    %vm559 = vcmp.eq.s32.totalorder %v551, 1
    %vm560 = vcmp.eq.s32.totalorder %v552, 1
    %vm561 = vcmp.eq.s32.totalorder %v553, 1
    %vm562 = vcmp.eq.s32.totalorder %v554, 1
    %vm563 = vcmp.eq.s32.totalorder %v555, 1
    %v564 = vsel %vm556, %v494, 0.0
    %v565 = vsel %vm557, %v496, 0.0
    %v566 = vsel %vm558, %v498, 0.0
    %v567 = vsel %vm559, %v500, 0.0
    %v568 = vsel %vm560, %v502, 0.0
    %v569 = vsel %vm561, %v504, 0.0
    %v570 = vsel %vm562, %v506, 0.0
    %v571 = vsel %vm563, %v515, 0.0
    %v572 = vpack.c.bf16 %v565, %v564
    %v573 = vpack.c.bf16 %v567, %v566
    %v574 = vpack.c.bf16 %v569, %v568
    %v575 = vpack.c.bf16 %v571, %v570
    %s576 = scalar_lea.vmem [#allocation2], 128
    %v577 = vld [vmem:[%s576] sm:$0xf]
    %v578 = vld [vmem:[%s576 + $0x4] sm:$0xf]
    %v579 = vld [vmem:[%s576 + $0x8] sm:$0xf]
    %v580 = vld [vmem:[%s576 + $0xc] sm:$0xf]
    %v581 = vld [vmem:[%s576 + $0x10] sm:$0xf]
    %v582 = vld [vmem:[%s576 + $0x14] sm:$0xf]
    %v583 = vld [vmem:[%s576 + $0x18] sm:$0xf]
    %v584 = vld [vmem:[%s576 + $0x1c] sm:$0xf]
    %v585 = vld [vmem:[%s576 + $0x20] sm:$0xf]
    %v586 = vld [vmem:[%s576 + $0x24] sm:$0xf]
    %v587 = vld [vmem:[%s576 + $0x28] sm:$0xf]
    %v588 = vld [vmem:[%s576 + $0x2c] sm:$0xf]
    %v589 = vld [vmem:[%s576 + $0x30] sm:$0xf]
    %v590 = vld [vmem:[%s576 + $0x34] sm:$0xf]
    %v591 = vld [vmem:[%s576 + $0x38] sm:$0xf]
    %v592 = vld [vmem:[%s576 + $0x3c] sm:$0xf]
    %v609 = vunpack.c.l.b16 %v577
    %v610 = vunpack.c.l.b16 %v578
    %v611 = vunpack.c.l.b16 %v579
    %v612 = vunpack.c.l.b16 %v580
    %v613 = vunpack.c.l.b16 %v581
    %v614 = vunpack.c.l.b16 %v582
    %v615 = vunpack.c.l.b16 %v583
    %v616 = vunpack.c.l.b16 %v584
    %v617 = vunpack.c.l.b16 %v585
    %v618 = vunpack.c.l.b16 %v586
    %v619 = vunpack.c.l.b16 %v587
    %v620 = vunpack.c.l.b16 %v588
    %v621 = vunpack.c.l.b16 %v589
    %v622 = vunpack.c.l.b16 %v590
    %v623 = vunpack.c.l.b16 %v591
    %v624 = vunpack.c.l.b16 %v592
    %v625 = vpack.c.b16 %v610, %v609
    %v626 = vpack.c.b16 %v612, %v611
    %v627 = vpack.c.b16 %v614, %v613
    %v628 = vpack.c.b16 %v616, %v615
    %v629 = vpack.c.b16 %v618, %v617
    %v630 = vpack.c.b16 %v620, %v619
    %v631 = vpack.c.b16 %v622, %v621
    %v632 = vpack.c.b16 %v624, %v623
    %641 = vmatpush.bf16.msra.mxu0 %v632
    %642 = vmatpush.bf16.msra.mxu0 %v631
    %643 = vmatpush.bf16.msra.mxu0 %v630
    %644 = vmatpush.bf16.msra.mxu0 %v629
    %645 = vmatpush.bf16.msra.mxu0 %v628
    %646 = vmatpush.bf16.msra.mxu0 %v627
    %647 = vmatpush.bf16.msra.mxu0 %v626
    %648 = vmatpush.bf16.msra.mxu0 %v625
    %649 = vmatmul.bf16.gmra.mxu0 %v572
    %v650 = vpop.f32.mrf.mxu0
    %v651 = vadd.f32 0.0, %v650
    %v652 = vpop.f32.mrf.mxu0
    %v653 = vadd.f32 0.0, %v652
    %654 = vmatmul.bf16.gmra.mxu0 %v573
    %v655 = vpop.f32.mrf.mxu0
    %v656 = vadd.f32 0.0, %v655
    %v657 = vpop.f32.mrf.mxu0
    %v658 = vadd.f32 0.0, %v657
    %659 = vmatmul.bf16.gmra.mxu0 %v574
    %v660 = vpop.f32.mrf.mxu0
    %v661 = vadd.f32 0.0, %v660
    %v662 = vpop.f32.mrf.mxu0
    %v663 = vadd.f32 0.0, %v662
    %664 = vmatmul.bf16.gmra.mxu0 %v575
    %v665 = vpop.f32.mrf.mxu0
    %v666 = vadd.f32 0.0, %v665
    %v667 = vpop.f32.mrf.mxu0
    %v668 = vadd.f32 0.0, %v667
    %669 = vdwg.mxu0
    %v670 = vadd.f32 %v472, %v651
    %v671 = vadd.f32 %v474, %v653
    %v672 = vadd.f32 %v477, %v656
    %v673 = vadd.f32 %v479, %v658
    %v674 = vadd.f32 %v482, %v661
    %v675 = vadd.f32 %v484, %v663
    %v676 = vadd.f32 %v487, %v666
    %v677 = vadd.f32 %v489, %v668
    %v678 = vld [vmem:[#allocation5] sm:$0x1]
    %v680 = vperm.slane %v678, 0
    %v682 = vadd.f32 %v670, %v680
    %v683 = vadd.f32 %v671, %v680
    %v684 = vadd.f32 %v672, %v680
    %v685 = vadd.f32 %v673, %v680
    %v686 = vadd.f32 %v674, %v680
    %v687 = vadd.f32 %v675, %v680
    %v688 = vadd.f32 %v676, %v680
    %v689 = vadd.f32 %v677, %v680
    %v690 = vmax.f32 %v682, 0.0
    %v691 = vmax.f32 %v683, 0.0
    %v692 = vmax.f32 %v684, 0.0
    %v693 = vmax.f32 %v685, 0.0
    %v694 = vmax.f32 %v686, 0.0
    %v695 = vmax.f32 %v687, 0.0
    %v696 = vmax.f32 %v688, 0.0
    %v697 = vmax.f32 %v689, 0.0
    %v706 = vrot.slane %v690, 7
    %v707 = vrot.slane %v691, 7
    %v708 = vsel %vm195, %v706, %v707
    %v709 = vrot.slane %v692, 7
    %v710 = vsel %vm195, %v707, %v709
    %v711 = vrot.slane %v693, 7
    %v712 = vsel %vm195, %v709, %v711
    %v713 = vrot.slane %v694, 7
    %v714 = vsel %vm195, %v711, %v713
    %v715 = vrot.slane %v695, 7
    %v716 = vsel %vm195, %v713, %v715
    %v717 = vrot.slane %v696, 7
    %v718 = vsel %vm195, %v715, %v717
    %v719 = vrot.slane %v697, 7
    %v720 = vsel %vm195, %v717, %v719
    %v729 = vsel %vm195, 0.0, %v706
    %v730 = vsel %vm260, %v729, 0.0
    %v731 = vsel %vm261, %v708, 0.0
    %v732 = vsel %vm262, %v710, 0.0
    %v733 = vsel %vm263, %v712, 0.0
    %v734 = vsel %vm264, %v714, 0.0
    %v735 = vsel %vm265, %v716, 0.0
    %v736 = vsel %vm266, %v718, 0.0
    %v737 = vsel %vm267, %v720, 0.0
    %v738 = vpack.c.bf16 %v731, %v730
    %v739 = vpack.c.bf16 %v733, %v732
    %v740 = vpack.c.bf16 %v735, %v734
    %v741 = vpack.c.bf16 %v737, %v736
    %s742 = scalar_lea.vmem [#allocation2], 192
    %v743 = vld [vmem:[%s742] sm:$0xf]
    %v744 = vld [vmem:[%s742 + $0x4] sm:$0xf]
    %v745 = vld [vmem:[%s742 + $0x8] sm:$0xf]
    %v746 = vld [vmem:[%s742 + $0xc] sm:$0xf]
    %v747 = vld [vmem:[%s742 + $0x10] sm:$0xf]
    %v748 = vld [vmem:[%s742 + $0x14] sm:$0xf]
    %v749 = vld [vmem:[%s742 + $0x18] sm:$0xf]
    %v750 = vld [vmem:[%s742 + $0x1c] sm:$0xf]
    %v751 = vld [vmem:[%s742 + $0x20] sm:$0xf]
    %v752 = vld [vmem:[%s742 + $0x24] sm:$0xf]
    %v753 = vld [vmem:[%s742 + $0x28] sm:$0xf]
    %v754 = vld [vmem:[%s742 + $0x2c] sm:$0xf]
    %v755 = vld [vmem:[%s742 + $0x30] sm:$0xf]
    %v756 = vld [vmem:[%s742 + $0x34] sm:$0xf]
    %v757 = vld [vmem:[%s742 + $0x38] sm:$0xf]
    %v758 = vld [vmem:[%s742 + $0x3c] sm:$0xf]
    %v759 = vpack.c.bf16 %v691, %v690
    %v760 = vpack.c.bf16 %v693, %v692
    %v761 = vpack.c.bf16 %v695, %v694
    %v762 = vpack.c.bf16 %v697, %v696
    %s763 = scalar_lea.vmem [#allocation2], 256
    %v764 = vld [vmem:[%s763] sm:$0xf]
    %v765 = vld [vmem:[%s763 + $0x4] sm:$0xf]
    %v766 = vld [vmem:[%s763 + $0x8] sm:$0xf]
    %v767 = vld [vmem:[%s763 + $0xc] sm:$0xf]
    %v768 = vld [vmem:[%s763 + $0x10] sm:$0xf]
    %v769 = vld [vmem:[%s763 + $0x14] sm:$0xf]
    %v770 = vld [vmem:[%s763 + $0x18] sm:$0xf]
    %v771 = vld [vmem:[%s763 + $0x1c] sm:$0xf]
    %v772 = vld [vmem:[%s763 + $0x20] sm:$0xf]
    %v773 = vld [vmem:[%s763 + $0x24] sm:$0xf]
    %v774 = vld [vmem:[%s763 + $0x28] sm:$0xf]
    %v775 = vld [vmem:[%s763 + $0x2c] sm:$0xf]
    %v776 = vld [vmem:[%s763 + $0x30] sm:$0xf]
    %v777 = vld [vmem:[%s763 + $0x34] sm:$0xf]
    %v778 = vld [vmem:[%s763 + $0x38] sm:$0xf]
    %v779 = vld [vmem:[%s763 + $0x3c] sm:$0xf]
    %v796 = vunpack.c.l.b16 %v764
    %v797 = vunpack.c.l.b16 %v765
    %v798 = vunpack.c.l.b16 %v766
    %v799 = vunpack.c.l.b16 %v767
    %v800 = vunpack.c.l.b16 %v768
    %v801 = vunpack.c.l.b16 %v769
    %v802 = vunpack.c.l.b16 %v770
    %v803 = vunpack.c.l.b16 %v771
    %v804 = vunpack.c.l.b16 %v772
    %v805 = vunpack.c.l.b16 %v773
    %v806 = vunpack.c.l.b16 %v774
    %v807 = vunpack.c.l.b16 %v775
    %v808 = vunpack.c.l.b16 %v776
    %v809 = vunpack.c.l.b16 %v777
    %v810 = vunpack.c.l.b16 %v778
    %v811 = vunpack.c.l.b16 %v779
    %v812 = vpack.c.b16 %v797, %v796
    %v813 = vpack.c.b16 %v799, %v798
    %v814 = vpack.c.b16 %v801, %v800
    %v815 = vpack.c.b16 %v803, %v802
    %v816 = vpack.c.b16 %v805, %v804
    %v817 = vpack.c.b16 %v807, %v806
    %v818 = vpack.c.b16 %v809, %v808
    %v819 = vpack.c.b16 %v811, %v810
    %828 = vmatpush.bf16.msra.mxu0 %v819
    %829 = vmatpush.bf16.msra.mxu0 %v818
    %830 = vmatpush.bf16.msra.mxu0 %v817
    %831 = vmatpush.bf16.msra.mxu0 %v816
    %832 = vmatpush.bf16.msra.mxu0 %v815
    %833 = vmatpush.bf16.msra.mxu0 %v814
    %834 = vmatpush.bf16.msra.mxu0 %v813
    %835 = vmatpush.bf16.msra.mxu0 %v812
    %836 = vmatmul.bf16.gmra.mxu0 %v759
    %v837 = vpop.f32.mrf.mxu0
    %v838 = vadd.f32 0.0, %v837
    %v839 = vpop.f32.mrf.mxu0
    %v840 = vadd.f32 0.0, %v839
    %841 = vmatmul.bf16.gmra.mxu0 %v760
    %v842 = vpop.f32.mrf.mxu0
    %v843 = vadd.f32 0.0, %v842
    %v844 = vpop.f32.mrf.mxu0
    %v845 = vadd.f32 0.0, %v844
    %846 = vmatmul.bf16.gmra.mxu0 %v761
    %v847 = vpop.f32.mrf.mxu0
    %v848 = vadd.f32 0.0, %v847
    %v849 = vpop.f32.mrf.mxu0
    %v850 = vadd.f32 0.0, %v849
    %851 = vmatmul.bf16.gmra.mxu0 %v762
    %v852 = vpop.f32.mrf.mxu0
    %v853 = vadd.f32 0.0, %v852
    %v854 = vpop.f32.mrf.mxu0
    %v855 = vadd.f32 0.0, %v854
    %856 = vdwg.mxu0
    %v873 = vunpack.c.l.b16 %v743
    %v874 = vunpack.c.l.b16 %v744
    %v875 = vunpack.c.l.b16 %v745
    %v876 = vunpack.c.l.b16 %v746
    %v877 = vunpack.c.l.b16 %v747
    %v878 = vunpack.c.l.b16 %v748
    %v879 = vunpack.c.l.b16 %v749
    %v880 = vunpack.c.l.b16 %v750
    %v881 = vunpack.c.l.b16 %v751
    %v882 = vunpack.c.l.b16 %v752
    %v883 = vunpack.c.l.b16 %v753
    %v884 = vunpack.c.l.b16 %v754
    %v885 = vunpack.c.l.b16 %v755
    %v886 = vunpack.c.l.b16 %v756
    %v887 = vunpack.c.l.b16 %v757
    %v888 = vunpack.c.l.b16 %v758
    %v889 = vpack.c.b16 %v874, %v873
    %v890 = vpack.c.b16 %v876, %v875
    %v891 = vpack.c.b16 %v878, %v877
    %v892 = vpack.c.b16 %v880, %v879
    %v893 = vpack.c.b16 %v882, %v881
    %v894 = vpack.c.b16 %v884, %v883
    %v895 = vpack.c.b16 %v886, %v885
    %v896 = vpack.c.b16 %v888, %v887
    %905 = vmatpush.bf16.msra.mxu0 %v896
    %906 = vmatpush.bf16.msra.mxu0 %v895
    %907 = vmatpush.bf16.msra.mxu0 %v894
    %908 = vmatpush.bf16.msra.mxu0 %v893
    %909 = vmatpush.bf16.msra.mxu0 %v892
    %910 = vmatpush.bf16.msra.mxu0 %v891
    %911 = vmatpush.bf16.msra.mxu0 %v890
    %912 = vmatpush.bf16.msra.mxu0 %v889
    %913 = vmatmul.bf16.gmra.mxu0 %v738
    %v914 = vpop.f32.mrf.mxu0
    %v915 = vadd.f32 %v838, %v914
    %v916 = vpop.f32.mrf.mxu0
    %v917 = vadd.f32 %v840, %v916
    %918 = vmatmul.bf16.gmra.mxu0 %v739
    %v919 = vpop.f32.mrf.mxu0
    %v920 = vadd.f32 %v843, %v919
    %v921 = vpop.f32.mrf.mxu0
    %v922 = vadd.f32 %v845, %v921
    %923 = vmatmul.bf16.gmra.mxu0 %v740
    %v924 = vpop.f32.mrf.mxu0
    %v925 = vadd.f32 %v848, %v924
    %v926 = vpop.f32.mrf.mxu0
    %v927 = vadd.f32 %v850, %v926
    %928 = vmatmul.bf16.gmra.mxu0 %v741
    %v929 = vpop.f32.mrf.mxu0
    %v930 = vadd.f32 %v853, %v929
    %v931 = vpop.f32.mrf.mxu0
    %v932 = vadd.f32 %v855, %v931
    %933 = vdwg.mxu0
    %v934 = vrot.slane %v690, 1
    %v935 = vrot.slane %v691, 1
    %v936 = vsel %vm491, %v934, %v935
    %v937 = vrot.slane %v692, 1
    %v938 = vsel %vm491, %v935, %v937
    %v939 = vrot.slane %v693, 1
    %v940 = vsel %vm491, %v937, %v939
    %v941 = vrot.slane %v694, 1
    %v942 = vsel %vm491, %v939, %v941
    %v943 = vrot.slane %v695, 1
    %v944 = vsel %vm491, %v941, %v943
    %v945 = vrot.slane %v696, 1
    %v946 = vsel %vm491, %v943, %v945
    %v947 = vrot.slane %v697, 1
    %v948 = vsel %vm491, %v945, %v947
    %v957 = vsel %vm491, %v947, 0.0
    %v958 = vsel %vm556, %v936, 0.0
    %v959 = vsel %vm557, %v938, 0.0
    %v960 = vsel %vm558, %v940, 0.0
    %v961 = vsel %vm559, %v942, 0.0
    %v962 = vsel %vm560, %v944, 0.0
    %v963 = vsel %vm561, %v946, 0.0
    %v964 = vsel %vm562, %v948, 0.0
    %v965 = vsel %vm563, %v957, 0.0
    %v966 = vpack.c.bf16 %v959, %v958
    %v967 = vpack.c.bf16 %v961, %v960
    %v968 = vpack.c.bf16 %v963, %v962
    %v969 = vpack.c.bf16 %v965, %v964
    %s970 = scalar_lea.vmem [#allocation2], 320
    %v971 = vld [vmem:[%s970] sm:$0xf]
    %v972 = vld [vmem:[%s970 + $0x4] sm:$0xf]
    %v973 = vld [vmem:[%s970 + $0x8] sm:$0xf]
    %v974 = vld [vmem:[%s970 + $0xc] sm:$0xf]
    %v975 = vld [vmem:[%s970 + $0x10] sm:$0xf]
    %v976 = vld [vmem:[%s970 + $0x14] sm:$0xf]
    %v977 = vld [vmem:[%s970 + $0x18] sm:$0xf]
    %v978 = vld [vmem:[%s970 + $0x1c] sm:$0xf]
    %v979 = vld [vmem:[%s970 + $0x20] sm:$0xf]
    %v980 = vld [vmem:[%s970 + $0x24] sm:$0xf]
    %v981 = vld [vmem:[%s970 + $0x28] sm:$0xf]
    %v982 = vld [vmem:[%s970 + $0x2c] sm:$0xf]
    %v983 = vld [vmem:[%s970 + $0x30] sm:$0xf]
    %v984 = vld [vmem:[%s970 + $0x34] sm:$0xf]
    %v985 = vld [vmem:[%s970 + $0x38] sm:$0xf]
    %v986 = vld [vmem:[%s970 + $0x3c] sm:$0xf]
    %v1003 = vunpack.c.l.b16 %v971
    %v1004 = vunpack.c.l.b16 %v972
    %v1005 = vunpack.c.l.b16 %v973
    %v1006 = vunpack.c.l.b16 %v974
    %v1007 = vunpack.c.l.b16 %v975
    %v1008 = vunpack.c.l.b16 %v976
    %v1009 = vunpack.c.l.b16 %v977
    %v1010 = vunpack.c.l.b16 %v978
    %v1011 = vunpack.c.l.b16 %v979
    %v1012 = vunpack.c.l.b16 %v980
    %v1013 = vunpack.c.l.b16 %v981
    %v1014 = vunpack.c.l.b16 %v982
    %v1015 = vunpack.c.l.b16 %v983
    %v1016 = vunpack.c.l.b16 %v984
    %v1017 = vunpack.c.l.b16 %v985
    %v1018 = vunpack.c.l.b16 %v986
    %v1019 = vpack.c.b16 %v1004, %v1003
    %v1020 = vpack.c.b16 %v1006, %v1005
    %v1021 = vpack.c.b16 %v1008, %v1007
    %v1022 = vpack.c.b16 %v1010, %v1009
    %v1023 = vpack.c.b16 %v1012, %v1011
    %v1024 = vpack.c.b16 %v1014, %v1013
    %v1025 = vpack.c.b16 %v1016, %v1015
    %v1026 = vpack.c.b16 %v1018, %v1017
    %1035 = vmatpush.bf16.msra.mxu0 %v1026
    %1036 = vmatpush.bf16.msra.mxu0 %v1025
    %1037 = vmatpush.bf16.msra.mxu0 %v1024
    %1038 = vmatpush.bf16.msra.mxu0 %v1023
    %1039 = vmatpush.bf16.msra.mxu0 %v1022
    %1040 = vmatpush.bf16.msra.mxu0 %v1021
    %1041 = vmatpush.bf16.msra.mxu0 %v1020
    %1042 = vmatpush.bf16.msra.mxu0 %v1019
    %1043 = vmatmul.bf16.gmra.mxu0 %v966
    %v1044 = vpop.f32.mrf.mxu0
    %v1045 = vadd.f32 0.0, %v1044
    %v1046 = vpop.f32.mrf.mxu0
    %v1047 = vadd.f32 0.0, %v1046
    %1048 = vmatmul.bf16.gmra.mxu0 %v967
    %v1049 = vpop.f32.mrf.mxu0
    %v1050 = vadd.f32 0.0, %v1049
    %v1051 = vpop.f32.mrf.mxu0
    %v1052 = vadd.f32 0.0, %v1051
    %1053 = vmatmul.bf16.gmra.mxu0 %v968
    %v1054 = vpop.f32.mrf.mxu0
    %v1055 = vadd.f32 0.0, %v1054
    %v1056 = vpop.f32.mrf.mxu0
    %v1057 = vadd.f32 0.0, %v1056
    %1058 = vmatmul.bf16.gmra.mxu0 %v969
    %v1059 = vpop.f32.mrf.mxu0
    %v1060 = vadd.f32 0.0, %v1059
    %v1061 = vpop.f32.mrf.mxu0
    %v1062 = vadd.f32 0.0, %v1061
    %1063 = vdwg.mxu0
    %v1064 = vadd.f32 %v915, %v1045
    %v1065 = vadd.f32 %v917, %v1047
    %v1066 = vadd.f32 %v920, %v1050
    %v1067 = vadd.f32 %v922, %v1052
    %v1068 = vadd.f32 %v925, %v1055
    %v1069 = vadd.f32 %v927, %v1057
    %v1070 = vadd.f32 %v930, %v1060
    %v1071 = vadd.f32 %v932, %v1062
    %s1072 = scalar_lea.vmem [#allocation5], 1
    %v1073 = vld [vmem:[%s1072] sm:$0x1]
    %v1075 = vperm.slane %v1073, 0
    %v1077 = vadd.f32 %v1064, %v1075
    %v1078 = vadd.f32 %v1065, %v1075
    %v1079 = vadd.f32 %v1066, %v1075
    %v1080 = vadd.f32 %v1067, %v1075
    %v1081 = vadd.f32 %v1068, %v1075
    %v1082 = vadd.f32 %v1069, %v1075
    %v1083 = vadd.f32 %v1070, %v1075
    %v1084 = vadd.f32 %v1071, %v1075
    %v1085 = vmax.f32 %v1077, 0.0
    %v1086 = vmax.f32 %v1078, 0.0
    %v1087 = vmax.f32 %v1079, 0.0
    %v1088 = vmax.f32 %v1080, 0.0
    %v1089 = vmax.f32 %v1081, 0.0
    %v1090 = vmax.f32 %v1082, 0.0
    %v1091 = vmax.f32 %v1083, 0.0
    %v1092 = vmax.f32 %v1084, 0.0
    %v1101 = vrot.slane %v1085, 1
    %v1102 = vrot.slane %v1086, 1
    %v1103 = vsel %vm491, %v1101, %v1102
    %v1104 = vrot.slane %v1087, 1
    %v1105 = vsel %vm491, %v1102, %v1104
    %v1106 = vrot.slane %v1088, 1
    %v1107 = vsel %vm491, %v1104, %v1106
    %v1108 = vrot.slane %v1089, 1
    %v1109 = vsel %vm491, %v1106, %v1108
    %v1110 = vrot.slane %v1090, 1
    %v1111 = vsel %vm491, %v1108, %v1110
    %v1112 = vrot.slane %v1091, 1
    %v1113 = vsel %vm491, %v1110, %v1112
    %v1114 = vrot.slane %v1092, 1
    %v1115 = vsel %vm491, %v1112, %v1114
    %v1124 = vsel %vm491, %v1114, 0.0
    %v1125 = vsel %vm556, %v1103, 0.0
    %v1126 = vsel %vm557, %v1105, 0.0
    %v1127 = vsel %vm558, %v1107, 0.0
    %v1128 = vsel %vm559, %v1109, 0.0
    %v1129 = vsel %vm560, %v1111, 0.0
    %v1130 = vsel %vm561, %v1113, 0.0
    %v1131 = vsel %vm562, %v1115, 0.0
    %v1132 = vsel %vm563, %v1124, 0.0
    %v1133 = vmax.f32 %v1085, %v1125
    %v1134 = vmax.f32 %v1086, %v1126
    %v1135 = vmax.f32 %v1087, %v1127
    %v1136 = vmax.f32 %v1088, %v1128
    %v1137 = vmax.f32 %v1089, %v1129
    %v1138 = vmax.f32 %v1090, %v1130
    %v1139 = vmax.f32 %v1091, %v1131
    %v1140 = vmax.f32 %v1092, %v1132
    %1141 = vrot.lane.b32.xlu0 %v1133, 124
    %v1142 = vpop.permute.xlu0 %1141
    %1143 = vrot.lane.b32.xlu0 %v1134, 124
    %v1144 = vpop.permute.xlu0 %1143
    %1145 = vrot.lane.b32.xlu0 %v1135, 124
    %v1146 = vpop.permute.xlu0 %1145
    %1147 = vrot.lane.b32.xlu0 %v1136, 124
    %v1148 = vpop.permute.xlu0 %1147
    %1149 = vrot.lane.b32.xlu0 %v1137, 124
    %v1150 = vpop.permute.xlu0 %1149
    %1151 = vrot.lane.b32.xlu0 %v1138, 124
    %v1152 = vpop.permute.xlu0 %1151
    %1153 = vrot.lane.b32.xlu0 %v1139, 124
    %v1154 = vpop.permute.xlu0 %1153
    %1155 = vrot.lane.b32.xlu0 %v1140, 124
    %v1156 = vpop.permute.xlu0 %1155
    %v1157 = vmax.f32 %v1133, %v1142
    %v1158 = vmax.f32 %v1134, %v1144
    %v1159 = vmax.f32 %v1135, %v1146
    %v1160 = vmax.f32 %v1136, %v1148
    %v1161 = vmax.f32 %v1137, %v1150
    %v1162 = vmax.f32 %v1138, %v1152
    %v1163 = vmax.f32 %v1139, %v1154
    %v1164 = vmax.f32 %v1140, %v1156
    %vm1173 = vcmask 1041408
    %v1174 = vrot.slane %v1157, 6
    %v1175 = vrot.slane %v1158, 6
    %v1176 = vsel %vm1173, %v1174, %v1175
    %v1177 = vrot.slane %v1159, 6
    %v1178 = vsel %vm1173, %v1175, %v1177
    %v1179 = vrot.slane %v1160, 6
    %v1180 = vsel %vm1173, %v1177, %v1179
    %v1181 = vrot.slane %v1161, 6
    %v1182 = vsel %vm1173, %v1179, %v1181
    %v1183 = vrot.slane %v1162, 6
    %v1184 = vsel %vm1173, %v1181, %v1183
    %v1185 = vrot.slane %v1163, 6
    %v1186 = vsel %vm1173, %v1183, %v1185
    %v1187 = vrot.slane %v1164, 6
    %v1188 = vsel %vm1173, %v1185, %v1187
    %v1197 = vsel %vm1173, 0.0, %v1174
    %v1198 = vadd.s32 %v163, 4294967294
    %v1199 = vadd.s32 %v164, 4294967294
    %v1200 = vadd.s32 %v165, 4294967294
    %v1201 = vadd.s32 %v166, 4294967294
    %v1202 = vadd.s32 %v167, 4294967294
    %v1203 = vadd.s32 %v168, 4294967294
    %v1204 = vadd.s32 %v169, 4294967294
    %v1205 = vadd.s32 %v170, 4294967294
    %vm1206 = vcmp.ge.s32.totalorder %v1198, 0
    %vm1207 = vcmp.ge.s32.totalorder %v1199, 0
    %vm1208 = vcmp.ge.s32.totalorder %v1200, 0
    %vm1209 = vcmp.ge.s32.totalorder %v1201, 0
    %vm1210 = vcmp.ge.s32.totalorder %v1202, 0
    %vm1211 = vcmp.ge.s32.totalorder %v1203, 0
    %vm1212 = vcmp.ge.s32.totalorder %v1204, 0
    %vm1213 = vcmp.ge.s32.totalorder %v1205, 0
    %vm1214 = vcmp.lt.s32.totalorder %v1198, 32
    %vm1215 = vcmp.lt.s32.totalorder %v1199, 32
    %vm1216 = vcmp.lt.s32.totalorder %v1200, 32
    %vm1217 = vcmp.lt.s32.totalorder %v1201, 32
    %vm1218 = vcmp.lt.s32.totalorder %v1202, 32
    %vm1219 = vcmp.lt.s32.totalorder %v1203, 32
    %vm1220 = vcmp.lt.s32.totalorder %v1204, 32
    %vm1221 = vcmp.lt.s32.totalorder %v1205, 32
    %vm1222 = vmand %vm1206, %vm1214
    %vm1223 = vmand %vm1207, %vm1215
    %vm1224 = vmand %vm1208, %vm1216
    %vm1225 = vmand %vm1209, %vm1217
    %vm1226 = vmand %vm1210, %vm1218
    %vm1227 = vmand %vm1211, %vm1219
    %vm1228 = vmand %vm1212, %vm1220
    %vm1229 = vmand %vm1213, %vm1221
    %v1230 = vsel %vm1222, 1, 0
    %v1231 = vsel %vm1223, 1, 0
    %v1232 = vsel %vm1224, 1, 0
    %v1233 = vsel %vm1225, 1, 0
    %v1234 = vsel %vm1226, 1, 0
    %v1235 = vsel %vm1227, 1, 0
    %v1236 = vsel %vm1228, 1, 0
    %v1237 = vsel %vm1229, 1, 0
    %vm1238 = vcmp.eq.s32.totalorder %v1230, 1
    %vm1239 = vcmp.eq.s32.totalorder %v1231, 1
    %vm1240 = vcmp.eq.s32.totalorder %v1232, 1
    %vm1241 = vcmp.eq.s32.totalorder %v1233, 1
    %vm1242 = vcmp.eq.s32.totalorder %v1234, 1
    %vm1243 = vcmp.eq.s32.totalorder %v1235, 1
    %vm1244 = vcmp.eq.s32.totalorder %v1236, 1
    %vm1245 = vcmp.eq.s32.totalorder %v1237, 1
    %v1246 = vsel %vm1238, %v1197, 0.0
    %v1247 = vsel %vm1239, %v1176, 0.0
    %v1248 = vsel %vm1240, %v1178, 0.0
    %v1249 = vsel %vm1241, %v1180, 0.0
    %v1250 = vsel %vm1242, %v1182, 0.0
    %v1251 = vsel %vm1243, %v1184, 0.0
    %v1252 = vsel %vm1244, %v1186, 0.0
    %v1253 = vsel %vm1245, %v1188, 0.0
    %v1254 = vpack.c.bf16 %v1247, %v1246
    %v1255 = vpack.c.bf16 %v1249, %v1248
    %v1256 = vpack.c.bf16 %v1251, %v1250
    %v1257 = vpack.c.bf16 %v1253, %v1252
    %s1258 = scalar_lea.vmem [#allocation2], 384
    %v1259 = vld [vmem:[%s1258] sm:$0xf]
    %v1260 = vld [vmem:[%s1258 + $0x4] sm:$0xf]
    %v1261 = vld [vmem:[%s1258 + $0x8] sm:$0xf]
    %v1262 = vld [vmem:[%s1258 + $0xc] sm:$0xf]
    %v1263 = vld [vmem:[%s1258 + $0x10] sm:$0xf]
    %v1264 = vld [vmem:[%s1258 + $0x14] sm:$0xf]
    %v1265 = vld [vmem:[%s1258 + $0x18] sm:$0xf]
    %v1266 = vld [vmem:[%s1258 + $0x1c] sm:$0xf]
    %v1267 = vld [vmem:[%s1258 + $0x20] sm:$0xf]
    %v1268 = vld [vmem:[%s1258 + $0x24] sm:$0xf]
    %v1269 = vld [vmem:[%s1258 + $0x28] sm:$0xf]
    %v1270 = vld [vmem:[%s1258 + $0x2c] sm:$0xf]
    %v1271 = vld [vmem:[%s1258 + $0x30] sm:$0xf]
    %v1272 = vld [vmem:[%s1258 + $0x34] sm:$0xf]
    %v1273 = vld [vmem:[%s1258 + $0x38] sm:$0xf]
    %v1274 = vld [vmem:[%s1258 + $0x3c] sm:$0xf]
    %v1275 = vpack.c.bf16 %v1158, %v1157
    %v1276 = vpack.c.bf16 %v1160, %v1159
    %v1277 = vpack.c.bf16 %v1162, %v1161
    %v1278 = vpack.c.bf16 %v1164, %v1163
    %s1279 = scalar_lea.vmem [#allocation2], 448
    %v1280 = vld [vmem:[%s1279] sm:$0xf]
    %v1281 = vld [vmem:[%s1279 + $0x4] sm:$0xf]
    %v1282 = vld [vmem:[%s1279 + $0x8] sm:$0xf]
    %v1283 = vld [vmem:[%s1279 + $0xc] sm:$0xf]
    %v1284 = vld [vmem:[%s1279 + $0x10] sm:$0xf]
    %v1285 = vld [vmem:[%s1279 + $0x14] sm:$0xf]
    %v1286 = vld [vmem:[%s1279 + $0x18] sm:$0xf]
    %v1287 = vld [vmem:[%s1279 + $0x1c] sm:$0xf]
    %v1288 = vld [vmem:[%s1279 + $0x20] sm:$0xf]
    %v1289 = vld [vmem:[%s1279 + $0x24] sm:$0xf]
    %v1290 = vld [vmem:[%s1279 + $0x28] sm:$0xf]
    %v1291 = vld [vmem:[%s1279 + $0x2c] sm:$0xf]
    %v1292 = vld [vmem:[%s1279 + $0x30] sm:$0xf]
    %v1293 = vld [vmem:[%s1279 + $0x34] sm:$0xf]
    %v1294 = vld [vmem:[%s1279 + $0x38] sm:$0xf]
    %v1295 = vld [vmem:[%s1279 + $0x3c] sm:$0xf]
    %v1312 = vunpack.c.l.b16 %v1280
    %v1313 = vunpack.c.l.b16 %v1281
    %v1314 = vunpack.c.l.b16 %v1282
    %v1315 = vunpack.c.l.b16 %v1283
    %v1316 = vunpack.c.l.b16 %v1284
    %v1317 = vunpack.c.l.b16 %v1285
    %v1318 = vunpack.c.l.b16 %v1286
    %v1319 = vunpack.c.l.b16 %v1287
    %v1320 = vunpack.c.l.b16 %v1288
    %v1321 = vunpack.c.l.b16 %v1289
    %v1322 = vunpack.c.l.b16 %v1290
    %v1323 = vunpack.c.l.b16 %v1291
    %v1324 = vunpack.c.l.b16 %v1292
    %v1325 = vunpack.c.l.b16 %v1293
    %v1326 = vunpack.c.l.b16 %v1294
    %v1327 = vunpack.c.l.b16 %v1295
    %v1328 = vpack.c.b16 %v1313, %v1312
    %v1329 = vpack.c.b16 %v1315, %v1314
    %v1330 = vpack.c.b16 %v1317, %v1316
    %v1331 = vpack.c.b16 %v1319, %v1318
    %v1332 = vpack.c.b16 %v1321, %v1320
    %v1333 = vpack.c.b16 %v1323, %v1322
    %v1334 = vpack.c.b16 %v1325, %v1324
    %v1335 = vpack.c.b16 %v1327, %v1326
    %1344 = vmatpush.bf16.msra.mxu0 %v1335
    %1345 = vmatpush.bf16.msra.mxu0 %v1334
    %1346 = vmatpush.bf16.msra.mxu0 %v1333
    %1347 = vmatpush.bf16.msra.mxu0 %v1332
    %1348 = vmatpush.bf16.msra.mxu0 %v1331
    %1349 = vmatpush.bf16.msra.mxu0 %v1330
    %1350 = vmatpush.bf16.msra.mxu0 %v1329
    %1351 = vmatpush.bf16.msra.mxu0 %v1328
    %1352 = vmatmul.bf16.gmra.mxu0 %v1275
    %v1353 = vpop.f32.mrf.mxu0
    %v1354 = vadd.f32 0.0, %v1353
    %v1355 = vpop.f32.mrf.mxu0
    %v1356 = vadd.f32 0.0, %v1355
    %1357 = vmatmul.bf16.gmra.mxu0 %v1276
    %v1358 = vpop.f32.mrf.mxu0
    %v1359 = vadd.f32 0.0, %v1358
    %v1360 = vpop.f32.mrf.mxu0
    %v1361 = vadd.f32 0.0, %v1360
    %1362 = vmatmul.bf16.gmra.mxu0 %v1277
    %v1363 = vpop.f32.mrf.mxu0
    %v1364 = vadd.f32 0.0, %v1363
    %v1365 = vpop.f32.mrf.mxu0
    %v1366 = vadd.f32 0.0, %v1365
    %1367 = vmatmul.bf16.gmra.mxu0 %v1278
    %v1368 = vpop.f32.mrf.mxu0
    %v1369 = vadd.f32 0.0, %v1368
    %v1370 = vpop.f32.mrf.mxu0
    %v1371 = vadd.f32 0.0, %v1370
    %1372 = vdwg.mxu0
    %v1389 = vunpack.c.l.b16 %v1259
    %v1390 = vunpack.c.l.b16 %v1260
    %v1391 = vunpack.c.l.b16 %v1261
    %v1392 = vunpack.c.l.b16 %v1262
    %v1393 = vunpack.c.l.b16 %v1263
    %v1394 = vunpack.c.l.b16 %v1264
    %v1395 = vunpack.c.l.b16 %v1265
    %v1396 = vunpack.c.l.b16 %v1266
    %v1397 = vunpack.c.l.b16 %v1267
    %v1398 = vunpack.c.l.b16 %v1268
    %v1399 = vunpack.c.l.b16 %v1269
    %v1400 = vunpack.c.l.b16 %v1270
    %v1401 = vunpack.c.l.b16 %v1271
    %v1402 = vunpack.c.l.b16 %v1272
    %v1403 = vunpack.c.l.b16 %v1273
    %v1404 = vunpack.c.l.b16 %v1274
    %v1405 = vpack.c.b16 %v1390, %v1389
    %v1406 = vpack.c.b16 %v1392, %v1391
    %v1407 = vpack.c.b16 %v1394, %v1393
    %v1408 = vpack.c.b16 %v1396, %v1395
    %v1409 = vpack.c.b16 %v1398, %v1397
    %v1410 = vpack.c.b16 %v1400, %v1399
    %v1411 = vpack.c.b16 %v1402, %v1401
    %v1412 = vpack.c.b16 %v1404, %v1403
    %1421 = vmatpush.bf16.msra.mxu0 %v1412
    %1422 = vmatpush.bf16.msra.mxu0 %v1411
    %1423 = vmatpush.bf16.msra.mxu0 %v1410
    %1424 = vmatpush.bf16.msra.mxu0 %v1409
    %1425 = vmatpush.bf16.msra.mxu0 %v1408
    %1426 = vmatpush.bf16.msra.mxu0 %v1407
    %1427 = vmatpush.bf16.msra.mxu0 %v1406
    %1428 = vmatpush.bf16.msra.mxu0 %v1405
    %1429 = vmatmul.bf16.gmra.mxu0 %v1254
    %v1430 = vpop.f32.mrf.mxu0
    %v1431 = vadd.f32 %v1354, %v1430
    %v1432 = vpop.f32.mrf.mxu0
    %v1433 = vadd.f32 %v1356, %v1432
    %1434 = vmatmul.bf16.gmra.mxu0 %v1255
    %v1435 = vpop.f32.mrf.mxu0
    %v1436 = vadd.f32 %v1359, %v1435
    %v1437 = vpop.f32.mrf.mxu0
    %v1438 = vadd.f32 %v1361, %v1437
    %1439 = vmatmul.bf16.gmra.mxu0 %v1256
    %v1440 = vpop.f32.mrf.mxu0
    %v1441 = vadd.f32 %v1364, %v1440
    %v1442 = vpop.f32.mrf.mxu0
    %v1443 = vadd.f32 %v1366, %v1442
    %1444 = vmatmul.bf16.gmra.mxu0 %v1257
    %v1445 = vpop.f32.mrf.mxu0
    %v1446 = vadd.f32 %v1369, %v1445
    %v1447 = vpop.f32.mrf.mxu0
    %v1448 = vadd.f32 %v1371, %v1447
    %1449 = vdwg.mxu0
    %vm1450 = vcmask 1045504
    %v1451 = vrot.slane %v1157, 2
    %v1452 = vrot.slane %v1158, 2
    %v1453 = vsel %vm1450, %v1451, %v1452
    %v1454 = vrot.slane %v1159, 2
    %v1455 = vsel %vm1450, %v1452, %v1454
    %v1456 = vrot.slane %v1160, 2
    %v1457 = vsel %vm1450, %v1454, %v1456
    %v1458 = vrot.slane %v1161, 2
    %v1459 = vsel %vm1450, %v1456, %v1458
    %v1460 = vrot.slane %v1162, 2
    %v1461 = vsel %vm1450, %v1458, %v1460
    %v1462 = vrot.slane %v1163, 2
    %v1463 = vsel %vm1450, %v1460, %v1462
    %v1464 = vrot.slane %v1164, 2
    %v1465 = vsel %vm1450, %v1462, %v1464
    %v1474 = vsel %vm1450, %v1464, 0.0
    %v1475 = vadd.s32 %v163, 2
    %v1476 = vadd.s32 %v164, 2
    %v1477 = vadd.s32 %v165, 2
    %v1478 = vadd.s32 %v166, 2
    %v1479 = vadd.s32 %v167, 2
    %v1480 = vadd.s32 %v168, 2
    %v1481 = vadd.s32 %v169, 2
    %v1482 = vadd.s32 %v170, 2
    %vm1483 = vcmp.ge.s32.totalorder %v1475, 0
    %vm1484 = vcmp.ge.s32.totalorder %v1476, 0
    %vm1485 = vcmp.ge.s32.totalorder %v1477, 0
    %vm1486 = vcmp.ge.s32.totalorder %v1478, 0
    %vm1487 = vcmp.ge.s32.totalorder %v1479, 0
    %vm1488 = vcmp.ge.s32.totalorder %v1480, 0
    %vm1489 = vcmp.ge.s32.totalorder %v1481, 0
    %vm1490 = vcmp.ge.s32.totalorder %v1482, 0
    %vm1491 = vcmp.lt.s32.totalorder %v1475, 32
    %vm1492 = vcmp.lt.s32.totalorder %v1476, 32
    %vm1493 = vcmp.lt.s32.totalorder %v1477, 32
    %vm1494 = vcmp.lt.s32.totalorder %v1478, 32
    %vm1495 = vcmp.lt.s32.totalorder %v1479, 32
    %vm1496 = vcmp.lt.s32.totalorder %v1480, 32
    %vm1497 = vcmp.lt.s32.totalorder %v1481, 32
    %vm1498 = vcmp.lt.s32.totalorder %v1482, 32
    %vm1499 = vmand %vm1483, %vm1491
    %vm1500 = vmand %vm1484, %vm1492
    %vm1501 = vmand %vm1485, %vm1493
    %vm1502 = vmand %vm1486, %vm1494
    %vm1503 = vmand %vm1487, %vm1495
    %vm1504 = vmand %vm1488, %vm1496
    %vm1505 = vmand %vm1489, %vm1497
    %vm1506 = vmand %vm1490, %vm1498
    %v1507 = vsel %vm1499, 1, 0
    %v1508 = vsel %vm1500, 1, 0
    %v1509 = vsel %vm1501, 1, 0
    %v1510 = vsel %vm1502, 1, 0
    %v1511 = vsel %vm1503, 1, 0
    %v1512 = vsel %vm1504, 1, 0
    %v1513 = vsel %vm1505, 1, 0
    %v1514 = vsel %vm1506, 1, 0
    %vm1515 = vcmp.eq.s32.totalorder %v1507, 1
    %vm1516 = vcmp.eq.s32.totalorder %v1508, 1
    %vm1517 = vcmp.eq.s32.totalorder %v1509, 1
    %vm1518 = vcmp.eq.s32.totalorder %v1510, 1
    %vm1519 = vcmp.eq.s32.totalorder %v1511, 1
    %vm1520 = vcmp.eq.s32.totalorder %v1512, 1
    %vm1521 = vcmp.eq.s32.totalorder %v1513, 1
    %vm1522 = vcmp.eq.s32.totalorder %v1514, 1
    %v1523 = vsel %vm1515, %v1453, 0.0
    %v1524 = vsel %vm1516, %v1455, 0.0
    %v1525 = vsel %vm1517, %v1457, 0.0
    %v1526 = vsel %vm1518, %v1459, 0.0
    %v1527 = vsel %vm1519, %v1461, 0.0
    %v1528 = vsel %vm1520, %v1463, 0.0
    %v1529 = vsel %vm1521, %v1465, 0.0
    %v1530 = vsel %vm1522, %v1474, 0.0
    %v1531 = vpack.c.bf16 %v1524, %v1523
    %v1532 = vpack.c.bf16 %v1526, %v1525
    %v1533 = vpack.c.bf16 %v1528, %v1527
    %v1534 = vpack.c.bf16 %v1530, %v1529
    %s1535 = scalar_lea.vmem [#allocation2], 512
    %v1536 = vld [vmem:[%s1535] sm:$0xf]
    %v1537 = vld [vmem:[%s1535 + $0x4] sm:$0xf]
    %v1538 = vld [vmem:[%s1535 + $0x8] sm:$0xf]
    %v1539 = vld [vmem:[%s1535 + $0xc] sm:$0xf]
    %v1540 = vld [vmem:[%s1535 + $0x10] sm:$0xf]
    %v1541 = vld [vmem:[%s1535 + $0x14] sm:$0xf]
    %v1542 = vld [vmem:[%s1535 + $0x18] sm:$0xf]
    %v1543 = vld [vmem:[%s1535 + $0x1c] sm:$0xf]
    %v1544 = vld [vmem:[%s1535 + $0x20] sm:$0xf]
    %v1545 = vld [vmem:[%s1535 + $0x24] sm:$0xf]
    %v1546 = vld [vmem:[%s1535 + $0x28] sm:$0xf]
    %v1547 = vld [vmem:[%s1535 + $0x2c] sm:$0xf]
    %v1548 = vld [vmem:[%s1535 + $0x30] sm:$0xf]
    %v1549 = vld [vmem:[%s1535 + $0x34] sm:$0xf]
    %v1550 = vld [vmem:[%s1535 + $0x38] sm:$0xf]
    %v1551 = vld [vmem:[%s1535 + $0x3c] sm:$0xf]
    %v1568 = vunpack.c.l.b16 %v1536
    %v1569 = vunpack.c.l.b16 %v1537
    %v1570 = vunpack.c.l.b16 %v1538
    %v1571 = vunpack.c.l.b16 %v1539
    %v1572 = vunpack.c.l.b16 %v1540
    %v1573 = vunpack.c.l.b16 %v1541
    %v1574 = vunpack.c.l.b16 %v1542
    %v1575 = vunpack.c.l.b16 %v1543
    %v1576 = vunpack.c.l.b16 %v1544
    %v1577 = vunpack.c.l.b16 %v1545
    %v1578 = vunpack.c.l.b16 %v1546
    %v1579 = vunpack.c.l.b16 %v1547
    %v1580 = vunpack.c.l.b16 %v1548
    %v1581 = vunpack.c.l.b16 %v1549
    %v1582 = vunpack.c.l.b16 %v1550
    %v1583 = vunpack.c.l.b16 %v1551
    %v1584 = vpack.c.b16 %v1569, %v1568
    %v1585 = vpack.c.b16 %v1571, %v1570
    %v1586 = vpack.c.b16 %v1573, %v1572
    %v1587 = vpack.c.b16 %v1575, %v1574
    %v1588 = vpack.c.b16 %v1577, %v1576
    %v1589 = vpack.c.b16 %v1579, %v1578
    %v1590 = vpack.c.b16 %v1581, %v1580
    %v1591 = vpack.c.b16 %v1583, %v1582
    %1600 = vmatpush.bf16.msra.mxu0 %v1591
    %1601 = vmatpush.bf16.msra.mxu0 %v1590
    %1602 = vmatpush.bf16.msra.mxu0 %v1589
    %1603 = vmatpush.bf16.msra.mxu0 %v1588
    %1604 = vmatpush.bf16.msra.mxu0 %v1587
    %1605 = vmatpush.bf16.msra.mxu0 %v1586
    %1606 = vmatpush.bf16.msra.mxu0 %v1585
    %1607 = vmatpush.bf16.msra.mxu0 %v1584
    %1608 = vmatmul.bf16.gmra.mxu0 %v1531
    %v1609 = vpop.f32.mrf.mxu0
    %v1610 = vadd.f32 0.0, %v1609
    %v1611 = vpop.f32.mrf.mxu0
    %v1612 = vadd.f32 0.0, %v1611
    %1613 = vmatmul.bf16.gmra.mxu0 %v1532
    %v1614 = vpop.f32.mrf.mxu0
    %v1615 = vadd.f32 0.0, %v1614
    %v1616 = vpop.f32.mrf.mxu0
    %v1617 = vadd.f32 0.0, %v1616
    %1618 = vmatmul.bf16.gmra.mxu0 %v1533
    %v1619 = vpop.f32.mrf.mxu0
    %v1620 = vadd.f32 0.0, %v1619
    %v1621 = vpop.f32.mrf.mxu0
    %v1622 = vadd.f32 0.0, %v1621
    %1623 = vmatmul.bf16.gmra.mxu0 %v1534
    %v1624 = vpop.f32.mrf.mxu0
    %v1625 = vadd.f32 0.0, %v1624
    %v1626 = vpop.f32.mrf.mxu0
    %v1627 = vadd.f32 0.0, %v1626
    %1628 = vdwg.mxu0
    %v1629 = vadd.f32 %v1431, %v1610
    %v1630 = vadd.f32 %v1433, %v1612
    %v1631 = vadd.f32 %v1436, %v1615
    %v1632 = vadd.f32 %v1438, %v1617
    %v1633 = vadd.f32 %v1441, %v1620
    %v1634 = vadd.f32 %v1443, %v1622
    %v1635 = vadd.f32 %v1446, %v1625
    %v1636 = vadd.f32 %v1448, %v1627
    %s1637 = scalar_lea.vmem [#allocation5], 2
    %v1638 = vld [vmem:[%s1637] sm:$0x1]
    %v1640 = vperm.slane %v1638, 0
    %v1642 = vadd.f32 %v1629, %v1640
    %v1643 = vadd.f32 %v1630, %v1640
    %v1644 = vadd.f32 %v1631, %v1640
    %v1645 = vadd.f32 %v1632, %v1640
    %v1646 = vadd.f32 %v1633, %v1640
    %v1647 = vadd.f32 %v1634, %v1640
    %v1648 = vadd.f32 %v1635, %v1640
    %v1649 = vadd.f32 %v1636, %v1640
    %v1650 = vmax.f32 %v1642, 0.0
    %v1651 = vmax.f32 %v1643, 0.0
    %v1652 = vmax.f32 %v1644, 0.0
    %v1653 = vmax.f32 %v1645, 0.0
    %v1654 = vmax.f32 %v1646, 0.0
    %v1655 = vmax.f32 %v1647, 0.0
    %v1656 = vmax.f32 %v1648, 0.0
    %v1657 = vmax.f32 %v1649, 0.0
    %v1666 = vrot.slane %v1650, 6
    %v1667 = vrot.slane %v1651, 6
    %v1668 = vsel %vm1173, %v1666, %v1667
    %v1669 = vrot.slane %v1652, 6
    %v1670 = vsel %vm1173, %v1667, %v1669
    %v1671 = vrot.slane %v1653, 6
    %v1672 = vsel %vm1173, %v1669, %v1671
    %v1673 = vrot.slane %v1654, 6
    %v1674 = vsel %vm1173, %v1671, %v1673
    %v1675 = vrot.slane %v1655, 6
    %v1676 = vsel %vm1173, %v1673, %v1675
    %v1677 = vrot.slane %v1656, 6
    %v1678 = vsel %vm1173, %v1675, %v1677
    %v1679 = vrot.slane %v1657, 6
    %v1680 = vsel %vm1173, %v1677, %v1679
    %v1689 = vsel %vm1173, 0.0, %v1666
    %v1690 = vsel %vm1238, %v1689, 0.0
    %v1691 = vsel %vm1239, %v1668, 0.0
    %v1692 = vsel %vm1240, %v1670, 0.0
    %v1693 = vsel %vm1241, %v1672, 0.0
    %v1694 = vsel %vm1242, %v1674, 0.0
    %v1695 = vsel %vm1243, %v1676, 0.0
    %v1696 = vsel %vm1244, %v1678, 0.0
    %v1697 = vsel %vm1245, %v1680, 0.0
    %v1698 = vpack.c.bf16 %v1691, %v1690
    %v1699 = vpack.c.bf16 %v1693, %v1692
    %v1700 = vpack.c.bf16 %v1695, %v1694
    %v1701 = vpack.c.bf16 %v1697, %v1696
    %s1702 = scalar_lea.vmem [#allocation2], 576
    %v1703 = vld [vmem:[%s1702] sm:$0xf]
    %v1704 = vld [vmem:[%s1702 + $0x4] sm:$0xf]
    %v1705 = vld [vmem:[%s1702 + $0x8] sm:$0xf]
    %v1706 = vld [vmem:[%s1702 + $0xc] sm:$0xf]
    %v1707 = vld [vmem:[%s1702 + $0x10] sm:$0xf]
    %v1708 = vld [vmem:[%s1702 + $0x14] sm:$0xf]
    %v1709 = vld [vmem:[%s1702 + $0x18] sm:$0xf]
    %v1710 = vld [vmem:[%s1702 + $0x1c] sm:$0xf]
    %v1711 = vld [vmem:[%s1702 + $0x20] sm:$0xf]
    %v1712 = vld [vmem:[%s1702 + $0x24] sm:$0xf]
    %v1713 = vld [vmem:[%s1702 + $0x28] sm:$0xf]
    %v1714 = vld [vmem:[%s1702 + $0x2c] sm:$0xf]
    %v1715 = vld [vmem:[%s1702 + $0x30] sm:$0xf]
    %v1716 = vld [vmem:[%s1702 + $0x34] sm:$0xf]
    %v1717 = vld [vmem:[%s1702 + $0x38] sm:$0xf]
    %v1718 = vld [vmem:[%s1702 + $0x3c] sm:$0xf]
    %v1719 = vpack.c.bf16 %v1651, %v1650
    %v1720 = vpack.c.bf16 %v1653, %v1652
    %v1721 = vpack.c.bf16 %v1655, %v1654
    %v1722 = vpack.c.bf16 %v1657, %v1656
    %s1723 = scalar_lea.vmem [#allocation2], 640
    %v1724 = vld [vmem:[%s1723] sm:$0xf]
    %v1725 = vld [vmem:[%s1723 + $0x4] sm:$0xf]
    %v1726 = vld [vmem:[%s1723 + $0x8] sm:$0xf]
    %v1727 = vld [vmem:[%s1723 + $0xc] sm:$0xf]
    %v1728 = vld [vmem:[%s1723 + $0x10] sm:$0xf]
    %v1729 = vld [vmem:[%s1723 + $0x14] sm:$0xf]
    %v1730 = vld [vmem:[%s1723 + $0x18] sm:$0xf]
    %v1731 = vld [vmem:[%s1723 + $0x1c] sm:$0xf]
    %v1732 = vld [vmem:[%s1723 + $0x20] sm:$0xf]
    %v1733 = vld [vmem:[%s1723 + $0x24] sm:$0xf]
    %v1734 = vld [vmem:[%s1723 + $0x28] sm:$0xf]
    %v1735 = vld [vmem:[%s1723 + $0x2c] sm:$0xf]
    %v1736 = vld [vmem:[%s1723 + $0x30] sm:$0xf]
    %v1737 = vld [vmem:[%s1723 + $0x34] sm:$0xf]
    %v1738 = vld [vmem:[%s1723 + $0x38] sm:$0xf]
    %v1739 = vld [vmem:[%s1723 + $0x3c] sm:$0xf]
    %v1756 = vunpack.c.l.b16 %v1724
    %v1757 = vunpack.c.l.b16 %v1725
    %v1758 = vunpack.c.l.b16 %v1726
    %v1759 = vunpack.c.l.b16 %v1727
    %v1760 = vunpack.c.l.b16 %v1728
    %v1761 = vunpack.c.l.b16 %v1729
    %v1762 = vunpack.c.l.b16 %v1730
    %v1763 = vunpack.c.l.b16 %v1731
    %v1764 = vunpack.c.l.b16 %v1732
    %v1765 = vunpack.c.l.b16 %v1733
    %v1766 = vunpack.c.l.b16 %v1734
    %v1767 = vunpack.c.l.b16 %v1735
    %v1768 = vunpack.c.l.b16 %v1736
    %v1769 = vunpack.c.l.b16 %v1737
    %v1770 = vunpack.c.l.b16 %v1738
    %v1771 = vunpack.c.l.b16 %v1739
    %v1772 = vpack.c.b16 %v1757, %v1756
    %v1773 = vpack.c.b16 %v1759, %v1758
    %v1774 = vpack.c.b16 %v1761, %v1760
    %v1775 = vpack.c.b16 %v1763, %v1762
    %v1776 = vpack.c.b16 %v1765, %v1764
    %v1777 = vpack.c.b16 %v1767, %v1766
    %v1778 = vpack.c.b16 %v1769, %v1768
    %v1779 = vpack.c.b16 %v1771, %v1770
    %1788 = vmatpush.bf16.msra.mxu0 %v1779
    %1789 = vmatpush.bf16.msra.mxu0 %v1778
    %1790 = vmatpush.bf16.msra.mxu0 %v1777
    %1791 = vmatpush.bf16.msra.mxu0 %v1776
    %1792 = vmatpush.bf16.msra.mxu0 %v1775
    %1793 = vmatpush.bf16.msra.mxu0 %v1774
    %1794 = vmatpush.bf16.msra.mxu0 %v1773
    %1795 = vmatpush.bf16.msra.mxu0 %v1772
    %1796 = vmatmul.bf16.gmra.mxu0 %v1719
    %v1797 = vpop.f32.mrf.mxu0
    %v1798 = vadd.f32 0.0, %v1797
    %v1799 = vpop.f32.mrf.mxu0
    %v1800 = vadd.f32 0.0, %v1799
    %1801 = vmatmul.bf16.gmra.mxu0 %v1720
    %v1802 = vpop.f32.mrf.mxu0
    %v1803 = vadd.f32 0.0, %v1802
    %v1804 = vpop.f32.mrf.mxu0
    %v1805 = vadd.f32 0.0, %v1804
    %1806 = vmatmul.bf16.gmra.mxu0 %v1721
    %v1807 = vpop.f32.mrf.mxu0
    %v1808 = vadd.f32 0.0, %v1807
    %v1809 = vpop.f32.mrf.mxu0
    %v1810 = vadd.f32 0.0, %v1809
    %1811 = vmatmul.bf16.gmra.mxu0 %v1722
    %v1812 = vpop.f32.mrf.mxu0
    %v1813 = vadd.f32 0.0, %v1812
    %v1814 = vpop.f32.mrf.mxu0
    %v1815 = vadd.f32 0.0, %v1814
    %1816 = vdwg.mxu0
    %v1833 = vunpack.c.l.b16 %v1703
    %v1834 = vunpack.c.l.b16 %v1704
    %v1835 = vunpack.c.l.b16 %v1705
    %v1836 = vunpack.c.l.b16 %v1706
    %v1837 = vunpack.c.l.b16 %v1707
    %v1838 = vunpack.c.l.b16 %v1708
    %v1839 = vunpack.c.l.b16 %v1709
    %v1840 = vunpack.c.l.b16 %v1710
    %v1841 = vunpack.c.l.b16 %v1711
    %v1842 = vunpack.c.l.b16 %v1712
    %v1843 = vunpack.c.l.b16 %v1713
    %v1844 = vunpack.c.l.b16 %v1714
    %v1845 = vunpack.c.l.b16 %v1715
    %v1846 = vunpack.c.l.b16 %v1716
    %v1847 = vunpack.c.l.b16 %v1717
    %v1848 = vunpack.c.l.b16 %v1718
    %v1849 = vpack.c.b16 %v1834, %v1833
    %v1850 = vpack.c.b16 %v1836, %v1835
    %v1851 = vpack.c.b16 %v1838, %v1837
    %v1852 = vpack.c.b16 %v1840, %v1839
    %v1853 = vpack.c.b16 %v1842, %v1841
    %v1854 = vpack.c.b16 %v1844, %v1843
    %v1855 = vpack.c.b16 %v1846, %v1845
    %v1856 = vpack.c.b16 %v1848, %v1847
    %1865 = vmatpush.bf16.msra.mxu0 %v1856
    %1866 = vmatpush.bf16.msra.mxu0 %v1855
    %1867 = vmatpush.bf16.msra.mxu0 %v1854
    %1868 = vmatpush.bf16.msra.mxu0 %v1853
    %1869 = vmatpush.bf16.msra.mxu0 %v1852
    %1870 = vmatpush.bf16.msra.mxu0 %v1851
    %1871 = vmatpush.bf16.msra.mxu0 %v1850
    %1872 = vmatpush.bf16.msra.mxu0 %v1849
    %1873 = vmatmul.bf16.gmra.mxu0 %v1698
    %v1874 = vpop.f32.mrf.mxu0
    %v1875 = vadd.f32 %v1798, %v1874
    %v1876 = vpop.f32.mrf.mxu0
    %v1877 = vadd.f32 %v1800, %v1876
    %1878 = vmatmul.bf16.gmra.mxu0 %v1699
    %v1879 = vpop.f32.mrf.mxu0
    %v1880 = vadd.f32 %v1803, %v1879
    %v1881 = vpop.f32.mrf.mxu0
    %v1882 = vadd.f32 %v1805, %v1881
    %1883 = vmatmul.bf16.gmra.mxu0 %v1700
    %v1884 = vpop.f32.mrf.mxu0
    %v1885 = vadd.f32 %v1808, %v1884
    %v1886 = vpop.f32.mrf.mxu0
    %v1887 = vadd.f32 %v1810, %v1886
    %1888 = vmatmul.bf16.gmra.mxu0 %v1701
    %v1889 = vpop.f32.mrf.mxu0
    %v1890 = vadd.f32 %v1813, %v1889
    %v1891 = vpop.f32.mrf.mxu0
    %v1892 = vadd.f32 %v1815, %v1891
    %1893 = vdwg.mxu0
    %v1894 = vrot.slane %v1650, 2
    %v1895 = vrot.slane %v1651, 2
    %v1896 = vsel %vm1450, %v1894, %v1895
    %v1897 = vrot.slane %v1652, 2
    %v1898 = vsel %vm1450, %v1895, %v1897
    %v1899 = vrot.slane %v1653, 2
    %v1900 = vsel %vm1450, %v1897, %v1899
    %v1901 = vrot.slane %v1654, 2
    %v1902 = vsel %vm1450, %v1899, %v1901
    %v1903 = vrot.slane %v1655, 2
    %v1904 = vsel %vm1450, %v1901, %v1903
    %v1905 = vrot.slane %v1656, 2
    %v1906 = vsel %vm1450, %v1903, %v1905
    %v1907 = vrot.slane %v1657, 2
    %v1908 = vsel %vm1450, %v1905, %v1907
    %v1917 = vsel %vm1450, %v1907, 0.0
    %v1918 = vsel %vm1515, %v1896, 0.0
    %v1919 = vsel %vm1516, %v1898, 0.0
    %v1920 = vsel %vm1517, %v1900, 0.0
    %v1921 = vsel %vm1518, %v1902, 0.0
    %v1922 = vsel %vm1519, %v1904, 0.0
    %v1923 = vsel %vm1520, %v1906, 0.0
    %v1924 = vsel %vm1521, %v1908, 0.0
    %v1925 = vsel %vm1522, %v1917, 0.0
    %v1926 = vpack.c.bf16 %v1919, %v1918
    %v1927 = vpack.c.bf16 %v1921, %v1920
    %v1928 = vpack.c.bf16 %v1923, %v1922
    %v1929 = vpack.c.bf16 %v1925, %v1924
    %s1930 = scalar_lea.vmem [#allocation2], 704
    %v1931 = vld [vmem:[%s1930] sm:$0xf]
    %v1932 = vld [vmem:[%s1930 + $0x4] sm:$0xf]
    %v1933 = vld [vmem:[%s1930 + $0x8] sm:$0xf]
    %v1934 = vld [vmem:[%s1930 + $0xc] sm:$0xf]
    %v1935 = vld [vmem:[%s1930 + $0x10] sm:$0xf]
    %v1936 = vld [vmem:[%s1930 + $0x14] sm:$0xf]
    %v1937 = vld [vmem:[%s1930 + $0x18] sm:$0xf]
    %v1938 = vld [vmem:[%s1930 + $0x1c] sm:$0xf]
    %v1939 = vld [vmem:[%s1930 + $0x20] sm:$0xf]
    %v1940 = vld [vmem:[%s1930 + $0x24] sm:$0xf]
    %v1941 = vld [vmem:[%s1930 + $0x28] sm:$0xf]
    %v1942 = vld [vmem:[%s1930 + $0x2c] sm:$0xf]
    %v1943 = vld [vmem:[%s1930 + $0x30] sm:$0xf]
    %v1944 = vld [vmem:[%s1930 + $0x34] sm:$0xf]
    %v1945 = vld [vmem:[%s1930 + $0x38] sm:$0xf]
    %v1946 = vld [vmem:[%s1930 + $0x3c] sm:$0xf]
    %v1963 = vunpack.c.l.b16 %v1931
    %v1964 = vunpack.c.l.b16 %v1932
    %v1965 = vunpack.c.l.b16 %v1933
    %v1966 = vunpack.c.l.b16 %v1934
    %v1967 = vunpack.c.l.b16 %v1935
    %v1968 = vunpack.c.l.b16 %v1936
    %v1969 = vunpack.c.l.b16 %v1937
    %v1970 = vunpack.c.l.b16 %v1938
    %v1971 = vunpack.c.l.b16 %v1939
    %v1972 = vunpack.c.l.b16 %v1940
    %v1973 = vunpack.c.l.b16 %v1941
    %v1974 = vunpack.c.l.b16 %v1942
    %v1975 = vunpack.c.l.b16 %v1943
    %v1976 = vunpack.c.l.b16 %v1944
    %v1977 = vunpack.c.l.b16 %v1945
    %v1978 = vunpack.c.l.b16 %v1946
    %v1979 = vpack.c.b16 %v1964, %v1963
    %v1980 = vpack.c.b16 %v1966, %v1965
    %v1981 = vpack.c.b16 %v1968, %v1967
    %v1982 = vpack.c.b16 %v1970, %v1969
    %v1983 = vpack.c.b16 %v1972, %v1971
    %v1984 = vpack.c.b16 %v1974, %v1973
    %v1985 = vpack.c.b16 %v1976, %v1975
    %v1986 = vpack.c.b16 %v1978, %v1977
    %1995 = vmatpush.bf16.msra.mxu0 %v1986
    %1996 = vmatpush.bf16.msra.mxu0 %v1985
    %1997 = vmatpush.bf16.msra.mxu0 %v1984
    %1998 = vmatpush.bf16.msra.mxu0 %v1983
    %1999 = vmatpush.bf16.msra.mxu0 %v1982
    %2000 = vmatpush.bf16.msra.mxu0 %v1981
    %2001 = vmatpush.bf16.msra.mxu0 %v1980
    %2002 = vmatpush.bf16.msra.mxu0 %v1979
    %2003 = vmatmul.bf16.gmra.mxu0 %v1926
    %v2004 = vpop.f32.mrf.mxu0
    %v2005 = vadd.f32 0.0, %v2004
    %v2006 = vpop.f32.mrf.mxu0
    %v2007 = vadd.f32 0.0, %v2006
    %2008 = vmatmul.bf16.gmra.mxu0 %v1927
    %v2009 = vpop.f32.mrf.mxu0
    %v2010 = vadd.f32 0.0, %v2009
    %v2011 = vpop.f32.mrf.mxu0
    %v2012 = vadd.f32 0.0, %v2011
    %2013 = vmatmul.bf16.gmra.mxu0 %v1928
    %v2014 = vpop.f32.mrf.mxu0
    %v2015 = vadd.f32 0.0, %v2014
    %v2016 = vpop.f32.mrf.mxu0
    %v2017 = vadd.f32 0.0, %v2016
    %2018 = vmatmul.bf16.gmra.mxu0 %v1929
    %v2019 = vpop.f32.mrf.mxu0
    %v2020 = vadd.f32 0.0, %v2019
    %v2021 = vpop.f32.mrf.mxu0
    %v2022 = vadd.f32 0.0, %v2021
    %2023 = vdwg.mxu0
    %v2024 = vadd.f32 %v1875, %v2005
    %v2025 = vadd.f32 %v1877, %v2007
    %v2026 = vadd.f32 %v1880, %v2010
    %v2027 = vadd.f32 %v1882, %v2012
    %v2028 = vadd.f32 %v1885, %v2015
    %v2029 = vadd.f32 %v1887, %v2017
    %v2030 = vadd.f32 %v1890, %v2020
    %v2031 = vadd.f32 %v1892, %v2022
    %s2032 = scalar_lea.vmem [#allocation5], 3
    %v2033 = vld [vmem:[%s2032] sm:$0x1]
    %v2035 = vperm.slane %v2033, 0
    %v2037 = vadd.f32 %v2024, %v2035
    %v2038 = vadd.f32 %v2025, %v2035
    %v2039 = vadd.f32 %v2026, %v2035
    %v2040 = vadd.f32 %v2027, %v2035
    %v2041 = vadd.f32 %v2028, %v2035
    %v2042 = vadd.f32 %v2029, %v2035
    %v2043 = vadd.f32 %v2030, %v2035
    %v2044 = vadd.f32 %v2031, %v2035
    %v2045 = vmax.f32 %v2037, 0.0
    %v2046 = vmax.f32 %v2038, 0.0
    %v2047 = vmax.f32 %v2039, 0.0
    %v2048 = vmax.f32 %v2040, 0.0
    %v2049 = vmax.f32 %v2041, 0.0
    %v2050 = vmax.f32 %v2042, 0.0
    %v2051 = vmax.f32 %v2043, 0.0
    %v2052 = vmax.f32 %v2044, 0.0
    %v2061 = vrot.slane %v2045, 2
    %v2062 = vrot.slane %v2046, 2
    %v2063 = vsel %vm1450, %v2061, %v2062
    %v2064 = vrot.slane %v2047, 2
    %v2065 = vsel %vm1450, %v2062, %v2064
    %v2066 = vrot.slane %v2048, 2
    %v2067 = vsel %vm1450, %v2064, %v2066
    %v2068 = vrot.slane %v2049, 2
    %v2069 = vsel %vm1450, %v2066, %v2068
    %v2070 = vrot.slane %v2050, 2
    %v2071 = vsel %vm1450, %v2068, %v2070
    %v2072 = vrot.slane %v2051, 2
    %v2073 = vsel %vm1450, %v2070, %v2072
    %v2074 = vrot.slane %v2052, 2
    %v2075 = vsel %vm1450, %v2072, %v2074
    %v2084 = vsel %vm1450, %v2074, 0.0
    %v2085 = vsel %vm1515, %v2063, 0.0
    %v2086 = vsel %vm1516, %v2065, 0.0
    %v2087 = vsel %vm1517, %v2067, 0.0
    %v2088 = vsel %vm1518, %v2069, 0.0
    %v2089 = vsel %vm1519, %v2071, 0.0
    %v2090 = vsel %vm1520, %v2073, 0.0
    %v2091 = vsel %vm1521, %v2075, 0.0
    %v2092 = vsel %vm1522, %v2084, 0.0
    %v2093 = vmax.f32 %v2045, %v2085
    %v2094 = vmax.f32 %v2046, %v2086
    %v2095 = vmax.f32 %v2047, %v2087
    %v2096 = vmax.f32 %v2048, %v2088
    %v2097 = vmax.f32 %v2049, %v2089
    %v2098 = vmax.f32 %v2050, %v2090
    %v2099 = vmax.f32 %v2051, %v2091
    %v2100 = vmax.f32 %v2052, %v2092
    %2101 = vrot.lane.b32.xlu0 %v2093, 120
    %v2102 = vpop.permute.xlu0 %2101
    %2103 = vrot.lane.b32.xlu0 %v2094, 120
    %v2104 = vpop.permute.xlu0 %2103
    %2105 = vrot.lane.b32.xlu0 %v2095, 120
    %v2106 = vpop.permute.xlu0 %2105
    %2107 = vrot.lane.b32.xlu0 %v2096, 120
    %v2108 = vpop.permute.xlu0 %2107
    %2109 = vrot.lane.b32.xlu0 %v2097, 120
    %v2110 = vpop.permute.xlu0 %2109
    %2111 = vrot.lane.b32.xlu0 %v2098, 120
    %v2112 = vpop.permute.xlu0 %2111
    %2113 = vrot.lane.b32.xlu0 %v2099, 120
    %v2114 = vpop.permute.xlu0 %2113
    %2115 = vrot.lane.b32.xlu0 %v2100, 120
    %v2116 = vpop.permute.xlu0 %2115
    %v2117 = vmax.f32 %v2093, %v2102
    %v2118 = vmax.f32 %v2094, %v2104
    %v2119 = vmax.f32 %v2095, %v2106
    %v2120 = vmax.f32 %v2096, %v2108
    %v2121 = vmax.f32 %v2097, %v2110
    %v2122 = vmax.f32 %v2098, %v2112
    %v2123 = vmax.f32 %v2099, %v2114
    %v2124 = vmax.f32 %v2100, %v2116
    %vm2133 = vcmask 1043456
    %v2134 = vrot.slane %v2117, 4
    %v2135 = vrot.slane %v2118, 4
    %v2136 = vsel %vm2133, %v2134, %v2135
    %v2137 = vrot.slane %v2119, 4
    %v2138 = vsel %vm2133, %v2135, %v2137
    %v2139 = vrot.slane %v2120, 4
    %v2140 = vsel %vm2133, %v2137, %v2139
    %v2141 = vrot.slane %v2121, 4
    %v2142 = vsel %vm2133, %v2139, %v2141
    %v2143 = vrot.slane %v2122, 4
    %v2144 = vsel %vm2133, %v2141, %v2143
    %v2145 = vrot.slane %v2123, 4
    %v2146 = vsel %vm2133, %v2143, %v2145
    %v2147 = vrot.slane %v2124, 4
    %v2148 = vsel %vm2133, %v2145, %v2147
    %v2157 = vsel %vm2133, 0.0, %v2134
    %v2158 = vadd.s32 %v163, 4294967292
    %v2159 = vadd.s32 %v164, 4294967292
    %v2160 = vadd.s32 %v165, 4294967292
    %v2161 = vadd.s32 %v166, 4294967292
    %v2162 = vadd.s32 %v167, 4294967292
    %v2163 = vadd.s32 %v168, 4294967292
    %v2164 = vadd.s32 %v169, 4294967292
    %v2165 = vadd.s32 %v170, 4294967292
    %vm2166 = vcmp.ge.s32.totalorder %v2158, 0
    %vm2167 = vcmp.ge.s32.totalorder %v2159, 0
    %vm2168 = vcmp.ge.s32.totalorder %v2160, 0
    %vm2169 = vcmp.ge.s32.totalorder %v2161, 0
    %vm2170 = vcmp.ge.s32.totalorder %v2162, 0
    %vm2171 = vcmp.ge.s32.totalorder %v2163, 0
    %vm2172 = vcmp.ge.s32.totalorder %v2164, 0
    %vm2173 = vcmp.ge.s32.totalorder %v2165, 0
    %vm2174 = vcmp.lt.s32.totalorder %v2158, 32
    %vm2175 = vcmp.lt.s32.totalorder %v2159, 32
    %vm2176 = vcmp.lt.s32.totalorder %v2160, 32
    %vm2177 = vcmp.lt.s32.totalorder %v2161, 32
    %vm2178 = vcmp.lt.s32.totalorder %v2162, 32
    %vm2179 = vcmp.lt.s32.totalorder %v2163, 32
    %vm2180 = vcmp.lt.s32.totalorder %v2164, 32
    %vm2181 = vcmp.lt.s32.totalorder %v2165, 32
    %vm2182 = vmand %vm2166, %vm2174
    %vm2183 = vmand %vm2167, %vm2175
    %vm2184 = vmand %vm2168, %vm2176
    %vm2185 = vmand %vm2169, %vm2177
    %vm2186 = vmand %vm2170, %vm2178
    %vm2187 = vmand %vm2171, %vm2179
    %vm2188 = vmand %vm2172, %vm2180
    %vm2189 = vmand %vm2173, %vm2181
    %v2190 = vsel %vm2182, 1, 0
    %v2191 = vsel %vm2183, 1, 0
    %v2192 = vsel %vm2184, 1, 0
    %v2193 = vsel %vm2185, 1, 0
    %v2194 = vsel %vm2186, 1, 0
    %v2195 = vsel %vm2187, 1, 0
    %v2196 = vsel %vm2188, 1, 0
    %v2197 = vsel %vm2189, 1, 0
    %vm2198 = vcmp.eq.s32.totalorder %v2190, 1
    %vm2199 = vcmp.eq.s32.totalorder %v2191, 1
    %vm2200 = vcmp.eq.s32.totalorder %v2192, 1
    %vm2201 = vcmp.eq.s32.totalorder %v2193, 1
    %vm2202 = vcmp.eq.s32.totalorder %v2194, 1
    %vm2203 = vcmp.eq.s32.totalorder %v2195, 1
    %vm2204 = vcmp.eq.s32.totalorder %v2196, 1
    %vm2205 = vcmp.eq.s32.totalorder %v2197, 1
    %v2206 = vsel %vm2198, %v2157, 0.0
    %v2207 = vsel %vm2199, %v2136, 0.0
    %v2208 = vsel %vm2200, %v2138, 0.0
    %v2209 = vsel %vm2201, %v2140, 0.0
    %v2210 = vsel %vm2202, %v2142, 0.0
    %v2211 = vsel %vm2203, %v2144, 0.0
    %v2212 = vsel %vm2204, %v2146, 0.0
    %v2213 = vsel %vm2205, %v2148, 0.0
    %v2214 = vpack.c.bf16 %v2207, %v2206
    %v2215 = vpack.c.bf16 %v2209, %v2208
    %v2216 = vpack.c.bf16 %v2211, %v2210
    %v2217 = vpack.c.bf16 %v2213, %v2212
    %s2218 = scalar_lea.vmem [#allocation2], 768
    %v2219 = vld [vmem:[%s2218] sm:$0xf]
    %v2220 = vld [vmem:[%s2218 + $0x4] sm:$0xf]
    %v2221 = vld [vmem:[%s2218 + $0x8] sm:$0xf]
    %v2222 = vld [vmem:[%s2218 + $0xc] sm:$0xf]
    %v2223 = vld [vmem:[%s2218 + $0x10] sm:$0xf]
    %v2224 = vld [vmem:[%s2218 + $0x14] sm:$0xf]
    %v2225 = vld [vmem:[%s2218 + $0x18] sm:$0xf]
    %v2226 = vld [vmem:[%s2218 + $0x1c] sm:$0xf]
    %v2227 = vld [vmem:[%s2218 + $0x20] sm:$0xf]
    %v2228 = vld [vmem:[%s2218 + $0x24] sm:$0xf]
    %v2229 = vld [vmem:[%s2218 + $0x28] sm:$0xf]
    %v2230 = vld [vmem:[%s2218 + $0x2c] sm:$0xf]
    %v2231 = vld [vmem:[%s2218 + $0x30] sm:$0xf]
    %v2232 = vld [vmem:[%s2218 + $0x34] sm:$0xf]
    %v2233 = vld [vmem:[%s2218 + $0x38] sm:$0xf]
    %v2234 = vld [vmem:[%s2218 + $0x3c] sm:$0xf]
    %v2235 = vpack.c.bf16 %v2118, %v2117
    %v2236 = vpack.c.bf16 %v2120, %v2119
    %v2237 = vpack.c.bf16 %v2122, %v2121
    %v2238 = vpack.c.bf16 %v2124, %v2123
    %s2239 = scalar_lea.vmem [#allocation2], 832
    %v2240 = vld [vmem:[%s2239] sm:$0xf]
    %v2241 = vld [vmem:[%s2239 + $0x4] sm:$0xf]
    %v2242 = vld [vmem:[%s2239 + $0x8] sm:$0xf]
    %v2243 = vld [vmem:[%s2239 + $0xc] sm:$0xf]
    %v2244 = vld [vmem:[%s2239 + $0x10] sm:$0xf]
    %v2245 = vld [vmem:[%s2239 + $0x14] sm:$0xf]
    %v2246 = vld [vmem:[%s2239 + $0x18] sm:$0xf]
    %v2247 = vld [vmem:[%s2239 + $0x1c] sm:$0xf]
    %v2248 = vld [vmem:[%s2239 + $0x20] sm:$0xf]
    %v2249 = vld [vmem:[%s2239 + $0x24] sm:$0xf]
    %v2250 = vld [vmem:[%s2239 + $0x28] sm:$0xf]
    %v2251 = vld [vmem:[%s2239 + $0x2c] sm:$0xf]
    %v2252 = vld [vmem:[%s2239 + $0x30] sm:$0xf]
    %v2253 = vld [vmem:[%s2239 + $0x34] sm:$0xf]
    %v2254 = vld [vmem:[%s2239 + $0x38] sm:$0xf]
    %v2255 = vld [vmem:[%s2239 + $0x3c] sm:$0xf]
    %v2272 = vunpack.c.l.b16 %v2240
    %v2273 = vunpack.c.l.b16 %v2241
    %v2274 = vunpack.c.l.b16 %v2242
    %v2275 = vunpack.c.l.b16 %v2243
    %v2276 = vunpack.c.l.b16 %v2244
    %v2277 = vunpack.c.l.b16 %v2245
    %v2278 = vunpack.c.l.b16 %v2246
    %v2279 = vunpack.c.l.b16 %v2247
    %v2280 = vunpack.c.l.b16 %v2248
    %v2281 = vunpack.c.l.b16 %v2249
    %v2282 = vunpack.c.l.b16 %v2250
    %v2283 = vunpack.c.l.b16 %v2251
    %v2284 = vunpack.c.l.b16 %v2252
    %v2285 = vunpack.c.l.b16 %v2253
    %v2286 = vunpack.c.l.b16 %v2254
    %v2287 = vunpack.c.l.b16 %v2255
    %v2288 = vpack.c.b16 %v2273, %v2272
    %v2289 = vpack.c.b16 %v2275, %v2274
    %v2290 = vpack.c.b16 %v2277, %v2276
    %v2291 = vpack.c.b16 %v2279, %v2278
    %v2292 = vpack.c.b16 %v2281, %v2280
    %v2293 = vpack.c.b16 %v2283, %v2282
    %v2294 = vpack.c.b16 %v2285, %v2284
    %v2295 = vpack.c.b16 %v2287, %v2286
    %2304 = vmatpush.bf16.msra.mxu0 %v2295
    %2305 = vmatpush.bf16.msra.mxu0 %v2294
    %2306 = vmatpush.bf16.msra.mxu0 %v2293
    %2307 = vmatpush.bf16.msra.mxu0 %v2292
    %2308 = vmatpush.bf16.msra.mxu0 %v2291
    %2309 = vmatpush.bf16.msra.mxu0 %v2290
    %2310 = vmatpush.bf16.msra.mxu0 %v2289
    %2311 = vmatpush.bf16.msra.mxu0 %v2288
    %2312 = vmatmul.bf16.gmra.mxu0 %v2235
    %v2313 = vpop.f32.mrf.mxu0
    %v2314 = vadd.f32 0.0, %v2313
    %v2315 = vpop.f32.mrf.mxu0
    %v2316 = vadd.f32 0.0, %v2315
    %2317 = vmatmul.bf16.gmra.mxu0 %v2236
    %v2318 = vpop.f32.mrf.mxu0
    %v2319 = vadd.f32 0.0, %v2318
    %v2320 = vpop.f32.mrf.mxu0
    %v2321 = vadd.f32 0.0, %v2320
    %2322 = vmatmul.bf16.gmra.mxu0 %v2237
    %v2323 = vpop.f32.mrf.mxu0
    %v2324 = vadd.f32 0.0, %v2323
    %v2325 = vpop.f32.mrf.mxu0
    %v2326 = vadd.f32 0.0, %v2325
    %2327 = vmatmul.bf16.gmra.mxu0 %v2238
    %v2328 = vpop.f32.mrf.mxu0
    %v2329 = vadd.f32 0.0, %v2328
    %v2330 = vpop.f32.mrf.mxu0
    %v2331 = vadd.f32 0.0, %v2330
    %2332 = vdwg.mxu0
    %v2349 = vunpack.c.l.b16 %v2219
    %v2350 = vunpack.c.l.b16 %v2220
    %v2351 = vunpack.c.l.b16 %v2221
    %v2352 = vunpack.c.l.b16 %v2222
    %v2353 = vunpack.c.l.b16 %v2223
    %v2354 = vunpack.c.l.b16 %v2224
    %v2355 = vunpack.c.l.b16 %v2225
    %v2356 = vunpack.c.l.b16 %v2226
    %v2357 = vunpack.c.l.b16 %v2227
    %v2358 = vunpack.c.l.b16 %v2228
    %v2359 = vunpack.c.l.b16 %v2229
    %v2360 = vunpack.c.l.b16 %v2230
    %v2361 = vunpack.c.l.b16 %v2231
    %v2362 = vunpack.c.l.b16 %v2232
    %v2363 = vunpack.c.l.b16 %v2233
    %v2364 = vunpack.c.l.b16 %v2234
    %v2365 = vpack.c.b16 %v2350, %v2349
    %v2366 = vpack.c.b16 %v2352, %v2351
    %v2367 = vpack.c.b16 %v2354, %v2353
    %v2368 = vpack.c.b16 %v2356, %v2355
    %v2369 = vpack.c.b16 %v2358, %v2357
    %v2370 = vpack.c.b16 %v2360, %v2359
    %v2371 = vpack.c.b16 %v2362, %v2361
    %v2372 = vpack.c.b16 %v2364, %v2363
    %2381 = vmatpush.bf16.msra.mxu0 %v2372
    %2382 = vmatpush.bf16.msra.mxu0 %v2371
    %2383 = vmatpush.bf16.msra.mxu0 %v2370
    %2384 = vmatpush.bf16.msra.mxu0 %v2369
    %2385 = vmatpush.bf16.msra.mxu0 %v2368
    %2386 = vmatpush.bf16.msra.mxu0 %v2367
    %2387 = vmatpush.bf16.msra.mxu0 %v2366
    %2388 = vmatpush.bf16.msra.mxu0 %v2365
    %2389 = vmatmul.bf16.gmra.mxu0 %v2214
    %v2390 = vpop.f32.mrf.mxu0
    %v2391 = vadd.f32 %v2314, %v2390
    %v2392 = vpop.f32.mrf.mxu0
    %v2393 = vadd.f32 %v2316, %v2392
    %2394 = vmatmul.bf16.gmra.mxu0 %v2215
    %v2395 = vpop.f32.mrf.mxu0
    %v2396 = vadd.f32 %v2319, %v2395
    %v2397 = vpop.f32.mrf.mxu0
    %v2398 = vadd.f32 %v2321, %v2397
    %2399 = vmatmul.bf16.gmra.mxu0 %v2216
    %v2400 = vpop.f32.mrf.mxu0
    %v2401 = vadd.f32 %v2324, %v2400
    %v2402 = vpop.f32.mrf.mxu0
    %v2403 = vadd.f32 %v2326, %v2402
    %2404 = vmatmul.bf16.gmra.mxu0 %v2217
    %v2405 = vpop.f32.mrf.mxu0
    %v2406 = vadd.f32 %v2329, %v2405
    %v2407 = vpop.f32.mrf.mxu0
    %v2408 = vadd.f32 %v2331, %v2407
    %2409 = vdwg.mxu0
    %v2411 = vsel %vm2133, %v2147, 0.0
    %v2412 = vadd.s32 %v163, 4
    %v2413 = vadd.s32 %v164, 4
    %v2414 = vadd.s32 %v165, 4
    %v2415 = vadd.s32 %v166, 4
    %v2416 = vadd.s32 %v167, 4
    %v2417 = vadd.s32 %v168, 4
    %v2418 = vadd.s32 %v169, 4
    %v2419 = vadd.s32 %v170, 4
    %vm2420 = vcmp.ge.s32.totalorder %v2412, 0
    %vm2421 = vcmp.ge.s32.totalorder %v2413, 0
    %vm2422 = vcmp.ge.s32.totalorder %v2414, 0
    %vm2423 = vcmp.ge.s32.totalorder %v2415, 0
    %vm2424 = vcmp.ge.s32.totalorder %v2416, 0
    %vm2425 = vcmp.ge.s32.totalorder %v2417, 0
    %vm2426 = vcmp.ge.s32.totalorder %v2418, 0
    %vm2427 = vcmp.ge.s32.totalorder %v2419, 0
    %vm2428 = vcmp.lt.s32.totalorder %v2412, 32
    %vm2429 = vcmp.lt.s32.totalorder %v2413, 32
    %vm2430 = vcmp.lt.s32.totalorder %v2414, 32
    %vm2431 = vcmp.lt.s32.totalorder %v2415, 32
    %vm2432 = vcmp.lt.s32.totalorder %v2416, 32
    %vm2433 = vcmp.lt.s32.totalorder %v2417, 32
    %vm2434 = vcmp.lt.s32.totalorder %v2418, 32
    %vm2435 = vcmp.lt.s32.totalorder %v2419, 32
    %vm2436 = vmand %vm2420, %vm2428
    %vm2437 = vmand %vm2421, %vm2429
    %vm2438 = vmand %vm2422, %vm2430
    %vm2439 = vmand %vm2423, %vm2431
    %vm2440 = vmand %vm2424, %vm2432
    %vm2441 = vmand %vm2425, %vm2433
    %vm2442 = vmand %vm2426, %vm2434
    %vm2443 = vmand %vm2427, %vm2435
    %v2444 = vsel %vm2436, 1, 0
    %v2445 = vsel %vm2437, 1, 0
    %v2446 = vsel %vm2438, 1, 0
    %v2447 = vsel %vm2439, 1, 0
    %v2448 = vsel %vm2440, 1, 0
    %v2449 = vsel %vm2441, 1, 0
    %v2450 = vsel %vm2442, 1, 0
    %v2451 = vsel %vm2443, 1, 0
    %vm2452 = vcmp.eq.s32.totalorder %v2444, 1
    %vm2453 = vcmp.eq.s32.totalorder %v2445, 1
    %vm2454 = vcmp.eq.s32.totalorder %v2446, 1
    %vm2455 = vcmp.eq.s32.totalorder %v2447, 1
    %vm2456 = vcmp.eq.s32.totalorder %v2448, 1
    %vm2457 = vcmp.eq.s32.totalorder %v2449, 1
    %vm2458 = vcmp.eq.s32.totalorder %v2450, 1
    %vm2459 = vcmp.eq.s32.totalorder %v2451, 1
    %v2460 = vsel %vm2452, %v2136, 0.0
    %v2461 = vsel %vm2453, %v2138, 0.0
    %v2462 = vsel %vm2454, %v2140, 0.0
    %v2463 = vsel %vm2455, %v2142, 0.0
    %v2464 = vsel %vm2456, %v2144, 0.0
    %v2465 = vsel %vm2457, %v2146, 0.0
    %v2466 = vsel %vm2458, %v2148, 0.0
    %v2467 = vsel %vm2459, %v2411, 0.0
    %v2468 = vpack.c.bf16 %v2461, %v2460
    %v2469 = vpack.c.bf16 %v2463, %v2462
    %v2470 = vpack.c.bf16 %v2465, %v2464
    %v2471 = vpack.c.bf16 %v2467, %v2466
    %s2472 = scalar_lea.vmem [#allocation2], 896
    %v2473 = vld [vmem:[%s2472] sm:$0xf]
    %v2474 = vld [vmem:[%s2472 + $0x4] sm:$0xf]
    %v2475 = vld [vmem:[%s2472 + $0x8] sm:$0xf]
    %v2476 = vld [vmem:[%s2472 + $0xc] sm:$0xf]
    %v2477 = vld [vmem:[%s2472 + $0x10] sm:$0xf]
    %v2478 = vld [vmem:[%s2472 + $0x14] sm:$0xf]
    %v2479 = vld [vmem:[%s2472 + $0x18] sm:$0xf]
    %v2480 = vld [vmem:[%s2472 + $0x1c] sm:$0xf]
    %v2481 = vld [vmem:[%s2472 + $0x20] sm:$0xf]
    %v2482 = vld [vmem:[%s2472 + $0x24] sm:$0xf]
    %v2483 = vld [vmem:[%s2472 + $0x28] sm:$0xf]
    %v2484 = vld [vmem:[%s2472 + $0x2c] sm:$0xf]
    %v2485 = vld [vmem:[%s2472 + $0x30] sm:$0xf]
    %v2486 = vld [vmem:[%s2472 + $0x34] sm:$0xf]
    %v2487 = vld [vmem:[%s2472 + $0x38] sm:$0xf]
    %v2488 = vld [vmem:[%s2472 + $0x3c] sm:$0xf]
    %v2505 = vunpack.c.l.b16 %v2473
    %v2506 = vunpack.c.l.b16 %v2474
    %v2507 = vunpack.c.l.b16 %v2475
    %v2508 = vunpack.c.l.b16 %v2476
    %v2509 = vunpack.c.l.b16 %v2477
    %v2510 = vunpack.c.l.b16 %v2478
    %v2511 = vunpack.c.l.b16 %v2479
    %v2512 = vunpack.c.l.b16 %v2480
    %v2513 = vunpack.c.l.b16 %v2481
    %v2514 = vunpack.c.l.b16 %v2482
    %v2515 = vunpack.c.l.b16 %v2483
    %v2516 = vunpack.c.l.b16 %v2484
    %v2517 = vunpack.c.l.b16 %v2485
    %v2518 = vunpack.c.l.b16 %v2486
    %v2519 = vunpack.c.l.b16 %v2487
    %v2520 = vunpack.c.l.b16 %v2488
    %v2521 = vpack.c.b16 %v2506, %v2505
    %v2522 = vpack.c.b16 %v2508, %v2507
    %v2523 = vpack.c.b16 %v2510, %v2509
    %v2524 = vpack.c.b16 %v2512, %v2511
    %v2525 = vpack.c.b16 %v2514, %v2513
    %v2526 = vpack.c.b16 %v2516, %v2515
    %v2527 = vpack.c.b16 %v2518, %v2517
    %v2528 = vpack.c.b16 %v2520, %v2519
    %2537 = vmatpush.bf16.msra.mxu0 %v2528
    %2538 = vmatpush.bf16.msra.mxu0 %v2527
    %2539 = vmatpush.bf16.msra.mxu0 %v2526
    %2540 = vmatpush.bf16.msra.mxu0 %v2525
    %2541 = vmatpush.bf16.msra.mxu0 %v2524
    %2542 = vmatpush.bf16.msra.mxu0 %v2523
    %2543 = vmatpush.bf16.msra.mxu0 %v2522
    %2544 = vmatpush.bf16.msra.mxu0 %v2521
    %2545 = vmatmul.bf16.gmra.mxu0 %v2468
    %v2546 = vpop.f32.mrf.mxu0
    %v2547 = vadd.f32 0.0, %v2546
    %v2548 = vpop.f32.mrf.mxu0
    %v2549 = vadd.f32 0.0, %v2548
    %2550 = vmatmul.bf16.gmra.mxu0 %v2469
    %v2551 = vpop.f32.mrf.mxu0
    %v2552 = vadd.f32 0.0, %v2551
    %v2553 = vpop.f32.mrf.mxu0
    %v2554 = vadd.f32 0.0, %v2553
    %2555 = vmatmul.bf16.gmra.mxu0 %v2470
    %v2556 = vpop.f32.mrf.mxu0
    %v2557 = vadd.f32 0.0, %v2556
    %v2558 = vpop.f32.mrf.mxu0
    %v2559 = vadd.f32 0.0, %v2558
    %2560 = vmatmul.bf16.gmra.mxu0 %v2471
    %v2561 = vpop.f32.mrf.mxu0
    %v2562 = vadd.f32 0.0, %v2561
    %v2563 = vpop.f32.mrf.mxu0
    %v2564 = vadd.f32 0.0, %v2563
    %2565 = vdwg.mxu0
    %v2566 = vadd.f32 %v2391, %v2547
    %v2567 = vadd.f32 %v2393, %v2549
    %v2568 = vadd.f32 %v2396, %v2552
    %v2569 = vadd.f32 %v2398, %v2554
    %v2570 = vadd.f32 %v2401, %v2557
    %v2571 = vadd.f32 %v2403, %v2559
    %v2572 = vadd.f32 %v2406, %v2562
    %v2573 = vadd.f32 %v2408, %v2564
    %s2574 = scalar_lea.vmem [#allocation5], 4
    %v2575 = vld [vmem:[%s2574] sm:$0x1]
    %v2577 = vperm.slane %v2575, 0
    %v2579 = vadd.f32 %v2566, %v2577
    %v2580 = vadd.f32 %v2567, %v2577
    %v2581 = vadd.f32 %v2568, %v2577
    %v2582 = vadd.f32 %v2569, %v2577
    %v2583 = vadd.f32 %v2570, %v2577
    %v2584 = vadd.f32 %v2571, %v2577
    %v2585 = vadd.f32 %v2572, %v2577
    %v2586 = vadd.f32 %v2573, %v2577
    %v2587 = vmax.f32 %v2579, 0.0
    %v2588 = vmax.f32 %v2580, 0.0
    %v2589 = vmax.f32 %v2581, 0.0
    %v2590 = vmax.f32 %v2582, 0.0
    %v2591 = vmax.f32 %v2583, 0.0
    %v2592 = vmax.f32 %v2584, 0.0
    %v2593 = vmax.f32 %v2585, 0.0
    %v2594 = vmax.f32 %v2586, 0.0
    %v2603 = vrot.slane %v2587, 4
    %v2604 = vrot.slane %v2588, 4
    %v2605 = vsel %vm2133, %v2603, %v2604
    %v2606 = vrot.slane %v2589, 4
    %v2607 = vsel %vm2133, %v2604, %v2606
    %v2608 = vrot.slane %v2590, 4
    %v2609 = vsel %vm2133, %v2606, %v2608
    %v2610 = vrot.slane %v2591, 4
    %v2611 = vsel %vm2133, %v2608, %v2610
    %v2612 = vrot.slane %v2592, 4
    %v2613 = vsel %vm2133, %v2610, %v2612
    %v2614 = vrot.slane %v2593, 4
    %v2615 = vsel %vm2133, %v2612, %v2614
    %v2616 = vrot.slane %v2594, 4
    %v2617 = vsel %vm2133, %v2614, %v2616
    %v2626 = vsel %vm2133, 0.0, %v2603
    %v2627 = vsel %vm2198, %v2626, 0.0
    %v2628 = vsel %vm2199, %v2605, 0.0
    %v2629 = vsel %vm2200, %v2607, 0.0
    %v2630 = vsel %vm2201, %v2609, 0.0
    %v2631 = vsel %vm2202, %v2611, 0.0
    %v2632 = vsel %vm2203, %v2613, 0.0
    %v2633 = vsel %vm2204, %v2615, 0.0
    %v2634 = vsel %vm2205, %v2617, 0.0
    %v2635 = vpack.c.bf16 %v2628, %v2627
    %v2636 = vpack.c.bf16 %v2630, %v2629
    %v2637 = vpack.c.bf16 %v2632, %v2631
    %v2638 = vpack.c.bf16 %v2634, %v2633
    %s2639 = scalar_lea.vmem [#allocation2], 960
    %v2640 = vld [vmem:[%s2639] sm:$0xf]
    %v2641 = vld [vmem:[%s2639 + $0x4] sm:$0xf]
    %v2642 = vld [vmem:[%s2639 + $0x8] sm:$0xf]
    %v2643 = vld [vmem:[%s2639 + $0xc] sm:$0xf]
    %v2644 = vld [vmem:[%s2639 + $0x10] sm:$0xf]
    %v2645 = vld [vmem:[%s2639 + $0x14] sm:$0xf]
    %v2646 = vld [vmem:[%s2639 + $0x18] sm:$0xf]
    %v2647 = vld [vmem:[%s2639 + $0x1c] sm:$0xf]
    %v2648 = vld [vmem:[%s2639 + $0x20] sm:$0xf]
    %v2649 = vld [vmem:[%s2639 + $0x24] sm:$0xf]
    %v2650 = vld [vmem:[%s2639 + $0x28] sm:$0xf]
    %v2651 = vld [vmem:[%s2639 + $0x2c] sm:$0xf]
    %v2652 = vld [vmem:[%s2639 + $0x30] sm:$0xf]
    %v2653 = vld [vmem:[%s2639 + $0x34] sm:$0xf]
    %v2654 = vld [vmem:[%s2639 + $0x38] sm:$0xf]
    %v2655 = vld [vmem:[%s2639 + $0x3c] sm:$0xf]
    %v2656 = vpack.c.bf16 %v2588, %v2587
    %v2657 = vpack.c.bf16 %v2590, %v2589
    %v2658 = vpack.c.bf16 %v2592, %v2591
    %v2659 = vpack.c.bf16 %v2594, %v2593
    %s2660 = scalar_lea.vmem [#allocation2], 1024
    %v2661 = vld [vmem:[%s2660] sm:$0xf]
    %v2662 = vld [vmem:[%s2660 + $0x4] sm:$0xf]
    %v2663 = vld [vmem:[%s2660 + $0x8] sm:$0xf]
    %v2664 = vld [vmem:[%s2660 + $0xc] sm:$0xf]
    %v2665 = vld [vmem:[%s2660 + $0x10] sm:$0xf]
    %v2666 = vld [vmem:[%s2660 + $0x14] sm:$0xf]
    %v2667 = vld [vmem:[%s2660 + $0x18] sm:$0xf]
    %v2668 = vld [vmem:[%s2660 + $0x1c] sm:$0xf]
    %v2669 = vld [vmem:[%s2660 + $0x20] sm:$0xf]
    %v2670 = vld [vmem:[%s2660 + $0x24] sm:$0xf]
    %v2671 = vld [vmem:[%s2660 + $0x28] sm:$0xf]
    %v2672 = vld [vmem:[%s2660 + $0x2c] sm:$0xf]
    %v2673 = vld [vmem:[%s2660 + $0x30] sm:$0xf]
    %v2674 = vld [vmem:[%s2660 + $0x34] sm:$0xf]
    %v2675 = vld [vmem:[%s2660 + $0x38] sm:$0xf]
    %v2676 = vld [vmem:[%s2660 + $0x3c] sm:$0xf]
    %v2693 = vunpack.c.l.b16 %v2661
    %v2694 = vunpack.c.l.b16 %v2662
    %v2695 = vunpack.c.l.b16 %v2663
    %v2696 = vunpack.c.l.b16 %v2664
    %v2697 = vunpack.c.l.b16 %v2665
    %v2698 = vunpack.c.l.b16 %v2666
    %v2699 = vunpack.c.l.b16 %v2667
    %v2700 = vunpack.c.l.b16 %v2668
    %v2701 = vunpack.c.l.b16 %v2669
    %v2702 = vunpack.c.l.b16 %v2670
    %v2703 = vunpack.c.l.b16 %v2671
    %v2704 = vunpack.c.l.b16 %v2672
    %v2705 = vunpack.c.l.b16 %v2673
    %v2706 = vunpack.c.l.b16 %v2674
    %v2707 = vunpack.c.l.b16 %v2675
    %v2708 = vunpack.c.l.b16 %v2676
    %v2709 = vpack.c.b16 %v2694, %v2693
    %v2710 = vpack.c.b16 %v2696, %v2695
    %v2711 = vpack.c.b16 %v2698, %v2697
    %v2712 = vpack.c.b16 %v2700, %v2699
    %v2713 = vpack.c.b16 %v2702, %v2701
    %v2714 = vpack.c.b16 %v2704, %v2703
    %v2715 = vpack.c.b16 %v2706, %v2705
    %v2716 = vpack.c.b16 %v2708, %v2707
    %2725 = vmatpush.bf16.msra.mxu0 %v2716
    %2726 = vmatpush.bf16.msra.mxu0 %v2715
    %2727 = vmatpush.bf16.msra.mxu0 %v2714
    %2728 = vmatpush.bf16.msra.mxu0 %v2713
    %2729 = vmatpush.bf16.msra.mxu0 %v2712
    %2730 = vmatpush.bf16.msra.mxu0 %v2711
    %2731 = vmatpush.bf16.msra.mxu0 %v2710
    %2732 = vmatpush.bf16.msra.mxu0 %v2709
    %2733 = vmatmul.bf16.gmra.mxu0 %v2656
    %v2734 = vpop.f32.mrf.mxu0
    %v2735 = vadd.f32 0.0, %v2734
    %v2736 = vpop.f32.mrf.mxu0
    %v2737 = vadd.f32 0.0, %v2736
    %2738 = vmatmul.bf16.gmra.mxu0 %v2657
    %v2739 = vpop.f32.mrf.mxu0
    %v2740 = vadd.f32 0.0, %v2739
    %v2741 = vpop.f32.mrf.mxu0
    %v2742 = vadd.f32 0.0, %v2741
    %2743 = vmatmul.bf16.gmra.mxu0 %v2658
    %v2744 = vpop.f32.mrf.mxu0
    %v2745 = vadd.f32 0.0, %v2744
    %v2746 = vpop.f32.mrf.mxu0
    %v2747 = vadd.f32 0.0, %v2746
    %2748 = vmatmul.bf16.gmra.mxu0 %v2659
    %v2749 = vpop.f32.mrf.mxu0
    %v2750 = vadd.f32 0.0, %v2749
    %v2751 = vpop.f32.mrf.mxu0
    %v2752 = vadd.f32 0.0, %v2751
    %2753 = vdwg.mxu0
    %v2770 = vunpack.c.l.b16 %v2640
    %v2771 = vunpack.c.l.b16 %v2641
    %v2772 = vunpack.c.l.b16 %v2642
    %v2773 = vunpack.c.l.b16 %v2643
    %v2774 = vunpack.c.l.b16 %v2644
    %v2775 = vunpack.c.l.b16 %v2645
    %v2776 = vunpack.c.l.b16 %v2646
    %v2777 = vunpack.c.l.b16 %v2647
    %v2778 = vunpack.c.l.b16 %v2648
    %v2779 = vunpack.c.l.b16 %v2649
    %v2780 = vunpack.c.l.b16 %v2650
    %v2781 = vunpack.c.l.b16 %v2651
    %v2782 = vunpack.c.l.b16 %v2652
    %v2783 = vunpack.c.l.b16 %v2653
    %v2784 = vunpack.c.l.b16 %v2654
    %v2785 = vunpack.c.l.b16 %v2655
    %v2786 = vpack.c.b16 %v2771, %v2770
    %v2787 = vpack.c.b16 %v2773, %v2772
    %v2788 = vpack.c.b16 %v2775, %v2774
    %v2789 = vpack.c.b16 %v2777, %v2776
    %v2790 = vpack.c.b16 %v2779, %v2778
    %v2791 = vpack.c.b16 %v2781, %v2780
    %v2792 = vpack.c.b16 %v2783, %v2782
    %v2793 = vpack.c.b16 %v2785, %v2784
    %2802 = vmatpush.bf16.msra.mxu0 %v2793
    %2803 = vmatpush.bf16.msra.mxu0 %v2792
    %2804 = vmatpush.bf16.msra.mxu0 %v2791
    %2805 = vmatpush.bf16.msra.mxu0 %v2790
    %2806 = vmatpush.bf16.msra.mxu0 %v2789
    %2807 = vmatpush.bf16.msra.mxu0 %v2788
    %2808 = vmatpush.bf16.msra.mxu0 %v2787
    %2809 = vmatpush.bf16.msra.mxu0 %v2786
    %2810 = vmatmul.bf16.gmra.mxu0 %v2635
    %v2811 = vpop.f32.mrf.mxu0
    %v2812 = vadd.f32 %v2735, %v2811
    %v2813 = vpop.f32.mrf.mxu0
    %v2814 = vadd.f32 %v2737, %v2813
    %2815 = vmatmul.bf16.gmra.mxu0 %v2636
    %v2816 = vpop.f32.mrf.mxu0
    %v2817 = vadd.f32 %v2740, %v2816
    %v2818 = vpop.f32.mrf.mxu0
    %v2819 = vadd.f32 %v2742, %v2818
    %2820 = vmatmul.bf16.gmra.mxu0 %v2637
    %v2821 = vpop.f32.mrf.mxu0
    %v2822 = vadd.f32 %v2745, %v2821
    %v2823 = vpop.f32.mrf.mxu0
    %v2824 = vadd.f32 %v2747, %v2823
    %2825 = vmatmul.bf16.gmra.mxu0 %v2638
    %v2826 = vpop.f32.mrf.mxu0
    %v2827 = vadd.f32 %v2750, %v2826
    %v2828 = vpop.f32.mrf.mxu0
    %v2829 = vadd.f32 %v2752, %v2828
    %2830 = vdwg.mxu0
    %v2832 = vsel %vm2133, %v2616, 0.0
    %v2833 = vsel %vm2452, %v2605, 0.0
    %v2834 = vsel %vm2453, %v2607, 0.0
    %v2835 = vsel %vm2454, %v2609, 0.0
    %v2836 = vsel %vm2455, %v2611, 0.0
    %v2837 = vsel %vm2456, %v2613, 0.0
    %v2838 = vsel %vm2457, %v2615, 0.0
    %v2839 = vsel %vm2458, %v2617, 0.0
    %v2840 = vsel %vm2459, %v2832, 0.0
    %v2841 = vpack.c.bf16 %v2834, %v2833
    %v2842 = vpack.c.bf16 %v2836, %v2835
    %v2843 = vpack.c.bf16 %v2838, %v2837
    %v2844 = vpack.c.bf16 %v2840, %v2839
    %s2845 = scalar_lea.vmem [#allocation2], 1088
    %v2846 = vld [vmem:[%s2845] sm:$0xf]
    %v2847 = vld [vmem:[%s2845 + $0x4] sm:$0xf]
    %v2848 = vld [vmem:[%s2845 + $0x8] sm:$0xf]
    %v2849 = vld [vmem:[%s2845 + $0xc] sm:$0xf]
    %v2850 = vld [vmem:[%s2845 + $0x10] sm:$0xf]
    %v2851 = vld [vmem:[%s2845 + $0x14] sm:$0xf]
    %v2852 = vld [vmem:[%s2845 + $0x18] sm:$0xf]
    %v2853 = vld [vmem:[%s2845 + $0x1c] sm:$0xf]
    %v2854 = vld [vmem:[%s2845 + $0x20] sm:$0xf]
    %v2855 = vld [vmem:[%s2845 + $0x24] sm:$0xf]
    %v2856 = vld [vmem:[%s2845 + $0x28] sm:$0xf]
    %v2857 = vld [vmem:[%s2845 + $0x2c] sm:$0xf]
    %v2858 = vld [vmem:[%s2845 + $0x30] sm:$0xf]
    %v2859 = vld [vmem:[%s2845 + $0x34] sm:$0xf]
    %v2860 = vld [vmem:[%s2845 + $0x38] sm:$0xf]
    %v2861 = vld [vmem:[%s2845 + $0x3c] sm:$0xf]
    %v2878 = vunpack.c.l.b16 %v2846
    %v2879 = vunpack.c.l.b16 %v2847
    %v2880 = vunpack.c.l.b16 %v2848
    %v2881 = vunpack.c.l.b16 %v2849
    %v2882 = vunpack.c.l.b16 %v2850
    %v2883 = vunpack.c.l.b16 %v2851
    %v2884 = vunpack.c.l.b16 %v2852
    %v2885 = vunpack.c.l.b16 %v2853
    %v2886 = vunpack.c.l.b16 %v2854
    %v2887 = vunpack.c.l.b16 %v2855
    %v2888 = vunpack.c.l.b16 %v2856
    %v2889 = vunpack.c.l.b16 %v2857
    %v2890 = vunpack.c.l.b16 %v2858
    %v2891 = vunpack.c.l.b16 %v2859
    %v2892 = vunpack.c.l.b16 %v2860
    %v2893 = vunpack.c.l.b16 %v2861
    %v2894 = vpack.c.b16 %v2879, %v2878
    %v2895 = vpack.c.b16 %v2881, %v2880
    %v2896 = vpack.c.b16 %v2883, %v2882
    %v2897 = vpack.c.b16 %v2885, %v2884
    %v2898 = vpack.c.b16 %v2887, %v2886
    %v2899 = vpack.c.b16 %v2889, %v2888
    %v2900 = vpack.c.b16 %v2891, %v2890
    %v2901 = vpack.c.b16 %v2893, %v2892
    %2910 = vmatpush.bf16.msra.mxu0 %v2901
    %2911 = vmatpush.bf16.msra.mxu0 %v2900
    %2912 = vmatpush.bf16.msra.mxu0 %v2899
    %2913 = vmatpush.bf16.msra.mxu0 %v2898
    %2914 = vmatpush.bf16.msra.mxu0 %v2897
    %2915 = vmatpush.bf16.msra.mxu0 %v2896
    %2916 = vmatpush.bf16.msra.mxu0 %v2895
    %2917 = vmatpush.bf16.msra.mxu0 %v2894
    %2918 = vmatmul.bf16.gmra.mxu0 %v2841
    %v2919 = vpop.f32.mrf.mxu0
    %v2920 = vadd.f32 0.0, %v2919
    %v2921 = vpop.f32.mrf.mxu0
    %v2922 = vadd.f32 0.0, %v2921
    %2923 = vmatmul.bf16.gmra.mxu0 %v2842
    %v2924 = vpop.f32.mrf.mxu0
    %v2925 = vadd.f32 0.0, %v2924
    %v2926 = vpop.f32.mrf.mxu0
    %v2927 = vadd.f32 0.0, %v2926
    %2928 = vmatmul.bf16.gmra.mxu0 %v2843
    %v2929 = vpop.f32.mrf.mxu0
    %v2930 = vadd.f32 0.0, %v2929
    %v2931 = vpop.f32.mrf.mxu0
    %v2932 = vadd.f32 0.0, %v2931
    %2933 = vmatmul.bf16.gmra.mxu0 %v2844
    %v2934 = vpop.f32.mrf.mxu0
    %v2935 = vadd.f32 0.0, %v2934
    %v2936 = vpop.f32.mrf.mxu0
    %v2937 = vadd.f32 0.0, %v2936
    %2938 = vdwg.mxu0
    %v2939 = vadd.f32 %v2812, %v2920
    %v2940 = vadd.f32 %v2814, %v2922
    %v2941 = vadd.f32 %v2817, %v2925
    %v2942 = vadd.f32 %v2819, %v2927
    %v2943 = vadd.f32 %v2822, %v2930
    %v2944 = vadd.f32 %v2824, %v2932
    %v2945 = vadd.f32 %v2827, %v2935
    %v2946 = vadd.f32 %v2829, %v2937
    %s2947 = scalar_lea.vmem [#allocation5], 5
    %v2948 = vld [vmem:[%s2947] sm:$0x1]
    %v2950 = vperm.slane %v2948, 0
    %v2952 = vadd.f32 %v2939, %v2950
    %v2953 = vadd.f32 %v2940, %v2950
    %v2954 = vadd.f32 %v2941, %v2950
    %v2955 = vadd.f32 %v2942, %v2950
    %v2956 = vadd.f32 %v2943, %v2950
    %v2957 = vadd.f32 %v2944, %v2950
    %v2958 = vadd.f32 %v2945, %v2950
    %v2959 = vadd.f32 %v2946, %v2950
    %v2960 = vmax.f32 %v2952, 0.0
    %v2961 = vmax.f32 %v2953, 0.0
    %v2962 = vmax.f32 %v2954, 0.0
    %v2963 = vmax.f32 %v2955, 0.0
    %v2964 = vmax.f32 %v2956, 0.0
    %v2965 = vmax.f32 %v2957, 0.0
    %v2966 = vmax.f32 %v2958, 0.0
    %v2967 = vmax.f32 %v2959, 0.0
    %v2976 = vrot.slane %v2960, 4
    %v2977 = vrot.slane %v2961, 4
    %v2978 = vsel %vm2133, %v2976, %v2977
    %v2979 = vrot.slane %v2962, 4
    %v2980 = vsel %vm2133, %v2977, %v2979
    %v2981 = vrot.slane %v2963, 4
    %v2982 = vsel %vm2133, %v2979, %v2981
    %v2983 = vrot.slane %v2964, 4
    %v2984 = vsel %vm2133, %v2981, %v2983
    %v2985 = vrot.slane %v2965, 4
    %v2986 = vsel %vm2133, %v2983, %v2985
    %v2987 = vrot.slane %v2966, 4
    %v2988 = vsel %vm2133, %v2985, %v2987
    %v2989 = vrot.slane %v2967, 4
    %v2990 = vsel %vm2133, %v2987, %v2989
    %v2999 = vsel %vm2133, 0.0, %v2976
    %v3000 = vsel %vm2198, %v2999, 0.0
    %v3001 = vsel %vm2199, %v2978, 0.0
    %v3002 = vsel %vm2200, %v2980, 0.0
    %v3003 = vsel %vm2201, %v2982, 0.0
    %v3004 = vsel %vm2202, %v2984, 0.0
    %v3005 = vsel %vm2203, %v2986, 0.0
    %v3006 = vsel %vm2204, %v2988, 0.0
    %v3007 = vsel %vm2205, %v2990, 0.0
    %v3008 = vpack.c.bf16 %v3001, %v3000
    %v3009 = vpack.c.bf16 %v3003, %v3002
    %v3010 = vpack.c.bf16 %v3005, %v3004
    %v3011 = vpack.c.bf16 %v3007, %v3006
    %s3012 = scalar_lea.vmem [#allocation2], 1152
    %v3013 = vld [vmem:[%s3012] sm:$0xf]
    %v3014 = vld [vmem:[%s3012 + $0x4] sm:$0xf]
    %v3015 = vld [vmem:[%s3012 + $0x8] sm:$0xf]
    %v3016 = vld [vmem:[%s3012 + $0xc] sm:$0xf]
    %v3017 = vld [vmem:[%s3012 + $0x10] sm:$0xf]
    %v3018 = vld [vmem:[%s3012 + $0x14] sm:$0xf]
    %v3019 = vld [vmem:[%s3012 + $0x18] sm:$0xf]
    %v3020 = vld [vmem:[%s3012 + $0x1c] sm:$0xf]
    %v3021 = vld [vmem:[%s3012 + $0x20] sm:$0xf]
    %v3022 = vld [vmem:[%s3012 + $0x24] sm:$0xf]
    %v3023 = vld [vmem:[%s3012 + $0x28] sm:$0xf]
    %v3024 = vld [vmem:[%s3012 + $0x2c] sm:$0xf]
    %v3025 = vld [vmem:[%s3012 + $0x30] sm:$0xf]
    %v3026 = vld [vmem:[%s3012 + $0x34] sm:$0xf]
    %v3027 = vld [vmem:[%s3012 + $0x38] sm:$0xf]
    %v3028 = vld [vmem:[%s3012 + $0x3c] sm:$0xf]
    %v3029 = vpack.c.bf16 %v2961, %v2960
    %v3030 = vpack.c.bf16 %v2963, %v2962
    %v3031 = vpack.c.bf16 %v2965, %v2964
    %v3032 = vpack.c.bf16 %v2967, %v2966
    %s3033 = scalar_lea.vmem [#allocation2], 1216
    %v3034 = vld [vmem:[%s3033] sm:$0xf]
    %v3035 = vld [vmem:[%s3033 + $0x4] sm:$0xf]
    %v3036 = vld [vmem:[%s3033 + $0x8] sm:$0xf]
    %v3037 = vld [vmem:[%s3033 + $0xc] sm:$0xf]
    %v3038 = vld [vmem:[%s3033 + $0x10] sm:$0xf]
    %v3039 = vld [vmem:[%s3033 + $0x14] sm:$0xf]
    %v3040 = vld [vmem:[%s3033 + $0x18] sm:$0xf]
    %v3041 = vld [vmem:[%s3033 + $0x1c] sm:$0xf]
    %v3042 = vld [vmem:[%s3033 + $0x20] sm:$0xf]
    %v3043 = vld [vmem:[%s3033 + $0x24] sm:$0xf]
    %v3044 = vld [vmem:[%s3033 + $0x28] sm:$0xf]
    %v3045 = vld [vmem:[%s3033 + $0x2c] sm:$0xf]
    %v3046 = vld [vmem:[%s3033 + $0x30] sm:$0xf]
    %v3047 = vld [vmem:[%s3033 + $0x34] sm:$0xf]
    %v3048 = vld [vmem:[%s3033 + $0x38] sm:$0xf]
    %v3049 = vld [vmem:[%s3033 + $0x3c] sm:$0xf]
    %v3066 = vunpack.c.l.b16 %v3034
    %v3067 = vunpack.c.l.b16 %v3035
    %v3068 = vunpack.c.l.b16 %v3036
    %v3069 = vunpack.c.l.b16 %v3037
    %v3070 = vunpack.c.l.b16 %v3038
    %v3071 = vunpack.c.l.b16 %v3039
    %v3072 = vunpack.c.l.b16 %v3040
    %v3073 = vunpack.c.l.b16 %v3041
    %v3074 = vunpack.c.l.b16 %v3042
    %v3075 = vunpack.c.l.b16 %v3043
    %v3076 = vunpack.c.l.b16 %v3044
    %v3077 = vunpack.c.l.b16 %v3045
    %v3078 = vunpack.c.l.b16 %v3046
    %v3079 = vunpack.c.l.b16 %v3047
    %v3080 = vunpack.c.l.b16 %v3048
    %v3081 = vunpack.c.l.b16 %v3049
    %v3082 = vpack.c.b16 %v3067, %v3066
    %v3083 = vpack.c.b16 %v3069, %v3068
    %v3084 = vpack.c.b16 %v3071, %v3070
    %v3085 = vpack.c.b16 %v3073, %v3072
    %v3086 = vpack.c.b16 %v3075, %v3074
    %v3087 = vpack.c.b16 %v3077, %v3076
    %v3088 = vpack.c.b16 %v3079, %v3078
    %v3089 = vpack.c.b16 %v3081, %v3080
    %3098 = vmatpush.bf16.msra.mxu0 %v3089
    %3099 = vmatpush.bf16.msra.mxu0 %v3088
    %3100 = vmatpush.bf16.msra.mxu0 %v3087
    %3101 = vmatpush.bf16.msra.mxu0 %v3086
    %3102 = vmatpush.bf16.msra.mxu0 %v3085
    %3103 = vmatpush.bf16.msra.mxu0 %v3084
    %3104 = vmatpush.bf16.msra.mxu0 %v3083
    %3105 = vmatpush.bf16.msra.mxu0 %v3082
    %3106 = vmatmul.bf16.gmra.mxu0 %v3029
    %v3107 = vpop.f32.mrf.mxu0
    %v3108 = vadd.f32 0.0, %v3107
    %v3109 = vpop.f32.mrf.mxu0
    %v3110 = vadd.f32 0.0, %v3109
    %3111 = vmatmul.bf16.gmra.mxu0 %v3030
    %v3112 = vpop.f32.mrf.mxu0
    %v3113 = vadd.f32 0.0, %v3112
    %v3114 = vpop.f32.mrf.mxu0
    %v3115 = vadd.f32 0.0, %v3114
    %3116 = vmatmul.bf16.gmra.mxu0 %v3031
    %v3117 = vpop.f32.mrf.mxu0
    %v3118 = vadd.f32 0.0, %v3117
    %v3119 = vpop.f32.mrf.mxu0
    %v3120 = vadd.f32 0.0, %v3119
    %3121 = vmatmul.bf16.gmra.mxu0 %v3032
    %v3122 = vpop.f32.mrf.mxu0
    %v3123 = vadd.f32 0.0, %v3122
    %v3124 = vpop.f32.mrf.mxu0
    %v3125 = vadd.f32 0.0, %v3124
    %3126 = vdwg.mxu0
    %v3143 = vunpack.c.l.b16 %v3013
    %v3144 = vunpack.c.l.b16 %v3014
    %v3145 = vunpack.c.l.b16 %v3015
    %v3146 = vunpack.c.l.b16 %v3016
    %v3147 = vunpack.c.l.b16 %v3017
    %v3148 = vunpack.c.l.b16 %v3018
    %v3149 = vunpack.c.l.b16 %v3019
    %v3150 = vunpack.c.l.b16 %v3020
    %v3151 = vunpack.c.l.b16 %v3021
    %v3152 = vunpack.c.l.b16 %v3022
    %v3153 = vunpack.c.l.b16 %v3023
    %v3154 = vunpack.c.l.b16 %v3024
    %v3155 = vunpack.c.l.b16 %v3025
    %v3156 = vunpack.c.l.b16 %v3026
    %v3157 = vunpack.c.l.b16 %v3027
    %v3158 = vunpack.c.l.b16 %v3028
    %v3159 = vpack.c.b16 %v3144, %v3143
    %v3160 = vpack.c.b16 %v3146, %v3145
    %v3161 = vpack.c.b16 %v3148, %v3147
    %v3162 = vpack.c.b16 %v3150, %v3149
    %v3163 = vpack.c.b16 %v3152, %v3151
    %v3164 = vpack.c.b16 %v3154, %v3153
    %v3165 = vpack.c.b16 %v3156, %v3155
    %v3166 = vpack.c.b16 %v3158, %v3157
    %3175 = vmatpush.bf16.msra.mxu0 %v3166
    %3176 = vmatpush.bf16.msra.mxu0 %v3165
    %3177 = vmatpush.bf16.msra.mxu0 %v3164
    %3178 = vmatpush.bf16.msra.mxu0 %v3163
    %3179 = vmatpush.bf16.msra.mxu0 %v3162
    %3180 = vmatpush.bf16.msra.mxu0 %v3161
    %3181 = vmatpush.bf16.msra.mxu0 %v3160
    %3182 = vmatpush.bf16.msra.mxu0 %v3159
    %3183 = vmatmul.bf16.gmra.mxu0 %v3008
    %v3184 = vpop.f32.mrf.mxu0
    %v3185 = vadd.f32 %v3108, %v3184
    %v3186 = vpop.f32.mrf.mxu0
    %v3187 = vadd.f32 %v3110, %v3186
    %3188 = vmatmul.bf16.gmra.mxu0 %v3009
    %v3189 = vpop.f32.mrf.mxu0
    %v3190 = vadd.f32 %v3113, %v3189
    %v3191 = vpop.f32.mrf.mxu0
    %v3192 = vadd.f32 %v3115, %v3191
    %3193 = vmatmul.bf16.gmra.mxu0 %v3010
    %v3194 = vpop.f32.mrf.mxu0
    %v3195 = vadd.f32 %v3118, %v3194
    %v3196 = vpop.f32.mrf.mxu0
    %v3197 = vadd.f32 %v3120, %v3196
    %3198 = vmatmul.bf16.gmra.mxu0 %v3011
    %v3199 = vpop.f32.mrf.mxu0
    %v3200 = vadd.f32 %v3123, %v3199
    %v3201 = vpop.f32.mrf.mxu0
    %v3202 = vadd.f32 %v3125, %v3201
    %3203 = vdwg.mxu0
    %v3205 = vsel %vm2133, %v2989, 0.0
    %v3206 = vsel %vm2452, %v2978, 0.0
    %v3207 = vsel %vm2453, %v2980, 0.0
    %v3208 = vsel %vm2454, %v2982, 0.0
    %v3209 = vsel %vm2455, %v2984, 0.0
    %v3210 = vsel %vm2456, %v2986, 0.0
    %v3211 = vsel %vm2457, %v2988, 0.0
    %v3212 = vsel %vm2458, %v2990, 0.0
    %v3213 = vsel %vm2459, %v3205, 0.0
    %v3214 = vpack.c.bf16 %v3207, %v3206
    %v3215 = vpack.c.bf16 %v3209, %v3208
    %v3216 = vpack.c.bf16 %v3211, %v3210
    %v3217 = vpack.c.bf16 %v3213, %v3212
    %s3218 = scalar_lea.vmem [#allocation2], 1280
    %v3219 = vld [vmem:[%s3218] sm:$0xf]
    %v3220 = vld [vmem:[%s3218 + $0x4] sm:$0xf]
    %v3221 = vld [vmem:[%s3218 + $0x8] sm:$0xf]
    %v3222 = vld [vmem:[%s3218 + $0xc] sm:$0xf]
    %v3223 = vld [vmem:[%s3218 + $0x10] sm:$0xf]
    %v3224 = vld [vmem:[%s3218 + $0x14] sm:$0xf]
    %v3225 = vld [vmem:[%s3218 + $0x18] sm:$0xf]
    %v3226 = vld [vmem:[%s3218 + $0x1c] sm:$0xf]
    %v3227 = vld [vmem:[%s3218 + $0x20] sm:$0xf]
    %v3228 = vld [vmem:[%s3218 + $0x24] sm:$0xf]
    %v3229 = vld [vmem:[%s3218 + $0x28] sm:$0xf]
    %v3230 = vld [vmem:[%s3218 + $0x2c] sm:$0xf]
    %v3231 = vld [vmem:[%s3218 + $0x30] sm:$0xf]
    %v3232 = vld [vmem:[%s3218 + $0x34] sm:$0xf]
    %v3233 = vld [vmem:[%s3218 + $0x38] sm:$0xf]
    %v3234 = vld [vmem:[%s3218 + $0x3c] sm:$0xf]
    %v3251 = vunpack.c.l.b16 %v3219
    %v3252 = vunpack.c.l.b16 %v3220
    %v3253 = vunpack.c.l.b16 %v3221
    %v3254 = vunpack.c.l.b16 %v3222
    %v3255 = vunpack.c.l.b16 %v3223
    %v3256 = vunpack.c.l.b16 %v3224
    %v3257 = vunpack.c.l.b16 %v3225
    %v3258 = vunpack.c.l.b16 %v3226
    %v3259 = vunpack.c.l.b16 %v3227
    %v3260 = vunpack.c.l.b16 %v3228
    %v3261 = vunpack.c.l.b16 %v3229
    %v3262 = vunpack.c.l.b16 %v3230
    %v3263 = vunpack.c.l.b16 %v3231
    %v3264 = vunpack.c.l.b16 %v3232
    %v3265 = vunpack.c.l.b16 %v3233
    %v3266 = vunpack.c.l.b16 %v3234
    %v3267 = vpack.c.b16 %v3252, %v3251
    %v3268 = vpack.c.b16 %v3254, %v3253
    %v3269 = vpack.c.b16 %v3256, %v3255
    %v3270 = vpack.c.b16 %v3258, %v3257
    %v3271 = vpack.c.b16 %v3260, %v3259
    %v3272 = vpack.c.b16 %v3262, %v3261
    %v3273 = vpack.c.b16 %v3264, %v3263
    %v3274 = vpack.c.b16 %v3266, %v3265
    %3283 = vmatpush.bf16.msra.mxu0 %v3274
    %3284 = vmatpush.bf16.msra.mxu0 %v3273
    %3285 = vmatpush.bf16.msra.mxu0 %v3272
    %3286 = vmatpush.bf16.msra.mxu0 %v3271
    %3287 = vmatpush.bf16.msra.mxu0 %v3270
    %3288 = vmatpush.bf16.msra.mxu0 %v3269
    %3289 = vmatpush.bf16.msra.mxu0 %v3268
    %3290 = vmatpush.bf16.msra.mxu0 %v3267
    %3291 = vmatmul.bf16.gmra.mxu0 %v3214
    %v3292 = vpop.f32.mrf.mxu0
    %v3293 = vadd.f32 0.0, %v3292
    %v3294 = vpop.f32.mrf.mxu0
    %v3295 = vadd.f32 0.0, %v3294
    %3296 = vmatmul.bf16.gmra.mxu0 %v3215
    %v3297 = vpop.f32.mrf.mxu0
    %v3298 = vadd.f32 0.0, %v3297
    %v3299 = vpop.f32.mrf.mxu0
    %v3300 = vadd.f32 0.0, %v3299
    %3301 = vmatmul.bf16.gmra.mxu0 %v3216
    %v3302 = vpop.f32.mrf.mxu0
    %v3303 = vadd.f32 0.0, %v3302
    %v3304 = vpop.f32.mrf.mxu0
    %v3305 = vadd.f32 0.0, %v3304
    %3306 = vmatmul.bf16.gmra.mxu0 %v3217
    %v3307 = vpop.f32.mrf.mxu0
    %v3308 = vadd.f32 0.0, %v3307
    %v3309 = vpop.f32.mrf.mxu0
    %v3310 = vadd.f32 0.0, %v3309
    %3311 = vdwg.mxu0
    %v3312 = vadd.f32 %v3185, %v3293
    %v3313 = vadd.f32 %v3187, %v3295
    %v3314 = vadd.f32 %v3190, %v3298
    %v3315 = vadd.f32 %v3192, %v3300
    %v3316 = vadd.f32 %v3195, %v3303
    %v3317 = vadd.f32 %v3197, %v3305
    %v3318 = vadd.f32 %v3200, %v3308
    %v3319 = vadd.f32 %v3202, %v3310
    %s3320 = scalar_lea.vmem [#allocation5], 6
    %v3321 = vld [vmem:[%s3320] sm:$0x1]
    %v3323 = vperm.slane %v3321, 0
    %v3325 = vadd.f32 %v3312, %v3323
    %v3326 = vadd.f32 %v3313, %v3323
    %v3327 = vadd.f32 %v3314, %v3323
    %v3328 = vadd.f32 %v3315, %v3323
    %v3329 = vadd.f32 %v3316, %v3323
    %v3330 = vadd.f32 %v3317, %v3323
    %v3331 = vadd.f32 %v3318, %v3323
    %v3332 = vadd.f32 %v3319, %v3323
    %v3333 = vmax.f32 %v3325, 0.0
    %v3334 = vmax.f32 %v3326, 0.0
    %v3335 = vmax.f32 %v3327, 0.0
    %v3336 = vmax.f32 %v3328, 0.0
    %v3337 = vmax.f32 %v3329, 0.0
    %v3338 = vmax.f32 %v3330, 0.0
    %v3339 = vmax.f32 %v3331, 0.0
    %v3340 = vmax.f32 %v3332, 0.0
    %v3349 = vrot.slane %v3333, 4
    %v3350 = vrot.slane %v3334, 4
    %v3351 = vsel %vm2133, %v3349, %v3350
    %v3352 = vrot.slane %v3335, 4
    %v3353 = vsel %vm2133, %v3350, %v3352
    %v3354 = vrot.slane %v3336, 4
    %v3355 = vsel %vm2133, %v3352, %v3354
    %v3356 = vrot.slane %v3337, 4
    %v3357 = vsel %vm2133, %v3354, %v3356
    %v3358 = vrot.slane %v3338, 4
    %v3359 = vsel %vm2133, %v3356, %v3358
    %v3360 = vrot.slane %v3339, 4
    %v3361 = vsel %vm2133, %v3358, %v3360
    %v3362 = vrot.slane %v3340, 4
    %v3363 = vsel %vm2133, %v3360, %v3362
    %v3372 = vsel %vm2133, 0.0, %v3349
    %v3373 = vsel %vm2198, %v3372, 0.0
    %v3374 = vsel %vm2199, %v3351, 0.0
    %v3375 = vsel %vm2200, %v3353, 0.0
    %v3376 = vsel %vm2201, %v3355, 0.0
    %v3377 = vsel %vm2202, %v3357, 0.0
    %v3378 = vsel %vm2203, %v3359, 0.0
    %v3379 = vsel %vm2204, %v3361, 0.0
    %v3380 = vsel %vm2205, %v3363, 0.0
    %v3381 = vpack.c.bf16 %v3374, %v3373
    %v3382 = vpack.c.bf16 %v3376, %v3375
    %v3383 = vpack.c.bf16 %v3378, %v3377
    %v3384 = vpack.c.bf16 %v3380, %v3379
    %s3385 = scalar_lea.vmem [#allocation2], 1344
    %v3386 = vld [vmem:[%s3385] sm:$0xf]
    %v3387 = vld [vmem:[%s3385 + $0x4] sm:$0xf]
    %v3388 = vld [vmem:[%s3385 + $0x8] sm:$0xf]
    %v3389 = vld [vmem:[%s3385 + $0xc] sm:$0xf]
    %v3390 = vld [vmem:[%s3385 + $0x10] sm:$0xf]
    %v3391 = vld [vmem:[%s3385 + $0x14] sm:$0xf]
    %v3392 = vld [vmem:[%s3385 + $0x18] sm:$0xf]
    %v3393 = vld [vmem:[%s3385 + $0x1c] sm:$0xf]
    %v3394 = vld [vmem:[%s3385 + $0x20] sm:$0xf]
    %v3395 = vld [vmem:[%s3385 + $0x24] sm:$0xf]
    %v3396 = vld [vmem:[%s3385 + $0x28] sm:$0xf]
    %v3397 = vld [vmem:[%s3385 + $0x2c] sm:$0xf]
    %v3398 = vld [vmem:[%s3385 + $0x30] sm:$0xf]
    %v3399 = vld [vmem:[%s3385 + $0x34] sm:$0xf]
    %v3400 = vld [vmem:[%s3385 + $0x38] sm:$0xf]
    %v3401 = vld [vmem:[%s3385 + $0x3c] sm:$0xf]
    %v3402 = vpack.c.bf16 %v3334, %v3333
    %v3403 = vpack.c.bf16 %v3336, %v3335
    %v3404 = vpack.c.bf16 %v3338, %v3337
    %v3405 = vpack.c.bf16 %v3340, %v3339
    %s3406 = scalar_lea.vmem [#allocation2], 1408
    %v3407 = vld [vmem:[%s3406] sm:$0xf]
    %v3408 = vld [vmem:[%s3406 + $0x4] sm:$0xf]
    %v3409 = vld [vmem:[%s3406 + $0x8] sm:$0xf]
    %v3410 = vld [vmem:[%s3406 + $0xc] sm:$0xf]
    %v3411 = vld [vmem:[%s3406 + $0x10] sm:$0xf]
    %v3412 = vld [vmem:[%s3406 + $0x14] sm:$0xf]
    %v3413 = vld [vmem:[%s3406 + $0x18] sm:$0xf]
    %v3414 = vld [vmem:[%s3406 + $0x1c] sm:$0xf]
    %v3415 = vld [vmem:[%s3406 + $0x20] sm:$0xf]
    %v3416 = vld [vmem:[%s3406 + $0x24] sm:$0xf]
    %v3417 = vld [vmem:[%s3406 + $0x28] sm:$0xf]
    %v3418 = vld [vmem:[%s3406 + $0x2c] sm:$0xf]
    %v3419 = vld [vmem:[%s3406 + $0x30] sm:$0xf]
    %v3420 = vld [vmem:[%s3406 + $0x34] sm:$0xf]
    %v3421 = vld [vmem:[%s3406 + $0x38] sm:$0xf]
    %v3422 = vld [vmem:[%s3406 + $0x3c] sm:$0xf]
    %v3439 = vunpack.c.l.b16 %v3407
    %v3440 = vunpack.c.l.b16 %v3408
    %v3441 = vunpack.c.l.b16 %v3409
    %v3442 = vunpack.c.l.b16 %v3410
    %v3443 = vunpack.c.l.b16 %v3411
    %v3444 = vunpack.c.l.b16 %v3412
    %v3445 = vunpack.c.l.b16 %v3413
    %v3446 = vunpack.c.l.b16 %v3414
    %v3447 = vunpack.c.l.b16 %v3415
    %v3448 = vunpack.c.l.b16 %v3416
    %v3449 = vunpack.c.l.b16 %v3417
    %v3450 = vunpack.c.l.b16 %v3418
    %v3451 = vunpack.c.l.b16 %v3419
    %v3452 = vunpack.c.l.b16 %v3420
    %v3453 = vunpack.c.l.b16 %v3421
    %v3454 = vunpack.c.l.b16 %v3422
    %v3455 = vpack.c.b16 %v3440, %v3439
    %v3456 = vpack.c.b16 %v3442, %v3441
    %v3457 = vpack.c.b16 %v3444, %v3443
    %v3458 = vpack.c.b16 %v3446, %v3445
    %v3459 = vpack.c.b16 %v3448, %v3447
    %v3460 = vpack.c.b16 %v3450, %v3449
    %v3461 = vpack.c.b16 %v3452, %v3451
    %v3462 = vpack.c.b16 %v3454, %v3453
    %3471 = vmatpush.bf16.msra.mxu0 %v3462
    %3472 = vmatpush.bf16.msra.mxu0 %v3461
    %3473 = vmatpush.bf16.msra.mxu0 %v3460
    %3474 = vmatpush.bf16.msra.mxu0 %v3459
    %3475 = vmatpush.bf16.msra.mxu0 %v3458
    %3476 = vmatpush.bf16.msra.mxu0 %v3457
    %3477 = vmatpush.bf16.msra.mxu0 %v3456
    %3478 = vmatpush.bf16.msra.mxu0 %v3455
    %3479 = vmatmul.bf16.gmra.mxu0 %v3402
    %v3480 = vpop.f32.mrf.mxu0
    %v3481 = vadd.f32 0.0, %v3480
    %v3482 = vpop.f32.mrf.mxu0
    %v3483 = vadd.f32 0.0, %v3482
    %3484 = vmatmul.bf16.gmra.mxu0 %v3403
    %v3485 = vpop.f32.mrf.mxu0
    %v3486 = vadd.f32 0.0, %v3485
    %v3487 = vpop.f32.mrf.mxu0
    %v3488 = vadd.f32 0.0, %v3487
    %3489 = vmatmul.bf16.gmra.mxu0 %v3404
    %v3490 = vpop.f32.mrf.mxu0
    %v3491 = vadd.f32 0.0, %v3490
    %v3492 = vpop.f32.mrf.mxu0
    %v3493 = vadd.f32 0.0, %v3492
    %3494 = vmatmul.bf16.gmra.mxu0 %v3405
    %v3495 = vpop.f32.mrf.mxu0
    %v3496 = vadd.f32 0.0, %v3495
    %v3497 = vpop.f32.mrf.mxu0
    %v3498 = vadd.f32 0.0, %v3497
    %3499 = vdwg.mxu0
    %v3516 = vunpack.c.l.b16 %v3386
    %v3517 = vunpack.c.l.b16 %v3387
    %v3518 = vunpack.c.l.b16 %v3388
    %v3519 = vunpack.c.l.b16 %v3389
    %v3520 = vunpack.c.l.b16 %v3390
    %v3521 = vunpack.c.l.b16 %v3391
    %v3522 = vunpack.c.l.b16 %v3392
    %v3523 = vunpack.c.l.b16 %v3393
    %v3524 = vunpack.c.l.b16 %v3394
    %v3525 = vunpack.c.l.b16 %v3395
    %v3526 = vunpack.c.l.b16 %v3396
    %v3527 = vunpack.c.l.b16 %v3397
    %v3528 = vunpack.c.l.b16 %v3398
    %v3529 = vunpack.c.l.b16 %v3399
    %v3530 = vunpack.c.l.b16 %v3400
    %v3531 = vunpack.c.l.b16 %v3401
    %v3532 = vpack.c.b16 %v3517, %v3516
    %v3533 = vpack.c.b16 %v3519, %v3518
    %v3534 = vpack.c.b16 %v3521, %v3520
    %v3535 = vpack.c.b16 %v3523, %v3522
    %v3536 = vpack.c.b16 %v3525, %v3524
    %v3537 = vpack.c.b16 %v3527, %v3526
    %v3538 = vpack.c.b16 %v3529, %v3528
    %v3539 = vpack.c.b16 %v3531, %v3530
    %3548 = vmatpush.bf16.msra.mxu0 %v3539
    %3549 = vmatpush.bf16.msra.mxu0 %v3538
    %3550 = vmatpush.bf16.msra.mxu0 %v3537
    %3551 = vmatpush.bf16.msra.mxu0 %v3536
    %3552 = vmatpush.bf16.msra.mxu0 %v3535
    %3553 = vmatpush.bf16.msra.mxu0 %v3534
    %3554 = vmatpush.bf16.msra.mxu0 %v3533
    %3555 = vmatpush.bf16.msra.mxu0 %v3532
    %3556 = vmatmul.bf16.gmra.mxu0 %v3381
    %v3557 = vpop.f32.mrf.mxu0
    %v3558 = vadd.f32 %v3481, %v3557
    %v3559 = vpop.f32.mrf.mxu0
    %v3560 = vadd.f32 %v3483, %v3559
    %3561 = vmatmul.bf16.gmra.mxu0 %v3382
    %v3562 = vpop.f32.mrf.mxu0
    %v3563 = vadd.f32 %v3486, %v3562
    %v3564 = vpop.f32.mrf.mxu0
    %v3565 = vadd.f32 %v3488, %v3564
    %3566 = vmatmul.bf16.gmra.mxu0 %v3383
    %v3567 = vpop.f32.mrf.mxu0
    %v3568 = vadd.f32 %v3491, %v3567
    %v3569 = vpop.f32.mrf.mxu0
    %v3570 = vadd.f32 %v3493, %v3569
    %3571 = vmatmul.bf16.gmra.mxu0 %v3384
    %v3572 = vpop.f32.mrf.mxu0
    %v3573 = vadd.f32 %v3496, %v3572
    %v3574 = vpop.f32.mrf.mxu0
    %v3575 = vadd.f32 %v3498, %v3574
    %3576 = vdwg.mxu0
    %v3578 = vsel %vm2133, %v3362, 0.0
    %v3579 = vsel %vm2452, %v3351, 0.0
    %v3580 = vsel %vm2453, %v3353, 0.0
    %v3581 = vsel %vm2454, %v3355, 0.0
    %v3582 = vsel %vm2455, %v3357, 0.0
    %v3583 = vsel %vm2456, %v3359, 0.0
    %v3584 = vsel %vm2457, %v3361, 0.0
    %v3585 = vsel %vm2458, %v3363, 0.0
    %v3586 = vsel %vm2459, %v3578, 0.0
    %v3587 = vpack.c.bf16 %v3580, %v3579
    %v3588 = vpack.c.bf16 %v3582, %v3581
    %v3589 = vpack.c.bf16 %v3584, %v3583
    %v3590 = vpack.c.bf16 %v3586, %v3585
    %s3591 = scalar_lea.vmem [#allocation2], 1472
    %v3592 = vld [vmem:[%s3591] sm:$0xf]
    %v3593 = vld [vmem:[%s3591 + $0x4] sm:$0xf]
    %v3594 = vld [vmem:[%s3591 + $0x8] sm:$0xf]
    %v3595 = vld [vmem:[%s3591 + $0xc] sm:$0xf]
    %v3596 = vld [vmem:[%s3591 + $0x10] sm:$0xf]
    %v3597 = vld [vmem:[%s3591 + $0x14] sm:$0xf]
    %v3598 = vld [vmem:[%s3591 + $0x18] sm:$0xf]
    %v3599 = vld [vmem:[%s3591 + $0x1c] sm:$0xf]
    %v3600 = vld [vmem:[%s3591 + $0x20] sm:$0xf]
    %v3601 = vld [vmem:[%s3591 + $0x24] sm:$0xf]
    %v3602 = vld [vmem:[%s3591 + $0x28] sm:$0xf]
    %v3603 = vld [vmem:[%s3591 + $0x2c] sm:$0xf]
    %v3604 = vld [vmem:[%s3591 + $0x30] sm:$0xf]
    %v3605 = vld [vmem:[%s3591 + $0x34] sm:$0xf]
    %v3606 = vld [vmem:[%s3591 + $0x38] sm:$0xf]
    %v3607 = vld [vmem:[%s3591 + $0x3c] sm:$0xf]
    %v3624 = vunpack.c.l.b16 %v3592
    %v3625 = vunpack.c.l.b16 %v3593
    %v3626 = vunpack.c.l.b16 %v3594
    %v3627 = vunpack.c.l.b16 %v3595
    %v3628 = vunpack.c.l.b16 %v3596
    %v3629 = vunpack.c.l.b16 %v3597
    %v3630 = vunpack.c.l.b16 %v3598
    %v3631 = vunpack.c.l.b16 %v3599
    %v3632 = vunpack.c.l.b16 %v3600
    %v3633 = vunpack.c.l.b16 %v3601
    %v3634 = vunpack.c.l.b16 %v3602
    %v3635 = vunpack.c.l.b16 %v3603
    %v3636 = vunpack.c.l.b16 %v3604
    %v3637 = vunpack.c.l.b16 %v3605
    %v3638 = vunpack.c.l.b16 %v3606
    %v3639 = vunpack.c.l.b16 %v3607
    %v3640 = vpack.c.b16 %v3625, %v3624
    %v3641 = vpack.c.b16 %v3627, %v3626
    %v3642 = vpack.c.b16 %v3629, %v3628
    %v3643 = vpack.c.b16 %v3631, %v3630
    %v3644 = vpack.c.b16 %v3633, %v3632
    %v3645 = vpack.c.b16 %v3635, %v3634
    %v3646 = vpack.c.b16 %v3637, %v3636
    %v3647 = vpack.c.b16 %v3639, %v3638
    %3656 = vmatpush.bf16.msra.mxu0 %v3647
    %3657 = vmatpush.bf16.msra.mxu0 %v3646
    %3658 = vmatpush.bf16.msra.mxu0 %v3645
    %3659 = vmatpush.bf16.msra.mxu0 %v3644
    %3660 = vmatpush.bf16.msra.mxu0 %v3643
    %3661 = vmatpush.bf16.msra.mxu0 %v3642
    %3662 = vmatpush.bf16.msra.mxu0 %v3641
    %3663 = vmatpush.bf16.msra.mxu0 %v3640
    %3664 = vmatmul.bf16.gmra.mxu0 %v3587
    %v3665 = vpop.f32.mrf.mxu0
    %v3666 = vadd.f32 0.0, %v3665
    %v3667 = vpop.f32.mrf.mxu0
    %v3668 = vadd.f32 0.0, %v3667
    %3669 = vmatmul.bf16.gmra.mxu0 %v3588
    %v3670 = vpop.f32.mrf.mxu0
    %v3671 = vadd.f32 0.0, %v3670
    %v3672 = vpop.f32.mrf.mxu0
    %v3673 = vadd.f32 0.0, %v3672
    %3674 = vmatmul.bf16.gmra.mxu0 %v3589
    %v3675 = vpop.f32.mrf.mxu0
    %v3676 = vadd.f32 0.0, %v3675
    %v3677 = vpop.f32.mrf.mxu0
    %v3678 = vadd.f32 0.0, %v3677
    %3679 = vmatmul.bf16.gmra.mxu0 %v3590
    %v3680 = vpop.f32.mrf.mxu0
    %v3681 = vadd.f32 0.0, %v3680
    %v3682 = vpop.f32.mrf.mxu0
    %v3683 = vadd.f32 0.0, %v3682
    %3684 = vdwg.mxu0
    %v3685 = vadd.f32 %v3558, %v3666
    %v3686 = vadd.f32 %v3560, %v3668
    %v3687 = vadd.f32 %v3563, %v3671
    %v3688 = vadd.f32 %v3565, %v3673
    %v3689 = vadd.f32 %v3568, %v3676
    %v3690 = vadd.f32 %v3570, %v3678
    %v3691 = vadd.f32 %v3573, %v3681
    %v3692 = vadd.f32 %v3575, %v3683
    %s3693 = scalar_lea.vmem [#allocation5], 7
    %v3694 = vld [vmem:[%s3693] sm:$0x1]
    %v3696 = vperm.slane %v3694, 0
    %v3698 = vadd.f32 %v3685, %v3696
    %v3699 = vadd.f32 %v3686, %v3696
    %v3700 = vadd.f32 %v3687, %v3696
    %v3701 = vadd.f32 %v3688, %v3696
    %v3702 = vadd.f32 %v3689, %v3696
    %v3703 = vadd.f32 %v3690, %v3696
    %v3704 = vadd.f32 %v3691, %v3696
    %v3705 = vadd.f32 %v3692, %v3696
    %v3706 = vmax.f32 %v3698, 0.0
    %v3707 = vmax.f32 %v3699, 0.0
    %v3708 = vmax.f32 %v3700, 0.0
    %v3709 = vmax.f32 %v3701, 0.0
    %v3710 = vmax.f32 %v3702, 0.0
    %v3711 = vmax.f32 %v3703, 0.0
    %v3712 = vmax.f32 %v3704, 0.0
    %v3713 = vmax.f32 %v3705, 0.0
    %v3722 = vrot.slane %v3706, 4
    %v3723 = vrot.slane %v3707, 4
    %v3724 = vsel %vm2133, %v3722, %v3723
    %v3725 = vrot.slane %v3708, 4
    %v3726 = vsel %vm2133, %v3723, %v3725
    %v3727 = vrot.slane %v3709, 4
    %v3728 = vsel %vm2133, %v3725, %v3727
    %v3729 = vrot.slane %v3710, 4
    %v3730 = vsel %vm2133, %v3727, %v3729
    %v3731 = vrot.slane %v3711, 4
    %v3732 = vsel %vm2133, %v3729, %v3731
    %v3733 = vrot.slane %v3712, 4
    %v3734 = vsel %vm2133, %v3731, %v3733
    %v3735 = vrot.slane %v3713, 4
    %v3736 = vsel %vm2133, %v3733, %v3735
    %v3745 = vsel %vm2133, %v3735, 0.0
    %v3746 = vsel %vm2452, %v3724, 0.0
    %v3747 = vsel %vm2453, %v3726, 0.0
    %v3748 = vsel %vm2454, %v3728, 0.0
    %v3749 = vsel %vm2455, %v3730, 0.0
    %v3750 = vsel %vm2456, %v3732, 0.0
    %v3751 = vsel %vm2457, %v3734, 0.0
    %v3752 = vsel %vm2458, %v3736, 0.0
    %v3753 = vsel %vm2459, %v3745, 0.0
    %v3754 = vmax.f32 %v3706, %v3746
    %v3755 = vmax.f32 %v3707, %v3747
    %v3756 = vmax.f32 %v3708, %v3748
    %v3757 = vmax.f32 %v3709, %v3749
    %v3758 = vmax.f32 %v3710, %v3750
    %v3759 = vmax.f32 %v3711, %v3751
    %v3760 = vmax.f32 %v3712, %v3752
    %v3761 = vmax.f32 %v3713, %v3753
    %3762 = vrot.lane.b32.xlu0 %v3754, 112
    %v3763 = vpop.permute.xlu0 %3762
    %3764 = vrot.lane.b32.xlu0 %v3755, 112
    %v3765 = vpop.permute.xlu0 %3764
    %3766 = vrot.lane.b32.xlu0 %v3756, 112
    %v3767 = vpop.permute.xlu0 %3766
    %3768 = vrot.lane.b32.xlu0 %v3757, 112
    %v3769 = vpop.permute.xlu0 %3768
    %3770 = vrot.lane.b32.xlu0 %v3758, 112
    %v3771 = vpop.permute.xlu0 %3770
    %3772 = vrot.lane.b32.xlu0 %v3759, 112
    %v3773 = vpop.permute.xlu0 %3772
    %3774 = vrot.lane.b32.xlu0 %v3760, 112
    %v3775 = vpop.permute.xlu0 %3774
    %3776 = vrot.lane.b32.xlu0 %v3761, 112
    %v3777 = vpop.permute.xlu0 %3776
    %v3778 = vmax.f32 %v3754, %v3763
    %v3779 = vmax.f32 %v3755, %v3765
    %v3780 = vmax.f32 %v3756, %v3767
    %v3781 = vmax.f32 %v3757, %v3769
    %v3782 = vmax.f32 %v3758, %v3771
    %v3783 = vmax.f32 %v3759, %v3773
    %v3784 = vmax.f32 %v3760, %v3775
    %v3785 = vmax.f32 %v3761, %v3777
    %v3786 = vadd.s32 %v164, 4294967288
    %v3787 = vadd.s32 %v165, 4294967288
    %v3788 = vadd.s32 %v166, 4294967288
    %v3789 = vadd.s32 %v167, 4294967288
    %v3790 = vadd.s32 %v168, 4294967288
    %v3791 = vadd.s32 %v169, 4294967288
    %v3792 = vadd.s32 %v170, 4294967288
    %vm3793 = vcmp.ge.s32.totalorder %v3786, 0
    %vm3794 = vcmp.ge.s32.totalorder %v3787, 0
    %vm3795 = vcmp.ge.s32.totalorder %v3788, 0
    %vm3796 = vcmp.ge.s32.totalorder %v3789, 0
    %vm3797 = vcmp.ge.s32.totalorder %v3790, 0
    %vm3798 = vcmp.ge.s32.totalorder %v3791, 0
    %vm3799 = vcmp.ge.s32.totalorder %v3792, 0
    %vm3800 = vcmp.lt.s32.totalorder %v3786, 32
    %vm3801 = vcmp.lt.s32.totalorder %v3787, 32
    %vm3802 = vcmp.lt.s32.totalorder %v3788, 32
    %vm3803 = vcmp.lt.s32.totalorder %v3789, 32
    %vm3804 = vcmp.lt.s32.totalorder %v3790, 32
    %vm3805 = vcmp.lt.s32.totalorder %v3791, 32
    %vm3806 = vcmp.lt.s32.totalorder %v3792, 32
    %vm3807 = vmand %vm3793, %vm3800
    %vm3808 = vmand %vm3794, %vm3801
    %vm3809 = vmand %vm3795, %vm3802
    %vm3810 = vmand %vm3796, %vm3803
    %vm3811 = vmand %vm3797, %vm3804
    %vm3812 = vmand %vm3798, %vm3805
    %vm3813 = vmand %vm3799, %vm3806
    %v3814 = vsel %vm3807, 1, 0
    %v3815 = vsel %vm3808, 1, 0
    %v3816 = vsel %vm3809, 1, 0
    %v3817 = vsel %vm3810, 1, 0
    %v3818 = vsel %vm3811, 1, 0
    %v3819 = vsel %vm3812, 1, 0
    %v3820 = vsel %vm3813, 1, 0
    %vm3821 = vcmp.eq.s32.totalorder %v3814, 1
    %vm3822 = vcmp.eq.s32.totalorder %v3815, 1
    %vm3823 = vcmp.eq.s32.totalorder %v3816, 1
    %vm3824 = vcmp.eq.s32.totalorder %v3817, 1
    %vm3825 = vcmp.eq.s32.totalorder %v3818, 1
    %vm3826 = vcmp.eq.s32.totalorder %v3819, 1
    %vm3827 = vcmp.eq.s32.totalorder %v3820, 1
    %v3828 = vsel %vm3821, %v3778, 0.0
    %v3829 = vsel %vm3822, %v3779, 0.0
    %v3830 = vsel %vm3823, %v3780, 0.0
    %v3831 = vsel %vm3824, %v3781, 0.0
    %v3832 = vsel %vm3825, %v3782, 0.0
    %v3833 = vsel %vm3826, %v3783, 0.0
    %v3834 = vsel %vm3827, %v3784, 0.0
    %v3835 = vpack.c.bf16 %v3828, 0.0
    %v3836 = vpack.c.bf16 %v3830, %v3829
    %v3837 = vpack.c.bf16 %v3832, %v3831
    %v3838 = vpack.c.bf16 %v3834, %v3833
    %s3839 = scalar_lea.vmem [#allocation2], 1536
    %v3840 = vld [vmem:[%s3839] sm:$0xf]
    %v3841 = vld [vmem:[%s3839 + $0x4] sm:$0xf]
    %v3842 = vld [vmem:[%s3839 + $0x8] sm:$0xf]
    %v3843 = vld [vmem:[%s3839 + $0xc] sm:$0xf]
    %v3844 = vld [vmem:[%s3839 + $0x10] sm:$0xf]
    %v3845 = vld [vmem:[%s3839 + $0x14] sm:$0xf]
    %v3846 = vld [vmem:[%s3839 + $0x18] sm:$0xf]
    %v3847 = vld [vmem:[%s3839 + $0x1c] sm:$0xf]
    %v3848 = vld [vmem:[%s3839 + $0x20] sm:$0xf]
    %v3849 = vld [vmem:[%s3839 + $0x24] sm:$0xf]
    %v3850 = vld [vmem:[%s3839 + $0x28] sm:$0xf]
    %v3851 = vld [vmem:[%s3839 + $0x2c] sm:$0xf]
    %v3852 = vld [vmem:[%s3839 + $0x30] sm:$0xf]
    %v3853 = vld [vmem:[%s3839 + $0x34] sm:$0xf]
    %v3854 = vld [vmem:[%s3839 + $0x38] sm:$0xf]
    %v3855 = vld [vmem:[%s3839 + $0x3c] sm:$0xf]
    %v3856 = vpack.c.bf16 %v3779, %v3778
    %v3857 = vpack.c.bf16 %v3781, %v3780
    %v3858 = vpack.c.bf16 %v3783, %v3782
    %v3859 = vpack.c.bf16 %v3785, %v3784
    %s3860 = scalar_lea.vmem [#allocation2], 1600
    %v3861 = vld [vmem:[%s3860] sm:$0xf]
    %v3862 = vld [vmem:[%s3860 + $0x4] sm:$0xf]
    %v3863 = vld [vmem:[%s3860 + $0x8] sm:$0xf]
    %v3864 = vld [vmem:[%s3860 + $0xc] sm:$0xf]
    %v3865 = vld [vmem:[%s3860 + $0x10] sm:$0xf]
    %v3866 = vld [vmem:[%s3860 + $0x14] sm:$0xf]
    %v3867 = vld [vmem:[%s3860 + $0x18] sm:$0xf]
    %v3868 = vld [vmem:[%s3860 + $0x1c] sm:$0xf]
    %v3869 = vld [vmem:[%s3860 + $0x20] sm:$0xf]
    %v3870 = vld [vmem:[%s3860 + $0x24] sm:$0xf]
    %v3871 = vld [vmem:[%s3860 + $0x28] sm:$0xf]
    %v3872 = vld [vmem:[%s3860 + $0x2c] sm:$0xf]
    %v3873 = vld [vmem:[%s3860 + $0x30] sm:$0xf]
    %v3874 = vld [vmem:[%s3860 + $0x34] sm:$0xf]
    %v3875 = vld [vmem:[%s3860 + $0x38] sm:$0xf]
    %v3876 = vld [vmem:[%s3860 + $0x3c] sm:$0xf]
    %v3893 = vunpack.c.l.b16 %v3861
    %v3894 = vunpack.c.l.b16 %v3862
    %v3895 = vunpack.c.l.b16 %v3863
    %v3896 = vunpack.c.l.b16 %v3864
    %v3897 = vunpack.c.l.b16 %v3865
    %v3898 = vunpack.c.l.b16 %v3866
    %v3899 = vunpack.c.l.b16 %v3867
    %v3900 = vunpack.c.l.b16 %v3868
    %v3901 = vunpack.c.l.b16 %v3869
    %v3902 = vunpack.c.l.b16 %v3870
    %v3903 = vunpack.c.l.b16 %v3871
    %v3904 = vunpack.c.l.b16 %v3872
    %v3905 = vunpack.c.l.b16 %v3873
    %v3906 = vunpack.c.l.b16 %v3874
    %v3907 = vunpack.c.l.b16 %v3875
    %v3908 = vunpack.c.l.b16 %v3876
    %v3909 = vpack.c.b16 %v3894, %v3893
    %v3910 = vpack.c.b16 %v3896, %v3895
    %v3911 = vpack.c.b16 %v3898, %v3897
    %v3912 = vpack.c.b16 %v3900, %v3899
    %v3913 = vpack.c.b16 %v3902, %v3901
    %v3914 = vpack.c.b16 %v3904, %v3903
    %v3915 = vpack.c.b16 %v3906, %v3905
    %v3916 = vpack.c.b16 %v3908, %v3907
    %3925 = vmatpush.bf16.msra.mxu0 %v3916
    %3926 = vmatpush.bf16.msra.mxu0 %v3915
    %3927 = vmatpush.bf16.msra.mxu0 %v3914
    %3928 = vmatpush.bf16.msra.mxu0 %v3913
    %3929 = vmatpush.bf16.msra.mxu0 %v3912
    %3930 = vmatpush.bf16.msra.mxu0 %v3911
    %3931 = vmatpush.bf16.msra.mxu0 %v3910
    %3932 = vmatpush.bf16.msra.mxu0 %v3909
    %3933 = vmatmul.bf16.gmra.mxu0 %v3856
    %v3934 = vpop.f32.mrf.mxu0
    %v3935 = vadd.f32 0.0, %v3934
    %v3936 = vpop.f32.mrf.mxu0
    %v3937 = vadd.f32 0.0, %v3936
    %3938 = vmatmul.bf16.gmra.mxu0 %v3857
    %v3939 = vpop.f32.mrf.mxu0
    %v3940 = vadd.f32 0.0, %v3939
    %v3941 = vpop.f32.mrf.mxu0
    %v3942 = vadd.f32 0.0, %v3941
    %3943 = vmatmul.bf16.gmra.mxu0 %v3858
    %v3944 = vpop.f32.mrf.mxu0
    %v3945 = vadd.f32 0.0, %v3944
    %v3946 = vpop.f32.mrf.mxu0
    %v3947 = vadd.f32 0.0, %v3946
    %3948 = vmatmul.bf16.gmra.mxu0 %v3859
    %v3949 = vpop.f32.mrf.mxu0
    %v3950 = vadd.f32 0.0, %v3949
    %v3951 = vpop.f32.mrf.mxu0
    %v3952 = vadd.f32 0.0, %v3951
    %3953 = vdwg.mxu0
    %v3970 = vunpack.c.l.b16 %v3840
    %v3971 = vunpack.c.l.b16 %v3841
    %v3972 = vunpack.c.l.b16 %v3842
    %v3973 = vunpack.c.l.b16 %v3843
    %v3974 = vunpack.c.l.b16 %v3844
    %v3975 = vunpack.c.l.b16 %v3845
    %v3976 = vunpack.c.l.b16 %v3846
    %v3977 = vunpack.c.l.b16 %v3847
    %v3978 = vunpack.c.l.b16 %v3848
    %v3979 = vunpack.c.l.b16 %v3849
    %v3980 = vunpack.c.l.b16 %v3850
    %v3981 = vunpack.c.l.b16 %v3851
    %v3982 = vunpack.c.l.b16 %v3852
    %v3983 = vunpack.c.l.b16 %v3853
    %v3984 = vunpack.c.l.b16 %v3854
    %v3985 = vunpack.c.l.b16 %v3855
    %v3986 = vpack.c.b16 %v3971, %v3970
    %v3987 = vpack.c.b16 %v3973, %v3972
    %v3988 = vpack.c.b16 %v3975, %v3974
    %v3989 = vpack.c.b16 %v3977, %v3976
    %v3990 = vpack.c.b16 %v3979, %v3978
    %v3991 = vpack.c.b16 %v3981, %v3980
    %v3992 = vpack.c.b16 %v3983, %v3982
    %v3993 = vpack.c.b16 %v3985, %v3984
    %4002 = vmatpush.bf16.msra.mxu0 %v3993
    %4003 = vmatpush.bf16.msra.mxu0 %v3992
    %4004 = vmatpush.bf16.msra.mxu0 %v3991
    %4005 = vmatpush.bf16.msra.mxu0 %v3990
    %4006 = vmatpush.bf16.msra.mxu0 %v3989
    %4007 = vmatpush.bf16.msra.mxu0 %v3988
    %4008 = vmatpush.bf16.msra.mxu0 %v3987
    %4009 = vmatpush.bf16.msra.mxu0 %v3986
    %4010 = vmatmul.bf16.gmra.mxu0 %v3835
    %v4011 = vpop.f32.mrf.mxu0
    %v4012 = vadd.f32 %v3935, %v4011
    %v4013 = vpop.f32.mrf.mxu0
    %v4014 = vadd.f32 %v3937, %v4013
    %4015 = vmatmul.bf16.gmra.mxu0 %v3836
    %v4016 = vpop.f32.mrf.mxu0
    %v4017 = vadd.f32 %v3940, %v4016
    %v4018 = vpop.f32.mrf.mxu0
    %v4019 = vadd.f32 %v3942, %v4018
    %4020 = vmatmul.bf16.gmra.mxu0 %v3837
    %v4021 = vpop.f32.mrf.mxu0
    %v4022 = vadd.f32 %v3945, %v4021
    %v4023 = vpop.f32.mrf.mxu0
    %v4024 = vadd.f32 %v3947, %v4023
    %4025 = vmatmul.bf16.gmra.mxu0 %v3838
    %v4026 = vpop.f32.mrf.mxu0
    %v4027 = vadd.f32 %v3950, %v4026
    %v4028 = vpop.f32.mrf.mxu0
    %v4029 = vadd.f32 %v3952, %v4028
    %4030 = vdwg.mxu0
    %v4031 = vadd.s32 %v163, 8
    %v4032 = vadd.s32 %v164, 8
    %v4033 = vadd.s32 %v165, 8
    %v4034 = vadd.s32 %v166, 8
    %v4035 = vadd.s32 %v167, 8
    %v4036 = vadd.s32 %v168, 8
    %v4037 = vadd.s32 %v169, 8
    %vm4038 = vcmp.ge.s32.totalorder %v4031, 0
    %vm4039 = vcmp.ge.s32.totalorder %v4032, 0
    %vm4040 = vcmp.ge.s32.totalorder %v4033, 0
    %vm4041 = vcmp.ge.s32.totalorder %v4034, 0
    %vm4042 = vcmp.ge.s32.totalorder %v4035, 0
    %vm4043 = vcmp.ge.s32.totalorder %v4036, 0
    %vm4044 = vcmp.ge.s32.totalorder %v4037, 0
    %vm4045 = vcmp.lt.s32.totalorder %v4031, 32
    %vm4046 = vcmp.lt.s32.totalorder %v4032, 32
    %vm4047 = vcmp.lt.s32.totalorder %v4033, 32
    %vm4048 = vcmp.lt.s32.totalorder %v4034, 32
    %vm4049 = vcmp.lt.s32.totalorder %v4035, 32
    %vm4050 = vcmp.lt.s32.totalorder %v4036, 32
    %vm4051 = vcmp.lt.s32.totalorder %v4037, 32
    %vm4052 = vmand %vm4038, %vm4045
    %vm4053 = vmand %vm4039, %vm4046
    %vm4054 = vmand %vm4040, %vm4047
    %vm4055 = vmand %vm4041, %vm4048
    %vm4056 = vmand %vm4042, %vm4049
    %vm4057 = vmand %vm4043, %vm4050
    %vm4058 = vmand %vm4044, %vm4051
    %v4059 = vsel %vm4052, 1, 0
    %v4060 = vsel %vm4053, 1, 0
    %v4061 = vsel %vm4054, 1, 0
    %v4062 = vsel %vm4055, 1, 0
    %v4063 = vsel %vm4056, 1, 0
    %v4064 = vsel %vm4057, 1, 0
    %v4065 = vsel %vm4058, 1, 0
    %vm4066 = vcmp.eq.s32.totalorder %v4059, 1
    %vm4067 = vcmp.eq.s32.totalorder %v4060, 1
    %vm4068 = vcmp.eq.s32.totalorder %v4061, 1
    %vm4069 = vcmp.eq.s32.totalorder %v4062, 1
    %vm4070 = vcmp.eq.s32.totalorder %v4063, 1
    %vm4071 = vcmp.eq.s32.totalorder %v4064, 1
    %vm4072 = vcmp.eq.s32.totalorder %v4065, 1
    %v4073 = vsel %vm4066, %v3779, 0.0
    %v4074 = vsel %vm4067, %v3780, 0.0
    %v4075 = vsel %vm4068, %v3781, 0.0
    %v4076 = vsel %vm4069, %v3782, 0.0
    %v4077 = vsel %vm4070, %v3783, 0.0
    %v4078 = vsel %vm4071, %v3784, 0.0
    %v4079 = vsel %vm4072, %v3785, 0.0
    %v4080 = vpack.c.bf16 %v4074, %v4073
    %v4081 = vpack.c.bf16 %v4076, %v4075
    %v4082 = vpack.c.bf16 %v4078, %v4077
    %v4083 = vpack.c.bf16 0.0, %v4079
    %s4084 = scalar_lea.vmem [#allocation2], 1664
    %v4085 = vld [vmem:[%s4084] sm:$0xf]
    %v4086 = vld [vmem:[%s4084 + $0x4] sm:$0xf]
    %v4087 = vld [vmem:[%s4084 + $0x8] sm:$0xf]
    %v4088 = vld [vmem:[%s4084 + $0xc] sm:$0xf]
    %v4089 = vld [vmem:[%s4084 + $0x10] sm:$0xf]
    %v4090 = vld [vmem:[%s4084 + $0x14] sm:$0xf]
    %v4091 = vld [vmem:[%s4084 + $0x18] sm:$0xf]
    %v4092 = vld [vmem:[%s4084 + $0x1c] sm:$0xf]
    %v4093 = vld [vmem:[%s4084 + $0x20] sm:$0xf]
    %v4094 = vld [vmem:[%s4084 + $0x24] sm:$0xf]
    %v4095 = vld [vmem:[%s4084 + $0x28] sm:$0xf]
    %v4096 = vld [vmem:[%s4084 + $0x2c] sm:$0xf]
    %v4097 = vld [vmem:[%s4084 + $0x30] sm:$0xf]
    %v4098 = vld [vmem:[%s4084 + $0x34] sm:$0xf]
    %v4099 = vld [vmem:[%s4084 + $0x38] sm:$0xf]
    %v4100 = vld [vmem:[%s4084 + $0x3c] sm:$0xf]
    %v4117 = vunpack.c.l.b16 %v4085
    %v4118 = vunpack.c.l.b16 %v4086
    %v4119 = vunpack.c.l.b16 %v4087
    %v4120 = vunpack.c.l.b16 %v4088
    %v4121 = vunpack.c.l.b16 %v4089
    %v4122 = vunpack.c.l.b16 %v4090
    %v4123 = vunpack.c.l.b16 %v4091
    %v4124 = vunpack.c.l.b16 %v4092
    %v4125 = vunpack.c.l.b16 %v4093
    %v4126 = vunpack.c.l.b16 %v4094
    %v4127 = vunpack.c.l.b16 %v4095
    %v4128 = vunpack.c.l.b16 %v4096
    %v4129 = vunpack.c.l.b16 %v4097
    %v4130 = vunpack.c.l.b16 %v4098
    %v4131 = vunpack.c.l.b16 %v4099
    %v4132 = vunpack.c.l.b16 %v4100
    %v4133 = vpack.c.b16 %v4118, %v4117
    %v4134 = vpack.c.b16 %v4120, %v4119
    %v4135 = vpack.c.b16 %v4122, %v4121
    %v4136 = vpack.c.b16 %v4124, %v4123
    %v4137 = vpack.c.b16 %v4126, %v4125
    %v4138 = vpack.c.b16 %v4128, %v4127
    %v4139 = vpack.c.b16 %v4130, %v4129
    %v4140 = vpack.c.b16 %v4132, %v4131
    %4149 = vmatpush.bf16.msra.mxu0 %v4140
    %4150 = vmatpush.bf16.msra.mxu0 %v4139
    %4151 = vmatpush.bf16.msra.mxu0 %v4138
    %4152 = vmatpush.bf16.msra.mxu0 %v4137
    %4153 = vmatpush.bf16.msra.mxu0 %v4136
    %4154 = vmatpush.bf16.msra.mxu0 %v4135
    %4155 = vmatpush.bf16.msra.mxu0 %v4134
    %4156 = vmatpush.bf16.msra.mxu0 %v4133
    %4157 = vmatmul.bf16.gmra.mxu0 %v4080
    %v4158 = vpop.f32.mrf.mxu0
    %v4159 = vadd.f32 0.0, %v4158
    %v4160 = vpop.f32.mrf.mxu0
    %v4161 = vadd.f32 0.0, %v4160
    %4162 = vmatmul.bf16.gmra.mxu0 %v4081
    %v4163 = vpop.f32.mrf.mxu0
    %v4164 = vadd.f32 0.0, %v4163
    %v4165 = vpop.f32.mrf.mxu0
    %v4166 = vadd.f32 0.0, %v4165
    %4167 = vmatmul.bf16.gmra.mxu0 %v4082
    %v4168 = vpop.f32.mrf.mxu0
    %v4169 = vadd.f32 0.0, %v4168
    %v4170 = vpop.f32.mrf.mxu0
    %v4171 = vadd.f32 0.0, %v4170
    %4172 = vmatmul.bf16.gmra.mxu0 %v4083
    %v4173 = vpop.f32.mrf.mxu0
    %v4174 = vadd.f32 0.0, %v4173
    %v4175 = vpop.f32.mrf.mxu0
    %v4176 = vadd.f32 0.0, %v4175
    %4177 = vdwg.mxu0
    %v4178 = vadd.f32 %v4012, %v4159
    %v4179 = vadd.f32 %v4014, %v4161
    %v4180 = vadd.f32 %v4017, %v4164
    %v4181 = vadd.f32 %v4019, %v4166
    %v4182 = vadd.f32 %v4022, %v4169
    %v4183 = vadd.f32 %v4024, %v4171
    %v4184 = vadd.f32 %v4027, %v4174
    %v4185 = vadd.f32 %v4029, %v4176
    %s4186 = scalar_lea.vmem [#allocation5], 8
    %v4187 = vld [vmem:[%s4186] sm:$0x1]
    %v4189 = vperm.slane %v4187, 0
    %v4191 = vadd.f32 %v4178, %v4189
    %v4192 = vadd.f32 %v4179, %v4189
    %v4193 = vadd.f32 %v4180, %v4189
    %v4194 = vadd.f32 %v4181, %v4189
    %v4195 = vadd.f32 %v4182, %v4189
    %v4196 = vadd.f32 %v4183, %v4189
    %v4197 = vadd.f32 %v4184, %v4189
    %v4198 = vadd.f32 %v4185, %v4189
    %v4199 = vmax.f32 %v4191, 0.0
    %v4200 = vmax.f32 %v4192, 0.0
    %v4201 = vmax.f32 %v4193, 0.0
    %v4202 = vmax.f32 %v4194, 0.0
    %v4203 = vmax.f32 %v4195, 0.0
    %v4204 = vmax.f32 %v4196, 0.0
    %v4205 = vmax.f32 %v4197, 0.0
    %v4206 = vmax.f32 %v4198, 0.0
    %v4207 = vsel %vm3821, %v4199, 0.0
    %v4208 = vsel %vm3822, %v4200, 0.0
    %v4209 = vsel %vm3823, %v4201, 0.0
    %v4210 = vsel %vm3824, %v4202, 0.0
    %v4211 = vsel %vm3825, %v4203, 0.0
    %v4212 = vsel %vm3826, %v4204, 0.0
    %v4213 = vsel %vm3827, %v4205, 0.0
    %v4214 = vpack.c.bf16 %v4207, 0.0
    %v4215 = vpack.c.bf16 %v4209, %v4208
    %v4216 = vpack.c.bf16 %v4211, %v4210
    %v4217 = vpack.c.bf16 %v4213, %v4212
    %s4218 = scalar_lea.vmem [#allocation2], 1728
    %v4219 = vld [vmem:[%s4218] sm:$0xf]
    %v4220 = vld [vmem:[%s4218 + $0x4] sm:$0xf]
    %v4221 = vld [vmem:[%s4218 + $0x8] sm:$0xf]
    %v4222 = vld [vmem:[%s4218 + $0xc] sm:$0xf]
    %v4223 = vld [vmem:[%s4218 + $0x10] sm:$0xf]
    %v4224 = vld [vmem:[%s4218 + $0x14] sm:$0xf]
    %v4225 = vld [vmem:[%s4218 + $0x18] sm:$0xf]
    %v4226 = vld [vmem:[%s4218 + $0x1c] sm:$0xf]
    %v4227 = vld [vmem:[%s4218 + $0x20] sm:$0xf]
    %v4228 = vld [vmem:[%s4218 + $0x24] sm:$0xf]
    %v4229 = vld [vmem:[%s4218 + $0x28] sm:$0xf]
    %v4230 = vld [vmem:[%s4218 + $0x2c] sm:$0xf]
    %v4231 = vld [vmem:[%s4218 + $0x30] sm:$0xf]
    %v4232 = vld [vmem:[%s4218 + $0x34] sm:$0xf]
    %v4233 = vld [vmem:[%s4218 + $0x38] sm:$0xf]
    %v4234 = vld [vmem:[%s4218 + $0x3c] sm:$0xf]
    %v4235 = vpack.c.bf16 %v4200, %v4199
    %v4236 = vpack.c.bf16 %v4202, %v4201
    %v4237 = vpack.c.bf16 %v4204, %v4203
    %v4238 = vpack.c.bf16 %v4206, %v4205
    %s4239 = scalar_lea.vmem [#allocation2], 1792
    %v4240 = vld [vmem:[%s4239] sm:$0xf]
    %v4241 = vld [vmem:[%s4239 + $0x4] sm:$0xf]
    %v4242 = vld [vmem:[%s4239 + $0x8] sm:$0xf]
    %v4243 = vld [vmem:[%s4239 + $0xc] sm:$0xf]
    %v4244 = vld [vmem:[%s4239 + $0x10] sm:$0xf]
    %v4245 = vld [vmem:[%s4239 + $0x14] sm:$0xf]
    %v4246 = vld [vmem:[%s4239 + $0x18] sm:$0xf]
    %v4247 = vld [vmem:[%s4239 + $0x1c] sm:$0xf]
    %v4248 = vld [vmem:[%s4239 + $0x20] sm:$0xf]
    %v4249 = vld [vmem:[%s4239 + $0x24] sm:$0xf]
    %v4250 = vld [vmem:[%s4239 + $0x28] sm:$0xf]
    %v4251 = vld [vmem:[%s4239 + $0x2c] sm:$0xf]
    %v4252 = vld [vmem:[%s4239 + $0x30] sm:$0xf]
    %v4253 = vld [vmem:[%s4239 + $0x34] sm:$0xf]
    %v4254 = vld [vmem:[%s4239 + $0x38] sm:$0xf]
    %v4255 = vld [vmem:[%s4239 + $0x3c] sm:$0xf]
    %v4272 = vunpack.c.l.b16 %v4240
    %v4273 = vunpack.c.l.b16 %v4241
    %v4274 = vunpack.c.l.b16 %v4242
    %v4275 = vunpack.c.l.b16 %v4243
    %v4276 = vunpack.c.l.b16 %v4244
    %v4277 = vunpack.c.l.b16 %v4245
    %v4278 = vunpack.c.l.b16 %v4246
    %v4279 = vunpack.c.l.b16 %v4247
    %v4280 = vunpack.c.l.b16 %v4248
    %v4281 = vunpack.c.l.b16 %v4249
    %v4282 = vunpack.c.l.b16 %v4250
    %v4283 = vunpack.c.l.b16 %v4251
    %v4284 = vunpack.c.l.b16 %v4252
    %v4285 = vunpack.c.l.b16 %v4253
    %v4286 = vunpack.c.l.b16 %v4254
    %v4287 = vunpack.c.l.b16 %v4255
    %v4288 = vpack.c.b16 %v4273, %v4272
    %v4289 = vpack.c.b16 %v4275, %v4274
    %v4290 = vpack.c.b16 %v4277, %v4276
    %v4291 = vpack.c.b16 %v4279, %v4278
    %v4292 = vpack.c.b16 %v4281, %v4280
    %v4293 = vpack.c.b16 %v4283, %v4282
    %v4294 = vpack.c.b16 %v4285, %v4284
    %v4295 = vpack.c.b16 %v4287, %v4286
    %4304 = vmatpush.bf16.msra.mxu0 %v4295
    %4305 = vmatpush.bf16.msra.mxu0 %v4294
    %4306 = vmatpush.bf16.msra.mxu0 %v4293
    %4307 = vmatpush.bf16.msra.mxu0 %v4292
    %4308 = vmatpush.bf16.msra.mxu0 %v4291
    %4309 = vmatpush.bf16.msra.mxu0 %v4290
    %4310 = vmatpush.bf16.msra.mxu0 %v4289
    %4311 = vmatpush.bf16.msra.mxu0 %v4288
    %4312 = vmatmul.bf16.gmra.mxu0 %v4235
    %v4313 = vpop.f32.mrf.mxu0
    %v4314 = vadd.f32 0.0, %v4313
    %v4315 = vpop.f32.mrf.mxu0
    %v4316 = vadd.f32 0.0, %v4315
    %4317 = vmatmul.bf16.gmra.mxu0 %v4236
    %v4318 = vpop.f32.mrf.mxu0
    %v4319 = vadd.f32 0.0, %v4318
    %v4320 = vpop.f32.mrf.mxu0
    %v4321 = vadd.f32 0.0, %v4320
    %4322 = vmatmul.bf16.gmra.mxu0 %v4237
    %v4323 = vpop.f32.mrf.mxu0
    %v4324 = vadd.f32 0.0, %v4323
    %v4325 = vpop.f32.mrf.mxu0
    %v4326 = vadd.f32 0.0, %v4325
    %4327 = vmatmul.bf16.gmra.mxu0 %v4238
    %v4328 = vpop.f32.mrf.mxu0
    %v4329 = vadd.f32 0.0, %v4328
    %v4330 = vpop.f32.mrf.mxu0
    %v4331 = vadd.f32 0.0, %v4330
    %4332 = vdwg.mxu0
    %v4349 = vunpack.c.l.b16 %v4219
    %v4350 = vunpack.c.l.b16 %v4220
    %v4351 = vunpack.c.l.b16 %v4221
    %v4352 = vunpack.c.l.b16 %v4222
    %v4353 = vunpack.c.l.b16 %v4223
    %v4354 = vunpack.c.l.b16 %v4224
    %v4355 = vunpack.c.l.b16 %v4225
    %v4356 = vunpack.c.l.b16 %v4226
    %v4357 = vunpack.c.l.b16 %v4227
    %v4358 = vunpack.c.l.b16 %v4228
    %v4359 = vunpack.c.l.b16 %v4229
    %v4360 = vunpack.c.l.b16 %v4230
    %v4361 = vunpack.c.l.b16 %v4231
    %v4362 = vunpack.c.l.b16 %v4232
    %v4363 = vunpack.c.l.b16 %v4233
    %v4364 = vunpack.c.l.b16 %v4234
    %v4365 = vpack.c.b16 %v4350, %v4349
    %v4366 = vpack.c.b16 %v4352, %v4351
    %v4367 = vpack.c.b16 %v4354, %v4353
    %v4368 = vpack.c.b16 %v4356, %v4355
    %v4369 = vpack.c.b16 %v4358, %v4357
    %v4370 = vpack.c.b16 %v4360, %v4359
    %v4371 = vpack.c.b16 %v4362, %v4361
    %v4372 = vpack.c.b16 %v4364, %v4363
    %4381 = vmatpush.bf16.msra.mxu0 %v4372
    %4382 = vmatpush.bf16.msra.mxu0 %v4371
    %4383 = vmatpush.bf16.msra.mxu0 %v4370
    %4384 = vmatpush.bf16.msra.mxu0 %v4369
    %4385 = vmatpush.bf16.msra.mxu0 %v4368
    %4386 = vmatpush.bf16.msra.mxu0 %v4367
    %4387 = vmatpush.bf16.msra.mxu0 %v4366
    %4388 = vmatpush.bf16.msra.mxu0 %v4365
    %4389 = vmatmul.bf16.gmra.mxu0 %v4214
    %v4390 = vpop.f32.mrf.mxu0
    %v4391 = vadd.f32 %v4314, %v4390
    %v4392 = vpop.f32.mrf.mxu0
    %v4393 = vadd.f32 %v4316, %v4392
    %4394 = vmatmul.bf16.gmra.mxu0 %v4215
    %v4395 = vpop.f32.mrf.mxu0
    %v4396 = vadd.f32 %v4319, %v4395
    %v4397 = vpop.f32.mrf.mxu0
    %v4398 = vadd.f32 %v4321, %v4397
    %4399 = vmatmul.bf16.gmra.mxu0 %v4216
    %v4400 = vpop.f32.mrf.mxu0
    %v4401 = vadd.f32 %v4324, %v4400
    %v4402 = vpop.f32.mrf.mxu0
    %v4403 = vadd.f32 %v4326, %v4402
    %4404 = vmatmul.bf16.gmra.mxu0 %v4217
    %v4405 = vpop.f32.mrf.mxu0
    %v4406 = vadd.f32 %v4329, %v4405
    %v4407 = vpop.f32.mrf.mxu0
    %v4408 = vadd.f32 %v4331, %v4407
    %4409 = vdwg.mxu0
    %v4410 = vsel %vm4066, %v4200, 0.0
    %v4411 = vsel %vm4067, %v4201, 0.0
    %v4412 = vsel %vm4068, %v4202, 0.0
    %v4413 = vsel %vm4069, %v4203, 0.0
    %v4414 = vsel %vm4070, %v4204, 0.0
    %v4415 = vsel %vm4071, %v4205, 0.0
    %v4416 = vsel %vm4072, %v4206, 0.0
    %v4417 = vpack.c.bf16 %v4411, %v4410
    %v4418 = vpack.c.bf16 %v4413, %v4412
    %v4419 = vpack.c.bf16 %v4415, %v4414
    %v4420 = vpack.c.bf16 0.0, %v4416
    %s4421 = scalar_lea.vmem [#allocation2], 1856
    %v4422 = vld [vmem:[%s4421] sm:$0xf]
    %v4423 = vld [vmem:[%s4421 + $0x4] sm:$0xf]
    %v4424 = vld [vmem:[%s4421 + $0x8] sm:$0xf]
    %v4425 = vld [vmem:[%s4421 + $0xc] sm:$0xf]
    %v4426 = vld [vmem:[%s4421 + $0x10] sm:$0xf]
    %v4427 = vld [vmem:[%s4421 + $0x14] sm:$0xf]
    %v4428 = vld [vmem:[%s4421 + $0x18] sm:$0xf]
    %v4429 = vld [vmem:[%s4421 + $0x1c] sm:$0xf]
    %v4430 = vld [vmem:[%s4421 + $0x20] sm:$0xf]
    %v4431 = vld [vmem:[%s4421 + $0x24] sm:$0xf]
    %v4432 = vld [vmem:[%s4421 + $0x28] sm:$0xf]
    %v4433 = vld [vmem:[%s4421 + $0x2c] sm:$0xf]
    %v4434 = vld [vmem:[%s4421 + $0x30] sm:$0xf]
    %v4435 = vld [vmem:[%s4421 + $0x34] sm:$0xf]
    %v4436 = vld [vmem:[%s4421 + $0x38] sm:$0xf]
    %v4437 = vld [vmem:[%s4421 + $0x3c] sm:$0xf]
    %v4454 = vunpack.c.l.b16 %v4422
    %v4455 = vunpack.c.l.b16 %v4423
    %v4456 = vunpack.c.l.b16 %v4424
    %v4457 = vunpack.c.l.b16 %v4425
    %v4458 = vunpack.c.l.b16 %v4426
    %v4459 = vunpack.c.l.b16 %v4427
    %v4460 = vunpack.c.l.b16 %v4428
    %v4461 = vunpack.c.l.b16 %v4429
    %v4462 = vunpack.c.l.b16 %v4430
    %v4463 = vunpack.c.l.b16 %v4431
    %v4464 = vunpack.c.l.b16 %v4432
    %v4465 = vunpack.c.l.b16 %v4433
    %v4466 = vunpack.c.l.b16 %v4434
    %v4467 = vunpack.c.l.b16 %v4435
    %v4468 = vunpack.c.l.b16 %v4436
    %v4469 = vunpack.c.l.b16 %v4437
    %v4470 = vpack.c.b16 %v4455, %v4454
    %v4471 = vpack.c.b16 %v4457, %v4456
    %v4472 = vpack.c.b16 %v4459, %v4458
    %v4473 = vpack.c.b16 %v4461, %v4460
    %v4474 = vpack.c.b16 %v4463, %v4462
    %v4475 = vpack.c.b16 %v4465, %v4464
    %v4476 = vpack.c.b16 %v4467, %v4466
    %v4477 = vpack.c.b16 %v4469, %v4468
    %4486 = vmatpush.bf16.msra.mxu0 %v4477
    %4487 = vmatpush.bf16.msra.mxu0 %v4476
    %4488 = vmatpush.bf16.msra.mxu0 %v4475
    %4489 = vmatpush.bf16.msra.mxu0 %v4474
    %4490 = vmatpush.bf16.msra.mxu0 %v4473
    %4491 = vmatpush.bf16.msra.mxu0 %v4472
    %4492 = vmatpush.bf16.msra.mxu0 %v4471
    %4493 = vmatpush.bf16.msra.mxu0 %v4470
    %4494 = vmatmul.bf16.gmra.mxu0 %v4417
    %v4495 = vpop.f32.mrf.mxu0
    %v4496 = vadd.f32 0.0, %v4495
    %v4497 = vpop.f32.mrf.mxu0
    %v4498 = vadd.f32 0.0, %v4497
    %4499 = vmatmul.bf16.gmra.mxu0 %v4418
    %v4500 = vpop.f32.mrf.mxu0
    %v4501 = vadd.f32 0.0, %v4500
    %v4502 = vpop.f32.mrf.mxu0
    %v4503 = vadd.f32 0.0, %v4502
    %4504 = vmatmul.bf16.gmra.mxu0 %v4419
    %v4505 = vpop.f32.mrf.mxu0
    %v4506 = vadd.f32 0.0, %v4505
    %v4507 = vpop.f32.mrf.mxu0
    %v4508 = vadd.f32 0.0, %v4507
    %4509 = vmatmul.bf16.gmra.mxu0 %v4420
    %v4510 = vpop.f32.mrf.mxu0
    %v4511 = vadd.f32 0.0, %v4510
    %v4512 = vpop.f32.mrf.mxu0
    %v4513 = vadd.f32 0.0, %v4512
    %4514 = vdwg.mxu0
    %v4515 = vadd.f32 %v4391, %v4496
    %v4516 = vadd.f32 %v4393, %v4498
    %v4517 = vadd.f32 %v4396, %v4501
    %v4518 = vadd.f32 %v4398, %v4503
    %v4519 = vadd.f32 %v4401, %v4506
    %v4520 = vadd.f32 %v4403, %v4508
    %v4521 = vadd.f32 %v4406, %v4511
    %v4522 = vadd.f32 %v4408, %v4513
    %s4523 = scalar_lea.vmem [#allocation5], 9
    %v4524 = vld [vmem:[%s4523] sm:$0x1]
    %v4526 = vperm.slane %v4524, 0
    %v4528 = vadd.f32 %v4515, %v4526
    %v4529 = vadd.f32 %v4516, %v4526
    %v4530 = vadd.f32 %v4517, %v4526
    %v4531 = vadd.f32 %v4518, %v4526
    %v4532 = vadd.f32 %v4519, %v4526
    %v4533 = vadd.f32 %v4520, %v4526
    %v4534 = vadd.f32 %v4521, %v4526
    %v4535 = vadd.f32 %v4522, %v4526
    %v4536 = vmax.f32 %v4528, 0.0
    %v4537 = vmax.f32 %v4529, 0.0
    %v4538 = vmax.f32 %v4530, 0.0
    %v4539 = vmax.f32 %v4531, 0.0
    %v4540 = vmax.f32 %v4532, 0.0
    %v4541 = vmax.f32 %v4533, 0.0
    %v4542 = vmax.f32 %v4534, 0.0
    %v4543 = vmax.f32 %v4535, 0.0
    %v4544 = vsel %vm3821, %v4536, 0.0
    %v4545 = vsel %vm3822, %v4537, 0.0
    %v4546 = vsel %vm3823, %v4538, 0.0
    %v4547 = vsel %vm3824, %v4539, 0.0
    %v4548 = vsel %vm3825, %v4540, 0.0
    %v4549 = vsel %vm3826, %v4541, 0.0
    %v4550 = vsel %vm3827, %v4542, 0.0
    %v4551 = vpack.c.bf16 %v4544, 0.0
    %v4552 = vpack.c.bf16 %v4546, %v4545
    %v4553 = vpack.c.bf16 %v4548, %v4547
    %v4554 = vpack.c.bf16 %v4550, %v4549
    %s4555 = scalar_lea.vmem [#allocation2], 1920
    %v4556 = vld [vmem:[%s4555] sm:$0xf]
    %v4557 = vld [vmem:[%s4555 + $0x4] sm:$0xf]
    %v4558 = vld [vmem:[%s4555 + $0x8] sm:$0xf]
    %v4559 = vld [vmem:[%s4555 + $0xc] sm:$0xf]
    %v4560 = vld [vmem:[%s4555 + $0x10] sm:$0xf]
    %v4561 = vld [vmem:[%s4555 + $0x14] sm:$0xf]
    %v4562 = vld [vmem:[%s4555 + $0x18] sm:$0xf]
    %v4563 = vld [vmem:[%s4555 + $0x1c] sm:$0xf]
    %v4564 = vld [vmem:[%s4555 + $0x20] sm:$0xf]
    %v4565 = vld [vmem:[%s4555 + $0x24] sm:$0xf]
    %v4566 = vld [vmem:[%s4555 + $0x28] sm:$0xf]
    %v4567 = vld [vmem:[%s4555 + $0x2c] sm:$0xf]
    %v4568 = vld [vmem:[%s4555 + $0x30] sm:$0xf]
    %v4569 = vld [vmem:[%s4555 + $0x34] sm:$0xf]
    %v4570 = vld [vmem:[%s4555 + $0x38] sm:$0xf]
    %v4571 = vld [vmem:[%s4555 + $0x3c] sm:$0xf]
    %v4572 = vpack.c.bf16 %v4537, %v4536
    %v4573 = vpack.c.bf16 %v4539, %v4538
    %v4574 = vpack.c.bf16 %v4541, %v4540
    %v4575 = vpack.c.bf16 %v4543, %v4542
    %s4576 = scalar_lea.vmem [#allocation2], 1984
    %v4577 = vld [vmem:[%s4576] sm:$0xf]
    %v4578 = vld [vmem:[%s4576 + $0x4] sm:$0xf]
    %v4579 = vld [vmem:[%s4576 + $0x8] sm:$0xf]
    %v4580 = vld [vmem:[%s4576 + $0xc] sm:$0xf]
    %v4581 = vld [vmem:[%s4576 + $0x10] sm:$0xf]
    %v4582 = vld [vmem:[%s4576 + $0x14] sm:$0xf]
    %v4583 = vld [vmem:[%s4576 + $0x18] sm:$0xf]
    %v4584 = vld [vmem:[%s4576 + $0x1c] sm:$0xf]
    %v4585 = vld [vmem:[%s4576 + $0x20] sm:$0xf]
    %v4586 = vld [vmem:[%s4576 + $0x24] sm:$0xf]
    %v4587 = vld [vmem:[%s4576 + $0x28] sm:$0xf]
    %v4588 = vld [vmem:[%s4576 + $0x2c] sm:$0xf]
    %v4589 = vld [vmem:[%s4576 + $0x30] sm:$0xf]
    %v4590 = vld [vmem:[%s4576 + $0x34] sm:$0xf]
    %v4591 = vld [vmem:[%s4576 + $0x38] sm:$0xf]
    %v4592 = vld [vmem:[%s4576 + $0x3c] sm:$0xf]
    %v4609 = vunpack.c.l.b16 %v4577
    %v4610 = vunpack.c.l.b16 %v4578
    %v4611 = vunpack.c.l.b16 %v4579
    %v4612 = vunpack.c.l.b16 %v4580
    %v4613 = vunpack.c.l.b16 %v4581
    %v4614 = vunpack.c.l.b16 %v4582
    %v4615 = vunpack.c.l.b16 %v4583
    %v4616 = vunpack.c.l.b16 %v4584
    %v4617 = vunpack.c.l.b16 %v4585
    %v4618 = vunpack.c.l.b16 %v4586
    %v4619 = vunpack.c.l.b16 %v4587
    %v4620 = vunpack.c.l.b16 %v4588
    %v4621 = vunpack.c.l.b16 %v4589
    %v4622 = vunpack.c.l.b16 %v4590
    %v4623 = vunpack.c.l.b16 %v4591
    %v4624 = vunpack.c.l.b16 %v4592
    %v4625 = vpack.c.b16 %v4610, %v4609
    %v4626 = vpack.c.b16 %v4612, %v4611
    %v4627 = vpack.c.b16 %v4614, %v4613
    %v4628 = vpack.c.b16 %v4616, %v4615
    %v4629 = vpack.c.b16 %v4618, %v4617
    %v4630 = vpack.c.b16 %v4620, %v4619
    %v4631 = vpack.c.b16 %v4622, %v4621
    %v4632 = vpack.c.b16 %v4624, %v4623
    %4641 = vmatpush.bf16.msra.mxu0 %v4632
    %4642 = vmatpush.bf16.msra.mxu0 %v4631
    %4643 = vmatpush.bf16.msra.mxu0 %v4630
    %4644 = vmatpush.bf16.msra.mxu0 %v4629
    %4645 = vmatpush.bf16.msra.mxu0 %v4628
    %4646 = vmatpush.bf16.msra.mxu0 %v4627
    %4647 = vmatpush.bf16.msra.mxu0 %v4626
    %4648 = vmatpush.bf16.msra.mxu0 %v4625
    %4649 = vmatmul.bf16.gmra.mxu0 %v4572
    %v4650 = vpop.f32.mrf.mxu0
    %v4651 = vadd.f32 0.0, %v4650
    %v4652 = vpop.f32.mrf.mxu0
    %v4653 = vadd.f32 0.0, %v4652
    %4654 = vmatmul.bf16.gmra.mxu0 %v4573
    %v4655 = vpop.f32.mrf.mxu0
    %v4656 = vadd.f32 0.0, %v4655
    %v4657 = vpop.f32.mrf.mxu0
    %v4658 = vadd.f32 0.0, %v4657
    %4659 = vmatmul.bf16.gmra.mxu0 %v4574
    %v4660 = vpop.f32.mrf.mxu0
    %v4661 = vadd.f32 0.0, %v4660
    %v4662 = vpop.f32.mrf.mxu0
    %v4663 = vadd.f32 0.0, %v4662
    %4664 = vmatmul.bf16.gmra.mxu0 %v4575
    %v4665 = vpop.f32.mrf.mxu0
    %v4666 = vadd.f32 0.0, %v4665
    %v4667 = vpop.f32.mrf.mxu0
    %v4668 = vadd.f32 0.0, %v4667
    %4669 = vdwg.mxu0
    %v4686 = vunpack.c.l.b16 %v4556
    %v4687 = vunpack.c.l.b16 %v4557
    %v4688 = vunpack.c.l.b16 %v4558
    %v4689 = vunpack.c.l.b16 %v4559
    %v4690 = vunpack.c.l.b16 %v4560
    %v4691 = vunpack.c.l.b16 %v4561
    %v4692 = vunpack.c.l.b16 %v4562
    %v4693 = vunpack.c.l.b16 %v4563
    %v4694 = vunpack.c.l.b16 %v4564
    %v4695 = vunpack.c.l.b16 %v4565
    %v4696 = vunpack.c.l.b16 %v4566
    %v4697 = vunpack.c.l.b16 %v4567
    %v4698 = vunpack.c.l.b16 %v4568
    %v4699 = vunpack.c.l.b16 %v4569
    %v4700 = vunpack.c.l.b16 %v4570
    %v4701 = vunpack.c.l.b16 %v4571
    %v4702 = vpack.c.b16 %v4687, %v4686
    %v4703 = vpack.c.b16 %v4689, %v4688
    %v4704 = vpack.c.b16 %v4691, %v4690
    %v4705 = vpack.c.b16 %v4693, %v4692
    %v4706 = vpack.c.b16 %v4695, %v4694
    %v4707 = vpack.c.b16 %v4697, %v4696
    %v4708 = vpack.c.b16 %v4699, %v4698
    %v4709 = vpack.c.b16 %v4701, %v4700
    %4718 = vmatpush.bf16.msra.mxu0 %v4709
    %4719 = vmatpush.bf16.msra.mxu0 %v4708
    %4720 = vmatpush.bf16.msra.mxu0 %v4707
    %4721 = vmatpush.bf16.msra.mxu0 %v4706
    %4722 = vmatpush.bf16.msra.mxu0 %v4705
    %4723 = vmatpush.bf16.msra.mxu0 %v4704
    %4724 = vmatpush.bf16.msra.mxu0 %v4703
    %4725 = vmatpush.bf16.msra.mxu0 %v4702
    %4726 = vmatmul.bf16.gmra.mxu0 %v4551
    %v4727 = vpop.f32.mrf.mxu0
    %v4728 = vadd.f32 %v4651, %v4727
    %v4729 = vpop.f32.mrf.mxu0
    %v4730 = vadd.f32 %v4653, %v4729
    %4731 = vmatmul.bf16.gmra.mxu0 %v4552
    %v4732 = vpop.f32.mrf.mxu0
    %v4733 = vadd.f32 %v4656, %v4732
    %v4734 = vpop.f32.mrf.mxu0
    %v4735 = vadd.f32 %v4658, %v4734
    %4736 = vmatmul.bf16.gmra.mxu0 %v4553
    %v4737 = vpop.f32.mrf.mxu0
    %v4738 = vadd.f32 %v4661, %v4737
    %v4739 = vpop.f32.mrf.mxu0
    %v4740 = vadd.f32 %v4663, %v4739
    %4741 = vmatmul.bf16.gmra.mxu0 %v4554
    %v4742 = vpop.f32.mrf.mxu0
    %v4743 = vadd.f32 %v4666, %v4742
    %v4744 = vpop.f32.mrf.mxu0
    %v4745 = vadd.f32 %v4668, %v4744
    %4746 = vdwg.mxu0
    %v4747 = vsel %vm4066, %v4537, 0.0
    %v4748 = vsel %vm4067, %v4538, 0.0
    %v4749 = vsel %vm4068, %v4539, 0.0
    %v4750 = vsel %vm4069, %v4540, 0.0
    %v4751 = vsel %vm4070, %v4541, 0.0
    %v4752 = vsel %vm4071, %v4542, 0.0
    %v4753 = vsel %vm4072, %v4543, 0.0
    %v4754 = vpack.c.bf16 %v4748, %v4747
    %v4755 = vpack.c.bf16 %v4750, %v4749
    %v4756 = vpack.c.bf16 %v4752, %v4751
    %v4757 = vpack.c.bf16 0.0, %v4753
    %s4758 = scalar_lea.vmem [#allocation2], 2048
    %v4759 = vld [vmem:[%s4758] sm:$0xf]
    %v4760 = vld [vmem:[%s4758 + $0x4] sm:$0xf]
    %v4761 = vld [vmem:[%s4758 + $0x8] sm:$0xf]
    %v4762 = vld [vmem:[%s4758 + $0xc] sm:$0xf]
    %v4763 = vld [vmem:[%s4758 + $0x10] sm:$0xf]
    %v4764 = vld [vmem:[%s4758 + $0x14] sm:$0xf]
    %v4765 = vld [vmem:[%s4758 + $0x18] sm:$0xf]
    %v4766 = vld [vmem:[%s4758 + $0x1c] sm:$0xf]
    %v4767 = vld [vmem:[%s4758 + $0x20] sm:$0xf]
    %v4768 = vld [vmem:[%s4758 + $0x24] sm:$0xf]
    %v4769 = vld [vmem:[%s4758 + $0x28] sm:$0xf]
    %v4770 = vld [vmem:[%s4758 + $0x2c] sm:$0xf]
    %v4771 = vld [vmem:[%s4758 + $0x30] sm:$0xf]
    %v4772 = vld [vmem:[%s4758 + $0x34] sm:$0xf]
    %v4773 = vld [vmem:[%s4758 + $0x38] sm:$0xf]
    %v4774 = vld [vmem:[%s4758 + $0x3c] sm:$0xf]
    %v4791 = vunpack.c.l.b16 %v4759
    %v4792 = vunpack.c.l.b16 %v4760
    %v4793 = vunpack.c.l.b16 %v4761
    %v4794 = vunpack.c.l.b16 %v4762
    %v4795 = vunpack.c.l.b16 %v4763
    %v4796 = vunpack.c.l.b16 %v4764
    %v4797 = vunpack.c.l.b16 %v4765
    %v4798 = vunpack.c.l.b16 %v4766
    %v4799 = vunpack.c.l.b16 %v4767
    %v4800 = vunpack.c.l.b16 %v4768
    %v4801 = vunpack.c.l.b16 %v4769
    %v4802 = vunpack.c.l.b16 %v4770
    %v4803 = vunpack.c.l.b16 %v4771
    %v4804 = vunpack.c.l.b16 %v4772
    %v4805 = vunpack.c.l.b16 %v4773
    %v4806 = vunpack.c.l.b16 %v4774
    %v4807 = vpack.c.b16 %v4792, %v4791
    %v4808 = vpack.c.b16 %v4794, %v4793
    %v4809 = vpack.c.b16 %v4796, %v4795
    %v4810 = vpack.c.b16 %v4798, %v4797
    %v4811 = vpack.c.b16 %v4800, %v4799
    %v4812 = vpack.c.b16 %v4802, %v4801
    %v4813 = vpack.c.b16 %v4804, %v4803
    %v4814 = vpack.c.b16 %v4806, %v4805
    %4823 = vmatpush.bf16.msra.mxu0 %v4814
    %4824 = vmatpush.bf16.msra.mxu0 %v4813
    %4825 = vmatpush.bf16.msra.mxu0 %v4812
    %4826 = vmatpush.bf16.msra.mxu0 %v4811
    %4827 = vmatpush.bf16.msra.mxu0 %v4810
    %4828 = vmatpush.bf16.msra.mxu0 %v4809
    %4829 = vmatpush.bf16.msra.mxu0 %v4808
    %4830 = vmatpush.bf16.msra.mxu0 %v4807
    %4831 = vmatmul.bf16.gmra.mxu0 %v4754
    %v4832 = vpop.f32.mrf.mxu0
    %v4833 = vadd.f32 0.0, %v4832
    %v4834 = vpop.f32.mrf.mxu0
    %v4835 = vadd.f32 0.0, %v4834
    %4836 = vmatmul.bf16.gmra.mxu0 %v4755
    %v4837 = vpop.f32.mrf.mxu0
    %v4838 = vadd.f32 0.0, %v4837
    %v4839 = vpop.f32.mrf.mxu0
    %v4840 = vadd.f32 0.0, %v4839
    %4841 = vmatmul.bf16.gmra.mxu0 %v4756
    %v4842 = vpop.f32.mrf.mxu0
    %v4843 = vadd.f32 0.0, %v4842
    %v4844 = vpop.f32.mrf.mxu0
    %v4845 = vadd.f32 0.0, %v4844
    %4846 = vmatmul.bf16.gmra.mxu0 %v4757
    %v4847 = vpop.f32.mrf.mxu0
    %v4848 = vadd.f32 0.0, %v4847
    %v4849 = vpop.f32.mrf.mxu0
    %v4850 = vadd.f32 0.0, %v4849
    %4851 = vdwg.mxu0
    %v4852 = vadd.f32 %v4728, %v4833
    %v4853 = vadd.f32 %v4730, %v4835
    %v4854 = vadd.f32 %v4733, %v4838
    %v4855 = vadd.f32 %v4735, %v4840
    %v4856 = vadd.f32 %v4738, %v4843
    %v4857 = vadd.f32 %v4740, %v4845
    %v4858 = vadd.f32 %v4743, %v4848
    %v4859 = vadd.f32 %v4745, %v4850
    %s4860 = scalar_lea.vmem [#allocation5], 10
    %v4861 = vld [vmem:[%s4860] sm:$0x1]
    %v4863 = vperm.slane %v4861, 0
    %v4865 = vadd.f32 %v4852, %v4863
    %v4866 = vadd.f32 %v4853, %v4863
    %v4867 = vadd.f32 %v4854, %v4863
    %v4868 = vadd.f32 %v4855, %v4863
    %v4869 = vadd.f32 %v4856, %v4863
    %v4870 = vadd.f32 %v4857, %v4863
    %v4871 = vadd.f32 %v4858, %v4863
    %v4872 = vadd.f32 %v4859, %v4863
    %v4873 = vmax.f32 %v4865, 0.0
    %v4874 = vmax.f32 %v4866, 0.0
    %v4875 = vmax.f32 %v4867, 0.0
    %v4876 = vmax.f32 %v4868, 0.0
    %v4877 = vmax.f32 %v4869, 0.0
    %v4878 = vmax.f32 %v4870, 0.0
    %v4879 = vmax.f32 %v4871, 0.0
    %v4880 = vmax.f32 %v4872, 0.0
    %v4881 = vsel %vm3821, %v4873, 0.0
    %v4882 = vsel %vm3822, %v4874, 0.0
    %v4883 = vsel %vm3823, %v4875, 0.0
    %v4884 = vsel %vm3824, %v4876, 0.0
    %v4885 = vsel %vm3825, %v4877, 0.0
    %v4886 = vsel %vm3826, %v4878, 0.0
    %v4887 = vsel %vm3827, %v4879, 0.0
    %v4888 = vpack.c.bf16 %v4881, 0.0
    %v4889 = vpack.c.bf16 %v4883, %v4882
    %v4890 = vpack.c.bf16 %v4885, %v4884
    %v4891 = vpack.c.bf16 %v4887, %v4886
    %s4892 = scalar_lea.vmem [#allocation2], 2112
    %v4893 = vld [vmem:[%s4892] sm:$0xf]
    %v4894 = vld [vmem:[%s4892 + $0x4] sm:$0xf]
    %v4895 = vld [vmem:[%s4892 + $0x8] sm:$0xf]
    %v4896 = vld [vmem:[%s4892 + $0xc] sm:$0xf]
    %v4897 = vld [vmem:[%s4892 + $0x10] sm:$0xf]
    %v4898 = vld [vmem:[%s4892 + $0x14] sm:$0xf]
    %v4899 = vld [vmem:[%s4892 + $0x18] sm:$0xf]
    %v4900 = vld [vmem:[%s4892 + $0x1c] sm:$0xf]
    %v4901 = vld [vmem:[%s4892 + $0x20] sm:$0xf]
    %v4902 = vld [vmem:[%s4892 + $0x24] sm:$0xf]
    %v4903 = vld [vmem:[%s4892 + $0x28] sm:$0xf]
    %v4904 = vld [vmem:[%s4892 + $0x2c] sm:$0xf]
    %v4905 = vld [vmem:[%s4892 + $0x30] sm:$0xf]
    %v4906 = vld [vmem:[%s4892 + $0x34] sm:$0xf]
    %v4907 = vld [vmem:[%s4892 + $0x38] sm:$0xf]
    %v4908 = vld [vmem:[%s4892 + $0x3c] sm:$0xf]
    %v4909 = vpack.c.bf16 %v4874, %v4873
    %v4910 = vpack.c.bf16 %v4876, %v4875
    %v4911 = vpack.c.bf16 %v4878, %v4877
    %v4912 = vpack.c.bf16 %v4880, %v4879
    %s4913 = scalar_lea.vmem [#allocation2], 2176
    %v4914 = vld [vmem:[%s4913] sm:$0xf]
    %v4915 = vld [vmem:[%s4913 + $0x4] sm:$0xf]
    %v4916 = vld [vmem:[%s4913 + $0x8] sm:$0xf]
    %v4917 = vld [vmem:[%s4913 + $0xc] sm:$0xf]
    %v4918 = vld [vmem:[%s4913 + $0x10] sm:$0xf]
    %v4919 = vld [vmem:[%s4913 + $0x14] sm:$0xf]
    %v4920 = vld [vmem:[%s4913 + $0x18] sm:$0xf]
    %v4921 = vld [vmem:[%s4913 + $0x1c] sm:$0xf]
    %v4922 = vld [vmem:[%s4913 + $0x20] sm:$0xf]
    %v4923 = vld [vmem:[%s4913 + $0x24] sm:$0xf]
    %v4924 = vld [vmem:[%s4913 + $0x28] sm:$0xf]
    %v4925 = vld [vmem:[%s4913 + $0x2c] sm:$0xf]
    %v4926 = vld [vmem:[%s4913 + $0x30] sm:$0xf]
    %v4927 = vld [vmem:[%s4913 + $0x34] sm:$0xf]
    %v4928 = vld [vmem:[%s4913 + $0x38] sm:$0xf]
    %v4929 = vld [vmem:[%s4913 + $0x3c] sm:$0xf]
    %v4946 = vunpack.c.l.b16 %v4914
    %v4947 = vunpack.c.l.b16 %v4915
    %v4948 = vunpack.c.l.b16 %v4916
    %v4949 = vunpack.c.l.b16 %v4917
    %v4950 = vunpack.c.l.b16 %v4918
    %v4951 = vunpack.c.l.b16 %v4919
    %v4952 = vunpack.c.l.b16 %v4920
    %v4953 = vunpack.c.l.b16 %v4921
    %v4954 = vunpack.c.l.b16 %v4922
    %v4955 = vunpack.c.l.b16 %v4923
    %v4956 = vunpack.c.l.b16 %v4924
    %v4957 = vunpack.c.l.b16 %v4925
    %v4958 = vunpack.c.l.b16 %v4926
    %v4959 = vunpack.c.l.b16 %v4927
    %v4960 = vunpack.c.l.b16 %v4928
    %v4961 = vunpack.c.l.b16 %v4929
    %v4962 = vpack.c.b16 %v4947, %v4946
    %v4963 = vpack.c.b16 %v4949, %v4948
    %v4964 = vpack.c.b16 %v4951, %v4950
    %v4965 = vpack.c.b16 %v4953, %v4952
    %v4966 = vpack.c.b16 %v4955, %v4954
    %v4967 = vpack.c.b16 %v4957, %v4956
    %v4968 = vpack.c.b16 %v4959, %v4958
    %v4969 = vpack.c.b16 %v4961, %v4960
    %4978 = vmatpush.bf16.msra.mxu0 %v4969
    %4979 = vmatpush.bf16.msra.mxu0 %v4968
    %4980 = vmatpush.bf16.msra.mxu0 %v4967
    %4981 = vmatpush.bf16.msra.mxu0 %v4966
    %4982 = vmatpush.bf16.msra.mxu0 %v4965
    %4983 = vmatpush.bf16.msra.mxu0 %v4964
    %4984 = vmatpush.bf16.msra.mxu0 %v4963
    %4985 = vmatpush.bf16.msra.mxu0 %v4962
    %4986 = vmatmul.bf16.gmra.mxu0 %v4909
    %v4987 = vpop.f32.mrf.mxu0
    %v4988 = vadd.f32 0.0, %v4987
    %v4989 = vpop.f32.mrf.mxu0
    %v4990 = vadd.f32 0.0, %v4989
    %4991 = vmatmul.bf16.gmra.mxu0 %v4910
    %v4992 = vpop.f32.mrf.mxu0
    %v4993 = vadd.f32 0.0, %v4992
    %v4994 = vpop.f32.mrf.mxu0
    %v4995 = vadd.f32 0.0, %v4994
    %4996 = vmatmul.bf16.gmra.mxu0 %v4911
    %v4997 = vpop.f32.mrf.mxu0
    %v4998 = vadd.f32 0.0, %v4997
    %v4999 = vpop.f32.mrf.mxu0
    %v5000 = vadd.f32 0.0, %v4999
    %5001 = vmatmul.bf16.gmra.mxu0 %v4912
    %v5002 = vpop.f32.mrf.mxu0
    %v5003 = vadd.f32 0.0, %v5002
    %v5004 = vpop.f32.mrf.mxu0
    %v5005 = vadd.f32 0.0, %v5004
    %5006 = vdwg.mxu0
    %v5023 = vunpack.c.l.b16 %v4893
    %v5024 = vunpack.c.l.b16 %v4894
    %v5025 = vunpack.c.l.b16 %v4895
    %v5026 = vunpack.c.l.b16 %v4896
    %v5027 = vunpack.c.l.b16 %v4897
    %v5028 = vunpack.c.l.b16 %v4898
    %v5029 = vunpack.c.l.b16 %v4899
    %v5030 = vunpack.c.l.b16 %v4900
    %v5031 = vunpack.c.l.b16 %v4901
    %v5032 = vunpack.c.l.b16 %v4902
    %v5033 = vunpack.c.l.b16 %v4903
    %v5034 = vunpack.c.l.b16 %v4904
    %v5035 = vunpack.c.l.b16 %v4905
    %v5036 = vunpack.c.l.b16 %v4906
    %v5037 = vunpack.c.l.b16 %v4907
    %v5038 = vunpack.c.l.b16 %v4908
    %v5039 = vpack.c.b16 %v5024, %v5023
    %v5040 = vpack.c.b16 %v5026, %v5025
    %v5041 = vpack.c.b16 %v5028, %v5027
    %v5042 = vpack.c.b16 %v5030, %v5029
    %v5043 = vpack.c.b16 %v5032, %v5031
    %v5044 = vpack.c.b16 %v5034, %v5033
    %v5045 = vpack.c.b16 %v5036, %v5035
    %v5046 = vpack.c.b16 %v5038, %v5037
    %5055 = vmatpush.bf16.msra.mxu0 %v5046
    %5056 = vmatpush.bf16.msra.mxu0 %v5045
    %5057 = vmatpush.bf16.msra.mxu0 %v5044
    %5058 = vmatpush.bf16.msra.mxu0 %v5043
    %5059 = vmatpush.bf16.msra.mxu0 %v5042
    %5060 = vmatpush.bf16.msra.mxu0 %v5041
    %5061 = vmatpush.bf16.msra.mxu0 %v5040
    %5062 = vmatpush.bf16.msra.mxu0 %v5039
    %5063 = vmatmul.bf16.gmra.mxu0 %v4888
    %v5064 = vpop.f32.mrf.mxu0
    %v5065 = vadd.f32 %v4988, %v5064
    %v5066 = vpop.f32.mrf.mxu0
    %v5067 = vadd.f32 %v4990, %v5066
    %5068 = vmatmul.bf16.gmra.mxu0 %v4889
    %v5069 = vpop.f32.mrf.mxu0
    %v5070 = vadd.f32 %v4993, %v5069
    %v5071 = vpop.f32.mrf.mxu0
    %v5072 = vadd.f32 %v4995, %v5071
    %5073 = vmatmul.bf16.gmra.mxu0 %v4890
    %v5074 = vpop.f32.mrf.mxu0
    %v5075 = vadd.f32 %v4998, %v5074
    %v5076 = vpop.f32.mrf.mxu0
    %v5077 = vadd.f32 %v5000, %v5076
    %5078 = vmatmul.bf16.gmra.mxu0 %v4891
    %v5079 = vpop.f32.mrf.mxu0
    %v5080 = vadd.f32 %v5003, %v5079
    %v5081 = vpop.f32.mrf.mxu0
    %v5082 = vadd.f32 %v5005, %v5081
    %5083 = vdwg.mxu0
    %v5084 = vsel %vm4066, %v4874, 0.0
    %v5085 = vsel %vm4067, %v4875, 0.0
    %v5086 = vsel %vm4068, %v4876, 0.0
    %v5087 = vsel %vm4069, %v4877, 0.0
    %v5088 = vsel %vm4070, %v4878, 0.0
    %v5089 = vsel %vm4071, %v4879, 0.0
    %v5090 = vsel %vm4072, %v4880, 0.0
    %v5091 = vpack.c.bf16 %v5085, %v5084
    %v5092 = vpack.c.bf16 %v5087, %v5086
    %v5093 = vpack.c.bf16 %v5089, %v5088
    %v5094 = vpack.c.bf16 0.0, %v5090
    %s5095 = scalar_lea.vmem [#allocation2], 2240
    %v5096 = vld [vmem:[%s5095] sm:$0xf]
    %v5097 = vld [vmem:[%s5095 + $0x4] sm:$0xf]
    %v5098 = vld [vmem:[%s5095 + $0x8] sm:$0xf]
    %v5099 = vld [vmem:[%s5095 + $0xc] sm:$0xf]
    %v5100 = vld [vmem:[%s5095 + $0x10] sm:$0xf]
    %v5101 = vld [vmem:[%s5095 + $0x14] sm:$0xf]
    %v5102 = vld [vmem:[%s5095 + $0x18] sm:$0xf]
    %v5103 = vld [vmem:[%s5095 + $0x1c] sm:$0xf]
    %v5104 = vld [vmem:[%s5095 + $0x20] sm:$0xf]
    %v5105 = vld [vmem:[%s5095 + $0x24] sm:$0xf]
    %v5106 = vld [vmem:[%s5095 + $0x28] sm:$0xf]
    %v5107 = vld [vmem:[%s5095 + $0x2c] sm:$0xf]
    %v5108 = vld [vmem:[%s5095 + $0x30] sm:$0xf]
    %v5109 = vld [vmem:[%s5095 + $0x34] sm:$0xf]
    %v5110 = vld [vmem:[%s5095 + $0x38] sm:$0xf]
    %v5111 = vld [vmem:[%s5095 + $0x3c] sm:$0xf]
    %v5128 = vunpack.c.l.b16 %v5096
    %v5129 = vunpack.c.l.b16 %v5097
    %v5130 = vunpack.c.l.b16 %v5098
    %v5131 = vunpack.c.l.b16 %v5099
    %v5132 = vunpack.c.l.b16 %v5100
    %v5133 = vunpack.c.l.b16 %v5101
    %v5134 = vunpack.c.l.b16 %v5102
    %v5135 = vunpack.c.l.b16 %v5103
    %v5136 = vunpack.c.l.b16 %v5104
    %v5137 = vunpack.c.l.b16 %v5105
    %v5138 = vunpack.c.l.b16 %v5106
    %v5139 = vunpack.c.l.b16 %v5107
    %v5140 = vunpack.c.l.b16 %v5108
    %v5141 = vunpack.c.l.b16 %v5109
    %v5142 = vunpack.c.l.b16 %v5110
    %v5143 = vunpack.c.l.b16 %v5111
    %v5144 = vpack.c.b16 %v5129, %v5128
    %v5145 = vpack.c.b16 %v5131, %v5130
    %v5146 = vpack.c.b16 %v5133, %v5132
    %v5147 = vpack.c.b16 %v5135, %v5134
    %v5148 = vpack.c.b16 %v5137, %v5136
    %v5149 = vpack.c.b16 %v5139, %v5138
    %v5150 = vpack.c.b16 %v5141, %v5140
    %v5151 = vpack.c.b16 %v5143, %v5142
    %5160 = vmatpush.bf16.msra.mxu0 %v5151
    %5161 = vmatpush.bf16.msra.mxu0 %v5150
    %5162 = vmatpush.bf16.msra.mxu0 %v5149
    %5163 = vmatpush.bf16.msra.mxu0 %v5148
    %5164 = vmatpush.bf16.msra.mxu0 %v5147
    %5165 = vmatpush.bf16.msra.mxu0 %v5146
    %5166 = vmatpush.bf16.msra.mxu0 %v5145
    %5167 = vmatpush.bf16.msra.mxu0 %v5144
    %5168 = vmatmul.bf16.gmra.mxu0 %v5091
    %v5169 = vpop.f32.mrf.mxu0
    %v5170 = vadd.f32 0.0, %v5169
    %v5171 = vpop.f32.mrf.mxu0
    %v5172 = vadd.f32 0.0, %v5171
    %5173 = vmatmul.bf16.gmra.mxu0 %v5092
    %v5174 = vpop.f32.mrf.mxu0
    %v5175 = vadd.f32 0.0, %v5174
    %v5176 = vpop.f32.mrf.mxu0
    %v5177 = vadd.f32 0.0, %v5176
    %5178 = vmatmul.bf16.gmra.mxu0 %v5093
    %v5179 = vpop.f32.mrf.mxu0
    %v5180 = vadd.f32 0.0, %v5179
    %v5181 = vpop.f32.mrf.mxu0
    %v5182 = vadd.f32 0.0, %v5181
    %5183 = vmatmul.bf16.gmra.mxu0 %v5094
    %v5184 = vpop.f32.mrf.mxu0
    %v5185 = vadd.f32 0.0, %v5184
    %v5186 = vpop.f32.mrf.mxu0
    %v5187 = vadd.f32 0.0, %v5186
    %5188 = vdwg.mxu0
    %v5189 = vadd.f32 %v5065, %v5170
    %v5190 = vadd.f32 %v5067, %v5172
    %v5191 = vadd.f32 %v5070, %v5175
    %v5192 = vadd.f32 %v5072, %v5177
    %v5193 = vadd.f32 %v5075, %v5180
    %v5194 = vadd.f32 %v5077, %v5182
    %v5195 = vadd.f32 %v5080, %v5185
    %v5196 = vadd.f32 %v5082, %v5187
    %s5197 = scalar_lea.vmem [#allocation5], 11
    %v5198 = vld [vmem:[%s5197] sm:$0x1]
    %v5200 = vperm.slane %v5198, 0
    %v5202 = vadd.f32 %v5189, %v5200
    %v5203 = vadd.f32 %v5190, %v5200
    %v5204 = vadd.f32 %v5191, %v5200
    %v5205 = vadd.f32 %v5192, %v5200
    %v5206 = vadd.f32 %v5193, %v5200
    %v5207 = vadd.f32 %v5194, %v5200
    %v5208 = vadd.f32 %v5195, %v5200
    %v5209 = vadd.f32 %v5196, %v5200
    %v5210 = vmax.f32 %v5202, 0.0
    %v5211 = vmax.f32 %v5203, 0.0
    %v5212 = vmax.f32 %v5204, 0.0
    %v5213 = vmax.f32 %v5205, 0.0
    %v5214 = vmax.f32 %v5206, 0.0
    %v5215 = vmax.f32 %v5207, 0.0
    %v5216 = vmax.f32 %v5208, 0.0
    %v5217 = vmax.f32 %v5209, 0.0
    %v5218 = vsel %vm4066, %v5211, 0.0
    %v5219 = vsel %vm4067, %v5212, 0.0
    %v5220 = vsel %vm4068, %v5213, 0.0
    %v5221 = vsel %vm4069, %v5214, 0.0
    %v5222 = vsel %vm4070, %v5215, 0.0
    %v5223 = vsel %vm4071, %v5216, 0.0
    %v5224 = vsel %vm4072, %v5217, 0.0
    %v5225 = vmax.f32 %v5210, %v5218
    %v5226 = vmax.f32 %v5211, %v5219
    %v5227 = vmax.f32 %v5212, %v5220
    %v5228 = vmax.f32 %v5213, %v5221
    %v5229 = vmax.f32 %v5214, %v5222
    %v5230 = vmax.f32 %v5215, %v5223
    %v5231 = vmax.f32 %v5216, %v5224
    %v5232 = vmax.f32 %v5217, 0.0
    %5233 = vrot.lane.b32.xlu0 %v5225, 96
    %v5234 = vpop.permute.xlu0 %5233
    %5235 = vrot.lane.b32.xlu0 %v5226, 96
    %v5236 = vpop.permute.xlu0 %5235
    %5237 = vrot.lane.b32.xlu0 %v5227, 96
    %v5238 = vpop.permute.xlu0 %5237
    %5239 = vrot.lane.b32.xlu0 %v5228, 96
    %v5240 = vpop.permute.xlu0 %5239
    %5241 = vrot.lane.b32.xlu0 %v5229, 96
    %v5242 = vpop.permute.xlu0 %5241
    %5243 = vrot.lane.b32.xlu0 %v5230, 96
    %v5244 = vpop.permute.xlu0 %5243
    %5245 = vrot.lane.b32.xlu0 %v5231, 96
    %v5246 = vpop.permute.xlu0 %5245
    %5247 = vrot.lane.b32.xlu0 %v5232, 96
    %v5248 = vpop.permute.xlu0 %5247
    %v5249 = vmax.f32 %v5225, %v5234
    %v5250 = vmax.f32 %v5226, %v5236
    %v5251 = vmax.f32 %v5227, %v5238
    %v5252 = vmax.f32 %v5228, %v5240
    %v5253 = vmax.f32 %v5229, %v5242
    %v5254 = vmax.f32 %v5230, %v5244
    %v5255 = vmax.f32 %v5231, %v5246
    %v5256 = vmax.f32 %v5232, %v5248
    %v5257 = vadd.s32 %v165, 4294967280
    %v5258 = vadd.s32 %v166, 4294967280
    %v5259 = vadd.s32 %v167, 4294967280
    %v5260 = vadd.s32 %v168, 4294967280
    %v5261 = vadd.s32 %v169, 4294967280
    %v5262 = vadd.s32 %v170, 4294967280
    %vm5263 = vcmp.ge.s32.totalorder %v5257, 0
    %vm5264 = vcmp.ge.s32.totalorder %v5258, 0
    %vm5265 = vcmp.ge.s32.totalorder %v5259, 0
    %vm5266 = vcmp.ge.s32.totalorder %v5260, 0
    %vm5267 = vcmp.ge.s32.totalorder %v5261, 0
    %vm5268 = vcmp.ge.s32.totalorder %v5262, 0
    %vm5269 = vcmp.lt.s32.totalorder %v5257, 32
    %vm5270 = vcmp.lt.s32.totalorder %v5258, 32
    %vm5271 = vcmp.lt.s32.totalorder %v5259, 32
    %vm5272 = vcmp.lt.s32.totalorder %v5260, 32
    %vm5273 = vcmp.lt.s32.totalorder %v5261, 32
    %vm5274 = vcmp.lt.s32.totalorder %v5262, 32
    %vm5275 = vmand %vm5263, %vm5269
    %vm5276 = vmand %vm5264, %vm5270
    %vm5277 = vmand %vm5265, %vm5271
    %vm5278 = vmand %vm5266, %vm5272
    %vm5279 = vmand %vm5267, %vm5273
    %vm5280 = vmand %vm5268, %vm5274
    %v5281 = vsel %vm5275, 1, 0
    %v5282 = vsel %vm5276, 1, 0
    %v5283 = vsel %vm5277, 1, 0
    %v5284 = vsel %vm5278, 1, 0
    %v5285 = vsel %vm5279, 1, 0
    %v5286 = vsel %vm5280, 1, 0
    %vm5287 = vcmp.eq.s32.totalorder %v5281, 1
    %vm5288 = vcmp.eq.s32.totalorder %v5282, 1
    %vm5289 = vcmp.eq.s32.totalorder %v5283, 1
    %vm5290 = vcmp.eq.s32.totalorder %v5284, 1
    %vm5291 = vcmp.eq.s32.totalorder %v5285, 1
    %vm5292 = vcmp.eq.s32.totalorder %v5286, 1
    %v5293 = vsel %vm5287, %v5249, 0.0
    %v5294 = vsel %vm5288, %v5250, 0.0
    %v5295 = vsel %vm5289, %v5251, 0.0
    %v5296 = vsel %vm5290, %v5252, 0.0
    %v5297 = vsel %vm5291, %v5253, 0.0
    %v5298 = vsel %vm5292, %v5254, 0.0
    %v5299 = vpack.c.bf16 0.0, 0.0
    %v5300 = vpack.c.bf16 %v5294, %v5293
    %v5301 = vpack.c.bf16 %v5296, %v5295
    %v5302 = vpack.c.bf16 %v5298, %v5297
    %s5303 = scalar_lea.vmem [#allocation2], 2304
    %v5304 = vld [vmem:[%s5303] sm:$0xf]
    %v5305 = vld [vmem:[%s5303 + $0x4] sm:$0xf]
    %v5306 = vld [vmem:[%s5303 + $0x8] sm:$0xf]
    %v5307 = vld [vmem:[%s5303 + $0xc] sm:$0xf]
    %v5308 = vld [vmem:[%s5303 + $0x10] sm:$0xf]
    %v5309 = vld [vmem:[%s5303 + $0x14] sm:$0xf]
    %v5310 = vld [vmem:[%s5303 + $0x18] sm:$0xf]
    %v5311 = vld [vmem:[%s5303 + $0x1c] sm:$0xf]
    %v5312 = vld [vmem:[%s5303 + $0x20] sm:$0xf]
    %v5313 = vld [vmem:[%s5303 + $0x24] sm:$0xf]
    %v5314 = vld [vmem:[%s5303 + $0x28] sm:$0xf]
    %v5315 = vld [vmem:[%s5303 + $0x2c] sm:$0xf]
    %v5316 = vld [vmem:[%s5303 + $0x30] sm:$0xf]
    %v5317 = vld [vmem:[%s5303 + $0x34] sm:$0xf]
    %v5318 = vld [vmem:[%s5303 + $0x38] sm:$0xf]
    %v5319 = vld [vmem:[%s5303 + $0x3c] sm:$0xf]
    %v5320 = vpack.c.bf16 %v5250, %v5249
    %v5321 = vpack.c.bf16 %v5252, %v5251
    %v5322 = vpack.c.bf16 %v5254, %v5253
    %v5323 = vpack.c.bf16 %v5256, %v5255
    %s5324 = scalar_lea.vmem [#allocation2], 2368
    %v5325 = vld [vmem:[%s5324] sm:$0xf]
    %v5326 = vld [vmem:[%s5324 + $0x4] sm:$0xf]
    %v5327 = vld [vmem:[%s5324 + $0x8] sm:$0xf]
    %v5328 = vld [vmem:[%s5324 + $0xc] sm:$0xf]
    %v5329 = vld [vmem:[%s5324 + $0x10] sm:$0xf]
    %v5330 = vld [vmem:[%s5324 + $0x14] sm:$0xf]
    %v5331 = vld [vmem:[%s5324 + $0x18] sm:$0xf]
    %v5332 = vld [vmem:[%s5324 + $0x1c] sm:$0xf]
    %v5333 = vld [vmem:[%s5324 + $0x20] sm:$0xf]
    %v5334 = vld [vmem:[%s5324 + $0x24] sm:$0xf]
    %v5335 = vld [vmem:[%s5324 + $0x28] sm:$0xf]
    %v5336 = vld [vmem:[%s5324 + $0x2c] sm:$0xf]
    %v5337 = vld [vmem:[%s5324 + $0x30] sm:$0xf]
    %v5338 = vld [vmem:[%s5324 + $0x34] sm:$0xf]
    %v5339 = vld [vmem:[%s5324 + $0x38] sm:$0xf]
    %v5340 = vld [vmem:[%s5324 + $0x3c] sm:$0xf]
    %v5357 = vunpack.c.l.b16 %v5325
    %v5358 = vunpack.c.l.b16 %v5326
    %v5359 = vunpack.c.l.b16 %v5327
    %v5360 = vunpack.c.l.b16 %v5328
    %v5361 = vunpack.c.l.b16 %v5329
    %v5362 = vunpack.c.l.b16 %v5330
    %v5363 = vunpack.c.l.b16 %v5331
    %v5364 = vunpack.c.l.b16 %v5332
    %v5365 = vunpack.c.l.b16 %v5333
    %v5366 = vunpack.c.l.b16 %v5334
    %v5367 = vunpack.c.l.b16 %v5335
    %v5368 = vunpack.c.l.b16 %v5336
    %v5369 = vunpack.c.l.b16 %v5337
    %v5370 = vunpack.c.l.b16 %v5338
    %v5371 = vunpack.c.l.b16 %v5339
    %v5372 = vunpack.c.l.b16 %v5340
    %v5373 = vpack.c.b16 %v5358, %v5357
    %v5374 = vpack.c.b16 %v5360, %v5359
    %v5375 = vpack.c.b16 %v5362, %v5361
    %v5376 = vpack.c.b16 %v5364, %v5363
    %v5377 = vpack.c.b16 %v5366, %v5365
    %v5378 = vpack.c.b16 %v5368, %v5367
    %v5379 = vpack.c.b16 %v5370, %v5369
    %v5380 = vpack.c.b16 %v5372, %v5371
    %5389 = vmatpush.bf16.msra.mxu0 %v5380
    %5390 = vmatpush.bf16.msra.mxu0 %v5379
    %5391 = vmatpush.bf16.msra.mxu0 %v5378
    %5392 = vmatpush.bf16.msra.mxu0 %v5377
    %5393 = vmatpush.bf16.msra.mxu0 %v5376
    %5394 = vmatpush.bf16.msra.mxu0 %v5375
    %5395 = vmatpush.bf16.msra.mxu0 %v5374
    %5396 = vmatpush.bf16.msra.mxu0 %v5373
    %5397 = vmatmul.bf16.gmra.mxu0 %v5320
    %v5398 = vpop.f32.mrf.mxu0
    %v5399 = vadd.f32 0.0, %v5398
    %v5400 = vpop.f32.mrf.mxu0
    %v5401 = vadd.f32 0.0, %v5400
    %5402 = vmatmul.bf16.gmra.mxu0 %v5321
    %v5403 = vpop.f32.mrf.mxu0
    %v5404 = vadd.f32 0.0, %v5403
    %v5405 = vpop.f32.mrf.mxu0
    %v5406 = vadd.f32 0.0, %v5405
    %5407 = vmatmul.bf16.gmra.mxu0 %v5322
    %v5408 = vpop.f32.mrf.mxu0
    %v5409 = vadd.f32 0.0, %v5408
    %v5410 = vpop.f32.mrf.mxu0
    %v5411 = vadd.f32 0.0, %v5410
    %5412 = vmatmul.bf16.gmra.mxu0 %v5323
    %v5413 = vpop.f32.mrf.mxu0
    %v5414 = vadd.f32 0.0, %v5413
    %v5415 = vpop.f32.mrf.mxu0
    %v5416 = vadd.f32 0.0, %v5415
    %5417 = vdwg.mxu0
    %v5434 = vunpack.c.l.b16 %v5304
    %v5435 = vunpack.c.l.b16 %v5305
    %v5436 = vunpack.c.l.b16 %v5306
    %v5437 = vunpack.c.l.b16 %v5307
    %v5438 = vunpack.c.l.b16 %v5308
    %v5439 = vunpack.c.l.b16 %v5309
    %v5440 = vunpack.c.l.b16 %v5310
    %v5441 = vunpack.c.l.b16 %v5311
    %v5442 = vunpack.c.l.b16 %v5312
    %v5443 = vunpack.c.l.b16 %v5313
    %v5444 = vunpack.c.l.b16 %v5314
    %v5445 = vunpack.c.l.b16 %v5315
    %v5446 = vunpack.c.l.b16 %v5316
    %v5447 = vunpack.c.l.b16 %v5317
    %v5448 = vunpack.c.l.b16 %v5318
    %v5449 = vunpack.c.l.b16 %v5319
    %v5450 = vpack.c.b16 %v5435, %v5434
    %v5451 = vpack.c.b16 %v5437, %v5436
    %v5452 = vpack.c.b16 %v5439, %v5438
    %v5453 = vpack.c.b16 %v5441, %v5440
    %v5454 = vpack.c.b16 %v5443, %v5442
    %v5455 = vpack.c.b16 %v5445, %v5444
    %v5456 = vpack.c.b16 %v5447, %v5446
    %v5457 = vpack.c.b16 %v5449, %v5448
    %5466 = vmatpush.bf16.msra.mxu0 %v5457
    %5467 = vmatpush.bf16.msra.mxu0 %v5456
    %5468 = vmatpush.bf16.msra.mxu0 %v5455
    %5469 = vmatpush.bf16.msra.mxu0 %v5454
    %5470 = vmatpush.bf16.msra.mxu0 %v5453
    %5471 = vmatpush.bf16.msra.mxu0 %v5452
    %5472 = vmatpush.bf16.msra.mxu0 %v5451
    %5473 = vmatpush.bf16.msra.mxu0 %v5450
    %5474 = vmatmul.bf16.gmra.mxu0 %v5299
    %v5475 = vpop.f32.mrf.mxu0
    %v5476 = vadd.f32 %v5399, %v5475
    %v5477 = vpop.f32.mrf.mxu0
    %v5478 = vadd.f32 %v5401, %v5477
    %5479 = vmatmul.bf16.gmra.mxu0 %v5300
    %v5480 = vpop.f32.mrf.mxu0
    %v5481 = vadd.f32 %v5404, %v5480
    %v5482 = vpop.f32.mrf.mxu0
    %v5483 = vadd.f32 %v5406, %v5482
    %5484 = vmatmul.bf16.gmra.mxu0 %v5301
    %v5485 = vpop.f32.mrf.mxu0
    %v5486 = vadd.f32 %v5409, %v5485
    %v5487 = vpop.f32.mrf.mxu0
    %v5488 = vadd.f32 %v5411, %v5487
    %5489 = vmatmul.bf16.gmra.mxu0 %v5302
    %v5490 = vpop.f32.mrf.mxu0
    %v5491 = vadd.f32 %v5414, %v5490
    %v5492 = vpop.f32.mrf.mxu0
    %v5493 = vadd.f32 %v5416, %v5492
    %5494 = vdwg.mxu0
    %v5495 = vadd.s32 %v163, 16
    %v5496 = vadd.s32 %v164, 16
    %v5497 = vadd.s32 %v165, 16
    %v5498 = vadd.s32 %v166, 16
    %v5499 = vadd.s32 %v167, 16
    %v5500 = vadd.s32 %v168, 16
    %vm5501 = vcmp.ge.s32.totalorder %v5495, 0
    %vm5502 = vcmp.ge.s32.totalorder %v5496, 0
    %vm5503 = vcmp.ge.s32.totalorder %v5497, 0
    %vm5504 = vcmp.ge.s32.totalorder %v5498, 0
    %vm5505 = vcmp.ge.s32.totalorder %v5499, 0
    %vm5506 = vcmp.ge.s32.totalorder %v5500, 0
    %vm5507 = vcmp.lt.s32.totalorder %v5495, 32
    %vm5508 = vcmp.lt.s32.totalorder %v5496, 32
    %vm5509 = vcmp.lt.s32.totalorder %v5497, 32
    %vm5510 = vcmp.lt.s32.totalorder %v5498, 32
    %vm5511 = vcmp.lt.s32.totalorder %v5499, 32
    %vm5512 = vcmp.lt.s32.totalorder %v5500, 32
    %vm5513 = vmand %vm5501, %vm5507
    %vm5514 = vmand %vm5502, %vm5508
    %vm5515 = vmand %vm5503, %vm5509
    %vm5516 = vmand %vm5504, %vm5510
    %vm5517 = vmand %vm5505, %vm5511
    %vm5518 = vmand %vm5506, %vm5512
    %v5519 = vsel %vm5513, 1, 0
    %v5520 = vsel %vm5514, 1, 0
    %v5521 = vsel %vm5515, 1, 0
    %v5522 = vsel %vm5516, 1, 0
    %v5523 = vsel %vm5517, 1, 0
    %v5524 = vsel %vm5518, 1, 0
    %vm5525 = vcmp.eq.s32.totalorder %v5519, 1
    %vm5526 = vcmp.eq.s32.totalorder %v5520, 1
    %vm5527 = vcmp.eq.s32.totalorder %v5521, 1
    %vm5528 = vcmp.eq.s32.totalorder %v5522, 1
    %vm5529 = vcmp.eq.s32.totalorder %v5523, 1
    %vm5530 = vcmp.eq.s32.totalorder %v5524, 1
    %v5531 = vsel %vm5525, %v5251, 0.0
    %v5532 = vsel %vm5526, %v5252, 0.0
    %v5533 = vsel %vm5527, %v5253, 0.0
    %v5534 = vsel %vm5528, %v5254, 0.0
    %v5535 = vsel %vm5529, %v5255, 0.0
    %v5536 = vsel %vm5530, %v5256, 0.0
    %v5537 = vpack.c.bf16 %v5532, %v5531
    %v5538 = vpack.c.bf16 %v5534, %v5533
    %v5539 = vpack.c.bf16 %v5536, %v5535
    %s5540 = scalar_lea.vmem [#allocation2], 2432
    %v5541 = vld [vmem:[%s5540] sm:$0xf]
    %v5542 = vld [vmem:[%s5540 + $0x4] sm:$0xf]
    %v5543 = vld [vmem:[%s5540 + $0x8] sm:$0xf]
    %v5544 = vld [vmem:[%s5540 + $0xc] sm:$0xf]
    %v5545 = vld [vmem:[%s5540 + $0x10] sm:$0xf]
    %v5546 = vld [vmem:[%s5540 + $0x14] sm:$0xf]
    %v5547 = vld [vmem:[%s5540 + $0x18] sm:$0xf]
    %v5548 = vld [vmem:[%s5540 + $0x1c] sm:$0xf]
    %v5549 = vld [vmem:[%s5540 + $0x20] sm:$0xf]
    %v5550 = vld [vmem:[%s5540 + $0x24] sm:$0xf]
    %v5551 = vld [vmem:[%s5540 + $0x28] sm:$0xf]
    %v5552 = vld [vmem:[%s5540 + $0x2c] sm:$0xf]
    %v5553 = vld [vmem:[%s5540 + $0x30] sm:$0xf]
    %v5554 = vld [vmem:[%s5540 + $0x34] sm:$0xf]
    %v5555 = vld [vmem:[%s5540 + $0x38] sm:$0xf]
    %v5556 = vld [vmem:[%s5540 + $0x3c] sm:$0xf]
    %v5573 = vunpack.c.l.b16 %v5541
    %v5574 = vunpack.c.l.b16 %v5542
    %v5575 = vunpack.c.l.b16 %v5543
    %v5576 = vunpack.c.l.b16 %v5544
    %v5577 = vunpack.c.l.b16 %v5545
    %v5578 = vunpack.c.l.b16 %v5546
    %v5579 = vunpack.c.l.b16 %v5547
    %v5580 = vunpack.c.l.b16 %v5548
    %v5581 = vunpack.c.l.b16 %v5549
    %v5582 = vunpack.c.l.b16 %v5550
    %v5583 = vunpack.c.l.b16 %v5551
    %v5584 = vunpack.c.l.b16 %v5552
    %v5585 = vunpack.c.l.b16 %v5553
    %v5586 = vunpack.c.l.b16 %v5554
    %v5587 = vunpack.c.l.b16 %v5555
    %v5588 = vunpack.c.l.b16 %v5556
    %v5589 = vpack.c.b16 %v5574, %v5573
    %v5590 = vpack.c.b16 %v5576, %v5575
    %v5591 = vpack.c.b16 %v5578, %v5577
    %v5592 = vpack.c.b16 %v5580, %v5579
    %v5593 = vpack.c.b16 %v5582, %v5581
    %v5594 = vpack.c.b16 %v5584, %v5583
    %v5595 = vpack.c.b16 %v5586, %v5585
    %v5596 = vpack.c.b16 %v5588, %v5587
    %5605 = vmatpush.bf16.msra.mxu0 %v5596
    %5606 = vmatpush.bf16.msra.mxu0 %v5595
    %5607 = vmatpush.bf16.msra.mxu0 %v5594
    %5608 = vmatpush.bf16.msra.mxu0 %v5593
    %5609 = vmatpush.bf16.msra.mxu0 %v5592
    %5610 = vmatpush.bf16.msra.mxu0 %v5591
    %5611 = vmatpush.bf16.msra.mxu0 %v5590
    %5612 = vmatpush.bf16.msra.mxu0 %v5589
    %5613 = vmatmul.bf16.gmra.mxu0 %v5537
    %v5614 = vpop.f32.mrf.mxu0
    %v5615 = vadd.f32 0.0, %v5614
    %v5616 = vpop.f32.mrf.mxu0
    %v5617 = vadd.f32 0.0, %v5616
    %5618 = vmatmul.bf16.gmra.mxu0 %v5538
    %v5619 = vpop.f32.mrf.mxu0
    %v5620 = vadd.f32 0.0, %v5619
    %v5621 = vpop.f32.mrf.mxu0
    %v5622 = vadd.f32 0.0, %v5621
    %5623 = vmatmul.bf16.gmra.mxu0 %v5539
    %v5624 = vpop.f32.mrf.mxu0
    %v5625 = vadd.f32 0.0, %v5624
    %v5626 = vpop.f32.mrf.mxu0
    %v5627 = vadd.f32 0.0, %v5626
    %5628 = vmatmul.bf16.gmra.mxu0 %v5299
    %v5629 = vpop.f32.mrf.mxu0
    %v5630 = vadd.f32 0.0, %v5629
    %v5631 = vpop.f32.mrf.mxu0
    %v5632 = vadd.f32 0.0, %v5631
    %5633 = vdwg.mxu0
    %v5634 = vadd.f32 %v5476, %v5615
    %v5635 = vadd.f32 %v5478, %v5617
    %v5636 = vadd.f32 %v5481, %v5620
    %v5637 = vadd.f32 %v5483, %v5622
    %v5638 = vadd.f32 %v5486, %v5625
    %v5639 = vadd.f32 %v5488, %v5627
    %v5640 = vadd.f32 %v5491, %v5630
    %v5641 = vadd.f32 %v5493, %v5632
    %s5642 = scalar_lea.vmem [#allocation5], 12
    %v5643 = vld [vmem:[%s5642] sm:$0x1]
    %v5645 = vperm.slane %v5643, 0
    %v5647 = vadd.f32 %v5634, %v5645
    %v5648 = vadd.f32 %v5635, %v5645
    %v5649 = vadd.f32 %v5636, %v5645
    %v5650 = vadd.f32 %v5637, %v5645
    %v5651 = vadd.f32 %v5638, %v5645
    %v5652 = vadd.f32 %v5639, %v5645
    %v5653 = vadd.f32 %v5640, %v5645
    %v5654 = vadd.f32 %v5641, %v5645
    %v5655 = vmax.f32 %v5647, 0.0
    %v5656 = vmax.f32 %v5648, 0.0
    %v5657 = vmax.f32 %v5649, 0.0
    %v5658 = vmax.f32 %v5650, 0.0
    %v5659 = vmax.f32 %v5651, 0.0
    %v5660 = vmax.f32 %v5652, 0.0
    %v5661 = vmax.f32 %v5653, 0.0
    %v5662 = vmax.f32 %v5654, 0.0
    %v5663 = vsel %vm5287, %v5655, 0.0
    %v5664 = vsel %vm5288, %v5656, 0.0
    %v5665 = vsel %vm5289, %v5657, 0.0
    %v5666 = vsel %vm5290, %v5658, 0.0
    %v5667 = vsel %vm5291, %v5659, 0.0
    %v5668 = vsel %vm5292, %v5660, 0.0
    %v5669 = vpack.c.bf16 %v5664, %v5663
    %v5670 = vpack.c.bf16 %v5666, %v5665
    %v5671 = vpack.c.bf16 %v5668, %v5667
    %s5672 = scalar_lea.vmem [#allocation2], 2496
    %v5673 = vld [vmem:[%s5672] sm:$0xf]
    %v5674 = vld [vmem:[%s5672 + $0x4] sm:$0xf]
    %v5675 = vld [vmem:[%s5672 + $0x8] sm:$0xf]
    %v5676 = vld [vmem:[%s5672 + $0xc] sm:$0xf]
    %v5677 = vld [vmem:[%s5672 + $0x10] sm:$0xf]
    %v5678 = vld [vmem:[%s5672 + $0x14] sm:$0xf]
    %v5679 = vld [vmem:[%s5672 + $0x18] sm:$0xf]
    %v5680 = vld [vmem:[%s5672 + $0x1c] sm:$0xf]
    %v5681 = vld [vmem:[%s5672 + $0x20] sm:$0xf]
    %v5682 = vld [vmem:[%s5672 + $0x24] sm:$0xf]
    %v5683 = vld [vmem:[%s5672 + $0x28] sm:$0xf]
    %v5684 = vld [vmem:[%s5672 + $0x2c] sm:$0xf]
    %v5685 = vld [vmem:[%s5672 + $0x30] sm:$0xf]
    %v5686 = vld [vmem:[%s5672 + $0x34] sm:$0xf]
    %v5687 = vld [vmem:[%s5672 + $0x38] sm:$0xf]
    %v5688 = vld [vmem:[%s5672 + $0x3c] sm:$0xf]
    %v5689 = vpack.c.bf16 %v5656, %v5655
    %v5690 = vpack.c.bf16 %v5658, %v5657
    %v5691 = vpack.c.bf16 %v5660, %v5659
    %v5692 = vpack.c.bf16 %v5662, %v5661
    %s5693 = scalar_lea.vmem [#allocation2], 2560
    %v5694 = vld [vmem:[%s5693] sm:$0xf]
    %v5695 = vld [vmem:[%s5693 + $0x4] sm:$0xf]
    %v5696 = vld [vmem:[%s5693 + $0x8] sm:$0xf]
    %v5697 = vld [vmem:[%s5693 + $0xc] sm:$0xf]
    %v5698 = vld [vmem:[%s5693 + $0x10] sm:$0xf]
    %v5699 = vld [vmem:[%s5693 + $0x14] sm:$0xf]
    %v5700 = vld [vmem:[%s5693 + $0x18] sm:$0xf]
    %v5701 = vld [vmem:[%s5693 + $0x1c] sm:$0xf]
    %v5702 = vld [vmem:[%s5693 + $0x20] sm:$0xf]
    %v5703 = vld [vmem:[%s5693 + $0x24] sm:$0xf]
    %v5704 = vld [vmem:[%s5693 + $0x28] sm:$0xf]
    %v5705 = vld [vmem:[%s5693 + $0x2c] sm:$0xf]
    %v5706 = vld [vmem:[%s5693 + $0x30] sm:$0xf]
    %v5707 = vld [vmem:[%s5693 + $0x34] sm:$0xf]
    %v5708 = vld [vmem:[%s5693 + $0x38] sm:$0xf]
    %v5709 = vld [vmem:[%s5693 + $0x3c] sm:$0xf]
    %v5726 = vunpack.c.l.b16 %v5694
    %v5727 = vunpack.c.l.b16 %v5695
    %v5728 = vunpack.c.l.b16 %v5696
    %v5729 = vunpack.c.l.b16 %v5697
    %v5730 = vunpack.c.l.b16 %v5698
    %v5731 = vunpack.c.l.b16 %v5699
    %v5732 = vunpack.c.l.b16 %v5700
    %v5733 = vunpack.c.l.b16 %v5701
    %v5734 = vunpack.c.l.b16 %v5702
    %v5735 = vunpack.c.l.b16 %v5703
    %v5736 = vunpack.c.l.b16 %v5704
    %v5737 = vunpack.c.l.b16 %v5705
    %v5738 = vunpack.c.l.b16 %v5706
    %v5739 = vunpack.c.l.b16 %v5707
    %v5740 = vunpack.c.l.b16 %v5708
    %v5741 = vunpack.c.l.b16 %v5709
    %v5742 = vpack.c.b16 %v5727, %v5726
    %v5743 = vpack.c.b16 %v5729, %v5728
    %v5744 = vpack.c.b16 %v5731, %v5730
    %v5745 = vpack.c.b16 %v5733, %v5732
    %v5746 = vpack.c.b16 %v5735, %v5734
    %v5747 = vpack.c.b16 %v5737, %v5736
    %v5748 = vpack.c.b16 %v5739, %v5738
    %v5749 = vpack.c.b16 %v5741, %v5740
    %5758 = vmatpush.bf16.msra.mxu0 %v5749
    %5759 = vmatpush.bf16.msra.mxu0 %v5748
    %5760 = vmatpush.bf16.msra.mxu0 %v5747
    %5761 = vmatpush.bf16.msra.mxu0 %v5746
    %5762 = vmatpush.bf16.msra.mxu0 %v5745
    %5763 = vmatpush.bf16.msra.mxu0 %v5744
    %5764 = vmatpush.bf16.msra.mxu0 %v5743
    %5765 = vmatpush.bf16.msra.mxu0 %v5742
    %5766 = vmatmul.bf16.gmra.mxu0 %v5689
    %v5767 = vpop.f32.mrf.mxu0
    %v5768 = vadd.f32 0.0, %v5767
    %v5769 = vpop.f32.mrf.mxu0
    %v5770 = vadd.f32 0.0, %v5769
    %5771 = vmatmul.bf16.gmra.mxu0 %v5690
    %v5772 = vpop.f32.mrf.mxu0
    %v5773 = vadd.f32 0.0, %v5772
    %v5774 = vpop.f32.mrf.mxu0
    %v5775 = vadd.f32 0.0, %v5774
    %5776 = vmatmul.bf16.gmra.mxu0 %v5691
    %v5777 = vpop.f32.mrf.mxu0
    %v5778 = vadd.f32 0.0, %v5777
    %v5779 = vpop.f32.mrf.mxu0
    %v5780 = vadd.f32 0.0, %v5779
    %5781 = vmatmul.bf16.gmra.mxu0 %v5692
    %v5782 = vpop.f32.mrf.mxu0
    %v5783 = vadd.f32 0.0, %v5782
    %v5784 = vpop.f32.mrf.mxu0
    %v5785 = vadd.f32 0.0, %v5784
    %5786 = vdwg.mxu0
    %v5803 = vunpack.c.l.b16 %v5673
    %v5804 = vunpack.c.l.b16 %v5674
    %v5805 = vunpack.c.l.b16 %v5675
    %v5806 = vunpack.c.l.b16 %v5676
    %v5807 = vunpack.c.l.b16 %v5677
    %v5808 = vunpack.c.l.b16 %v5678
    %v5809 = vunpack.c.l.b16 %v5679
    %v5810 = vunpack.c.l.b16 %v5680
    %v5811 = vunpack.c.l.b16 %v5681
    %v5812 = vunpack.c.l.b16 %v5682
    %v5813 = vunpack.c.l.b16 %v5683
    %v5814 = vunpack.c.l.b16 %v5684
    %v5815 = vunpack.c.l.b16 %v5685
    %v5816 = vunpack.c.l.b16 %v5686
    %v5817 = vunpack.c.l.b16 %v5687
    %v5818 = vunpack.c.l.b16 %v5688
    %v5819 = vpack.c.b16 %v5804, %v5803
    %v5820 = vpack.c.b16 %v5806, %v5805
    %v5821 = vpack.c.b16 %v5808, %v5807
    %v5822 = vpack.c.b16 %v5810, %v5809
    %v5823 = vpack.c.b16 %v5812, %v5811
    %v5824 = vpack.c.b16 %v5814, %v5813
    %v5825 = vpack.c.b16 %v5816, %v5815
    %v5826 = vpack.c.b16 %v5818, %v5817
    %5835 = vmatpush.bf16.msra.mxu0 %v5826
    %5836 = vmatpush.bf16.msra.mxu0 %v5825
    %5837 = vmatpush.bf16.msra.mxu0 %v5824
    %5838 = vmatpush.bf16.msra.mxu0 %v5823
    %5839 = vmatpush.bf16.msra.mxu0 %v5822
    %5840 = vmatpush.bf16.msra.mxu0 %v5821
    %5841 = vmatpush.bf16.msra.mxu0 %v5820
    %5842 = vmatpush.bf16.msra.mxu0 %v5819
    %5843 = vmatmul.bf16.gmra.mxu0 %v5299
    %v5844 = vpop.f32.mrf.mxu0
    %v5845 = vadd.f32 %v5768, %v5844
    %v5846 = vpop.f32.mrf.mxu0
    %v5847 = vadd.f32 %v5770, %v5846
    %5848 = vmatmul.bf16.gmra.mxu0 %v5669
    %v5849 = vpop.f32.mrf.mxu0
    %v5850 = vadd.f32 %v5773, %v5849
    %v5851 = vpop.f32.mrf.mxu0
    %v5852 = vadd.f32 %v5775, %v5851
    %5853 = vmatmul.bf16.gmra.mxu0 %v5670
    %v5854 = vpop.f32.mrf.mxu0
    %v5855 = vadd.f32 %v5778, %v5854
    %v5856 = vpop.f32.mrf.mxu0
    %v5857 = vadd.f32 %v5780, %v5856
    %5858 = vmatmul.bf16.gmra.mxu0 %v5671
    %v5859 = vpop.f32.mrf.mxu0
    %v5860 = vadd.f32 %v5783, %v5859
    %v5861 = vpop.f32.mrf.mxu0
    %v5862 = vadd.f32 %v5785, %v5861
    %5863 = vdwg.mxu0
    %v5864 = vsel %vm5525, %v5657, 0.0
    %v5865 = vsel %vm5526, %v5658, 0.0
    %v5866 = vsel %vm5527, %v5659, 0.0
    %v5867 = vsel %vm5528, %v5660, 0.0
    %v5868 = vsel %vm5529, %v5661, 0.0
    %v5869 = vsel %vm5530, %v5662, 0.0
    %v5870 = vpack.c.bf16 %v5865, %v5864
    %v5871 = vpack.c.bf16 %v5867, %v5866
    %v5872 = vpack.c.bf16 %v5869, %v5868
    %s5873 = scalar_lea.vmem [#allocation2], 2624
    %v5874 = vld [vmem:[%s5873] sm:$0xf]
    %v5875 = vld [vmem:[%s5873 + $0x4] sm:$0xf]
    %v5876 = vld [vmem:[%s5873 + $0x8] sm:$0xf]
    %v5877 = vld [vmem:[%s5873 + $0xc] sm:$0xf]
    %v5878 = vld [vmem:[%s5873 + $0x10] sm:$0xf]
    %v5879 = vld [vmem:[%s5873 + $0x14] sm:$0xf]
    %v5880 = vld [vmem:[%s5873 + $0x18] sm:$0xf]
    %v5881 = vld [vmem:[%s5873 + $0x1c] sm:$0xf]
    %v5882 = vld [vmem:[%s5873 + $0x20] sm:$0xf]
    %v5883 = vld [vmem:[%s5873 + $0x24] sm:$0xf]
    %v5884 = vld [vmem:[%s5873 + $0x28] sm:$0xf]
    %v5885 = vld [vmem:[%s5873 + $0x2c] sm:$0xf]
    %v5886 = vld [vmem:[%s5873 + $0x30] sm:$0xf]
    %v5887 = vld [vmem:[%s5873 + $0x34] sm:$0xf]
    %v5888 = vld [vmem:[%s5873 + $0x38] sm:$0xf]
    %v5889 = vld [vmem:[%s5873 + $0x3c] sm:$0xf]
    %v5906 = vunpack.c.l.b16 %v5874
    %v5907 = vunpack.c.l.b16 %v5875
    %v5908 = vunpack.c.l.b16 %v5876
    %v5909 = vunpack.c.l.b16 %v5877
    %v5910 = vunpack.c.l.b16 %v5878
    %v5911 = vunpack.c.l.b16 %v5879
    %v5912 = vunpack.c.l.b16 %v5880
    %v5913 = vunpack.c.l.b16 %v5881
    %v5914 = vunpack.c.l.b16 %v5882
    %v5915 = vunpack.c.l.b16 %v5883
    %v5916 = vunpack.c.l.b16 %v5884
    %v5917 = vunpack.c.l.b16 %v5885
    %v5918 = vunpack.c.l.b16 %v5886
    %v5919 = vunpack.c.l.b16 %v5887
    %v5920 = vunpack.c.l.b16 %v5888
    %v5921 = vunpack.c.l.b16 %v5889
    %v5922 = vpack.c.b16 %v5907, %v5906
    %v5923 = vpack.c.b16 %v5909, %v5908
    %v5924 = vpack.c.b16 %v5911, %v5910
    %v5925 = vpack.c.b16 %v5913, %v5912
    %v5926 = vpack.c.b16 %v5915, %v5914
    %v5927 = vpack.c.b16 %v5917, %v5916
    %v5928 = vpack.c.b16 %v5919, %v5918
    %v5929 = vpack.c.b16 %v5921, %v5920
    %5938 = vmatpush.bf16.msra.mxu0 %v5929
    %5939 = vmatpush.bf16.msra.mxu0 %v5928
    %5940 = vmatpush.bf16.msra.mxu0 %v5927
    %5941 = vmatpush.bf16.msra.mxu0 %v5926
    %5942 = vmatpush.bf16.msra.mxu0 %v5925
    %5943 = vmatpush.bf16.msra.mxu0 %v5924
    %5944 = vmatpush.bf16.msra.mxu0 %v5923
    %5945 = vmatpush.bf16.msra.mxu0 %v5922
    %5946 = vmatmul.bf16.gmra.mxu0 %v5870
    %v5947 = vpop.f32.mrf.mxu0
    %v5948 = vadd.f32 0.0, %v5947
    %v5949 = vpop.f32.mrf.mxu0
    %v5950 = vadd.f32 0.0, %v5949
    %5951 = vmatmul.bf16.gmra.mxu0 %v5871
    %v5952 = vpop.f32.mrf.mxu0
    %v5953 = vadd.f32 0.0, %v5952
    %v5954 = vpop.f32.mrf.mxu0
    %v5955 = vadd.f32 0.0, %v5954
    %5956 = vmatmul.bf16.gmra.mxu0 %v5872
    %v5957 = vpop.f32.mrf.mxu0
    %v5958 = vadd.f32 0.0, %v5957
    %v5959 = vpop.f32.mrf.mxu0
    %v5960 = vadd.f32 0.0, %v5959
    %5961 = vmatmul.bf16.gmra.mxu0 %v5299
    %v5962 = vpop.f32.mrf.mxu0
    %v5963 = vadd.f32 0.0, %v5962
    %v5964 = vpop.f32.mrf.mxu0
    %v5965 = vadd.f32 0.0, %v5964
    %5966 = vdwg.mxu0
    %v5967 = vadd.f32 %v5845, %v5948
    %v5968 = vadd.f32 %v5847, %v5950
    %v5969 = vadd.f32 %v5850, %v5953
    %v5970 = vadd.f32 %v5852, %v5955
    %v5971 = vadd.f32 %v5855, %v5958
    %v5972 = vadd.f32 %v5857, %v5960
    %v5973 = vadd.f32 %v5860, %v5963
    %v5974 = vadd.f32 %v5862, %v5965
    %s5975 = scalar_lea.vmem [#allocation5], 13
    %v5976 = vld [vmem:[%s5975] sm:$0x1]
    %v5978 = vperm.slane %v5976, 0
    %v5980 = vadd.f32 %v5967, %v5978
    %v5981 = vadd.f32 %v5968, %v5978
    %v5982 = vadd.f32 %v5969, %v5978
    %v5983 = vadd.f32 %v5970, %v5978
    %v5984 = vadd.f32 %v5971, %v5978
    %v5985 = vadd.f32 %v5972, %v5978
    %v5986 = vadd.f32 %v5973, %v5978
    %v5987 = vadd.f32 %v5974, %v5978
    %v5988 = vmax.f32 %v5980, 0.0
    %v5989 = vmax.f32 %v5981, 0.0
    %v5990 = vmax.f32 %v5982, 0.0
    %v5991 = vmax.f32 %v5983, 0.0
    %v5992 = vmax.f32 %v5984, 0.0
    %v5993 = vmax.f32 %v5985, 0.0
    %v5994 = vmax.f32 %v5986, 0.0
    %v5995 = vmax.f32 %v5987, 0.0
    %v5996 = vsel %vm5287, %v5988, 0.0
    %v5997 = vsel %vm5288, %v5989, 0.0
    %v5998 = vsel %vm5289, %v5990, 0.0
    %v5999 = vsel %vm5290, %v5991, 0.0
    %v6000 = vsel %vm5291, %v5992, 0.0
    %v6001 = vsel %vm5292, %v5993, 0.0
    %v6002 = vpack.c.bf16 %v5997, %v5996
    %v6003 = vpack.c.bf16 %v5999, %v5998
    %v6004 = vpack.c.bf16 %v6001, %v6000
    %s6005 = scalar_lea.vmem [#allocation2], 2688
    %v6006 = vld [vmem:[%s6005] sm:$0xf]
    %v6007 = vld [vmem:[%s6005 + $0x4] sm:$0xf]
    %v6008 = vld [vmem:[%s6005 + $0x8] sm:$0xf]
    %v6009 = vld [vmem:[%s6005 + $0xc] sm:$0xf]
    %v6010 = vld [vmem:[%s6005 + $0x10] sm:$0xf]
    %v6011 = vld [vmem:[%s6005 + $0x14] sm:$0xf]
    %v6012 = vld [vmem:[%s6005 + $0x18] sm:$0xf]
    %v6013 = vld [vmem:[%s6005 + $0x1c] sm:$0xf]
    %v6014 = vld [vmem:[%s6005 + $0x20] sm:$0xf]
    %v6015 = vld [vmem:[%s6005 + $0x24] sm:$0xf]
    %v6016 = vld [vmem:[%s6005 + $0x28] sm:$0xf]
    %v6017 = vld [vmem:[%s6005 + $0x2c] sm:$0xf]
    %v6018 = vld [vmem:[%s6005 + $0x30] sm:$0xf]
    %v6019 = vld [vmem:[%s6005 + $0x34] sm:$0xf]
    %v6020 = vld [vmem:[%s6005 + $0x38] sm:$0xf]
    %v6021 = vld [vmem:[%s6005 + $0x3c] sm:$0xf]
    %v6022 = vpack.c.bf16 %v5989, %v5988
    %v6023 = vpack.c.bf16 %v5991, %v5990
    %v6024 = vpack.c.bf16 %v5993, %v5992
    %v6025 = vpack.c.bf16 %v5995, %v5994
    %s6026 = scalar_lea.vmem [#allocation2], 2752
    %v6027 = vld [vmem:[%s6026] sm:$0xf]
    %v6028 = vld [vmem:[%s6026 + $0x4] sm:$0xf]
    %v6029 = vld [vmem:[%s6026 + $0x8] sm:$0xf]
    %v6030 = vld [vmem:[%s6026 + $0xc] sm:$0xf]
    %v6031 = vld [vmem:[%s6026 + $0x10] sm:$0xf]
    %v6032 = vld [vmem:[%s6026 + $0x14] sm:$0xf]
    %v6033 = vld [vmem:[%s6026 + $0x18] sm:$0xf]
    %v6034 = vld [vmem:[%s6026 + $0x1c] sm:$0xf]
    %v6035 = vld [vmem:[%s6026 + $0x20] sm:$0xf]
    %v6036 = vld [vmem:[%s6026 + $0x24] sm:$0xf]
    %v6037 = vld [vmem:[%s6026 + $0x28] sm:$0xf]
    %v6038 = vld [vmem:[%s6026 + $0x2c] sm:$0xf]
    %v6039 = vld [vmem:[%s6026 + $0x30] sm:$0xf]
    %v6040 = vld [vmem:[%s6026 + $0x34] sm:$0xf]
    %v6041 = vld [vmem:[%s6026 + $0x38] sm:$0xf]
    %v6042 = vld [vmem:[%s6026 + $0x3c] sm:$0xf]
    %v6059 = vunpack.c.l.b16 %v6027
    %v6060 = vunpack.c.l.b16 %v6028
    %v6061 = vunpack.c.l.b16 %v6029
    %v6062 = vunpack.c.l.b16 %v6030
    %v6063 = vunpack.c.l.b16 %v6031
    %v6064 = vunpack.c.l.b16 %v6032
    %v6065 = vunpack.c.l.b16 %v6033
    %v6066 = vunpack.c.l.b16 %v6034
    %v6067 = vunpack.c.l.b16 %v6035
    %v6068 = vunpack.c.l.b16 %v6036
    %v6069 = vunpack.c.l.b16 %v6037
    %v6070 = vunpack.c.l.b16 %v6038
    %v6071 = vunpack.c.l.b16 %v6039
    %v6072 = vunpack.c.l.b16 %v6040
    %v6073 = vunpack.c.l.b16 %v6041
    %v6074 = vunpack.c.l.b16 %v6042
    %v6075 = vpack.c.b16 %v6060, %v6059
    %v6076 = vpack.c.b16 %v6062, %v6061
    %v6077 = vpack.c.b16 %v6064, %v6063
    %v6078 = vpack.c.b16 %v6066, %v6065
    %v6079 = vpack.c.b16 %v6068, %v6067
    %v6080 = vpack.c.b16 %v6070, %v6069
    %v6081 = vpack.c.b16 %v6072, %v6071
    %v6082 = vpack.c.b16 %v6074, %v6073
    %6091 = vmatpush.bf16.msra.mxu0 %v6082
    %6092 = vmatpush.bf16.msra.mxu0 %v6081
    %6093 = vmatpush.bf16.msra.mxu0 %v6080
    %6094 = vmatpush.bf16.msra.mxu0 %v6079
    %6095 = vmatpush.bf16.msra.mxu0 %v6078
    %6096 = vmatpush.bf16.msra.mxu0 %v6077
    %6097 = vmatpush.bf16.msra.mxu0 %v6076
    %6098 = vmatpush.bf16.msra.mxu0 %v6075
    %6099 = vmatmul.bf16.gmra.mxu0 %v6022
    %v6100 = vpop.f32.mrf.mxu0
    %v6101 = vadd.f32 0.0, %v6100
    %v6102 = vpop.f32.mrf.mxu0
    %v6103 = vadd.f32 0.0, %v6102
    %6104 = vmatmul.bf16.gmra.mxu0 %v6023
    %v6105 = vpop.f32.mrf.mxu0
    %v6106 = vadd.f32 0.0, %v6105
    %v6107 = vpop.f32.mrf.mxu0
    %v6108 = vadd.f32 0.0, %v6107
    %6109 = vmatmul.bf16.gmra.mxu0 %v6024
    %v6110 = vpop.f32.mrf.mxu0
    %v6111 = vadd.f32 0.0, %v6110
    %v6112 = vpop.f32.mrf.mxu0
    %v6113 = vadd.f32 0.0, %v6112
    %6114 = vmatmul.bf16.gmra.mxu0 %v6025
    %v6115 = vpop.f32.mrf.mxu0
    %v6116 = vadd.f32 0.0, %v6115
    %v6117 = vpop.f32.mrf.mxu0
    %v6118 = vadd.f32 0.0, %v6117
    %6119 = vdwg.mxu0
    %v6136 = vunpack.c.l.b16 %v6006
    %v6137 = vunpack.c.l.b16 %v6007
    %v6138 = vunpack.c.l.b16 %v6008
    %v6139 = vunpack.c.l.b16 %v6009
    %v6140 = vunpack.c.l.b16 %v6010
    %v6141 = vunpack.c.l.b16 %v6011
    %v6142 = vunpack.c.l.b16 %v6012
    %v6143 = vunpack.c.l.b16 %v6013
    %v6144 = vunpack.c.l.b16 %v6014
    %v6145 = vunpack.c.l.b16 %v6015
    %v6146 = vunpack.c.l.b16 %v6016
    %v6147 = vunpack.c.l.b16 %v6017
    %v6148 = vunpack.c.l.b16 %v6018
    %v6149 = vunpack.c.l.b16 %v6019
    %v6150 = vunpack.c.l.b16 %v6020
    %v6151 = vunpack.c.l.b16 %v6021
    %v6152 = vpack.c.b16 %v6137, %v6136
    %v6153 = vpack.c.b16 %v6139, %v6138
    %v6154 = vpack.c.b16 %v6141, %v6140
    %v6155 = vpack.c.b16 %v6143, %v6142
    %v6156 = vpack.c.b16 %v6145, %v6144
    %v6157 = vpack.c.b16 %v6147, %v6146
    %v6158 = vpack.c.b16 %v6149, %v6148
    %v6159 = vpack.c.b16 %v6151, %v6150
    %6168 = vmatpush.bf16.msra.mxu0 %v6159
    %6169 = vmatpush.bf16.msra.mxu0 %v6158
    %6170 = vmatpush.bf16.msra.mxu0 %v6157
    %6171 = vmatpush.bf16.msra.mxu0 %v6156
    %6172 = vmatpush.bf16.msra.mxu0 %v6155
    %6173 = vmatpush.bf16.msra.mxu0 %v6154
    %6174 = vmatpush.bf16.msra.mxu0 %v6153
    %6175 = vmatpush.bf16.msra.mxu0 %v6152
    %6176 = vmatmul.bf16.gmra.mxu0 %v5299
    %v6177 = vpop.f32.mrf.mxu0
    %v6178 = vadd.f32 %v6101, %v6177
    %v6179 = vpop.f32.mrf.mxu0
    %v6180 = vadd.f32 %v6103, %v6179
    %6181 = vmatmul.bf16.gmra.mxu0 %v6002
    %v6182 = vpop.f32.mrf.mxu0
    %v6183 = vadd.f32 %v6106, %v6182
    %v6184 = vpop.f32.mrf.mxu0
    %v6185 = vadd.f32 %v6108, %v6184
    %6186 = vmatmul.bf16.gmra.mxu0 %v6003
    %v6187 = vpop.f32.mrf.mxu0
    %v6188 = vadd.f32 %v6111, %v6187
    %v6189 = vpop.f32.mrf.mxu0
    %v6190 = vadd.f32 %v6113, %v6189
    %6191 = vmatmul.bf16.gmra.mxu0 %v6004
    %v6192 = vpop.f32.mrf.mxu0
    %v6193 = vadd.f32 %v6116, %v6192
    %v6194 = vpop.f32.mrf.mxu0
    %v6195 = vadd.f32 %v6118, %v6194
    %6196 = vdwg.mxu0
    %v6197 = vsel %vm5525, %v5990, 0.0
    %v6198 = vsel %vm5526, %v5991, 0.0
    %v6199 = vsel %vm5527, %v5992, 0.0
    %v6200 = vsel %vm5528, %v5993, 0.0
    %v6201 = vsel %vm5529, %v5994, 0.0
    %v6202 = vsel %vm5530, %v5995, 0.0
    %v6203 = vpack.c.bf16 %v6198, %v6197
    %v6204 = vpack.c.bf16 %v6200, %v6199
    %v6205 = vpack.c.bf16 %v6202, %v6201
    %s6206 = scalar_lea.vmem [#allocation2], 2816
    %v6207 = vld [vmem:[%s6206] sm:$0xf]
    %v6208 = vld [vmem:[%s6206 + $0x4] sm:$0xf]
    %v6209 = vld [vmem:[%s6206 + $0x8] sm:$0xf]
    %v6210 = vld [vmem:[%s6206 + $0xc] sm:$0xf]
    %v6211 = vld [vmem:[%s6206 + $0x10] sm:$0xf]
    %v6212 = vld [vmem:[%s6206 + $0x14] sm:$0xf]
    %v6213 = vld [vmem:[%s6206 + $0x18] sm:$0xf]
    %v6214 = vld [vmem:[%s6206 + $0x1c] sm:$0xf]
    %v6215 = vld [vmem:[%s6206 + $0x20] sm:$0xf]
    %v6216 = vld [vmem:[%s6206 + $0x24] sm:$0xf]
    %v6217 = vld [vmem:[%s6206 + $0x28] sm:$0xf]
    %v6218 = vld [vmem:[%s6206 + $0x2c] sm:$0xf]
    %v6219 = vld [vmem:[%s6206 + $0x30] sm:$0xf]
    %v6220 = vld [vmem:[%s6206 + $0x34] sm:$0xf]
    %v6221 = vld [vmem:[%s6206 + $0x38] sm:$0xf]
    %v6222 = vld [vmem:[%s6206 + $0x3c] sm:$0xf]
    %v6239 = vunpack.c.l.b16 %v6207
    %v6240 = vunpack.c.l.b16 %v6208
    %v6241 = vunpack.c.l.b16 %v6209
    %v6242 = vunpack.c.l.b16 %v6210
    %v6243 = vunpack.c.l.b16 %v6211
    %v6244 = vunpack.c.l.b16 %v6212
    %v6245 = vunpack.c.l.b16 %v6213
    %v6246 = vunpack.c.l.b16 %v6214
    %v6247 = vunpack.c.l.b16 %v6215
    %v6248 = vunpack.c.l.b16 %v6216
    %v6249 = vunpack.c.l.b16 %v6217
    %v6250 = vunpack.c.l.b16 %v6218
    %v6251 = vunpack.c.l.b16 %v6219
    %v6252 = vunpack.c.l.b16 %v6220
    %v6253 = vunpack.c.l.b16 %v6221
    %v6254 = vunpack.c.l.b16 %v6222
    %v6255 = vpack.c.b16 %v6240, %v6239
    %v6256 = vpack.c.b16 %v6242, %v6241
    %v6257 = vpack.c.b16 %v6244, %v6243
    %v6258 = vpack.c.b16 %v6246, %v6245
    %v6259 = vpack.c.b16 %v6248, %v6247
    %v6260 = vpack.c.b16 %v6250, %v6249
    %v6261 = vpack.c.b16 %v6252, %v6251
    %v6262 = vpack.c.b16 %v6254, %v6253
    %6271 = vmatpush.bf16.msra.mxu0 %v6262
    %6272 = vmatpush.bf16.msra.mxu0 %v6261
    %6273 = vmatpush.bf16.msra.mxu0 %v6260
    %6274 = vmatpush.bf16.msra.mxu0 %v6259
    %6275 = vmatpush.bf16.msra.mxu0 %v6258
    %6276 = vmatpush.bf16.msra.mxu0 %v6257
    %6277 = vmatpush.bf16.msra.mxu0 %v6256
    %6278 = vmatpush.bf16.msra.mxu0 %v6255
    %6279 = vmatmul.bf16.gmra.mxu0 %v6203
    %v6280 = vpop.f32.mrf.mxu0
    %v6281 = vadd.f32 0.0, %v6280
    %v6282 = vpop.f32.mrf.mxu0
    %v6283 = vadd.f32 0.0, %v6282
    %6284 = vmatmul.bf16.gmra.mxu0 %v6204
    %v6285 = vpop.f32.mrf.mxu0
    %v6286 = vadd.f32 0.0, %v6285
    %v6287 = vpop.f32.mrf.mxu0
    %v6288 = vadd.f32 0.0, %v6287
    %6289 = vmatmul.bf16.gmra.mxu0 %v6205
    %v6290 = vpop.f32.mrf.mxu0
    %v6291 = vadd.f32 0.0, %v6290
    %v6292 = vpop.f32.mrf.mxu0
    %v6293 = vadd.f32 0.0, %v6292
    %6294 = vmatmul.bf16.gmra.mxu0 %v5299
    %v6295 = vpop.f32.mrf.mxu0
    %v6296 = vadd.f32 0.0, %v6295
    %v6297 = vpop.f32.mrf.mxu0
    %v6298 = vadd.f32 0.0, %v6297
    %6299 = vdwg.mxu0
    %v6300 = vadd.f32 %v6178, %v6281
    %v6301 = vadd.f32 %v6180, %v6283
    %v6302 = vadd.f32 %v6183, %v6286
    %v6303 = vadd.f32 %v6185, %v6288
    %v6304 = vadd.f32 %v6188, %v6291
    %v6305 = vadd.f32 %v6190, %v6293
    %v6306 = vadd.f32 %v6193, %v6296
    %v6307 = vadd.f32 %v6195, %v6298
    %s6308 = scalar_lea.vmem [#allocation5], 14
    %v6309 = vld [vmem:[%s6308] sm:$0x1]
    %v6311 = vperm.slane %v6309, 0
    %v6313 = vadd.f32 %v6300, %v6311
    %v6314 = vadd.f32 %v6301, %v6311
    %v6315 = vadd.f32 %v6302, %v6311
    %v6316 = vadd.f32 %v6303, %v6311
    %v6317 = vadd.f32 %v6304, %v6311
    %v6318 = vadd.f32 %v6305, %v6311
    %v6319 = vadd.f32 %v6306, %v6311
    %v6320 = vadd.f32 %v6307, %v6311
    %v6321 = vmax.f32 %v6313, 0.0
    %v6322 = vmax.f32 %v6314, 0.0
    %v6323 = vmax.f32 %v6315, 0.0
    %v6324 = vmax.f32 %v6316, 0.0
    %v6325 = vmax.f32 %v6317, 0.0
    %v6326 = vmax.f32 %v6318, 0.0
    %v6327 = vmax.f32 %v6319, 0.0
    %v6328 = vmax.f32 %v6320, 0.0
    %v6329 = vsel %vm5287, %v6321, 0.0
    %v6330 = vsel %vm5288, %v6322, 0.0
    %v6331 = vsel %vm5289, %v6323, 0.0
    %v6332 = vsel %vm5290, %v6324, 0.0
    %v6333 = vsel %vm5291, %v6325, 0.0
    %v6334 = vsel %vm5292, %v6326, 0.0
    %v6335 = vpack.c.bf16 %v6330, %v6329
    %v6336 = vpack.c.bf16 %v6332, %v6331
    %v6337 = vpack.c.bf16 %v6334, %v6333
    %s6338 = scalar_lea.vmem [#allocation2], 2880
    %v6339 = vld [vmem:[%s6338] sm:$0xf]
    %v6340 = vld [vmem:[%s6338 + $0x4] sm:$0xf]
    %v6341 = vld [vmem:[%s6338 + $0x8] sm:$0xf]
    %v6342 = vld [vmem:[%s6338 + $0xc] sm:$0xf]
    %v6343 = vld [vmem:[%s6338 + $0x10] sm:$0xf]
    %v6344 = vld [vmem:[%s6338 + $0x14] sm:$0xf]
    %v6345 = vld [vmem:[%s6338 + $0x18] sm:$0xf]
    %v6346 = vld [vmem:[%s6338 + $0x1c] sm:$0xf]
    %v6347 = vld [vmem:[%s6338 + $0x20] sm:$0xf]
    %v6348 = vld [vmem:[%s6338 + $0x24] sm:$0xf]
    %v6349 = vld [vmem:[%s6338 + $0x28] sm:$0xf]
    %v6350 = vld [vmem:[%s6338 + $0x2c] sm:$0xf]
    %v6351 = vld [vmem:[%s6338 + $0x30] sm:$0xf]
    %v6352 = vld [vmem:[%s6338 + $0x34] sm:$0xf]
    %v6353 = vld [vmem:[%s6338 + $0x38] sm:$0xf]
    %v6354 = vld [vmem:[%s6338 + $0x3c] sm:$0xf]
    %v6355 = vpack.c.bf16 %v6322, %v6321
    %v6356 = vpack.c.bf16 %v6324, %v6323
    %v6357 = vpack.c.bf16 %v6326, %v6325
    %v6358 = vpack.c.bf16 %v6328, %v6327
    %s6359 = scalar_lea.vmem [#allocation2], 2944
    %v6360 = vld [vmem:[%s6359] sm:$0xf]
    %v6361 = vld [vmem:[%s6359 + $0x4] sm:$0xf]
    %v6362 = vld [vmem:[%s6359 + $0x8] sm:$0xf]
    %v6363 = vld [vmem:[%s6359 + $0xc] sm:$0xf]
    %v6364 = vld [vmem:[%s6359 + $0x10] sm:$0xf]
    %v6365 = vld [vmem:[%s6359 + $0x14] sm:$0xf]
    %v6366 = vld [vmem:[%s6359 + $0x18] sm:$0xf]
    %v6367 = vld [vmem:[%s6359 + $0x1c] sm:$0xf]
    %v6368 = vld [vmem:[%s6359 + $0x20] sm:$0xf]
    %v6369 = vld [vmem:[%s6359 + $0x24] sm:$0xf]
    %v6370 = vld [vmem:[%s6359 + $0x28] sm:$0xf]
    %v6371 = vld [vmem:[%s6359 + $0x2c] sm:$0xf]
    %v6372 = vld [vmem:[%s6359 + $0x30] sm:$0xf]
    %v6373 = vld [vmem:[%s6359 + $0x34] sm:$0xf]
    %v6374 = vld [vmem:[%s6359 + $0x38] sm:$0xf]
    %v6375 = vld [vmem:[%s6359 + $0x3c] sm:$0xf]
    %v6392 = vunpack.c.l.b16 %v6360
    %v6393 = vunpack.c.l.b16 %v6361
    %v6394 = vunpack.c.l.b16 %v6362
    %v6395 = vunpack.c.l.b16 %v6363
    %v6396 = vunpack.c.l.b16 %v6364
    %v6397 = vunpack.c.l.b16 %v6365
    %v6398 = vunpack.c.l.b16 %v6366
    %v6399 = vunpack.c.l.b16 %v6367
    %v6400 = vunpack.c.l.b16 %v6368
    %v6401 = vunpack.c.l.b16 %v6369
    %v6402 = vunpack.c.l.b16 %v6370
    %v6403 = vunpack.c.l.b16 %v6371
    %v6404 = vunpack.c.l.b16 %v6372
    %v6405 = vunpack.c.l.b16 %v6373
    %v6406 = vunpack.c.l.b16 %v6374
    %v6407 = vunpack.c.l.b16 %v6375
    %v6408 = vpack.c.b16 %v6393, %v6392
    %v6409 = vpack.c.b16 %v6395, %v6394
    %v6410 = vpack.c.b16 %v6397, %v6396
    %v6411 = vpack.c.b16 %v6399, %v6398
    %v6412 = vpack.c.b16 %v6401, %v6400
    %v6413 = vpack.c.b16 %v6403, %v6402
    %v6414 = vpack.c.b16 %v6405, %v6404
    %v6415 = vpack.c.b16 %v6407, %v6406
    %6424 = vmatpush.bf16.msra.mxu0 %v6415
    %6425 = vmatpush.bf16.msra.mxu0 %v6414
    %6426 = vmatpush.bf16.msra.mxu0 %v6413
    %6427 = vmatpush.bf16.msra.mxu0 %v6412
    %6428 = vmatpush.bf16.msra.mxu0 %v6411
    %6429 = vmatpush.bf16.msra.mxu0 %v6410
    %6430 = vmatpush.bf16.msra.mxu0 %v6409
    %6431 = vmatpush.bf16.msra.mxu0 %v6408
    %6432 = vmatmul.bf16.gmra.mxu0 %v6355
    %v6433 = vpop.f32.mrf.mxu0
    %v6434 = vadd.f32 0.0, %v6433
    %v6435 = vpop.f32.mrf.mxu0
    %6436 = vmatmul.bf16.gmra.mxu0 %v6356
    %v6437 = vpop.f32.mrf.mxu0
    %v6438 = vadd.f32 0.0, %v6437
    %v6439 = vpop.f32.mrf.mxu0
    %6440 = vmatmul.bf16.gmra.mxu0 %v6357
    %v6441 = vpop.f32.mrf.mxu0
    %v6442 = vadd.f32 0.0, %v6441
    %v6443 = vpop.f32.mrf.mxu0
    %6444 = vmatmul.bf16.gmra.mxu0 %v6358
    %v6445 = vpop.f32.mrf.mxu0
    %v6446 = vadd.f32 0.0, %v6445
    %v6447 = vpop.f32.mrf.mxu0
    %6448 = vdwg.mxu0
    %v6465 = vunpack.c.l.b16 %v6339
    %v6466 = vunpack.c.l.b16 %v6340
    %v6467 = vunpack.c.l.b16 %v6341
    %v6468 = vunpack.c.l.b16 %v6342
    %v6469 = vunpack.c.l.b16 %v6343
    %v6470 = vunpack.c.l.b16 %v6344
    %v6471 = vunpack.c.l.b16 %v6345
    %v6472 = vunpack.c.l.b16 %v6346
    %v6473 = vunpack.c.l.b16 %v6347
    %v6474 = vunpack.c.l.b16 %v6348
    %v6475 = vunpack.c.l.b16 %v6349
    %v6476 = vunpack.c.l.b16 %v6350
    %v6477 = vunpack.c.l.b16 %v6351
    %v6478 = vunpack.c.l.b16 %v6352
    %v6479 = vunpack.c.l.b16 %v6353
    %v6480 = vunpack.c.l.b16 %v6354
    %v6481 = vpack.c.b16 %v6466, %v6465
    %v6482 = vpack.c.b16 %v6468, %v6467
    %v6483 = vpack.c.b16 %v6470, %v6469
    %v6484 = vpack.c.b16 %v6472, %v6471
    %v6485 = vpack.c.b16 %v6474, %v6473
    %v6486 = vpack.c.b16 %v6476, %v6475
    %v6487 = vpack.c.b16 %v6478, %v6477
    %v6488 = vpack.c.b16 %v6480, %v6479
    %6497 = vmatpush.bf16.msra.mxu0 %v6488
    %6498 = vmatpush.bf16.msra.mxu0 %v6487
    %6499 = vmatpush.bf16.msra.mxu0 %v6486
    %6500 = vmatpush.bf16.msra.mxu0 %v6485
    %6501 = vmatpush.bf16.msra.mxu0 %v6484
    %6502 = vmatpush.bf16.msra.mxu0 %v6483
    %6503 = vmatpush.bf16.msra.mxu0 %v6482
    %6504 = vmatpush.bf16.msra.mxu0 %v6481
    %6505 = vmatmul.bf16.gmra.mxu0 %v5299
    %v6506 = vpop.f32.mrf.mxu0
    %v6507 = vadd.f32 %v6434, %v6506
    %v6508 = vpop.f32.mrf.mxu0
    %6509 = vmatmul.bf16.gmra.mxu0 %v6335
    %v6510 = vpop.f32.mrf.mxu0
    %v6511 = vadd.f32 %v6438, %v6510
    %v6512 = vpop.f32.mrf.mxu0
    %6513 = vmatmul.bf16.gmra.mxu0 %v6336
    %v6514 = vpop.f32.mrf.mxu0
    %v6515 = vadd.f32 %v6442, %v6514
    %v6516 = vpop.f32.mrf.mxu0
    %6517 = vmatmul.bf16.gmra.mxu0 %v6337
    %v6518 = vpop.f32.mrf.mxu0
    %v6519 = vadd.f32 %v6446, %v6518
    %v6520 = vpop.f32.mrf.mxu0
    %6521 = vdwg.mxu0
    %v6522 = vsel %vm5525, %v6323, 0.0
    %v6523 = vsel %vm5526, %v6324, 0.0
    %v6524 = vsel %vm5527, %v6325, 0.0
    %v6525 = vsel %vm5528, %v6326, 0.0
    %v6526 = vsel %vm5529, %v6327, 0.0
    %v6527 = vsel %vm5530, %v6328, 0.0
    %v6528 = vpack.c.bf16 %v6523, %v6522
    %v6529 = vpack.c.bf16 %v6525, %v6524
    %v6530 = vpack.c.bf16 %v6527, %v6526
    %s6531 = scalar_lea.vmem [#allocation2], 3008
    %v6532 = vld [vmem:[%s6531] sm:$0xf]
    %v6533 = vld [vmem:[%s6531 + $0x4] sm:$0xf]
    %v6534 = vld [vmem:[%s6531 + $0x8] sm:$0xf]
    %v6535 = vld [vmem:[%s6531 + $0xc] sm:$0xf]
    %v6536 = vld [vmem:[%s6531 + $0x10] sm:$0xf]
    %v6537 = vld [vmem:[%s6531 + $0x14] sm:$0xf]
    %v6538 = vld [vmem:[%s6531 + $0x18] sm:$0xf]
    %v6539 = vld [vmem:[%s6531 + $0x1c] sm:$0xf]
    %v6540 = vld [vmem:[%s6531 + $0x20] sm:$0xf]
    %v6541 = vld [vmem:[%s6531 + $0x24] sm:$0xf]
    %v6542 = vld [vmem:[%s6531 + $0x28] sm:$0xf]
    %v6543 = vld [vmem:[%s6531 + $0x2c] sm:$0xf]
    %v6544 = vld [vmem:[%s6531 + $0x30] sm:$0xf]
    %v6545 = vld [vmem:[%s6531 + $0x34] sm:$0xf]
    %v6546 = vld [vmem:[%s6531 + $0x38] sm:$0xf]
    %v6547 = vld [vmem:[%s6531 + $0x3c] sm:$0xf]
    %v6564 = vunpack.c.l.b16 %v6532
    %v6565 = vunpack.c.l.b16 %v6533
    %v6566 = vunpack.c.l.b16 %v6534
    %v6567 = vunpack.c.l.b16 %v6535
    %v6568 = vunpack.c.l.b16 %v6536
    %v6569 = vunpack.c.l.b16 %v6537
    %v6570 = vunpack.c.l.b16 %v6538
    %v6571 = vunpack.c.l.b16 %v6539
    %v6572 = vunpack.c.l.b16 %v6540
    %v6573 = vunpack.c.l.b16 %v6541
    %v6574 = vunpack.c.l.b16 %v6542
    %v6575 = vunpack.c.l.b16 %v6543
    %v6576 = vunpack.c.l.b16 %v6544
    %v6577 = vunpack.c.l.b16 %v6545
    %v6578 = vunpack.c.l.b16 %v6546
    %v6579 = vunpack.c.l.b16 %v6547
    %v6580 = vpack.c.b16 %v6565, %v6564
    %v6581 = vpack.c.b16 %v6567, %v6566
    %v6582 = vpack.c.b16 %v6569, %v6568
    %v6583 = vpack.c.b16 %v6571, %v6570
    %v6584 = vpack.c.b16 %v6573, %v6572
    %v6585 = vpack.c.b16 %v6575, %v6574
    %v6586 = vpack.c.b16 %v6577, %v6576
    %v6587 = vpack.c.b16 %v6579, %v6578
    %6596 = vmatpush.bf16.msra.mxu0 %v6587
    %6597 = vmatpush.bf16.msra.mxu0 %v6586
    %6598 = vmatpush.bf16.msra.mxu0 %v6585
    %6599 = vmatpush.bf16.msra.mxu0 %v6584
    %6600 = vmatpush.bf16.msra.mxu0 %v6583
    %6601 = vmatpush.bf16.msra.mxu0 %v6582
    %6602 = vmatpush.bf16.msra.mxu0 %v6581
    %6603 = vmatpush.bf16.msra.mxu0 %v6580
    %6604 = vmatmul.bf16.gmra.mxu0 %v6528
    %v6605 = vpop.f32.mrf.mxu0
    %v6606 = vadd.f32 0.0, %v6605
    %v6607 = vpop.f32.mrf.mxu0
    %6608 = vmatmul.bf16.gmra.mxu0 %v6529
    %v6609 = vpop.f32.mrf.mxu0
    %v6610 = vadd.f32 0.0, %v6609
    %v6611 = vpop.f32.mrf.mxu0
    %6612 = vmatmul.bf16.gmra.mxu0 %v6530
    %v6613 = vpop.f32.mrf.mxu0
    %v6614 = vadd.f32 0.0, %v6613
    %v6615 = vpop.f32.mrf.mxu0
    %6616 = vmatmul.bf16.gmra.mxu0 %v5299
    %v6617 = vpop.f32.mrf.mxu0
    %v6618 = vadd.f32 0.0, %v6617
    %v6619 = vpop.f32.mrf.mxu0
    %6620 = vdwg.mxu0
    %v6621 = vadd.f32 %v6507, %v6606
    %v6622 = vadd.f32 %v6511, %v6610
    %v6623 = vadd.f32 %v6515, %v6614
    %v6624 = vadd.f32 %v6519, %v6618
    %s6625 = scalar_lea.vmem [#allocation5], 15
    %v6626 = vld [vmem:[%s6625] sm:$0x1]
    %v6628 = vperm.slane %v6626, 0
    %v6630 = vadd.f32 %v6621, %v6628
    %v6631 = vadd.f32 %v6622, %v6628
    %v6632 = vadd.f32 %v6623, %v6628
    %v6633 = vadd.f32 %v6624, %v6628
    %v6634 = vmax.f32 %v6630, 0.0
    %v6635 = vmax.f32 %v6631, 0.0
    %v6636 = vmax.f32 %v6632, 0.0
    %v6637 = vmax.f32 %v6633, 0.0
    %v6638 = vsel %vm5525, %v6635, 0.0
    %v6639 = vsel %vm5529, %v6637, 0.0
    %v6640 = vmax.f32 %v6634, %v6638
    %v6641 = vmax.f32 %v6636, %v6639
    %6642 = vrot.lane.b32.xlu0 %v6640, 96
    %v6643 = vpop.permute.xlu0 %6642
    %6644 = vrot.lane.b32.xlu0 %v6641, 96
    %v6645 = vpop.permute.xlu0 %6644
    %v6646 = vmax.f32 %v6640, %v6643
    %v6647 = vmax.f32 %v6641, %v6645
    %v6649 = vrot.slane %v6647, 7
    %v6651 = vsel %vm195, %v6646, %v6649
    %v6652 = vld [vmem:[%s3] sm:$0xff]
    %v6653 = vld [vmem:[%s3 + $0x8] sm:$0xff]
    %v6654 = vld [vmem:[%s3 + $0x10] sm:$0xff]
    %v6655 = vld [vmem:[%s3 + $0x18] sm:$0xff]
    %v6656 = vld [vmem:[%s3 + $0x20] sm:$0xff]
    %v6657 = vld [vmem:[%s3 + $0x28] sm:$0xff]
    %v6658 = vld [vmem:[%s3 + $0x30] sm:$0xff]
    %v6659 = vld [vmem:[%s3 + $0x38] sm:$0xff]
    %v6660 = vld [vmem:[%s3 + $0x40] sm:$0xff]
    %v6661 = vld [vmem:[%s3 + $0x48] sm:$0xff]
    %v6662 = vld [vmem:[%s3 + $0x50] sm:$0xff]
    %v6663 = vld [vmem:[%s3 + $0x58] sm:$0xff]
    %v6664 = vld [vmem:[%s3 + $0x60] sm:$0xff]
    %v6665 = vld [vmem:[%s3 + $0x68] sm:$0xff]
    %v6666 = vld [vmem:[%s3 + $0x70] sm:$0xff]
    %v6667 = vld [vmem:[%s3 + $0x78] sm:$0xff]
    %v6668 = vld [vmem:[#allocation7] sm:$0x1]
    %v6670 = vperm.slane %v6668, 0
    %6672 = vmatpush.msra.mxu0 %v6667
    %6673 = vmatpush.msra.mxu0 %v6666
    %6674 = vmatpush.msra.mxu0 %v6665
    %6675 = vmatpush.msra.mxu0 %v6664
    %6676 = vmatpush.msra.mxu0 %v6663
    %6677 = vmatpush.msra.mxu0 %v6662
    %6678 = vmatpush.msra.mxu0 %v6661
    %6679 = vmatpush.msra.mxu0 %v6660
    %6680 = vmatpush.msra.mxu0 %v6659
    %6681 = vmatpush.msra.mxu0 %v6658
    %6682 = vmatpush.msra.mxu0 %v6657
    %6683 = vmatpush.msra.mxu0 %v6656
    %6684 = vmatpush.msra.mxu0 %v6655
    %6685 = vmatpush.msra.mxu0 %v6654
    %6686 = vmatpush.msra.mxu0 %v6653
    %6687 = vmatpush.msra.mxu0 %v6652
    %6688 = vmatmul.f32.gmra.mxu0 %v6651
    %v6689 = vpop.f32.mrf.mxu0
    %v6690 = vadd.f32 %v6670, %v6689
    %6691 = vdwg.mxu0
    %vm6692 = vcmask 74752
    %6693 = vst.msk [vmem:[#allocation8] sm:$0x3] %vm6692, %v6690
    // Predicated region
    $region34: #{custom_vgg_forward.1} parent=1 // pred_check
      _
    $region35: #{custom_vgg_forward.1} parent=1 // pred_check_branch
      %6695 = sbr.rel (0) target = $region37
    $region36: #{custom_vgg_forward.1} parent=1 // pred_region
      %6697 = vsyncadd [#allocation4], 0
      %s6699 = sshll.u32 [#allocation8], 4
      %s6700 = int_to_ptr.vmem [resolvable:$true] %s6699
      %s6701 = sshll.u32 %s5, 4
      %s6702 = int_to_ptr.hbm [resolvable:$true] %s6701
      %6704 = dma.vmem_to_hbm [thread:$0]  %s6700, 32, %s6702, [#allocation4]
    $region37: #{custom_vgg_forward.1} parent=1 // pred_fallthru
      _
    // Predicated region
    $region38: #{custom_vgg_forward.1} parent=1 // pred_check
      _
    $region39: #{custom_vgg_forward.1} parent=1 // pred_check_branch
      %6706 = sbr.rel (0) target = $region41
    $region40: #{custom_vgg_forward.1} parent=1 // pred_region
      %6708 = dma.done [#allocation4], 32
    $region41: #{custom_vgg_forward.1} parent=1 // pred_fallthru
      _
    %6709 = vsyncpa [#allocation3], 1
    %6710 = vsyncpa [#allocation6], 1
    %6711 = vsyncpa [#allocation4], 1

</llo_original>
